<compile_context>
chip_gen: v6e
topology: v6e:2x2x1
jax: 0.10.0
libtpu: 0.0.40
codegen_flags: <defaults>
</compile_context>

<pallas_src>
import numpy as np

import jax
import jax.numpy as jnp
from jax import lax
from jax.experimental import pallas as pl
from jax.experimental.pallas import tpu as pltpu


# ----------------------------------------------------------------------------
# Fused Pallas kernel: the entire forward pass
# ----------------------------------------------------------------------------
def _mnist_fused_kernel(
    x0_ref, x1_ref, x2_ref, x3_ref,        # input row-phases, each [7B, 28]
    w1b_ref, b1b_ref,                      # conv1 bands [10, 28, 72], bias [1, 72]
    w2b_ref, b2b_ref,                      # conv2 bands [10, 72, 64], bias [1, 64]
    w1fc_ref, b1fc_ref,                    # fc1 (reordered) [4, 64, 120], [1, 120]
    w2fc_ref, b2fc_ref,                    # fc2 [120, 84], [1, 84]
    w3fc_ref, b3fc_ref,                    # fc3 [84, 2],   [1, 2]
    out_ref,                               # softmax output [B, 2]
):
    B = out_ref.shape[0]
    f32 = jnp.float32
    xph = (x0_ref[...], x1_ref[...], x2_ref[...], x3_ref[...])

    # ---- conv1 (5x5 valid) as banded matmuls; output rows phase-split mod 4 ----
    # C1[q][s][(m, b), (c, j)] = conv1_out[b, c, oh=4m+q, ow=2j+s]
    def conv1_phase(q, s):
        acc = None
        for kh in range(5):
            src = q + kh                                  # input row h = 4m + src
            lhs = xph[src % 4][(src // 4) * B:(src // 4) * B + 6 * B, :]
            term = jnp.dot(lhs, w1b_ref[2 * kh + s], preferred_element_type=f32)
            acc = term if acc is None else acc + term
        return acc

    # ---- maxpool(2,2) + bias + ReLU; keep pooled-row parity split for conv2 ----
    # p1_par[p][(m, b), (ci, v)] = relu(maxpool(conv1)+b1)[b, ci, u=2m+p, v]
    p1_par = []
    for p in range(2):
        c00 = conv1_phase(2 * p, 0)
        c01 = conv1_phase(2 * p, 1)
        c10 = conv1_phase(2 * p + 1, 0)
        c11 = conv1_phase(2 * p + 1, 1)
        pooled = jnp.maximum(jnp.maximum(c00, c01), jnp.maximum(c10, c11))
        p1_par.append(jnp.maximum(pooled + b1b_ref[...], 0.0))

    # ---- conv2 (5x5 over 6 channels) as banded matmuls, phase-split mod 2 ------
    # C2[r][s][(t, b), (co, j2)] = conv2_out[b, co, oh2=2t+r, ow2=2j2+s]
    def conv2_phase(r, s):
        acc = None
        for kh in range(5):
            c = r + kh                                    # p1 row u = 2t + c
            lhs = p1_par[c % 2][(c // 2) * B:(c // 2) * B + 4 * B, :]
            term = jnp.dot(lhs, w2b_ref[2 * kh + s], preferred_element_type=f32)
            acc = term if acc is None else acc + term
        return acc

    d00 = conv2_phase(0, 0)
    d01 = conv2_phase(0, 1)
    d10 = conv2_phase(1, 0)
    d11 = conv2_phase(1, 1)
    p2 = jnp.maximum(jnp.maximum(d00, d01), jnp.maximum(d10, d11))
    p2 = jnp.maximum(p2 + b2b_ref[...], 0.0)   # pool2: rows (t, b), cols (co, j2)

    # ---- classifier (the x.view(-1,256) flatten is folded into fc1's weights) --
    h = None
    for t in range(4):
        term = jnp.dot(p2[t * B:(t + 1) * B, :], w1fc_ref[t],
                       preferred_element_type=f32)
        h = term if h is None else h + term
    h = jnp.maximum(h + b1fc_ref[...], 0.0)                           # [B, 120]
    h = jnp.maximum(
        jnp.dot(h, w2fc_ref[...], preferred_element_type=f32) + b2fc_ref[...],
        0.0)                                                          # [B, 84]
    logits = (jnp.dot(h, w3fc_ref[...], preferred_element_type=f32)
              + b3fc_ref[...])                                        # [B, 2]

    # ---- softmax(dim=1) --------------------------------------------------------
    m = jnp.max(logits, axis=1, keepdims=True)
    e = jnp.exp(logits - m)
    denom = jnp.sum(e, axis=1, keepdims=True)
    # approx=True would push this to the EUP, but it is kept exact here so the
    # output matches the XLA reference to ~1e-6 (the tensor is only [B, 1]).
    out_ref[...] = e * pl.reciprocal(denom, approx=False)


# ----------------------------------------------------------------------------
# Host-side weight repacking (done once, outside the jitted forward)
# ----------------------------------------------------------------------------
def _build_conv_bands(w, in_w):
    """Repack conv weights into banded matrices for conv-as-matmul along W.

    Returns float32 [KH*2, Cin*in_w, Cout*out_half]; index (kh*2 + s) selects
    kernel row kh and output-column parity s (ow = 2j + s).  Rows are (ci, w_in),
    columns are (co, j):
        band[kh*2+s, ci*in_w + ow + kw, co*out_half + j] = w[co, ci, kh, kw]
    """
    w = np.asarray(w, np.float32)
    cout, cin, kh_sz, kw_sz = w.shape
    out_w = in_w - kw_sz + 1
    out_half = out_w // 2
    bands = np.zeros((kh_sz * 2, cin * in_w, cout * out_half), np.float32)
    for kh in range(kh_sz):
        for s in range(2):
            for j in range(out_half):
                ow = 2 * j + s
                for kw in range(kw_sz):
                    for ci in range(cin):
                        bands[kh * 2 + s, ci * in_w + ow + kw, j::out_half] = \
                            w[:, ci, kh, kw]
    return bands


def pack_params(params):
    """One-time repacking of PyTorch-layout parameters into kernel operands."""
    w1b = jnp.asarray(_build_conv_bands(params["conv1_w"], 28))   # [10, 28, 72]
    w2b = jnp.asarray(_build_conv_bands(params["conv2_w"], 12))   # [10, 72, 64]
    b1b = jnp.repeat(params["conv1_b"], 12).reshape(1, 72)        # cols (c,  j)
    b2b = jnp.repeat(params["conv2_b"], 4).reshape(1, 64)         # cols (co, j2)
    # fc1 weight reordered so pool2 row-block t multiplies w1fc[t]; this absorbs
    # the NCHW x.view(-1, 16*4*4) flatten exactly.
    w1fc = jnp.transpose(params["fc1_w"].reshape(16, 4, 4, 120),
                         (1, 0, 2, 3)).reshape(4, 64, 120)
    return dict(
        w1b=w1b, b1b=b1b, w2b=w2b, b2b=b2b,
        w1fc=w1fc, b1fc=params["fc1_b"].reshape(1, 120),
        w2fc=params["fc2_w"], b2fc=params["fc2_b"].reshape(1, 84),
        w3fc=params["fc3_w"], b3fc=params["fc3_b"].reshape(1, 2),
    )


# ----------------------------------------------------------------------------
# Forward pass: 4 tiny input slices + ONE fused pallas_call
# ----------------------------------------------------------------------------
@jax.jit
def mnist_net_forward(x, packed):
    """x: [B, 1, 28, 28] float32 (NCHW). Returns softmax probabilities [B, 2]."""
    B, C, H, W = x.shape
    assert (C, H, W) == (1, 28, 28), "MNIST_Net expects 1x28x28 inputs"

    # Row-phase split of the input (h = 4*m + phase), rows packed as (m, b) so
    # every row window the kernel needs is a contiguous sublane slice.
    xt = jnp.transpose(x[:, 0, :, :], (1, 0, 2))                   # [28, B, 28]
    xph = [xt[p::4].reshape(7 * B, 28) for p in range(4)]          # 4 x [7B, 28]

    operands = (
        xph[0], xph[1], xph[2], xph[3],
        packed["w1b"], packed["b1b"], packed["w2b"], packed["b2b"],
        packed["w1fc"], packed["b1fc"], packed["w2fc"], packed["b2fc"],
        packed["w3fc"], packed["b3fc"],
    )

    def full_spec(a):
        nd = a.ndim
        return pl.BlockSpec(a.shape, lambda i, _nd=nd: (0,) * _nd)

    flops = int(
        4 * 2 * 5 * 2 * (6 * B) * 28 * 72      # conv1 banded matmuls
        + 2 * 2 * 5 * 2 * (4 * B) * 72 * 64    # conv2 banded matmuls
        + 4 * 2 * B * 64 * 120                 # fc1 (4 row blocks)
        + 2 * B * 120 * 84                     # fc2
        + 2 * B * 84 * 2                       # fc3
    )
    bytes_accessed = int(sum(op.size for op in operands) * 4 + B * 2 * 4)

    return pl.pallas_call(
        _mnist_fused_kernel,
        out_shape=jax.ShapeDtypeStruct((B, 2), jnp.float32),
        grid=(1,),
        in_specs=[full_spec(op) for op in operands],
        out_specs=pl.BlockSpec((B, 2), lambda i: (0, 0)),
        compiler_params=pltpu.CompilerParams(
            dimension_semantics=("arbitrary",)),
        cost_estimate=pl.CostEstimate(
            flops=flops, transcendentals=2 * B, bytes_accessed=bytes_accessed),
    )(*operands)


# ----------------------------------------------------------------------------
# Parameters (PyTorch default-init layout) and a pure-JAX reference
# ----------------------------------------------------------------------------
def init_params(key):
    ks = jax.random.split(key, 10)

    def u(k, fan_in, shape):
        bound = 1.0 / float(fan_in) ** 0.5  # PyTorch default init bound
        return jax.random.uniform(k, shape, jnp.float32, -bound, bound)

    return {
        "conv1_w": u(ks[0], 1 * 5 * 5, (6, 1, 5, 5)),
        "conv1_b": u(ks[1], 1 * 5 * 5, (6,)),
        "conv2_w": u(ks[2], 6 * 5 * 5, (16, 6, 5, 5)),
        "conv2_b": u(ks[3], 6 * 5 * 5, (16,)),
        "fc1_w": u(ks[4], 256, (256, 120)),   # stored as [in, out]
        "fc1_b": u(ks[5], 256, (120,)),
        "fc2_w": u(ks[6], 120, (120, 84)),
        "fc2_b": u(ks[7], 120, (84,)),
        "fc3_w": u(ks[8], 84, (84, 2)),
        "fc3_b": u(ks[9], 84, (2,)),
    }


def reference_forward(x, params):
    """Pure-JAX (XLA) reference with identical semantics to the PyTorch module."""
    dn = ("NCHW", "OIHW", "NCHW")
    y = lax.conv_general_dilated(x, params["conv1_w"], (1, 1), "VALID",
                                 dimension_numbers=dn)
    y = y + params["conv1_b"].reshape(1, -1, 1, 1)
    y = lax.reduce_window(y, -jnp.inf, lax.max, (1, 1, 2, 2), (1, 1, 2, 2), "VALID")
    y = jnp.maximum(y, 0.0)
    y = lax.conv_general_dilated(y, params["conv2_w"], (1, 1), "VALID",
                                 dimension_numbers=dn)
    y = y + params["conv2_b"].reshape(1, -1, 1, 1)
    y = lax.reduce_window(y, -jnp.inf, lax.max, (1, 1, 2, 2), (1, 1, 2, 2), "VALID")
    y = jnp.maximum(y, 0.0)
    y = y.reshape(x.shape[0], 16 * 4 * 4)
    y = jnp.maximum(y @ params["fc1_w"] + params["fc1_b"], 0.0)
    y = jnp.maximum(y @ params["fc2_w"] + params["fc2_b"], 0.0)
    logits = y @ params["fc3_w"] + params["fc3_b"]
    return jax.nn.softmax(logits, axis=1)


if __name__ == "__main__":
    key = jax.random.PRNGKey(0)
    k_x, k_p = jax.random.split(key)
    # Module implies 28x28 single-channel input (MNIST); batch=2.
    x = jax.random.normal(k_x, (2, 1, 28, 28), dtype=jnp.float32)
    params = init_params(k_p)
    packed = pack_params(params)

    out = jax.block_until_ready(mnist_net_forward(x, packed))

    assert out.shape == (2, 2), out.shape
    # Softmax rows must sum to 1 and match the XLA reference.
    assert bool(jnp.allclose(jnp.sum(out, axis=1), 1.0, atol=1e-3))
    ref = reference_forward(x, params)
    assert bool(jnp.allclose(out, ref, atol=1e-3, rtol=1e-3)), (out, ref)
    print("KERNEL_OK")
</pallas_src>

<mosaic_0001>
module attributes {stable_mosaic.version = 11 : i64} {
  func.func @_mnist_fused_kernel(%arg0: i32, %arg1: memref<14x28xf32, #tpu.memory_space<vmem>>, %arg2: memref<14x28xf32, #tpu.memory_space<vmem>>, %arg3: memref<14x28xf32, #tpu.memory_space<vmem>>, %arg4: memref<14x28xf32, #tpu.memory_space<vmem>>, %arg5: memref<10x28x72xf32, #tpu.memory_space<vmem>>, %arg6: memref<1x72xf32, #tpu.memory_space<vmem>>, %arg7: memref<10x72x64xf32, #tpu.memory_space<vmem>>, %arg8: memref<1x64xf32, #tpu.memory_space<vmem>>, %arg9: memref<4x64x120xf32, #tpu.memory_space<vmem>>, %arg10: memref<1x120xf32, #tpu.memory_space<vmem>>, %arg11: memref<120x84xf32, #tpu.memory_space<vmem>>, %arg12: memref<1x84xf32, #tpu.memory_space<vmem>>, %arg13: memref<84x2xf32, #tpu.memory_space<vmem>>, %arg14: memref<1x2xf32, #tpu.memory_space<vmem>>, %arg15: memref<2x2xf32, #tpu.memory_space<vmem>>) attributes {dimension_semantics = [#tpu.dimension_semantics<arbitrary>], iteration_bounds = array<i64: 1>, scalar_prefetch = 0 : i64, scratch_operands = 0 : i64, tpu.core_type = #tpu.core_type<tc>, window_params = [{pipeline_mode = #tpu.pipeline_mode<synchronous>, transform_indices = @transform_0, window_bounds = array<i64: 14, 28>}, {pipeline_mode = #tpu.pipeline_mode<synchronous>, transform_indices = @transform_1, window_bounds = array<i64: 14, 28>}, {pipeline_mode = #tpu.pipeline_mode<synchronous>, transform_indices = @transform_2, window_bounds = array<i64: 14, 28>}, {pipeline_mode = #tpu.pipeline_mode<synchronous>, transform_indices = @transform_3, window_bounds = array<i64: 14, 28>}, {pipeline_mode = #tpu.pipeline_mode<synchronous>, transform_indices = @transform_4, window_bounds = array<i64: 10, 28, 72>}, {pipeline_mode = #tpu.pipeline_mode<synchronous>, transform_indices = @transform_5, window_bounds = array<i64: 1, 72>}, {pipeline_mode = #tpu.pipeline_mode<synchronous>, transform_indices = @transform_6, window_bounds = array<i64: 10, 72, 64>}, {pipeline_mode = #tpu.pipeline_mode<synchronous>, transform_indices = @transform_7, window_bounds = array<i64: 1, 64>}, {pipeline_mode = #tpu.pipeline_mode<synchronous>, transform_indices = @transform_8, window_bounds = array<i64: 4, 64, 120>}, {pipeline_mode = #tpu.pipeline_mode<synchronous>, transform_indices = @transform_9, window_bounds = array<i64: 1, 120>}, {pipeline_mode = #tpu.pipeline_mode<synchronous>, transform_indices = @transform_10, window_bounds = array<i64: 120, 84>}, {pipeline_mode = #tpu.pipeline_mode<synchronous>, transform_indices = @transform_11, window_bounds = array<i64: 1, 84>}, {pipeline_mode = #tpu.pipeline_mode<synchronous>, transform_indices = @transform_12, window_bounds = array<i64: 84, 2>}, {pipeline_mode = #tpu.pipeline_mode<synchronous>, transform_indices = @transform_13, window_bounds = array<i64: 1, 2>}, {pipeline_mode = #tpu.pipeline_mode<synchronous>, transform_indices = @transform_14, window_bounds = array<i64: 2, 2>}]} {
    %c0 = arith.constant 0 : index
    %c0_0 = arith.constant 0 : index
    %0 = vector.load %arg1[%c0, %c0_0] : memref<14x28xf32, #tpu.memory_space<vmem>>, vector<14x28xf32>
    %c0_1 = arith.constant 0 : index
    %c0_2 = arith.constant 0 : index
    %1 = vector.load %arg2[%c0_1, %c0_2] : memref<14x28xf32, #tpu.memory_space<vmem>>, vector<14x28xf32>
    %c0_3 = arith.constant 0 : index
    %c0_4 = arith.constant 0 : index
    %2 = vector.load %arg3[%c0_3, %c0_4] : memref<14x28xf32, #tpu.memory_space<vmem>>, vector<14x28xf32>
    %c0_5 = arith.constant 0 : index
    %c0_6 = arith.constant 0 : index
    %3 = vector.load %arg4[%c0_5, %c0_6] : memref<14x28xf32, #tpu.memory_space<vmem>>, vector<14x28xf32>
    %4 = vector.extract_strided_slice %0 {offsets = [0, 0], sizes = [12, 28], strides = [1, 1]} : vector<14x28xf32> to vector<12x28xf32>
    %c0_7 = arith.constant 0 : index
    %c0_8 = arith.constant 0 : index
    %c0_9 = arith.constant 0 : index
    %5 = vector.load %arg5[%c0_7, %c0_8, %c0_9] : memref<10x28x72xf32, #tpu.memory_space<vmem>>, vector<1x28x72xf32>
    %6 = vector.shape_cast %5 : vector<1x28x72xf32> to vector<28x72xf32>
    %cst = arith.constant dense<0.000000e+00> : vector<12x72xf32>
    %7 = tpu.matmul %4, %6, %cst {dimension_numbers = #tpu.dot_dimension_numbers<[1], [0], [0], [1], [0, 0, 1, 1], [], []>} : vector<12x28xf32>, vector<28x72xf32>, vector<12x72xf32> -> vector<12x72xf32>
    %8 = vector.extract_strided_slice %1 {offsets = [0, 0], sizes = [12, 28], strides = [1, 1]} : vector<14x28xf32> to vector<12x28xf32>
    %c2 = arith.constant 2 : index
    %c0_10 = arith.constant 0 : index
    %c0_11 = arith.constant 0 : index
    %9 = vector.load %arg5[%c2, %c0_10, %c0_11] : memref<10x28x72xf32, #tpu.memory_space<vmem>>, vector<1x28x72xf32>
    %10 = vector.shape_cast %9 : vector<1x28x72xf32> to vector<28x72xf32>
    %cst_12 = arith.constant dense<0.000000e+00> : vector<12x72xf32>
    %11 = tpu.matmul %8, %10, %cst_12 {dimension_numbers = #tpu.dot_dimension_numbers<[1], [0], [0], [1], [0, 0, 1, 1], [], []>} : vector<12x28xf32>, vector<28x72xf32>, vector<12x72xf32> -> vector<12x72xf32>
    %12 = arith.addf %7, %11 : vector<12x72xf32>
    %13 = vector.extract_strided_slice %2 {offsets = [0, 0], sizes = [12, 28], strides = [1, 1]} : vector<14x28xf32> to vector<12x28xf32>
    %c4 = arith.constant 4 : index
    %c0_13 = arith.constant 0 : index
    %c0_14 = arith.constant 0 : index
    %14 = vector.load %arg5[%c4, %c0_13, %c0_14] : memref<10x28x72xf32, #tpu.memory_space<vmem>>, vector<1x28x72xf32>
    %15 = vector.shape_cast %14 : vector<1x28x72xf32> to vector<28x72xf32>
    %cst_15 = arith.constant dense<0.000000e+00> : vector<12x72xf32>
    %16 = tpu.matmul %13, %15, %cst_15 {dimension_numbers = #tpu.dot_dimension_numbers<[1], [0], [0], [1], [0, 0, 1, 1], [], []>} : vector<12x28xf32>, vector<28x72xf32>, vector<12x72xf32> -> vector<12x72xf32>
    %17 = arith.addf %12, %16 : vector<12x72xf32>
    %18 = vector.extract_strided_slice %3 {offsets = [0, 0], sizes = [12, 28], strides = [1, 1]} : vector<14x28xf32> to vector<12x28xf32>
    %c6 = arith.constant 6 : index
    %c0_16 = arith.constant 0 : index
    %c0_17 = arith.constant 0 : index
    %19 = vector.load %arg5[%c6, %c0_16, %c0_17] : memref<10x28x72xf32, #tpu.memory_space<vmem>>, vector<1x28x72xf32>
    %20 = vector.shape_cast %19 : vector<1x28x72xf32> to vector<28x72xf32>
    %cst_18 = arith.constant dense<0.000000e+00> : vector<12x72xf32>
    %21 = tpu.matmul %18, %20, %cst_18 {dimension_numbers = #tpu.dot_dimension_numbers<[1], [0], [0], [1], [0, 0, 1, 1], [], []>} : vector<12x28xf32>, vector<28x72xf32>, vector<12x72xf32> -> vector<12x72xf32>
    %22 = arith.addf %17, %21 : vector<12x72xf32>
    %23 = vector.extract_strided_slice %0 {offsets = [2, 0], sizes = [12, 28], strides = [1, 1]} : vector<14x28xf32> to vector<12x28xf32>
    %c8 = arith.constant 8 : index
    %c0_19 = arith.constant 0 : index
    %c0_20 = arith.constant 0 : index
    %24 = vector.load %arg5[%c8, %c0_19, %c0_20] : memref<10x28x72xf32, #tpu.memory_space<vmem>>, vector<1x28x72xf32>
    %25 = vector.shape_cast %24 : vector<1x28x72xf32> to vector<28x72xf32>
    %cst_21 = arith.constant dense<0.000000e+00> : vector<12x72xf32>
    %26 = tpu.matmul %23, %25, %cst_21 {dimension_numbers = #tpu.dot_dimension_numbers<[1], [0], [0], [1], [0, 0, 1, 1], [], []>} : vector<12x28xf32>, vector<28x72xf32>, vector<12x72xf32> -> vector<12x72xf32>
    %27 = arith.addf %22, %26 : vector<12x72xf32>
    %28 = vector.extract_strided_slice %0 {offsets = [0, 0], sizes = [12, 28], strides = [1, 1]} : vector<14x28xf32> to vector<12x28xf32>
    %c1 = arith.constant 1 : index
    %c0_22 = arith.constant 0 : index
    %c0_23 = arith.constant 0 : index
    %29 = vector.load %arg5[%c1, %c0_22, %c0_23] : memref<10x28x72xf32, #tpu.memory_space<vmem>>, vector<1x28x72xf32>
    %30 = vector.shape_cast %29 : vector<1x28x72xf32> to vector<28x72xf32>
    %cst_24 = arith.constant dense<0.000000e+00> : vector<12x72xf32>
    %31 = tpu.matmul %28, %30, %cst_24 {dimension_numbers = #tpu.dot_dimension_numbers<[1], [0], [0], [1], [0, 0, 1, 1], [], []>} : vector<12x28xf32>, vector<28x72xf32>, vector<12x72xf32> -> vector<12x72xf32>
    %32 = vector.extract_strided_slice %1 {offsets = [0, 0], sizes = [12, 28], strides = [1, 1]} : vector<14x28xf32> to vector<12x28xf32>
    %c3 = arith.constant 3 : index
    %c0_25 = arith.constant 0 : index
    %c0_26 = arith.constant 0 : index
    %33 = vector.load %arg5[%c3, %c0_25, %c0_26] : memref<10x28x72xf32, #tpu.memory_space<vmem>>, vector<1x28x72xf32>
    %34 = vector.shape_cast %33 : vector<1x28x72xf32> to vector<28x72xf32>
    %cst_27 = arith.constant dense<0.000000e+00> : vector<12x72xf32>
    %35 = tpu.matmul %32, %34, %cst_27 {dimension_numbers = #tpu.dot_dimension_numbers<[1], [0], [0], [1], [0, 0, 1, 1], [], []>} : vector<12x28xf32>, vector<28x72xf32>, vector<12x72xf32> -> vector<12x72xf32>
    %36 = arith.addf %31, %35 : vector<12x72xf32>
    %37 = vector.extract_strided_slice %2 {offsets = [0, 0], sizes = [12, 28], strides = [1, 1]} : vector<14x28xf32> to vector<12x28xf32>
    %c5 = arith.constant 5 : index
    %c0_28 = arith.constant 0 : index
    %c0_29 = arith.constant 0 : index
    %38 = vector.load %arg5[%c5, %c0_28, %c0_29] : memref<10x28x72xf32, #tpu.memory_space<vmem>>, vector<1x28x72xf32>
    %39 = vector.shape_cast %38 : vector<1x28x72xf32> to vector<28x72xf32>
    %cst_30 = arith.constant dense<0.000000e+00> : vector<12x72xf32>
    %40 = tpu.matmul %37, %39, %cst_30 {dimension_numbers = #tpu.dot_dimension_numbers<[1], [0], [0], [1], [0, 0, 1, 1], [], []>} : vector<12x28xf32>, vector<28x72xf32>, vector<12x72xf32> -> vector<12x72xf32>
    %41 = arith.addf %36, %40 : vector<12x72xf32>
    %42 = vector.extract_strided_slice %3 {offsets = [0, 0], sizes = [12, 28], strides = [1, 1]} : vector<14x28xf32> to vector<12x28xf32>
    %c7 = arith.constant 7 : index
    %c0_31 = arith.constant 0 : index
    %c0_32 = arith.constant 0 : index
    %43 = vector.load %arg5[%c7, %c0_31, %c0_32] : memref<10x28x72xf32, #tpu.memory_space<vmem>>, vector<1x28x72xf32>
    %44 = vector.shape_cast %43 : vector<1x28x72xf32> to vector<28x72xf32>
    %cst_33 = arith.constant dense<0.000000e+00> : vector<12x72xf32>
    %45 = tpu.matmul %42, %44, %cst_33 {dimension_numbers = #tpu.dot_dimension_numbers<[1], [0], [0], [1], [0, 0, 1, 1], [], []>} : vector<12x28xf32>, vector<28x72xf32>, vector<12x72xf32> -> vector<12x72xf32>
    %46 = arith.addf %41, %45 : vector<12x72xf32>
    %47 = vector.extract_strided_slice %0 {offsets = [2, 0], sizes = [12, 28], strides = [1, 1]} : vector<14x28xf32> to vector<12x28xf32>
    %c9 = arith.constant 9 : index
    %c0_34 = arith.constant 0 : index
    %c0_35 = arith.constant 0 : index
    %48 = vector.load %arg5[%c9, %c0_34, %c0_35] : memref<10x28x72xf32, #tpu.memory_space<vmem>>, vector<1x28x72xf32>
    %49 = vector.shape_cast %48 : vector<1x28x72xf32> to vector<28x72xf32>
    %cst_36 = arith.constant dense<0.000000e+00> : vector<12x72xf32>
    %50 = tpu.matmul %47, %49, %cst_36 {dimension_numbers = #tpu.dot_dimension_numbers<[1], [0], [0], [1], [0, 0, 1, 1], [], []>} : vector<12x28xf32>, vector<28x72xf32>, vector<12x72xf32> -> vector<12x72xf32>
    %51 = arith.addf %46, %50 : vector<12x72xf32>
    %52 = vector.extract_strided_slice %1 {offsets = [0, 0], sizes = [12, 28], strides = [1, 1]} : vector<14x28xf32> to vector<12x28xf32>
    %c0_37 = arith.constant 0 : index
    %c0_38 = arith.constant 0 : index
    %c0_39 = arith.constant 0 : index
    %53 = vector.load %arg5[%c0_37, %c0_38, %c0_39] : memref<10x28x72xf32, #tpu.memory_space<vmem>>, vector<1x28x72xf32>
    %54 = vector.shape_cast %53 : vector<1x28x72xf32> to vector<28x72xf32>
    %cst_40 = arith.constant dense<0.000000e+00> : vector<12x72xf32>
    %55 = tpu.matmul %52, %54, %cst_40 {dimension_numbers = #tpu.dot_dimension_numbers<[1], [0], [0], [1], [0, 0, 1, 1], [], []>} : vector<12x28xf32>, vector<28x72xf32>, vector<12x72xf32> -> vector<12x72xf32>
    %56 = vector.extract_strided_slice %2 {offsets = [0, 0], sizes = [12, 28], strides = [1, 1]} : vector<14x28xf32> to vector<12x28xf32>
    %c2_41 = arith.constant 2 : index
    %c0_42 = arith.constant 0 : index
    %c0_43 = arith.constant 0 : index
    %57 = vector.load %arg5[%c2_41, %c0_42, %c0_43] : memref<10x28x72xf32, #tpu.memory_space<vmem>>, vector<1x28x72xf32>
    %58 = vector.shape_cast %57 : vector<1x28x72xf32> to vector<28x72xf32>
    %cst_44 = arith.constant dense<0.000000e+00> : vector<12x72xf32>
    %59 = tpu.matmul %56, %58, %cst_44 {dimension_numbers = #tpu.dot_dimension_numbers<[1], [0], [0], [1], [0, 0, 1, 1], [], []>} : vector<12x28xf32>, vector<28x72xf32>, vector<12x72xf32> -> vector<12x72xf32>
    %60 = arith.addf %55, %59 : vector<12x72xf32>
    %61 = vector.extract_strided_slice %3 {offsets = [0, 0], sizes = [12, 28], strides = [1, 1]} : vector<14x28xf32> to vector<12x28xf32>
    %c4_45 = arith.constant 4 : index
    %c0_46 = arith.constant 0 : index
    %c0_47 = arith.constant 0 : index
    %62 = vector.load %arg5[%c4_45, %c0_46, %c0_47] : memref<10x28x72xf32, #tpu.memory_space<vmem>>, vector<1x28x72xf32>
    %63 = vector.shape_cast %62 : vector<1x28x72xf32> to vector<28x72xf32>
    %cst_48 = arith.constant dense<0.000000e+00> : vector<12x72xf32>
    %64 = tpu.matmul %61, %63, %cst_48 {dimension_numbers = #tpu.dot_dimension_numbers<[1], [0], [0], [1], [0, 0, 1, 1], [], []>} : vector<12x28xf32>, vector<28x72xf32>, vector<12x72xf32> -> vector<12x72xf32>
    %65 = arith.addf %60, %64 : vector<12x72xf32>
    %66 = vector.extract_strided_slice %0 {offsets = [2, 0], sizes = [12, 28], strides = [1, 1]} : vector<14x28xf32> to vector<12x28xf32>
    %c6_49 = arith.constant 6 : index
    %c0_50 = arith.constant 0 : index
    %c0_51 = arith.constant 0 : index
    %67 = vector.load %arg5[%c6_49, %c0_50, %c0_51] : memref<10x28x72xf32, #tpu.memory_space<vmem>>, vector<1x28x72xf32>
    %68 = vector.shape_cast %67 : vector<1x28x72xf32> to vector<28x72xf32>
    %cst_52 = arith.constant dense<0.000000e+00> : vector<12x72xf32>
    %69 = tpu.matmul %66, %68, %cst_52 {dimension_numbers = #tpu.dot_dimension_numbers<[1], [0], [0], [1], [0, 0, 1, 1], [], []>} : vector<12x28xf32>, vector<28x72xf32>, vector<12x72xf32> -> vector<12x72xf32>
    %70 = arith.addf %65, %69 : vector<12x72xf32>
    %71 = vector.extract_strided_slice %1 {offsets = [2, 0], sizes = [12, 28], strides = [1, 1]} : vector<14x28xf32> to vector<12x28xf32>
    %c8_53 = arith.constant 8 : index
    %c0_54 = arith.constant 0 : index
    %c0_55 = arith.constant 0 : index
    %72 = vector.load %arg5[%c8_53, %c0_54, %c0_55] : memref<10x28x72xf32, #tpu.memory_space<vmem>>, vector<1x28x72xf32>
    %73 = vector.shape_cast %72 : vector<1x28x72xf32> to vector<28x72xf32>
    %cst_56 = arith.constant dense<0.000000e+00> : vector<12x72xf32>
    %74 = tpu.matmul %71, %73, %cst_56 {dimension_numbers = #tpu.dot_dimension_numbers<[1], [0], [0], [1], [0, 0, 1, 1], [], []>} : vector<12x28xf32>, vector<28x72xf32>, vector<12x72xf32> -> vector<12x72xf32>
    %75 = arith.addf %70, %74 : vector<12x72xf32>
    %76 = vector.extract_strided_slice %1 {offsets = [0, 0], sizes = [12, 28], strides = [1, 1]} : vector<14x28xf32> to vector<12x28xf32>
    %c1_57 = arith.constant 1 : index
    %c0_58 = arith.constant 0 : index
    %c0_59 = arith.constant 0 : index
    %77 = vector.load %arg5[%c1_57, %c0_58, %c0_59] : memref<10x28x72xf32, #tpu.memory_space<vmem>>, vector<1x28x72xf32>
    %78 = vector.shape_cast %77 : vector<1x28x72xf32> to vector<28x72xf32>
    %cst_60 = arith.constant dense<0.000000e+00> : vector<12x72xf32>
    %79 = tpu.matmul %76, %78, %cst_60 {dimension_numbers = #tpu.dot_dimension_numbers<[1], [0], [0], [1], [0, 0, 1, 1], [], []>} : vector<12x28xf32>, vector<28x72xf32>, vector<12x72xf32> -> vector<12x72xf32>
    %80 = vector.extract_strided_slice %2 {offsets = [0, 0], sizes = [12, 28], strides = [1, 1]} : vector<14x28xf32> to vector<12x28xf32>
    %c3_61 = arith.constant 3 : index
    %c0_62 = arith.constant 0 : index
    %c0_63 = arith.constant 0 : index
    %81 = vector.load %arg5[%c3_61, %c0_62, %c0_63] : memref<10x28x72xf32, #tpu.memory_space<vmem>>, vector<1x28x72xf32>
    %82 = vector.shape_cast %81 : vector<1x28x72xf32> to vector<28x72xf32>
    %cst_64 = arith.constant dense<0.000000e+00> : vector<12x72xf32>
    %83 = tpu.matmul %80, %82, %cst_64 {dimension_numbers = #tpu.dot_dimension_numbers<[1], [0], [0], [1], [0, 0, 1, 1], [], []>} : vector<12x28xf32>, vector<28x72xf32>, vector<12x72xf32> -> vector<12x72xf32>
    %84 = arith.addf %79, %83 : vector<12x72xf32>
    %85 = vector.extract_strided_slice %3 {offsets = [0, 0], sizes = [12, 28], strides = [1, 1]} : vector<14x28xf32> to vector<12x28xf32>
    %c5_65 = arith.constant 5 : index
    %c0_66 = arith.constant 0 : index
    %c0_67 = arith.constant 0 : index
    %86 = vector.load %arg5[%c5_65, %c0_66, %c0_67] : memref<10x28x72xf32, #tpu.memory_space<vmem>>, vector<1x28x72xf32>
    %87 = vector.shape_cast %86 : vector<1x28x72xf32> to vector<28x72xf32>
    %cst_68 = arith.constant dense<0.000000e+00> : vector<12x72xf32>
    %88 = tpu.matmul %85, %87, %cst_68 {dimension_numbers = #tpu.dot_dimension_numbers<[1], [0], [0], [1], [0, 0, 1, 1], [], []>} : vector<12x28xf32>, vector<28x72xf32>, vector<12x72xf32> -> vector<12x72xf32>
    %89 = arith.addf %84, %88 : vector<12x72xf32>
    %90 = vector.extract_strided_slice %0 {offsets = [2, 0], sizes = [12, 28], strides = [1, 1]} : vector<14x28xf32> to vector<12x28xf32>
    %c7_69 = arith.constant 7 : index
    %c0_70 = arith.constant 0 : index
    %c0_71 = arith.constant 0 : index
    %91 = vector.load %arg5[%c7_69, %c0_70, %c0_71] : memref<10x28x72xf32, #tpu.memory_space<vmem>>, vector<1x28x72xf32>
    %92 = vector.shape_cast %91 : vector<1x28x72xf32> to vector<28x72xf32>
    %cst_72 = arith.constant dense<0.000000e+00> : vector<12x72xf32>
    %93 = tpu.matmul %90, %92, %cst_72 {dimension_numbers = #tpu.dot_dimension_numbers<[1], [0], [0], [1], [0, 0, 1, 1], [], []>} : vector<12x28xf32>, vector<28x72xf32>, vector<12x72xf32> -> vector<12x72xf32>
    %94 = arith.addf %89, %93 : vector<12x72xf32>
    %95 = vector.extract_strided_slice %1 {offsets = [2, 0], sizes = [12, 28], strides = [1, 1]} : vector<14x28xf32> to vector<12x28xf32>
    %c9_73 = arith.constant 9 : index
    %c0_74 = arith.constant 0 : index
    %c0_75 = arith.constant 0 : index
    %96 = vector.load %arg5[%c9_73, %c0_74, %c0_75] : memref<10x28x72xf32, #tpu.memory_space<vmem>>, vector<1x28x72xf32>
    %97 = vector.shape_cast %96 : vector<1x28x72xf32> to vector<28x72xf32>
    %cst_76 = arith.constant dense<0.000000e+00> : vector<12x72xf32>
    %98 = tpu.matmul %95, %97, %cst_76 {dimension_numbers = #tpu.dot_dimension_numbers<[1], [0], [0], [1], [0, 0, 1, 1], [], []>} : vector<12x28xf32>, vector<28x72xf32>, vector<12x72xf32> -> vector<12x72xf32>
    %99 = arith.addf %94, %98 : vector<12x72xf32>
    %100 = arith.maximumf %27, %51 : vector<12x72xf32>
    %101 = arith.maximumf %75, %99 : vector<12x72xf32>
    %102 = arith.maximumf %100, %101 : vector<12x72xf32>
    %c0_77 = arith.constant 0 : index
    %c0_78 = arith.constant 0 : index
    %103 = vector.load %arg6[%c0_77, %c0_78] : memref<1x72xf32, #tpu.memory_space<vmem>>, vector<1x72xf32>
    %104 = vector.broadcast %103 : vector<1x72xf32> to vector<12x72xf32>
    %105 = arith.addf %102, %104 : vector<12x72xf32>
    %cst_79 = arith.constant 0.000000e+00 : f32
    %106 = vector.broadcast %cst_79 : f32 to vector<12x72xf32>
    %107 = arith.maximumf %105, %106 : vector<12x72xf32>
    %108 = vector.extract_strided_slice %2 {offsets = [0, 0], sizes = [12, 28], strides = [1, 1]} : vector<14x28xf32> to vector<12x28xf32>
    %c0_80 = arith.constant 0 : index
    %c0_81 = arith.constant 0 : index
    %c0_82 = arith.constant 0 : index
    %109 = vector.load %arg5[%c0_80, %c0_81, %c0_82] : memref<10x28x72xf32, #tpu.memory_space<vmem>>, vector<1x28x72xf32>
    %110 = vector.shape_cast %109 : vector<1x28x72xf32> to vector<28x72xf32>
    %cst_83 = arith.constant dense<0.000000e+00> : vector<12x72xf32>
    %111 = tpu.matmul %108, %110, %cst_83 {dimension_numbers = #tpu.dot_dimension_numbers<[1], [0], [0], [1], [0, 0, 1, 1], [], []>} : vector<12x28xf32>, vector<28x72xf32>, vector<12x72xf32> -> vector<12x72xf32>
    %112 = vector.extract_strided_slice %3 {offsets = [0, 0], sizes = [12, 28], strides = [1, 1]} : vector<14x28xf32> to vector<12x28xf32>
    %c2_84 = arith.constant 2 : index
    %c0_85 = arith.constant 0 : index
    %c0_86 = arith.constant 0 : index
    %113 = vector.load %arg5[%c2_84, %c0_85, %c0_86] : memref<10x28x72xf32, #tpu.memory_space<vmem>>, vector<1x28x72xf32>
    %114 = vector.shape_cast %113 : vector<1x28x72xf32> to vector<28x72xf32>
    %cst_87 = arith.constant dense<0.000000e+00> : vector<12x72xf32>
    %115 = tpu.matmul %112, %114, %cst_87 {dimension_numbers = #tpu.dot_dimension_numbers<[1], [0], [0], [1], [0, 0, 1, 1], [], []>} : vector<12x28xf32>, vector<28x72xf32>, vector<12x72xf32> -> vector<12x72xf32>
    %116 = arith.addf %111, %115 : vector<12x72xf32>
    %117 = vector.extract_strided_slice %0 {offsets = [2, 0], sizes = [12, 28], strides = [1, 1]} : vector<14x28xf32> to vector<12x28xf32>
    %c4_88 = arith.constant 4 : index
    %c0_89 = arith.constant 0 : index
    %c0_90 = arith.constant 0 : index
    %118 = vector.load %arg5[%c4_88, %c0_89, %c0_90] : memref<10x28x72xf32, #tpu.memory_space<vmem>>, vector<1x28x72xf32>
    %119 = vector.shape_cast %118 : vector<1x28x72xf32> to vector<28x72xf32>
    %cst_91 = arith.constant dense<0.000000e+00> : vector<12x72xf32>
    %120 = tpu.matmul %117, %119, %cst_91 {dimension_numbers = #tpu.dot_dimension_numbers<[1], [0], [0], [1], [0, 0, 1, 1], [], []>} : vector<12x28xf32>, vector<28x72xf32>, vector<12x72xf32> -> vector<12x72xf32>
    %121 = arith.addf %116, %120 : vector<12x72xf32>
    %122 = vector.extract_strided_slice %1 {offsets = [2, 0], sizes = [12, 28], strides = [1, 1]} : vector<14x28xf32> to vector<12x28xf32>
    %c6_92 = arith.constant 6 : index
    %c0_93 = arith.constant 0 : index
    %c0_94 = arith.constant 0 : index
    %123 = vector.load %arg5[%c6_92, %c0_93, %c0_94] : memref<10x28x72xf32, #tpu.memory_space<vmem>>, vector<1x28x72xf32>
    %124 = vector.shape_cast %123 : vector<1x28x72xf32> to vector<28x72xf32>
    %cst_95 = arith.constant dense<0.000000e+00> : vector<12x72xf32>
    %125 = tpu.matmul %122, %124, %cst_95 {dimension_numbers = #tpu.dot_dimension_numbers<[1], [0], [0], [1], [0, 0, 1, 1], [], []>} : vector<12x28xf32>, vector<28x72xf32>, vector<12x72xf32> -> vector<12x72xf32>
    %126 = arith.addf %121, %125 : vector<12x72xf32>
    %127 = vector.extract_strided_slice %2 {offsets = [2, 0], sizes = [12, 28], strides = [1, 1]} : vector<14x28xf32> to vector<12x28xf32>
    %c8_96 = arith.constant 8 : index
    %c0_97 = arith.constant 0 : index
    %c0_98 = arith.constant 0 : index
    %128 = vector.load %arg5[%c8_96, %c0_97, %c0_98] : memref<10x28x72xf32, #tpu.memory_space<vmem>>, vector<1x28x72xf32>
    %129 = vector.shape_cast %128 : vector<1x28x72xf32> to vector<28x72xf32>
    %cst_99 = arith.constant dense<0.000000e+00> : vector<12x72xf32>
    %130 = tpu.matmul %127, %129, %cst_99 {dimension_numbers = #tpu.dot_dimension_numbers<[1], [0], [0], [1], [0, 0, 1, 1], [], []>} : vector<12x28xf32>, vector<28x72xf32>, vector<12x72xf32> -> vector<12x72xf32>
    %131 = arith.addf %126, %130 : vector<12x72xf32>
    %132 = vector.extract_strided_slice %2 {offsets = [0, 0], sizes = [12, 28], strides = [1, 1]} : vector<14x28xf32> to vector<12x28xf32>
    %c1_100 = arith.constant 1 : index
    %c0_101 = arith.constant 0 : index
    %c0_102 = arith.constant 0 : index
    %133 = vector.load %arg5[%c1_100, %c0_101, %c0_102] : memref<10x28x72xf32, #tpu.memory_space<vmem>>, vector<1x28x72xf32>
    %134 = vector.shape_cast %133 : vector<1x28x72xf32> to vector<28x72xf32>
    %cst_103 = arith.constant dense<0.000000e+00> : vector<12x72xf32>
    %135 = tpu.matmul %132, %134, %cst_103 {dimension_numbers = #tpu.dot_dimension_numbers<[1], [0], [0], [1], [0, 0, 1, 1], [], []>} : vector<12x28xf32>, vector<28x72xf32>, vector<12x72xf32> -> vector<12x72xf32>
    %136 = vector.extract_strided_slice %3 {offsets = [0, 0], sizes = [12, 28], strides = [1, 1]} : vector<14x28xf32> to vector<12x28xf32>
    %c3_104 = arith.constant 3 : index
    %c0_105 = arith.constant 0 : index
    %c0_106 = arith.constant 0 : index
    %137 = vector.load %arg5[%c3_104, %c0_105, %c0_106] : memref<10x28x72xf32, #tpu.memory_space<vmem>>, vector<1x28x72xf32>
    %138 = vector.shape_cast %137 : vector<1x28x72xf32> to vector<28x72xf32>
    %cst_107 = arith.constant dense<0.000000e+00> : vector<12x72xf32>
    %139 = tpu.matmul %136, %138, %cst_107 {dimension_numbers = #tpu.dot_dimension_numbers<[1], [0], [0], [1], [0, 0, 1, 1], [], []>} : vector<12x28xf32>, vector<28x72xf32>, vector<12x72xf32> -> vector<12x72xf32>
    %140 = arith.addf %135, %139 : vector<12x72xf32>
    %141 = vector.extract_strided_slice %0 {offsets = [2, 0], sizes = [12, 28], strides = [1, 1]} : vector<14x28xf32> to vector<12x28xf32>
    %c5_108 = arith.constant 5 : index
    %c0_109 = arith.constant 0 : index
    %c0_110 = arith.constant 0 : index
    %142 = vector.load %arg5[%c5_108, %c0_109, %c0_110] : memref<10x28x72xf32, #tpu.memory_space<vmem>>, vector<1x28x72xf32>
    %143 = vector.shape_cast %142 : vector<1x28x72xf32> to vector<28x72xf32>
    %cst_111 = arith.constant dense<0.000000e+00> : vector<12x72xf32>
    %144 = tpu.matmul %141, %143, %cst_111 {dimension_numbers = #tpu.dot_dimension_numbers<[1], [0], [0], [1], [0, 0, 1, 1], [], []>} : vector<12x28xf32>, vector<28x72xf32>, vector<12x72xf32> -> vector<12x72xf32>
    %145 = arith.addf %140, %144 : vector<12x72xf32>
    %146 = vector.extract_strided_slice %1 {offsets = [2, 0], sizes = [12, 28], strides = [1, 1]} : vector<14x28xf32> to vector<12x28xf32>
    %c7_112 = arith.constant 7 : index
    %c0_113 = arith.constant 0 : index
    %c0_114 = arith.constant 0 : index
    %147 = vector.load %arg5[%c7_112, %c0_113, %c0_114] : memref<10x28x72xf32, #tpu.memory_space<vmem>>, vector<1x28x72xf32>
    %148 = vector.shape_cast %147 : vector<1x28x72xf32> to vector<28x72xf32>
    %cst_115 = arith.constant dense<0.000000e+00> : vector<12x72xf32>
    %149 = tpu.matmul %146, %148, %cst_115 {dimension_numbers = #tpu.dot_dimension_numbers<[1], [0], [0], [1], [0, 0, 1, 1], [], []>} : vector<12x28xf32>, vector<28x72xf32>, vector<12x72xf32> -> vector<12x72xf32>
    %150 = arith.addf %145, %149 : vector<12x72xf32>
    %151 = vector.extract_strided_slice %2 {offsets = [2, 0], sizes = [12, 28], strides = [1, 1]} : vector<14x28xf32> to vector<12x28xf32>
    %c9_116 = arith.constant 9 : index
    %c0_117 = arith.constant 0 : index
    %c0_118 = arith.constant 0 : index
    %152 = vector.load %arg5[%c9_116, %c0_117, %c0_118] : memref<10x28x72xf32, #tpu.memory_space<vmem>>, vector<1x28x72xf32>
    %153 = vector.shape_cast %152 : vector<1x28x72xf32> to vector<28x72xf32>
    %cst_119 = arith.constant dense<0.000000e+00> : vector<12x72xf32>
    %154 = tpu.matmul %151, %153, %cst_119 {dimension_numbers = #tpu.dot_dimension_numbers<[1], [0], [0], [1], [0, 0, 1, 1], [], []>} : vector<12x28xf32>, vector<28x72xf32>, vector<12x72xf32> -> vector<12x72xf32>
    %155 = arith.addf %150, %154 : vector<12x72xf32>
    %156 = vector.extract_strided_slice %3 {offsets = [0, 0], sizes = [12, 28], strides = [1, 1]} : vector<14x28xf32> to vector<12x28xf32>
    %c0_120 = arith.constant 0 : index
    %c0_121 = arith.constant 0 : index
    %c0_122 = arith.constant 0 : index
    %157 = vector.load %arg5[%c0_120, %c0_121, %c0_122] : memref<10x28x72xf32, #tpu.memory_space<vmem>>, vector<1x28x72xf32>
    %158 = vector.shape_cast %157 : vector<1x28x72xf32> to vector<28x72xf32>
    %cst_123 = arith.constant dense<0.000000e+00> : vector<12x72xf32>
    %159 = tpu.matmul %156, %158, %cst_123 {dimension_numbers = #tpu.dot_dimension_numbers<[1], [0], [0], [1], [0, 0, 1, 1], [], []>} : vector<12x28xf32>, vector<28x72xf32>, vector<12x72xf32> -> vector<12x72xf32>
    %160 = vector.extract_strided_slice %0 {offsets = [2, 0], sizes = [12, 28], strides = [1, 1]} : vector<14x28xf32> to vector<12x28xf32>
    %c2_124 = arith.constant 2 : index
    %c0_125 = arith.constant 0 : index
    %c0_126 = arith.constant 0 : index
    %161 = vector.load %arg5[%c2_124, %c0_125, %c0_126] : memref<10x28x72xf32, #tpu.memory_space<vmem>>, vector<1x28x72xf32>
    %162 = vector.shape_cast %161 : vector<1x28x72xf32> to vector<28x72xf32>
    %cst_127 = arith.constant dense<0.000000e+00> : vector<12x72xf32>
    %163 = tpu.matmul %160, %162, %cst_127 {dimension_numbers = #tpu.dot_dimension_numbers<[1], [0], [0], [1], [0, 0, 1, 1], [], []>} : vector<12x28xf32>, vector<28x72xf32>, vector<12x72xf32> -> vector<12x72xf32>
    %164 = arith.addf %159, %163 : vector<12x72xf32>
    %165 = vector.extract_strided_slice %1 {offsets = [2, 0], sizes = [12, 28], strides = [1, 1]} : vector<14x28xf32> to vector<12x28xf32>
    %c4_128 = arith.constant 4 : index
    %c0_129 = arith.constant 0 : index
    %c0_130 = arith.constant 0 : index
    %166 = vector.load %arg5[%c4_128, %c0_129, %c0_130] : memref<10x28x72xf32, #tpu.memory_space<vmem>>, vector<1x28x72xf32>
    %167 = vector.shape_cast %166 : vector<1x28x72xf32> to vector<28x72xf32>
    %cst_131 = arith.constant dense<0.000000e+00> : vector<12x72xf32>
    %168 = tpu.matmul %165, %167, %cst_131 {dimension_numbers = #tpu.dot_dimension_numbers<[1], [0], [0], [1], [0, 0, 1, 1], [], []>} : vector<12x28xf32>, vector<28x72xf32>, vector<12x72xf32> -> vector<12x72xf32>
    %169 = arith.addf %164, %168 : vector<12x72xf32>
    %170 = vector.extract_strided_slice %2 {offsets = [2, 0], sizes = [12, 28], strides = [1, 1]} : vector<14x28xf32> to vector<12x28xf32>
    %c6_132 = arith.constant 6 : index
    %c0_133 = arith.constant 0 : index
    %c0_134 = arith.constant 0 : index
    %171 = vector.load %arg5[%c6_132, %c0_133, %c0_134] : memref<10x28x72xf32, #tpu.memory_space<vmem>>, vector<1x28x72xf32>
    %172 = vector.shape_cast %171 : vector<1x28x72xf32> to vector<28x72xf32>
    %cst_135 = arith.constant dense<0.000000e+00> : vector<12x72xf32>
    %173 = tpu.matmul %170, %172, %cst_135 {dimension_numbers = #tpu.dot_dimension_numbers<[1], [0], [0], [1], [0, 0, 1, 1], [], []>} : vector<12x28xf32>, vector<28x72xf32>, vector<12x72xf32> -> vector<12x72xf32>
    %174 = arith.addf %169, %173 : vector<12x72xf32>
    %175 = vector.extract_strided_slice %3 {offsets = [2, 0], sizes = [12, 28], strides = [1, 1]} : vector<14x28xf32> to vector<12x28xf32>
    %c8_136 = arith.constant 8 : index
    %c0_137 = arith.constant 0 : index
    %c0_138 = arith.constant 0 : index
    %176 = vector.load %arg5[%c8_136, %c0_137, %c0_138] : memref<10x28x72xf32, #tpu.memory_space<vmem>>, vector<1x28x72xf32>
    %177 = vector.shape_cast %176 : vector<1x28x72xf32> to vector<28x72xf32>
    %cst_139 = arith.constant dense<0.000000e+00> : vector<12x72xf32>
    %178 = tpu.matmul %175, %177, %cst_139 {dimension_numbers = #tpu.dot_dimension_numbers<[1], [0], [0], [1], [0, 0, 1, 1], [], []>} : vector<12x28xf32>, vector<28x72xf32>, vector<12x72xf32> -> vector<12x72xf32>
    %179 = arith.addf %174, %178 : vector<12x72xf32>
    %180 = vector.extract_strided_slice %3 {offsets = [0, 0], sizes = [12, 28], strides = [1, 1]} : vector<14x28xf32> to vector<12x28xf32>
    %c1_140 = arith.constant 1 : index
    %c0_141 = arith.constant 0 : index
    %c0_142 = arith.constant 0 : index
    %181 = vector.load %arg5[%c1_140, %c0_141, %c0_142] : memref<10x28x72xf32, #tpu.memory_space<vmem>>, vector<1x28x72xf32>
    %182 = vector.shape_cast %181 : vector<1x28x72xf32> to vector<28x72xf32>
    %cst_143 = arith.constant dense<0.000000e+00> : vector<12x72xf32>
    %183 = tpu.matmul %180, %182, %cst_143 {dimension_numbers = #tpu.dot_dimension_numbers<[1], [0], [0], [1], [0, 0, 1, 1], [], []>} : vector<12x28xf32>, vector<28x72xf32>, vector<12x72xf32> -> vector<12x72xf32>
    %184 = vector.extract_strided_slice %0 {offsets = [2, 0], sizes = [12, 28], strides = [1, 1]} : vector<14x28xf32> to vector<12x28xf32>
    %c3_144 = arith.constant 3 : index
    %c0_145 = arith.constant 0 : index
    %c0_146 = arith.constant 0 : index
    %185 = vector.load %arg5[%c3_144, %c0_145, %c0_146] : memref<10x28x72xf32, #tpu.memory_space<vmem>>, vector<1x28x72xf32>
    %186 = vector.shape_cast %185 : vector<1x28x72xf32> to vector<28x72xf32>
    %cst_147 = arith.constant dense<0.000000e+00> : vector<12x72xf32>
    %187 = tpu.matmul %184, %186, %cst_147 {dimension_numbers = #tpu.dot_dimension_numbers<[1], [0], [0], [1], [0, 0, 1, 1], [], []>} : vector<12x28xf32>, vector<28x72xf32>, vector<12x72xf32> -> vector<12x72xf32>
    %188 = arith.addf %183, %187 : vector<12x72xf32>
    %189 = vector.extract_strided_slice %1 {offsets = [2, 0], sizes = [12, 28], strides = [1, 1]} : vector<14x28xf32> to vector<12x28xf32>
    %c5_148 = arith.constant 5 : index
    %c0_149 = arith.constant 0 : index
    %c0_150 = arith.constant 0 : index
    %190 = vector.load %arg5[%c5_148, %c0_149, %c0_150] : memref<10x28x72xf32, #tpu.memory_space<vmem>>, vector<1x28x72xf32>
    %191 = vector.shape_cast %190 : vector<1x28x72xf32> to vector<28x72xf32>
    %cst_151 = arith.constant dense<0.000000e+00> : vector<12x72xf32>
    %192 = tpu.matmul %189, %191, %cst_151 {dimension_numbers = #tpu.dot_dimension_numbers<[1], [0], [0], [1], [0, 0, 1, 1], [], []>} : vector<12x28xf32>, vector<28x72xf32>, vector<12x72xf32> -> vector<12x72xf32>
    %193 = arith.addf %188, %192 : vector<12x72xf32>
    %194 = vector.extract_strided_slice %2 {offsets = [2, 0], sizes = [12, 28], strides = [1, 1]} : vector<14x28xf32> to vector<12x28xf32>
    %c7_152 = arith.constant 7 : index
    %c0_153 = arith.constant 0 : index
    %c0_154 = arith.constant 0 : index
    %195 = vector.load %arg5[%c7_152, %c0_153, %c0_154] : memref<10x28x72xf32, #tpu.memory_space<vmem>>, vector<1x28x72xf32>
    %196 = vector.shape_cast %195 : vector<1x28x72xf32> to vector<28x72xf32>
    %cst_155 = arith.constant dense<0.000000e+00> : vector<12x72xf32>
    %197 = tpu.matmul %194, %196, %cst_155 {dimension_numbers = #tpu.dot_dimension_numbers<[1], [0], [0], [1], [0, 0, 1, 1], [], []>} : vector<12x28xf32>, vector<28x72xf32>, vector<12x72xf32> -> vector<12x72xf32>
    %198 = arith.addf %193, %197 : vector<12x72xf32>
    %199 = vector.extract_strided_slice %3 {offsets = [2, 0], sizes = [12, 28], strides = [1, 1]} : vector<14x28xf32> to vector<12x28xf32>
    %c9_156 = arith.constant 9 : index
    %c0_157 = arith.constant 0 : index
    %c0_158 = arith.constant 0 : index
    %200 = vector.load %arg5[%c9_156, %c0_157, %c0_158] : memref<10x28x72xf32, #tpu.memory_space<vmem>>, vector<1x28x72xf32>
    %201 = vector.shape_cast %200 : vector<1x28x72xf32> to vector<28x72xf32>
    %cst_159 = arith.constant dense<0.000000e+00> : vector<12x72xf32>
    %202 = tpu.matmul %199, %201, %cst_159 {dimension_numbers = #tpu.dot_dimension_numbers<[1], [0], [0], [1], [0, 0, 1, 1], [], []>} : vector<12x28xf32>, vector<28x72xf32>, vector<12x72xf32> -> vector<12x72xf32>
    %203 = arith.addf %198, %202 : vector<12x72xf32>
    %204 = arith.maximumf %131, %155 : vector<12x72xf32>
    %205 = arith.maximumf %179, %203 : vector<12x72xf32>
    %206 = arith.maximumf %204, %205 : vector<12x72xf32>
    %c0_160 = arith.constant 0 : index
    %c0_161 = arith.constant 0 : index
    %207 = vector.load %arg6[%c0_160, %c0_161] : memref<1x72xf32, #tpu.memory_space<vmem>>, vector<1x72xf32>
    %208 = vector.broadcast %207 : vector<1x72xf32> to vector<12x72xf32>
    %209 = arith.addf %206, %208 : vector<12x72xf32>
    %cst_162 = arith.constant 0.000000e+00 : f32
    %210 = vector.broadcast %cst_162 : f32 to vector<12x72xf32>
    %211 = arith.maximumf %209, %210 : vector<12x72xf32>
    %212 = vector.extract_strided_slice %107 {offsets = [0, 0], sizes = [8, 72], strides = [1, 1]} : vector<12x72xf32> to vector<8x72xf32>
    %c0_163 = arith.constant 0 : index
    %c0_164 = arith.constant 0 : index
    %c0_165 = arith.constant 0 : index
    %213 = vector.load %arg7[%c0_163, %c0_164, %c0_165] : memref<10x72x64xf32, #tpu.memory_space<vmem>>, vector<1x72x64xf32>
    %214 = vector.shape_cast %213 : vector<1x72x64xf32> to vector<72x64xf32>
    %cst_166 = arith.constant dense<0.000000e+00> : vector<8x64xf32>
    %215 = tpu.matmul %212, %214, %cst_166 {dimension_numbers = #tpu.dot_dimension_numbers<[1], [0], [0], [1], [0, 0, 1, 1], [], []>} : vector<8x72xf32>, vector<72x64xf32>, vector<8x64xf32> -> vector<8x64xf32>
    %216 = vector.extract_strided_slice %211 {offsets = [0, 0], sizes = [8, 72], strides = [1, 1]} : vector<12x72xf32> to vector<8x72xf32>
    %c2_167 = arith.constant 2 : index
    %c0_168 = arith.constant 0 : index
    %c0_169 = arith.constant 0 : index
    %217 = vector.load %arg7[%c2_167, %c0_168, %c0_169] : memref<10x72x64xf32, #tpu.memory_space<vmem>>, vector<1x72x64xf32>
    %218 = vector.shape_cast %217 : vector<1x72x64xf32> to vector<72x64xf32>
    %cst_170 = arith.constant dense<0.000000e+00> : vector<8x64xf32>
    %219 = tpu.matmul %216, %218, %cst_170 {dimension_numbers = #tpu.dot_dimension_numbers<[1], [0], [0], [1], [0, 0, 1, 1], [], []>} : vector<8x72xf32>, vector<72x64xf32>, vector<8x64xf32> -> vector<8x64xf32>
    %220 = arith.addf %215, %219 : vector<8x64xf32>
    %221 = vector.extract_strided_slice %107 {offsets = [2, 0], sizes = [8, 72], strides = [1, 1]} : vector<12x72xf32> to vector<8x72xf32>
    %c4_171 = arith.constant 4 : index
    %c0_172 = arith.constant 0 : index
    %c0_173 = arith.constant 0 : index
    %222 = vector.load %arg7[%c4_171, %c0_172, %c0_173] : memref<10x72x64xf32, #tpu.memory_space<vmem>>, vector<1x72x64xf32>
    %223 = vector.shape_cast %222 : vector<1x72x64xf32> to vector<72x64xf32>
    %cst_174 = arith.constant dense<0.000000e+00> : vector<8x64xf32>
    %224 = tpu.matmul %221, %223, %cst_174 {dimension_numbers = #tpu.dot_dimension_numbers<[1], [0], [0], [1], [0, 0, 1, 1], [], []>} : vector<8x72xf32>, vector<72x64xf32>, vector<8x64xf32> -> vector<8x64xf32>
    %225 = arith.addf %220, %224 : vector<8x64xf32>
    %226 = vector.extract_strided_slice %211 {offsets = [2, 0], sizes = [8, 72], strides = [1, 1]} : vector<12x72xf32> to vector<8x72xf32>
    %c6_175 = arith.constant 6 : index
    %c0_176 = arith.constant 0 : index
    %c0_177 = arith.constant 0 : index
    %227 = vector.load %arg7[%c6_175, %c0_176, %c0_177] : memref<10x72x64xf32, #tpu.memory_space<vmem>>, vector<1x72x64xf32>
    %228 = vector.shape_cast %227 : vector<1x72x64xf32> to vector<72x64xf32>
    %cst_178 = arith.constant dense<0.000000e+00> : vector<8x64xf32>
    %229 = tpu.matmul %226, %228, %cst_178 {dimension_numbers = #tpu.dot_dimension_numbers<[1], [0], [0], [1], [0, 0, 1, 1], [], []>} : vector<8x72xf32>, vector<72x64xf32>, vector<8x64xf32> -> vector<8x64xf32>
    %230 = arith.addf %225, %229 : vector<8x64xf32>
    %231 = vector.extract_strided_slice %107 {offsets = [4, 0], sizes = [8, 72], strides = [1, 1]} : vector<12x72xf32> to vector<8x72xf32>
    %c8_179 = arith.constant 8 : index
    %c0_180 = arith.constant 0 : index
    %c0_181 = arith.constant 0 : index
    %232 = vector.load %arg7[%c8_179, %c0_180, %c0_181] : memref<10x72x64xf32, #tpu.memory_space<vmem>>, vector<1x72x64xf32>
    %233 = vector.shape_cast %232 : vector<1x72x64xf32> to vector<72x64xf32>
    %cst_182 = arith.constant dense<0.000000e+00> : vector<8x64xf32>
    %234 = tpu.matmul %231, %233, %cst_182 {dimension_numbers = #tpu.dot_dimension_numbers<[1], [0], [0], [1], [0, 0, 1, 1], [], []>} : vector<8x72xf32>, vector<72x64xf32>, vector<8x64xf32> -> vector<8x64xf32>
    %235 = arith.addf %230, %234 : vector<8x64xf32>
    %236 = vector.extract_strided_slice %107 {offsets = [0, 0], sizes = [8, 72], strides = [1, 1]} : vector<12x72xf32> to vector<8x72xf32>
    %c1_183 = arith.constant 1 : index
    %c0_184 = arith.constant 0 : index
    %c0_185 = arith.constant 0 : index
    %237 = vector.load %arg7[%c1_183, %c0_184, %c0_185] : memref<10x72x64xf32, #tpu.memory_space<vmem>>, vector<1x72x64xf32>
    %238 = vector.shape_cast %237 : vector<1x72x64xf32> to vector<72x64xf32>
    %cst_186 = arith.constant dense<0.000000e+00> : vector<8x64xf32>
    %239 = tpu.matmul %236, %238, %cst_186 {dimension_numbers = #tpu.dot_dimension_numbers<[1], [0], [0], [1], [0, 0, 1, 1], [], []>} : vector<8x72xf32>, vector<72x64xf32>, vector<8x64xf32> -> vector<8x64xf32>
    %240 = vector.extract_strided_slice %211 {offsets = [0, 0], sizes = [8, 72], strides = [1, 1]} : vector<12x72xf32> to vector<8x72xf32>
    %c3_187 = arith.constant 3 : index
    %c0_188 = arith.constant 0 : index
    %c0_189 = arith.constant 0 : index
    %241 = vector.load %arg7[%c3_187, %c0_188, %c0_189] : memref<10x72x64xf32, #tpu.memory_space<vmem>>, vector<1x72x64xf32>
    %242 = vector.shape_cast %241 : vector<1x72x64xf32> to vector<72x64xf32>
    %cst_190 = arith.constant dense<0.000000e+00> : vector<8x64xf32>
    %243 = tpu.matmul %240, %242, %cst_190 {dimension_numbers = #tpu.dot_dimension_numbers<[1], [0], [0], [1], [0, 0, 1, 1], [], []>} : vector<8x72xf32>, vector<72x64xf32>, vector<8x64xf32> -> vector<8x64xf32>
    %244 = arith.addf %239, %243 : vector<8x64xf32>
    %245 = vector.extract_strided_slice %107 {offsets = [2, 0], sizes = [8, 72], strides = [1, 1]} : vector<12x72xf32> to vector<8x72xf32>
    %c5_191 = arith.constant 5 : index
    %c0_192 = arith.constant 0 : index
    %c0_193 = arith.constant 0 : index
    %246 = vector.load %arg7[%c5_191, %c0_192, %c0_193] : memref<10x72x64xf32, #tpu.memory_space<vmem>>, vector<1x72x64xf32>
    %247 = vector.shape_cast %246 : vector<1x72x64xf32> to vector<72x64xf32>
    %cst_194 = arith.constant dense<0.000000e+00> : vector<8x64xf32>
    %248 = tpu.matmul %245, %247, %cst_194 {dimension_numbers = #tpu.dot_dimension_numbers<[1], [0], [0], [1], [0, 0, 1, 1], [], []>} : vector<8x72xf32>, vector<72x64xf32>, vector<8x64xf32> -> vector<8x64xf32>
    %249 = arith.addf %244, %248 : vector<8x64xf32>
    %250 = vector.extract_strided_slice %211 {offsets = [2, 0], sizes = [8, 72], strides = [1, 1]} : vector<12x72xf32> to vector<8x72xf32>
    %c7_195 = arith.constant 7 : index
    %c0_196 = arith.constant 0 : index
    %c0_197 = arith.constant 0 : index
    %251 = vector.load %arg7[%c7_195, %c0_196, %c0_197] : memref<10x72x64xf32, #tpu.memory_space<vmem>>, vector<1x72x64xf32>
    %252 = vector.shape_cast %251 : vector<1x72x64xf32> to vector<72x64xf32>
    %cst_198 = arith.constant dense<0.000000e+00> : vector<8x64xf32>
    %253 = tpu.matmul %250, %252, %cst_198 {dimension_numbers = #tpu.dot_dimension_numbers<[1], [0], [0], [1], [0, 0, 1, 1], [], []>} : vector<8x72xf32>, vector<72x64xf32>, vector<8x64xf32> -> vector<8x64xf32>
    %254 = arith.addf %249, %253 : vector<8x64xf32>
    %255 = vector.extract_strided_slice %107 {offsets = [4, 0], sizes = [8, 72], strides = [1, 1]} : vector<12x72xf32> to vector<8x72xf32>
    %c9_199 = arith.constant 9 : index
    %c0_200 = arith.constant 0 : index
    %c0_201 = arith.constant 0 : index
    %256 = vector.load %arg7[%c9_199, %c0_200, %c0_201] : memref<10x72x64xf32, #tpu.memory_space<vmem>>, vector<1x72x64xf32>
    %257 = vector.shape_cast %256 : vector<1x72x64xf32> to vector<72x64xf32>
    %cst_202 = arith.constant dense<0.000000e+00> : vector<8x64xf32>
    %258 = tpu.matmul %255, %257, %cst_202 {dimension_numbers = #tpu.dot_dimension_numbers<[1], [0], [0], [1], [0, 0, 1, 1], [], []>} : vector<8x72xf32>, vector<72x64xf32>, vector<8x64xf32> -> vector<8x64xf32>
    %259 = arith.addf %254, %258 : vector<8x64xf32>
    %260 = vector.extract_strided_slice %211 {offsets = [0, 0], sizes = [8, 72], strides = [1, 1]} : vector<12x72xf32> to vector<8x72xf32>
    %c0_203 = arith.constant 0 : index
    %c0_204 = arith.constant 0 : index
    %c0_205 = arith.constant 0 : index
    %261 = vector.load %arg7[%c0_203, %c0_204, %c0_205] : memref<10x72x64xf32, #tpu.memory_space<vmem>>, vector<1x72x64xf32>
    %262 = vector.shape_cast %261 : vector<1x72x64xf32> to vector<72x64xf32>
    %cst_206 = arith.constant dense<0.000000e+00> : vector<8x64xf32>
    %263 = tpu.matmul %260, %262, %cst_206 {dimension_numbers = #tpu.dot_dimension_numbers<[1], [0], [0], [1], [0, 0, 1, 1], [], []>} : vector<8x72xf32>, vector<72x64xf32>, vector<8x64xf32> -> vector<8x64xf32>
    %264 = vector.extract_strided_slice %107 {offsets = [2, 0], sizes = [8, 72], strides = [1, 1]} : vector<12x72xf32> to vector<8x72xf32>
    %c2_207 = arith.constant 2 : index
    %c0_208 = arith.constant 0 : index
    %c0_209 = arith.constant 0 : index
    %265 = vector.load %arg7[%c2_207, %c0_208, %c0_209] : memref<10x72x64xf32, #tpu.memory_space<vmem>>, vector<1x72x64xf32>
    %266 = vector.shape_cast %265 : vector<1x72x64xf32> to vector<72x64xf32>
    %cst_210 = arith.constant dense<0.000000e+00> : vector<8x64xf32>
    %267 = tpu.matmul %264, %266, %cst_210 {dimension_numbers = #tpu.dot_dimension_numbers<[1], [0], [0], [1], [0, 0, 1, 1], [], []>} : vector<8x72xf32>, vector<72x64xf32>, vector<8x64xf32> -> vector<8x64xf32>
    %268 = arith.addf %263, %267 : vector<8x64xf32>
    %269 = vector.extract_strided_slice %211 {offsets = [2, 0], sizes = [8, 72], strides = [1, 1]} : vector<12x72xf32> to vector<8x72xf32>
    %c4_211 = arith.constant 4 : index
    %c0_212 = arith.constant 0 : index
    %c0_213 = arith.constant 0 : index
    %270 = vector.load %arg7[%c4_211, %c0_212, %c0_213] : memref<10x72x64xf32, #tpu.memory_space<vmem>>, vector<1x72x64xf32>
    %271 = vector.shape_cast %270 : vector<1x72x64xf32> to vector<72x64xf32>
    %cst_214 = arith.constant dense<0.000000e+00> : vector<8x64xf32>
    %272 = tpu.matmul %269, %271, %cst_214 {dimension_numbers = #tpu.dot_dimension_numbers<[1], [0], [0], [1], [0, 0, 1, 1], [], []>} : vector<8x72xf32>, vector<72x64xf32>, vector<8x64xf32> -> vector<8x64xf32>
    %273 = arith.addf %268, %272 : vector<8x64xf32>
    %274 = vector.extract_strided_slice %107 {offsets = [4, 0], sizes = [8, 72], strides = [1, 1]} : vector<12x72xf32> to vector<8x72xf32>
    %c6_215 = arith.constant 6 : index
    %c0_216 = arith.constant 0 : index
    %c0_217 = arith.constant 0 : index
    %275 = vector.load %arg7[%c6_215, %c0_216, %c0_217] : memref<10x72x64xf32, #tpu.memory_space<vmem>>, vector<1x72x64xf32>
    %276 = vector.shape_cast %275 : vector<1x72x64xf32> to vector<72x64xf32>
    %cst_218 = arith.constant dense<0.000000e+00> : vector<8x64xf32>
    %277 = tpu.matmul %274, %276, %cst_218 {dimension_numbers = #tpu.dot_dimension_numbers<[1], [0], [0], [1], [0, 0, 1, 1], [], []>} : vector<8x72xf32>, vector<72x64xf32>, vector<8x64xf32> -> vector<8x64xf32>
    %278 = arith.addf %273, %277 : vector<8x64xf32>
    %279 = vector.extract_strided_slice %211 {offsets = [4, 0], sizes = [8, 72], strides = [1, 1]} : vector<12x72xf32> to vector<8x72xf32>
    %c8_219 = arith.constant 8 : index
    %c0_220 = arith.constant 0 : index
    %c0_221 = arith.constant 0 : index
    %280 = vector.load %arg7[%c8_219, %c0_220, %c0_221] : memref<10x72x64xf32, #tpu.memory_space<vmem>>, vector<1x72x64xf32>
    %281 = vector.shape_cast %280 : vector<1x72x64xf32> to vector<72x64xf32>
    %cst_222 = arith.constant dense<0.000000e+00> : vector<8x64xf32>
    %282 = tpu.matmul %279, %281, %cst_222 {dimension_numbers = #tpu.dot_dimension_numbers<[1], [0], [0], [1], [0, 0, 1, 1], [], []>} : vector<8x72xf32>, vector<72x64xf32>, vector<8x64xf32> -> vector<8x64xf32>
    %283 = arith.addf %278, %282 : vector<8x64xf32>
    %284 = vector.extract_strided_slice %211 {offsets = [0, 0], sizes = [8, 72], strides = [1, 1]} : vector<12x72xf32> to vector<8x72xf32>
    %c1_223 = arith.constant 1 : index
    %c0_224 = arith.constant 0 : index
    %c0_225 = arith.constant 0 : index
    %285 = vector.load %arg7[%c1_223, %c0_224, %c0_225] : memref<10x72x64xf32, #tpu.memory_space<vmem>>, vector<1x72x64xf32>
    %286 = vector.shape_cast %285 : vector<1x72x64xf32> to vector<72x64xf32>
    %cst_226 = arith.constant dense<0.000000e+00> : vector<8x64xf32>
    %287 = tpu.matmul %284, %286, %cst_226 {dimension_numbers = #tpu.dot_dimension_numbers<[1], [0], [0], [1], [0, 0, 1, 1], [], []>} : vector<8x72xf32>, vector<72x64xf32>, vector<8x64xf32> -> vector<8x64xf32>
    %288 = vector.extract_strided_slice %107 {offsets = [2, 0], sizes = [8, 72], strides = [1, 1]} : vector<12x72xf32> to vector<8x72xf32>
    %c3_227 = arith.constant 3 : index
    %c0_228 = arith.constant 0 : index
    %c0_229 = arith.constant 0 : index
    %289 = vector.load %arg7[%c3_227, %c0_228, %c0_229] : memref<10x72x64xf32, #tpu.memory_space<vmem>>, vector<1x72x64xf32>
    %290 = vector.shape_cast %289 : vector<1x72x64xf32> to vector<72x64xf32>
    %cst_230 = arith.constant dense<0.000000e+00> : vector<8x64xf32>
    %291 = tpu.matmul %288, %290, %cst_230 {dimension_numbers = #tpu.dot_dimension_numbers<[1], [0], [0], [1], [0, 0, 1, 1], [], []>} : vector<8x72xf32>, vector<72x64xf32>, vector<8x64xf32> -> vector<8x64xf32>
    %292 = arith.addf %287, %291 : vector<8x64xf32>
    %293 = vector.extract_strided_slice %211 {offsets = [2, 0], sizes = [8, 72], strides = [1, 1]} : vector<12x72xf32> to vector<8x72xf32>
    %c5_231 = arith.constant 5 : index
    %c0_232 = arith.constant 0 : index
    %c0_233 = arith.constant 0 : index
    %294 = vector.load %arg7[%c5_231, %c0_232, %c0_233] : memref<10x72x64xf32, #tpu.memory_space<vmem>>, vector<1x72x64xf32>
    %295 = vector.shape_cast %294 : vector<1x72x64xf32> to vector<72x64xf32>
    %cst_234 = arith.constant dense<0.000000e+00> : vector<8x64xf32>
    %296 = tpu.matmul %293, %295, %cst_234 {dimension_numbers = #tpu.dot_dimension_numbers<[1], [0], [0], [1], [0, 0, 1, 1], [], []>} : vector<8x72xf32>, vector<72x64xf32>, vector<8x64xf32> -> vector<8x64xf32>
    %297 = arith.addf %292, %296 : vector<8x64xf32>
    %298 = vector.extract_strided_slice %107 {offsets = [4, 0], sizes = [8, 72], strides = [1, 1]} : vector<12x72xf32> to vector<8x72xf32>
    %c7_235 = arith.constant 7 : index
    %c0_236 = arith.constant 0 : index
    %c0_237 = arith.constant 0 : index
    %299 = vector.load %arg7[%c7_235, %c0_236, %c0_237] : memref<10x72x64xf32, #tpu.memory_space<vmem>>, vector<1x72x64xf32>
    %300 = vector.shape_cast %299 : vector<1x72x64xf32> to vector<72x64xf32>
    %cst_238 = arith.constant dense<0.000000e+00> : vector<8x64xf32>
    %301 = tpu.matmul %298, %300, %cst_238 {dimension_numbers = #tpu.dot_dimension_numbers<[1], [0], [0], [1], [0, 0, 1, 1], [], []>} : vector<8x72xf32>, vector<72x64xf32>, vector<8x64xf32> -> vector<8x64xf32>
    %302 = arith.addf %297, %301 : vector<8x64xf32>
    %303 = vector.extract_strided_slice %211 {offsets = [4, 0], sizes = [8, 72], strides = [1, 1]} : vector<12x72xf32> to vector<8x72xf32>
    %c9_239 = arith.constant 9 : index
    %c0_240 = arith.constant 0 : index
    %c0_241 = arith.constant 0 : index
    %304 = vector.load %arg7[%c9_239, %c0_240, %c0_241] : memref<10x72x64xf32, #tpu.memory_space<vmem>>, vector<1x72x64xf32>
    %305 = vector.shape_cast %304 : vector<1x72x64xf32> to vector<72x64xf32>
    %cst_242 = arith.constant dense<0.000000e+00> : vector<8x64xf32>
    %306 = tpu.matmul %303, %305, %cst_242 {dimension_numbers = #tpu.dot_dimension_numbers<[1], [0], [0], [1], [0, 0, 1, 1], [], []>} : vector<8x72xf32>, vector<72x64xf32>, vector<8x64xf32> -> vector<8x64xf32>
    %307 = arith.addf %302, %306 : vector<8x64xf32>
    %308 = arith.maximumf %235, %259 : vector<8x64xf32>
    %309 = arith.maximumf %283, %307 : vector<8x64xf32>
    %310 = arith.maximumf %308, %309 : vector<8x64xf32>
    %c0_243 = arith.constant 0 : index
    %c0_244 = arith.constant 0 : index
    %311 = vector.load %arg8[%c0_243, %c0_244] : memref<1x64xf32, #tpu.memory_space<vmem>>, vector<1x64xf32>
    %312 = vector.broadcast %311 : vector<1x64xf32> to vector<8x64xf32>
    %313 = arith.addf %310, %312 : vector<8x64xf32>
    %cst_245 = arith.constant 0.000000e+00 : f32
    %314 = vector.broadcast %cst_245 : f32 to vector<8x64xf32>
    %315 = arith.maximumf %313, %314 : vector<8x64xf32>
    %316 = vector.extract_strided_slice %315 {offsets = [0, 0], sizes = [2, 64], strides = [1, 1]} : vector<8x64xf32> to vector<2x64xf32>
    %c0_246 = arith.constant 0 : index
    %c0_247 = arith.constant 0 : index
    %c0_248 = arith.constant 0 : index
    %317 = vector.load %arg9[%c0_246, %c0_247, %c0_248] : memref<4x64x120xf32, #tpu.memory_space<vmem>>, vector<1x64x120xf32>
    %318 = vector.shape_cast %317 : vector<1x64x120xf32> to vector<64x120xf32>
    %cst_249 = arith.constant dense<0.000000e+00> : vector<2x120xf32>
    %319 = tpu.matmul %316, %318, %cst_249 {dimension_numbers = #tpu.dot_dimension_numbers<[1], [0], [0], [1], [0, 0, 1, 1], [], []>} : vector<2x64xf32>, vector<64x120xf32>, vector<2x120xf32> -> vector<2x120xf32>
    %320 = vector.extract_strided_slice %315 {offsets = [2, 0], sizes = [2, 64], strides = [1, 1]} : vector<8x64xf32> to vector<2x64xf32>
    %c1_250 = arith.constant 1 : index
    %c0_251 = arith.constant 0 : index
    %c0_252 = arith.constant 0 : index
    %321 = vector.load %arg9[%c1_250, %c0_251, %c0_252] : memref<4x64x120xf32, #tpu.memory_space<vmem>>, vector<1x64x120xf32>
    %322 = vector.shape_cast %321 : vector<1x64x120xf32> to vector<64x120xf32>
    %cst_253 = arith.constant dense<0.000000e+00> : vector<2x120xf32>
    %323 = tpu.matmul %320, %322, %cst_253 {dimension_numbers = #tpu.dot_dimension_numbers<[1], [0], [0], [1], [0, 0, 1, 1], [], []>} : vector<2x64xf32>, vector<64x120xf32>, vector<2x120xf32> -> vector<2x120xf32>
    %324 = arith.addf %319, %323 : vector<2x120xf32>
    %325 = vector.extract_strided_slice %315 {offsets = [4, 0], sizes = [2, 64], strides = [1, 1]} : vector<8x64xf32> to vector<2x64xf32>
    %c2_254 = arith.constant 2 : index
    %c0_255 = arith.constant 0 : index
    %c0_256 = arith.constant 0 : index
    %326 = vector.load %arg9[%c2_254, %c0_255, %c0_256] : memref<4x64x120xf32, #tpu.memory_space<vmem>>, vector<1x64x120xf32>
    %327 = vector.shape_cast %326 : vector<1x64x120xf32> to vector<64x120xf32>
    %cst_257 = arith.constant dense<0.000000e+00> : vector<2x120xf32>
    %328 = tpu.matmul %325, %327, %cst_257 {dimension_numbers = #tpu.dot_dimension_numbers<[1], [0], [0], [1], [0, 0, 1, 1], [], []>} : vector<2x64xf32>, vector<64x120xf32>, vector<2x120xf32> -> vector<2x120xf32>
    %329 = arith.addf %324, %328 : vector<2x120xf32>
    %330 = vector.extract_strided_slice %315 {offsets = [6, 0], sizes = [2, 64], strides = [1, 1]} : vector<8x64xf32> to vector<2x64xf32>
    %c3_258 = arith.constant 3 : index
    %c0_259 = arith.constant 0 : index
    %c0_260 = arith.constant 0 : index
    %331 = vector.load %arg9[%c3_258, %c0_259, %c0_260] : memref<4x64x120xf32, #tpu.memory_space<vmem>>, vector<1x64x120xf32>
    %332 = vector.shape_cast %331 : vector<1x64x120xf32> to vector<64x120xf32>
    %cst_261 = arith.constant dense<0.000000e+00> : vector<2x120xf32>
    %333 = tpu.matmul %330, %332, %cst_261 {dimension_numbers = #tpu.dot_dimension_numbers<[1], [0], [0], [1], [0, 0, 1, 1], [], []>} : vector<2x64xf32>, vector<64x120xf32>, vector<2x120xf32> -> vector<2x120xf32>
    %334 = arith.addf %329, %333 : vector<2x120xf32>
    %c0_262 = arith.constant 0 : index
    %c0_263 = arith.constant 0 : index
    %335 = vector.load %arg10[%c0_262, %c0_263] : memref<1x120xf32, #tpu.memory_space<vmem>>, vector<1x120xf32>
    %336 = vector.broadcast %335 : vector<1x120xf32> to vector<2x120xf32>
    %337 = arith.addf %334, %336 : vector<2x120xf32>
    %cst_264 = arith.constant 0.000000e+00 : f32
    %338 = vector.broadcast %cst_264 : f32 to vector<2x120xf32>
    %339 = arith.maximumf %337, %338 : vector<2x120xf32>
    %c0_265 = arith.constant 0 : index
    %c0_266 = arith.constant 0 : index
    %340 = vector.load %arg11[%c0_265, %c0_266] : memref<120x84xf32, #tpu.memory_space<vmem>>, vector<120x84xf32>
    %cst_267 = arith.constant dense<0.000000e+00> : vector<2x84xf32>
    %341 = tpu.matmul %339, %340, %cst_267 {dimension_numbers = #tpu.dot_dimension_numbers<[1], [0], [0], [1], [0, 0, 1, 1], [], []>} : vector<2x120xf32>, vector<120x84xf32>, vector<2x84xf32> -> vector<2x84xf32>
    %c0_268 = arith.constant 0 : index
    %c0_269 = arith.constant 0 : index
    %342 = vector.load %arg12[%c0_268, %c0_269] : memref<1x84xf32, #tpu.memory_space<vmem>>, vector<1x84xf32>
    %343 = vector.broadcast %342 : vector<1x84xf32> to vector<2x84xf32>
    %344 = arith.addf %341, %343 : vector<2x84xf32>
    %cst_270 = arith.constant 0.000000e+00 : f32
    %345 = vector.broadcast %cst_270 : f32 to vector<2x84xf32>
    %346 = arith.maximumf %344, %345 : vector<2x84xf32>
    %c0_271 = arith.constant 0 : index
    %c0_272 = arith.constant 0 : index
    %347 = vector.load %arg13[%c0_271, %c0_272] : memref<84x2xf32, #tpu.memory_space<vmem>>, vector<84x2xf32>
    %cst_273 = arith.constant dense<0.000000e+00> : vector<2x2xf32>
    %348 = tpu.matmul %346, %347, %cst_273 {dimension_numbers = #tpu.dot_dimension_numbers<[1], [0], [0], [1], [0, 0, 1, 1], [], []>} : vector<2x84xf32>, vector<84x2xf32>, vector<2x2xf32> -> vector<2x2xf32>
    %c0_274 = arith.constant 0 : index
    %c0_275 = arith.constant 0 : index
    %349 = vector.load %arg14[%c0_274, %c0_275] : memref<1x2xf32, #tpu.memory_space<vmem>>, vector<1x2xf32>
    %350 = vector.broadcast %349 : vector<1x2xf32> to vector<2x2xf32>
    %351 = arith.addf %348, %350 : vector<2x2xf32>
    %cst_276 = arith.constant dense<0xFF800000> : vector<2xf32>
    %352 = vector.multi_reduction <maximumf>, %351, %cst_276 [1] : vector<2x2xf32> to vector<2xf32>
    %353 = vector.shape_cast %352 : vector<2xf32> to vector<2x1xf32>
    %354 = vector.broadcast %353 : vector<2x1xf32> to vector<2x2xf32>
    %355 = arith.subf %351, %354 : vector<2x2xf32>
    %356 = math.exp %355 : vector<2x2xf32>
    %cst_277 = arith.constant dense<0.000000e+00> : vector<2xf32>
    %357 = vector.multi_reduction <add>, %356, %cst_277 [1] : vector<2x2xf32> to vector<2xf32>
    %358 = vector.shape_cast %357 : vector<2xf32> to vector<2x1xf32>
    %359 = tpu.reciprocal %358 : vector<2x1xf32> -> vector<2x1xf32>
    %360 = vector.broadcast %359 : vector<2x1xf32> to vector<2x2xf32>
    %361 = arith.mulf %356, %360 : vector<2x2xf32>
    %c0_278 = arith.constant 0 : index
    %c0_279 = arith.constant 0 : index
    %362 = vector.load %arg15[%c0_278, %c0_279] : memref<2x2xf32, #tpu.memory_space<vmem>>, vector<2x2xf32>
    tpu.vector_store %arg15[%c0_278, %c0_279], %361 {strides = array<i32>} : memref<2x2xf32, #tpu.memory_space<vmem>>, vector<2x2xf32>,
    return
  }
  func.func @transform_0(%arg0: i32) -> (i32, i32) {
    %c0_i32 = arith.constant 0 : i32
    %c0_i32_0 = arith.constant 0 : i32
    %c0_i32_1 = arith.constant 0 : i32
    return %c0_i32, %c0_i32_0 : i32, i32
  }
  func.func @transform_1(%arg0: i32) -> (i32, i32) {
    %c0_i32 = arith.constant 0 : i32
    %c0_i32_0 = arith.constant 0 : i32
    %c0_i32_1 = arith.constant 0 : i32
    return %c0_i32, %c0_i32_0 : i32, i32
  }
  func.func @transform_2(%arg0: i32) -> (i32, i32) {
    %c0_i32 = arith.constant 0 : i32
    %c0_i32_0 = arith.constant 0 : i32
    %c0_i32_1 = arith.constant 0 : i32
    return %c0_i32, %c0_i32_0 : i32, i32
  }
  func.func @transform_3(%arg0: i32) -> (i32, i32) {
    %c0_i32 = arith.constant 0 : i32
    %c0_i32_0 = arith.constant 0 : i32
    %c0_i32_1 = arith.constant 0 : i32
    return %c0_i32, %c0_i32_0 : i32, i32
  }
  func.func @transform_4(%arg0: i32) -> (i32, i32, i32) {
    %c0_i32 = arith.constant 0 : i32
    %c0_i32_0 = arith.constant 0 : i32
    %c0_i32_1 = arith.constant 0 : i32
    %c0_i32_2 = arith.constant 0 : i32
    return %c0_i32, %c0_i32_0, %c0_i32_1 : i32, i32, i32
  }
  func.func @transform_5(%arg0: i32) -> (i32, i32) {
    %c0_i32 = arith.constant 0 : i32
    %c0_i32_0 = arith.constant 0 : i32
    %c0_i32_1 = arith.constant 0 : i32
    return %c0_i32, %c0_i32_0 : i32, i32
  }
  func.func @transform_6(%arg0: i32) -> (i32, i32, i32) {
    %c0_i32 = arith.constant 0 : i32
    %c0_i32_0 = arith.constant 0 : i32
    %c0_i32_1 = arith.constant 0 : i32
    %c0_i32_2 = arith.constant 0 : i32
    return %c0_i32, %c0_i32_0, %c0_i32_1 : i32, i32, i32
  }
  func.func @transform_7(%arg0: i32) -> (i32, i32) {
    %c0_i32 = arith.constant 0 : i32
    %c0_i32_0 = arith.constant 0 : i32
    %c0_i32_1 = arith.constant 0 : i32
    return %c0_i32, %c0_i32_0 : i32, i32
  }
  func.func @transform_8(%arg0: i32) -> (i32, i32, i32) {
    %c0_i32 = arith.constant 0 : i32
    %c0_i32_0 = arith.constant 0 : i32
    %c0_i32_1 = arith.constant 0 : i32
    %c0_i32_2 = arith.constant 0 : i32
    return %c0_i32, %c0_i32_0, %c0_i32_1 : i32, i32, i32
  }
  func.func @transform_9(%arg0: i32) -> (i32, i32) {
    %c0_i32 = arith.constant 0 : i32
    %c0_i32_0 = arith.constant 0 : i32
    %c0_i32_1 = arith.constant 0 : i32
    return %c0_i32, %c0_i32_0 : i32, i32
  }
  func.func @transform_10(%arg0: i32) -> (i32, i32) {
    %c0_i32 = arith.constant 0 : i32
    %c0_i32_0 = arith.constant 0 : i32
    %c0_i32_1 = arith.constant 0 : i32
    return %c0_i32, %c0_i32_0 : i32, i32
  }
  func.func @transform_11(%arg0: i32) -> (i32, i32) {
    %c0_i32 = arith.constant 0 : i32
    %c0_i32_0 = arith.constant 0 : i32
    %c0_i32_1 = arith.constant 0 : i32
    return %c0_i32, %c0_i32_0 : i32, i32
  }
  func.func @transform_12(%arg0: i32) -> (i32, i32) {
    %c0_i32 = arith.constant 0 : i32
    %c0_i32_0 = arith.constant 0 : i32
    %c0_i32_1 = arith.constant 0 : i32
    return %c0_i32, %c0_i32_0 : i32, i32
  }
  func.func @transform_13(%arg0: i32) -> (i32, i32) {
    %c0_i32 = arith.constant 0 : i32
    %c0_i32_0 = arith.constant 0 : i32
    %c0_i32_1 = arith.constant 0 : i32
    return %c0_i32, %c0_i32_0 : i32, i32
  }
  func.func @transform_14(%arg0: i32) -> (i32, i32) {
    %c0_i32 = arith.constant 0 : i32
    %c0_i32_0 = arith.constant 0 : i32
    %c0_i32_1 = arith.constant 0 : i32
    return %c0_i32, %c0_i32_0 : i32, i32
  }
}

</mosaic_0001>

<llo_original>
// kernel: mnist_net_forward.1
$region0: #{mnist_net_forward.1}
  #allocation0 [shape = 'u32[]', space=smem, size = 0x4, offset = 0x4, fixed_abs, tag = 'smem constant byte address 0x4 - core index']
  #allocation1 [shape = 'u32[144,128]{1,0:T(1,128)}', space=vmem, size = 0x12000, scoped, tag = 'internal scratch']
  %s0 = inlined_call_operand.vmem [shape: f32[14,28], index: 0, kind: input, shape index: {}]
  %s1 = inlined_call_operand.vmem [shape: f32[14,28], index: 1, kind: input, shape index: {}]
  %s2 = inlined_call_operand.vmem [shape: f32[14,28], index: 2, kind: input, shape index: {}]
  %s3 = inlined_call_operand.vmem [shape: f32[14,28], index: 3, kind: input, shape index: {}]
  %s4 = inlined_call_operand.vmem [shape: f32[10,28,72], index: 4, kind: input, shape index: {}]
  %s5 = inlined_call_operand.vmem [shape: f32[1,72], index: 5, kind: input, shape index: {}]
  %s6 = inlined_call_operand.vmem [shape: f32[10,72,64], index: 6, kind: input, shape index: {}]
  %s7 = inlined_call_operand.vmem [shape: f32[1,64], index: 7, kind: input, shape index: {}]
  %s8 = inlined_call_operand.vmem [shape: f32[4,64,120], index: 8, kind: input, shape index: {}]
  %s9 = inlined_call_operand.vmem [shape: f32[1,120], index: 9, kind: input, shape index: {}]
  %s10 = inlined_call_operand.vmem [shape: f32[120,84], index: 10, kind: input, shape index: {}]
  %s11 = inlined_call_operand.vmem [shape: f32[1,84], index: 11, kind: input, shape index: {}]
  %s12 = inlined_call_operand.vmem [shape: f32[84,2], index: 12, kind: input, shape index: {}]
  %s13 = inlined_call_operand.vmem [shape: f32[1,2], index: 13, kind: input, shape index: {}]
  %s14 = inlined_call_operand.hbm [shape: f32[2,2], index: 14, kind: output, shape index: {}]
  %s15 = sld [smem:[#allocation0]]
  $region66: #{mnist_net_forward.1} parent=0
    _
  %s17 = ssub.s32 1, %s15
  %s18 = scalar_select 0, %s17, %s15
  $region1: #{mnist_net_forward.1} parent=0
    #allocation2 [shape = 'u8[1024]{0}', space=vmem, size = 0x400, scoped, tag = 'output window, operand 0, single buffered']
    #allocation3 [shape = 's32[1]{0}', space=sflag, size = 0x4, scoped, tag = 'scoped memory for mnist_net_forward.1']
    %19 = vsyncpa [#allocation3], 0
    // Predicated region
    $region2: #{mnist_net_forward.1} parent=1 // pred_check
      _
    $region3: #{mnist_net_forward.1} parent=1 // pred_check_branch
      %21 = sbr.rel (0) target = $region5
    $region4: #{mnist_net_forward.1} parent=1 // pred_region
      _
    $region5: #{mnist_net_forward.1} parent=1 // pred_fallthru
      _
    // Predicated region
    $region6: #{mnist_net_forward.1} parent=1 // pred_check
      _
    $region7: #{mnist_net_forward.1} parent=1 // pred_check_branch
      %23 = sbr.rel (0) target = $region9
    $region8: #{mnist_net_forward.1} parent=1 // pred_region
      _
    $region9: #{mnist_net_forward.1} parent=1 // pred_fallthru
      _
    // Predicated region
    $region10: #{mnist_net_forward.1} parent=1 // pred_check
      _
    $region11: #{mnist_net_forward.1} parent=1 // pred_check_branch
      %25 = sbr.rel (0) target = $region13
    $region12: #{mnist_net_forward.1} parent=1 // pred_region
      _
    $region13: #{mnist_net_forward.1} parent=1 // pred_fallthru
      _
    // Predicated region
    $region14: #{mnist_net_forward.1} parent=1 // pred_check
      _
    $region15: #{mnist_net_forward.1} parent=1 // pred_check_branch
      %27 = sbr.rel (0) target = $region17
    $region16: #{mnist_net_forward.1} parent=1 // pred_region
      _
    $region17: #{mnist_net_forward.1} parent=1 // pred_fallthru
      _
    // Predicated region
    $region18: #{mnist_net_forward.1} parent=1 // pred_check
      _
    $region19: #{mnist_net_forward.1} parent=1 // pred_check_branch
      %29 = sbr.rel (0) target = $region21
    $region20: #{mnist_net_forward.1} parent=1 // pred_region
      _
    $region21: #{mnist_net_forward.1} parent=1 // pred_fallthru
      _
    // Predicated region
    $region22: #{mnist_net_forward.1} parent=1 // pred_check
      _
    $region23: #{mnist_net_forward.1} parent=1 // pred_check_branch
      %31 = sbr.rel (0) target = $region25
    $region24: #{mnist_net_forward.1} parent=1 // pred_region
      _
    $region25: #{mnist_net_forward.1} parent=1 // pred_fallthru
      _
    // Predicated region
    $region26: #{mnist_net_forward.1} parent=1 // pred_check
      _
    $region27: #{mnist_net_forward.1} parent=1 // pred_check_branch
      %33 = sbr.rel (0) target = $region29
    $region28: #{mnist_net_forward.1} parent=1 // pred_region
      _
    $region29: #{mnist_net_forward.1} parent=1 // pred_fallthru
      _
    // Predicated region
    $region30: #{mnist_net_forward.1} parent=1 // pred_check
      _
    $region31: #{mnist_net_forward.1} parent=1 // pred_check_branch
      %35 = sbr.rel (0) target = $region33
    $region32: #{mnist_net_forward.1} parent=1 // pred_region
      _
    $region33: #{mnist_net_forward.1} parent=1 // pred_fallthru
      _
    // Predicated region
    $region34: #{mnist_net_forward.1} parent=1 // pred_check
      _
    $region35: #{mnist_net_forward.1} parent=1 // pred_check_branch
      %37 = sbr.rel (0) target = $region37
    $region36: #{mnist_net_forward.1} parent=1 // pred_region
      _
    $region37: #{mnist_net_forward.1} parent=1 // pred_fallthru
      _
    // Predicated region
    $region38: #{mnist_net_forward.1} parent=1 // pred_check
      _
    $region39: #{mnist_net_forward.1} parent=1 // pred_check_branch
      %39 = sbr.rel (0) target = $region41
    $region40: #{mnist_net_forward.1} parent=1 // pred_region
      _
    $region41: #{mnist_net_forward.1} parent=1 // pred_fallthru
      _
    // Predicated region
    $region42: #{mnist_net_forward.1} parent=1 // pred_check
      _
    $region43: #{mnist_net_forward.1} parent=1 // pred_check_branch
      %41 = sbr.rel (0) target = $region45
    $region44: #{mnist_net_forward.1} parent=1 // pred_region
      _
    $region45: #{mnist_net_forward.1} parent=1 // pred_fallthru
      _
    // Predicated region
    $region46: #{mnist_net_forward.1} parent=1 // pred_check
      _
    $region47: #{mnist_net_forward.1} parent=1 // pred_check_branch
      %43 = sbr.rel (0) target = $region49
    $region48: #{mnist_net_forward.1} parent=1 // pred_region
      _
    $region49: #{mnist_net_forward.1} parent=1 // pred_fallthru
      _
    // Predicated region
    $region50: #{mnist_net_forward.1} parent=1 // pred_check
      _
    $region51: #{mnist_net_forward.1} parent=1 // pred_check_branch
      %45 = sbr.rel (0) target = $region53
    $region52: #{mnist_net_forward.1} parent=1 // pred_region
      _
    $region53: #{mnist_net_forward.1} parent=1 // pred_fallthru
      _
    // Predicated region
    $region54: #{mnist_net_forward.1} parent=1 // pred_check
      _
    $region55: #{mnist_net_forward.1} parent=1 // pred_check_branch
      %47 = sbr.rel (0) target = $region57
    $region56: #{mnist_net_forward.1} parent=1 // pred_region
      _
    $region57: #{mnist_net_forward.1} parent=1 // pred_fallthru
      _
    %v48 = vld [vmem:[%s0] sm:$0xff]
    %v49 = vld [vmem:[%s0 + $0x8] sm:$0x3f]
    %v50 = vld [vmem:[%s1] sm:$0xff]
    %v51 = vld [vmem:[%s1 + $0x8] sm:$0x3f]
    %v52 = vld [vmem:[%s2] sm:$0xff]
    %v53 = vld [vmem:[%s2 + $0x8] sm:$0x3f]
    %v54 = vld [vmem:[%s3] sm:$0xff]
    %v55 = vld [vmem:[%s3 + $0x8] sm:$0x3f]
    %v56 = vld [vmem:[%s4] sm:$0xff]
    %v57 = vld [vmem:[%s4 + $0x8] sm:$0xff]
    %v58 = vld [vmem:[%s4 + $0x10] sm:$0xff]
    %v59 = vld [vmem:[%s4 + $0x18] sm:$0xf]
    %s60 = scalar_lea.vmem %s4, 64
    %v61 = vld [vmem:[%s60] sm:$0xff]
    %v62 = vld [vmem:[%s60 + $0x8] sm:$0xff]
    %v63 = vld [vmem:[%s60 + $0x10] sm:$0xff]
    %v64 = vld [vmem:[%s60 + $0x18] sm:$0xf]
    %vm65 = vcmask 228352
    %v67 = vsel %vm65, %v50, 0
    %v70 = vsel %vm65, %v51, 0
    %vm72 = vcmask 1043456
    %v74 = vsel %vm72, %v64, 0
    %76 = vmatprep.subr.mxu0 0.0
    %77 = vmatpush1.msra.mxu0 0.0
    %78 = vmatprep.subr.mxu0 0.0
    %79 = vmatpush1.msra.mxu0 0.0
    %80 = vmatprep.subr.mxu0 0.0
    %81 = vmatpush1.msra.mxu0 0.0
    %82 = vmatprep.subr.mxu0 0.0
    %83 = vmatpush1.msra.mxu0 0.0
    %84 = vmatprep.subr.mxu0 0.0
    %85 = vmatpush1.msra.mxu0 0.0
    %86 = vmatprep.subr.mxu0 0.0
    %87 = vmatpush1.msra.mxu0 0.0
    %88 = vmatprep.subr.mxu0 0.0
    %89 = vmatpush1.msra.mxu0 0.0
    %90 = vmatprep.subr.mxu0 0.0
    %91 = vmatpush1.msra.mxu0 0.0
    %92 = vmatprep.subr.mxu0 0.0
    %93 = vmatpush1.msra.mxu0 0.0
    %94 = vmatprep.subr.mxu0 0.0
    %95 = vmatpush1.msra.mxu0 0.0
    %96 = vmatprep.subr.mxu0 0.0
    %97 = vmatpush1.msra.mxu0 0.0
    %98 = vmatprep.subr.mxu0 0.0
    %99 = vmatpush1.msra.mxu0 0.0
    %100 = vmatprep.subr.mxu0 0.0
    %101 = vmatpush1.msra.mxu0 %v74
    %102 = vmatprep.subr.mxu0 0.0
    %103 = vmatpush1.msra.mxu0 %v63
    %104 = vmatprep.subr.mxu0 0.0
    %105 = vmatpush1.msra.mxu0 %v62
    %106 = vmatprep.subr.mxu0 0.0
    %107 = vmatpush1.msra.mxu0 %v61
    %108 = vmatprep.subr.mxu0 0.0
    %109 = vmatpush2.msra.mxu0 0.0
    %110 = vmatprep.subr.mxu0 0.0
    %111 = vmatpush2.msra.mxu0 0.0
    %112 = vmatprep.subr.mxu0 0.0
    %113 = vmatpush2.msra.mxu0 0.0
    %114 = vmatprep.subr.mxu0 0.0
    %115 = vmatpush2.msra.mxu0 0.0
    %116 = vmatprep.subr.mxu0 0.0
    %117 = vmatpush2.msra.mxu0 0.0
    %118 = vmatprep.subr.mxu0 0.0
    %119 = vmatpush2.msra.mxu0 0.0
    %120 = vmatprep.subr.mxu0 0.0
    %121 = vmatpush2.msra.mxu0 0.0
    %122 = vmatprep.subr.mxu0 0.0
    %123 = vmatpush2.msra.mxu0 0.0
    %124 = vmatprep.subr.mxu0 0.0
    %125 = vmatpush2.msra.mxu0 0.0
    %126 = vmatprep.subr.mxu0 0.0
    %127 = vmatpush2.msra.mxu0 0.0
    %128 = vmatprep.subr.mxu0 0.0
    %129 = vmatpush2.msra.mxu0 0.0
    %130 = vmatprep.subr.mxu0 0.0
    %131 = vmatpush2.msra.mxu0 0.0
    %132 = vmatprep.subr.mxu0 0.0
    %133 = vmatpush2.msra.mxu0 0.0
    %134 = vmatprep.subr.mxu0 0.0
    %135 = vmatpush2.msra.mxu0 0.0
    %136 = vmatprep.subr.mxu0 0.0
    %137 = vmatpush2.msra.mxu0 0.0
    %138 = vmatprep.subr.mxu0 0.0
    %139 = vmatpush2.msra.mxu0 0.0
    %140 = vmatprep.mubr.f32.mxu0 0.0
    %141 = vmatmul.mubr.f32.gmra.mxu0 %v67
    %v142 = vpop.f32.mrf.mxu0
    %v143 = vadd.f32 0.0, %v142
    %v144 = vpop.f32.mrf.mxu0
    %145 = vmatprep.mubr.f32.mxu0 0.0
    %146 = vmatmul.mubr.f32.gmra.mxu0 %v70
    %v147 = vpop.f32.mrf.mxu0
    %v148 = vadd.f32 0.0, %v147
    %v149 = vpop.f32.mrf.mxu0
    %150 = vdwg.mxu0
    %v152 = vsel %vm65, %v48, 0
    %v155 = vsel %vm65, %v49, 0
    %v158 = vsel %vm72, %v59, 0
    %160 = vmatprep.subr.mxu0 0.0
    %161 = vmatpush1.msra.mxu0 0.0
    %162 = vmatprep.subr.mxu0 0.0
    %163 = vmatpush1.msra.mxu0 0.0
    %164 = vmatprep.subr.mxu0 0.0
    %165 = vmatpush1.msra.mxu0 0.0
    %166 = vmatprep.subr.mxu0 0.0
    %167 = vmatpush1.msra.mxu0 0.0
    %168 = vmatprep.subr.mxu0 0.0
    %169 = vmatpush1.msra.mxu0 0.0
    %170 = vmatprep.subr.mxu0 0.0
    %171 = vmatpush1.msra.mxu0 0.0
    %172 = vmatprep.subr.mxu0 0.0
    %173 = vmatpush1.msra.mxu0 0.0
    %174 = vmatprep.subr.mxu0 0.0
    %175 = vmatpush1.msra.mxu0 0.0
    %176 = vmatprep.subr.mxu0 0.0
    %177 = vmatpush1.msra.mxu0 0.0
    %178 = vmatprep.subr.mxu0 0.0
    %179 = vmatpush1.msra.mxu0 0.0
    %180 = vmatprep.subr.mxu0 0.0
    %181 = vmatpush1.msra.mxu0 0.0
    %182 = vmatprep.subr.mxu0 0.0
    %183 = vmatpush1.msra.mxu0 0.0
    %184 = vmatprep.subr.mxu0 0.0
    %185 = vmatpush1.msra.mxu0 %v158
    %186 = vmatprep.subr.mxu0 0.0
    %187 = vmatpush1.msra.mxu0 %v58
    %188 = vmatprep.subr.mxu0 0.0
    %189 = vmatpush1.msra.mxu0 %v57
    %190 = vmatprep.subr.mxu0 0.0
    %191 = vmatpush1.msra.mxu0 %v56
    %192 = vmatprep.subr.mxu0 0.0
    %193 = vmatpush2.msra.mxu0 0.0
    %194 = vmatprep.subr.mxu0 0.0
    %195 = vmatpush2.msra.mxu0 0.0
    %196 = vmatprep.subr.mxu0 0.0
    %197 = vmatpush2.msra.mxu0 0.0
    %198 = vmatprep.subr.mxu0 0.0
    %199 = vmatpush2.msra.mxu0 0.0
    %200 = vmatprep.subr.mxu0 0.0
    %201 = vmatpush2.msra.mxu0 0.0
    %202 = vmatprep.subr.mxu0 0.0
    %203 = vmatpush2.msra.mxu0 0.0
    %204 = vmatprep.subr.mxu0 0.0
    %205 = vmatpush2.msra.mxu0 0.0
    %206 = vmatprep.subr.mxu0 0.0
    %207 = vmatpush2.msra.mxu0 0.0
    %208 = vmatprep.subr.mxu0 0.0
    %209 = vmatpush2.msra.mxu0 0.0
    %210 = vmatprep.subr.mxu0 0.0
    %211 = vmatpush2.msra.mxu0 0.0
    %212 = vmatprep.subr.mxu0 0.0
    %213 = vmatpush2.msra.mxu0 0.0
    %214 = vmatprep.subr.mxu0 0.0
    %215 = vmatpush2.msra.mxu0 0.0
    %216 = vmatprep.subr.mxu0 0.0
    %217 = vmatpush2.msra.mxu0 0.0
    %218 = vmatprep.subr.mxu0 0.0
    %219 = vmatpush2.msra.mxu0 0.0
    %220 = vmatprep.subr.mxu0 0.0
    %221 = vmatpush2.msra.mxu0 0.0
    %222 = vmatprep.subr.mxu0 0.0
    %223 = vmatpush2.msra.mxu0 0.0
    %224 = vmatprep.mubr.f32.mxu0 0.0
    %225 = vmatmul.mubr.f32.gmra.mxu0 %v152
    %v226 = vpop.f32.mrf.mxu0
    %v227 = vadd.f32 %v143, %v226
    %v228 = vpop.f32.mrf.mxu0
    %229 = vmatprep.mubr.f32.mxu0 0.0
    %230 = vmatmul.mubr.f32.gmra.mxu0 %v155
    %v231 = vpop.f32.mrf.mxu0
    %v232 = vadd.f32 %v148, %v231
    %v233 = vpop.f32.mrf.mxu0
    %234 = vdwg.mxu0
    %s235 = scalar_lea.vmem %s4, 128
    %v236 = vld [vmem:[%s235] sm:$0xff]
    %v237 = vld [vmem:[%s235 + $0x8] sm:$0xff]
    %v238 = vld [vmem:[%s235 + $0x10] sm:$0xff]
    %v239 = vld [vmem:[%s235 + $0x18] sm:$0xf]
    %v241 = vsel %vm65, %v52, 0
    %v244 = vsel %vm65, %v53, 0
    %v247 = vsel %vm72, %v239, 0
    %249 = vmatprep.subr.mxu0 0.0
    %250 = vmatpush1.msra.mxu0 0.0
    %251 = vmatprep.subr.mxu0 0.0
    %252 = vmatpush1.msra.mxu0 0.0
    %253 = vmatprep.subr.mxu0 0.0
    %254 = vmatpush1.msra.mxu0 0.0
    %255 = vmatprep.subr.mxu0 0.0
    %256 = vmatpush1.msra.mxu0 0.0
    %257 = vmatprep.subr.mxu0 0.0
    %258 = vmatpush1.msra.mxu0 0.0
    %259 = vmatprep.subr.mxu0 0.0
    %260 = vmatpush1.msra.mxu0 0.0
    %261 = vmatprep.subr.mxu0 0.0
    %262 = vmatpush1.msra.mxu0 0.0
    %263 = vmatprep.subr.mxu0 0.0
    %264 = vmatpush1.msra.mxu0 0.0
    %265 = vmatprep.subr.mxu0 0.0
    %266 = vmatpush1.msra.mxu0 0.0
    %267 = vmatprep.subr.mxu0 0.0
    %268 = vmatpush1.msra.mxu0 0.0
    %269 = vmatprep.subr.mxu0 0.0
    %270 = vmatpush1.msra.mxu0 0.0
    %271 = vmatprep.subr.mxu0 0.0
    %272 = vmatpush1.msra.mxu0 0.0
    %273 = vmatprep.subr.mxu0 0.0
    %274 = vmatpush1.msra.mxu0 %v247
    %275 = vmatprep.subr.mxu0 0.0
    %276 = vmatpush1.msra.mxu0 %v238
    %277 = vmatprep.subr.mxu0 0.0
    %278 = vmatpush1.msra.mxu0 %v237
    %279 = vmatprep.subr.mxu0 0.0
    %280 = vmatpush1.msra.mxu0 %v236
    %281 = vmatprep.subr.mxu0 0.0
    %282 = vmatpush2.msra.mxu0 0.0
    %283 = vmatprep.subr.mxu0 0.0
    %284 = vmatpush2.msra.mxu0 0.0
    %285 = vmatprep.subr.mxu0 0.0
    %286 = vmatpush2.msra.mxu0 0.0
    %287 = vmatprep.subr.mxu0 0.0
    %288 = vmatpush2.msra.mxu0 0.0
    %289 = vmatprep.subr.mxu0 0.0
    %290 = vmatpush2.msra.mxu0 0.0
    %291 = vmatprep.subr.mxu0 0.0
    %292 = vmatpush2.msra.mxu0 0.0
    %293 = vmatprep.subr.mxu0 0.0
    %294 = vmatpush2.msra.mxu0 0.0
    %295 = vmatprep.subr.mxu0 0.0
    %296 = vmatpush2.msra.mxu0 0.0
    %297 = vmatprep.subr.mxu0 0.0
    %298 = vmatpush2.msra.mxu0 0.0
    %299 = vmatprep.subr.mxu0 0.0
    %300 = vmatpush2.msra.mxu0 0.0
    %301 = vmatprep.subr.mxu0 0.0
    %302 = vmatpush2.msra.mxu0 0.0
    %303 = vmatprep.subr.mxu0 0.0
    %304 = vmatpush2.msra.mxu0 0.0
    %305 = vmatprep.subr.mxu0 0.0
    %306 = vmatpush2.msra.mxu0 0.0
    %307 = vmatprep.subr.mxu0 0.0
    %308 = vmatpush2.msra.mxu0 0.0
    %309 = vmatprep.subr.mxu0 0.0
    %310 = vmatpush2.msra.mxu0 0.0
    %311 = vmatprep.subr.mxu0 0.0
    %312 = vmatpush2.msra.mxu0 0.0
    %313 = vmatprep.mubr.f32.mxu0 0.0
    %314 = vmatmul.mubr.f32.gmra.mxu0 %v241
    %v315 = vpop.f32.mrf.mxu0
    %v316 = vadd.f32 0.0, %v315
    %v317 = vpop.f32.mrf.mxu0
    %318 = vmatprep.mubr.f32.mxu0 0.0
    %319 = vmatmul.mubr.f32.gmra.mxu0 %v244
    %v320 = vpop.f32.mrf.mxu0
    %v321 = vadd.f32 0.0, %v320
    %v322 = vpop.f32.mrf.mxu0
    %323 = vdwg.mxu0
    %v324 = vadd.f32 %v227, %v316
    %v325 = vadd.f32 %v232, %v321
    %s326 = scalar_lea.vmem %s4, 192
    %v327 = vld [vmem:[%s326] sm:$0xff]
    %v328 = vld [vmem:[%s326 + $0x8] sm:$0xff]
    %v329 = vld [vmem:[%s326 + $0x10] sm:$0xff]
    %v330 = vld [vmem:[%s326 + $0x18] sm:$0xf]
    %v332 = vsel %vm65, %v54, 0
    %v335 = vsel %vm65, %v55, 0
    %v338 = vsel %vm72, %v330, 0
    %340 = vmatprep.subr.mxu0 0.0
    %341 = vmatpush1.msra.mxu0 0.0
    %342 = vmatprep.subr.mxu0 0.0
    %343 = vmatpush1.msra.mxu0 0.0
    %344 = vmatprep.subr.mxu0 0.0
    %345 = vmatpush1.msra.mxu0 0.0
    %346 = vmatprep.subr.mxu0 0.0
    %347 = vmatpush1.msra.mxu0 0.0
    %348 = vmatprep.subr.mxu0 0.0
    %349 = vmatpush1.msra.mxu0 0.0
    %350 = vmatprep.subr.mxu0 0.0
    %351 = vmatpush1.msra.mxu0 0.0
    %352 = vmatprep.subr.mxu0 0.0
    %353 = vmatpush1.msra.mxu0 0.0
    %354 = vmatprep.subr.mxu0 0.0
    %355 = vmatpush1.msra.mxu0 0.0
    %356 = vmatprep.subr.mxu0 0.0
    %357 = vmatpush1.msra.mxu0 0.0
    %358 = vmatprep.subr.mxu0 0.0
    %359 = vmatpush1.msra.mxu0 0.0
    %360 = vmatprep.subr.mxu0 0.0
    %361 = vmatpush1.msra.mxu0 0.0
    %362 = vmatprep.subr.mxu0 0.0
    %363 = vmatpush1.msra.mxu0 0.0
    %364 = vmatprep.subr.mxu0 0.0
    %365 = vmatpush1.msra.mxu0 %v338
    %366 = vmatprep.subr.mxu0 0.0
    %367 = vmatpush1.msra.mxu0 %v329
    %368 = vmatprep.subr.mxu0 0.0
    %369 = vmatpush1.msra.mxu0 %v328
    %370 = vmatprep.subr.mxu0 0.0
    %371 = vmatpush1.msra.mxu0 %v327
    %372 = vmatprep.subr.mxu0 0.0
    %373 = vmatpush2.msra.mxu0 0.0
    %374 = vmatprep.subr.mxu0 0.0
    %375 = vmatpush2.msra.mxu0 0.0
    %376 = vmatprep.subr.mxu0 0.0
    %377 = vmatpush2.msra.mxu0 0.0
    %378 = vmatprep.subr.mxu0 0.0
    %379 = vmatpush2.msra.mxu0 0.0
    %380 = vmatprep.subr.mxu0 0.0
    %381 = vmatpush2.msra.mxu0 0.0
    %382 = vmatprep.subr.mxu0 0.0
    %383 = vmatpush2.msra.mxu0 0.0
    %384 = vmatprep.subr.mxu0 0.0
    %385 = vmatpush2.msra.mxu0 0.0
    %386 = vmatprep.subr.mxu0 0.0
    %387 = vmatpush2.msra.mxu0 0.0
    %388 = vmatprep.subr.mxu0 0.0
    %389 = vmatpush2.msra.mxu0 0.0
    %390 = vmatprep.subr.mxu0 0.0
    %391 = vmatpush2.msra.mxu0 0.0
    %392 = vmatprep.subr.mxu0 0.0
    %393 = vmatpush2.msra.mxu0 0.0
    %394 = vmatprep.subr.mxu0 0.0
    %395 = vmatpush2.msra.mxu0 0.0
    %396 = vmatprep.subr.mxu0 0.0
    %397 = vmatpush2.msra.mxu0 0.0
    %398 = vmatprep.subr.mxu0 0.0
    %399 = vmatpush2.msra.mxu0 0.0
    %400 = vmatprep.subr.mxu0 0.0
    %401 = vmatpush2.msra.mxu0 0.0
    %402 = vmatprep.subr.mxu0 0.0
    %403 = vmatpush2.msra.mxu0 0.0
    %404 = vmatprep.mubr.f32.mxu0 0.0
    %405 = vmatmul.mubr.f32.gmra.mxu0 %v332
    %v406 = vpop.f32.mrf.mxu0
    %v407 = vadd.f32 0.0, %v406
    %v408 = vpop.f32.mrf.mxu0
    %409 = vmatprep.mubr.f32.mxu0 0.0
    %410 = vmatmul.mubr.f32.gmra.mxu0 %v335
    %v411 = vpop.f32.mrf.mxu0
    %v412 = vadd.f32 0.0, %v411
    %v413 = vpop.f32.mrf.mxu0
    %414 = vdwg.mxu0
    %v415 = vadd.f32 %v324, %v407
    %v416 = vadd.f32 %v325, %v412
    %s417 = scalar_lea.vmem %s4, 256
    %v418 = vld [vmem:[%s417] sm:$0xff]
    %v419 = vld [vmem:[%s417 + $0x8] sm:$0xff]
    %v420 = vld [vmem:[%s417 + $0x10] sm:$0xff]
    %v421 = vld [vmem:[%s417 + $0x18] sm:$0xf]
    %vm422 = vcmask 1045504
    %v423 = vrot.slane %v48, 2
    %v424 = vrot.slane %v49, 2
    %v425 = vsel %vm422, %v423, %v424
    %v426 = vsel %vm65, %v425, 0
    %v428 = vsel %vm65, %v424, 0
    %v431 = vsel %vm72, %v421, 0
    %433 = vmatprep.subr.mxu0 0.0
    %434 = vmatpush1.msra.mxu0 0.0
    %435 = vmatprep.subr.mxu0 0.0
    %436 = vmatpush1.msra.mxu0 0.0
    %437 = vmatprep.subr.mxu0 0.0
    %438 = vmatpush1.msra.mxu0 0.0
    %439 = vmatprep.subr.mxu0 0.0
    %440 = vmatpush1.msra.mxu0 0.0
    %441 = vmatprep.subr.mxu0 0.0
    %442 = vmatpush1.msra.mxu0 0.0
    %443 = vmatprep.subr.mxu0 0.0
    %444 = vmatpush1.msra.mxu0 0.0
    %445 = vmatprep.subr.mxu0 0.0
    %446 = vmatpush1.msra.mxu0 0.0
    %447 = vmatprep.subr.mxu0 0.0
    %448 = vmatpush1.msra.mxu0 0.0
    %449 = vmatprep.subr.mxu0 0.0
    %450 = vmatpush1.msra.mxu0 0.0
    %451 = vmatprep.subr.mxu0 0.0
    %452 = vmatpush1.msra.mxu0 0.0
    %453 = vmatprep.subr.mxu0 0.0
    %454 = vmatpush1.msra.mxu0 0.0
    %455 = vmatprep.subr.mxu0 0.0
    %456 = vmatpush1.msra.mxu0 0.0
    %457 = vmatprep.subr.mxu0 0.0
    %458 = vmatpush1.msra.mxu0 %v431
    %459 = vmatprep.subr.mxu0 0.0
    %460 = vmatpush1.msra.mxu0 %v420
    %461 = vmatprep.subr.mxu0 0.0
    %462 = vmatpush1.msra.mxu0 %v419
    %463 = vmatprep.subr.mxu0 0.0
    %464 = vmatpush1.msra.mxu0 %v418
    %465 = vmatprep.subr.mxu0 0.0
    %466 = vmatpush2.msra.mxu0 0.0
    %467 = vmatprep.subr.mxu0 0.0
    %468 = vmatpush2.msra.mxu0 0.0
    %469 = vmatprep.subr.mxu0 0.0
    %470 = vmatpush2.msra.mxu0 0.0
    %471 = vmatprep.subr.mxu0 0.0
    %472 = vmatpush2.msra.mxu0 0.0
    %473 = vmatprep.subr.mxu0 0.0
    %474 = vmatpush2.msra.mxu0 0.0
    %475 = vmatprep.subr.mxu0 0.0
    %476 = vmatpush2.msra.mxu0 0.0
    %477 = vmatprep.subr.mxu0 0.0
    %478 = vmatpush2.msra.mxu0 0.0
    %479 = vmatprep.subr.mxu0 0.0
    %480 = vmatpush2.msra.mxu0 0.0
    %481 = vmatprep.subr.mxu0 0.0
    %482 = vmatpush2.msra.mxu0 0.0
    %483 = vmatprep.subr.mxu0 0.0
    %484 = vmatpush2.msra.mxu0 0.0
    %485 = vmatprep.subr.mxu0 0.0
    %486 = vmatpush2.msra.mxu0 0.0
    %487 = vmatprep.subr.mxu0 0.0
    %488 = vmatpush2.msra.mxu0 0.0
    %489 = vmatprep.subr.mxu0 0.0
    %490 = vmatpush2.msra.mxu0 0.0
    %491 = vmatprep.subr.mxu0 0.0
    %492 = vmatpush2.msra.mxu0 0.0
    %493 = vmatprep.subr.mxu0 0.0
    %494 = vmatpush2.msra.mxu0 0.0
    %495 = vmatprep.subr.mxu0 0.0
    %496 = vmatpush2.msra.mxu0 0.0
    %497 = vmatprep.mubr.f32.mxu0 0.0
    %498 = vmatmul.mubr.f32.gmra.mxu0 %v426
    %v499 = vpop.f32.mrf.mxu0
    %v500 = vadd.f32 0.0, %v499
    %v501 = vpop.f32.mrf.mxu0
    %502 = vmatprep.mubr.f32.mxu0 0.0
    %503 = vmatmul.mubr.f32.gmra.mxu0 %v428
    %v504 = vpop.f32.mrf.mxu0
    %v505 = vadd.f32 0.0, %v504
    %v506 = vpop.f32.mrf.mxu0
    %507 = vdwg.mxu0
    %v508 = vadd.f32 %v415, %v500
    %v509 = vadd.f32 %v416, %v505
    %s510 = scalar_lea.vmem %s4, 32
    %v511 = vld [vmem:[%s510] sm:$0xff]
    %v512 = vld [vmem:[%s510 + $0x8] sm:$0xff]
    %v513 = vld [vmem:[%s510 + $0x10] sm:$0xff]
    %v514 = vld [vmem:[%s510 + $0x18] sm:$0xf]
    %s515 = scalar_lea.vmem %s4, 96
    %v516 = vld [vmem:[%s515] sm:$0xff]
    %v517 = vld [vmem:[%s515 + $0x8] sm:$0xff]
    %v518 = vld [vmem:[%s515 + $0x10] sm:$0xff]
    %v519 = vld [vmem:[%s515 + $0x18] sm:$0xf]
    %v521 = vsel %vm72, %v519, 0
    %523 = vmatprep.subr.mxu0 0.0
    %524 = vmatpush1.msra.mxu0 0.0
    %525 = vmatprep.subr.mxu0 0.0
    %526 = vmatpush1.msra.mxu0 0.0
    %527 = vmatprep.subr.mxu0 0.0
    %528 = vmatpush1.msra.mxu0 0.0
    %529 = vmatprep.subr.mxu0 0.0
    %530 = vmatpush1.msra.mxu0 0.0
    %531 = vmatprep.subr.mxu0 0.0
    %532 = vmatpush1.msra.mxu0 0.0
    %533 = vmatprep.subr.mxu0 0.0
    %534 = vmatpush1.msra.mxu0 0.0
    %535 = vmatprep.subr.mxu0 0.0
    %536 = vmatpush1.msra.mxu0 0.0
    %537 = vmatprep.subr.mxu0 0.0
    %538 = vmatpush1.msra.mxu0 0.0
    %539 = vmatprep.subr.mxu0 0.0
    %540 = vmatpush1.msra.mxu0 0.0
    %541 = vmatprep.subr.mxu0 0.0
    %542 = vmatpush1.msra.mxu0 0.0
    %543 = vmatprep.subr.mxu0 0.0
    %544 = vmatpush1.msra.mxu0 0.0
    %545 = vmatprep.subr.mxu0 0.0
    %546 = vmatpush1.msra.mxu0 0.0
    %547 = vmatprep.subr.mxu0 0.0
    %548 = vmatpush1.msra.mxu0 %v521
    %549 = vmatprep.subr.mxu0 0.0
    %550 = vmatpush1.msra.mxu0 %v518
    %551 = vmatprep.subr.mxu0 0.0
    %552 = vmatpush1.msra.mxu0 %v517
    %553 = vmatprep.subr.mxu0 0.0
    %554 = vmatpush1.msra.mxu0 %v516
    %555 = vmatprep.subr.mxu0 0.0
    %556 = vmatpush2.msra.mxu0 0.0
    %557 = vmatprep.subr.mxu0 0.0
    %558 = vmatpush2.msra.mxu0 0.0
    %559 = vmatprep.subr.mxu0 0.0
    %560 = vmatpush2.msra.mxu0 0.0
    %561 = vmatprep.subr.mxu0 0.0
    %562 = vmatpush2.msra.mxu0 0.0
    %563 = vmatprep.subr.mxu0 0.0
    %564 = vmatpush2.msra.mxu0 0.0
    %565 = vmatprep.subr.mxu0 0.0
    %566 = vmatpush2.msra.mxu0 0.0
    %567 = vmatprep.subr.mxu0 0.0
    %568 = vmatpush2.msra.mxu0 0.0
    %569 = vmatprep.subr.mxu0 0.0
    %570 = vmatpush2.msra.mxu0 0.0
    %571 = vmatprep.subr.mxu0 0.0
    %572 = vmatpush2.msra.mxu0 0.0
    %573 = vmatprep.subr.mxu0 0.0
    %574 = vmatpush2.msra.mxu0 0.0
    %575 = vmatprep.subr.mxu0 0.0
    %576 = vmatpush2.msra.mxu0 0.0
    %577 = vmatprep.subr.mxu0 0.0
    %578 = vmatpush2.msra.mxu0 0.0
    %579 = vmatprep.subr.mxu0 0.0
    %580 = vmatpush2.msra.mxu0 0.0
    %581 = vmatprep.subr.mxu0 0.0
    %582 = vmatpush2.msra.mxu0 0.0
    %583 = vmatprep.subr.mxu0 0.0
    %584 = vmatpush2.msra.mxu0 0.0
    %585 = vmatprep.subr.mxu0 0.0
    %586 = vmatpush2.msra.mxu0 0.0
    %587 = vmatprep.mubr.f32.mxu0 0.0
    %588 = vmatmul.mubr.f32.gmra.mxu0 %v67
    %v589 = vpop.f32.mrf.mxu0
    %v590 = vadd.f32 0.0, %v589
    %v591 = vpop.f32.mrf.mxu0
    %592 = vmatprep.mubr.f32.mxu0 0.0
    %593 = vmatmul.mubr.f32.gmra.mxu0 %v70
    %v594 = vpop.f32.mrf.mxu0
    %v595 = vadd.f32 0.0, %v594
    %v596 = vpop.f32.mrf.mxu0
    %597 = vdwg.mxu0
    %v599 = vsel %vm72, %v514, 0
    %601 = vmatprep.subr.mxu0 0.0
    %602 = vmatpush1.msra.mxu0 0.0
    %603 = vmatprep.subr.mxu0 0.0
    %604 = vmatpush1.msra.mxu0 0.0
    %605 = vmatprep.subr.mxu0 0.0
    %606 = vmatpush1.msra.mxu0 0.0
    %607 = vmatprep.subr.mxu0 0.0
    %608 = vmatpush1.msra.mxu0 0.0
    %609 = vmatprep.subr.mxu0 0.0
    %610 = vmatpush1.msra.mxu0 0.0
    %611 = vmatprep.subr.mxu0 0.0
    %612 = vmatpush1.msra.mxu0 0.0
    %613 = vmatprep.subr.mxu0 0.0
    %614 = vmatpush1.msra.mxu0 0.0
    %615 = vmatprep.subr.mxu0 0.0
    %616 = vmatpush1.msra.mxu0 0.0
    %617 = vmatprep.subr.mxu0 0.0
    %618 = vmatpush1.msra.mxu0 0.0
    %619 = vmatprep.subr.mxu0 0.0
    %620 = vmatpush1.msra.mxu0 0.0
    %621 = vmatprep.subr.mxu0 0.0
    %622 = vmatpush1.msra.mxu0 0.0
    %623 = vmatprep.subr.mxu0 0.0
    %624 = vmatpush1.msra.mxu0 0.0
    %625 = vmatprep.subr.mxu0 0.0
    %626 = vmatpush1.msra.mxu0 %v599
    %627 = vmatprep.subr.mxu0 0.0
    %628 = vmatpush1.msra.mxu0 %v513
    %629 = vmatprep.subr.mxu0 0.0
    %630 = vmatpush1.msra.mxu0 %v512
    %631 = vmatprep.subr.mxu0 0.0
    %632 = vmatpush1.msra.mxu0 %v511
    %633 = vmatprep.subr.mxu0 0.0
    %634 = vmatpush2.msra.mxu0 0.0
    %635 = vmatprep.subr.mxu0 0.0
    %636 = vmatpush2.msra.mxu0 0.0
    %637 = vmatprep.subr.mxu0 0.0
    %638 = vmatpush2.msra.mxu0 0.0
    %639 = vmatprep.subr.mxu0 0.0
    %640 = vmatpush2.msra.mxu0 0.0
    %641 = vmatprep.subr.mxu0 0.0
    %642 = vmatpush2.msra.mxu0 0.0
    %643 = vmatprep.subr.mxu0 0.0
    %644 = vmatpush2.msra.mxu0 0.0
    %645 = vmatprep.subr.mxu0 0.0
    %646 = vmatpush2.msra.mxu0 0.0
    %647 = vmatprep.subr.mxu0 0.0
    %648 = vmatpush2.msra.mxu0 0.0
    %649 = vmatprep.subr.mxu0 0.0
    %650 = vmatpush2.msra.mxu0 0.0
    %651 = vmatprep.subr.mxu0 0.0
    %652 = vmatpush2.msra.mxu0 0.0
    %653 = vmatprep.subr.mxu0 0.0
    %654 = vmatpush2.msra.mxu0 0.0
    %655 = vmatprep.subr.mxu0 0.0
    %656 = vmatpush2.msra.mxu0 0.0
    %657 = vmatprep.subr.mxu0 0.0
    %658 = vmatpush2.msra.mxu0 0.0
    %659 = vmatprep.subr.mxu0 0.0
    %660 = vmatpush2.msra.mxu0 0.0
    %661 = vmatprep.subr.mxu0 0.0
    %662 = vmatpush2.msra.mxu0 0.0
    %663 = vmatprep.subr.mxu0 0.0
    %664 = vmatpush2.msra.mxu0 0.0
    %665 = vmatprep.mubr.f32.mxu0 0.0
    %666 = vmatmul.mubr.f32.gmra.mxu0 %v152
    %v667 = vpop.f32.mrf.mxu0
    %v668 = vadd.f32 %v590, %v667
    %v669 = vpop.f32.mrf.mxu0
    %670 = vmatprep.mubr.f32.mxu0 0.0
    %671 = vmatmul.mubr.f32.gmra.mxu0 %v155
    %v672 = vpop.f32.mrf.mxu0
    %v673 = vadd.f32 %v595, %v672
    %v674 = vpop.f32.mrf.mxu0
    %675 = vdwg.mxu0
    %s676 = scalar_lea.vmem %s4, 160
    %v677 = vld [vmem:[%s676] sm:$0xff]
    %v678 = vld [vmem:[%s676 + $0x8] sm:$0xff]
    %v679 = vld [vmem:[%s676 + $0x10] sm:$0xff]
    %v680 = vld [vmem:[%s676 + $0x18] sm:$0xf]
    %v682 = vsel %vm72, %v680, 0
    %684 = vmatprep.subr.mxu0 0.0
    %685 = vmatpush1.msra.mxu0 0.0
    %686 = vmatprep.subr.mxu0 0.0
    %687 = vmatpush1.msra.mxu0 0.0
    %688 = vmatprep.subr.mxu0 0.0
    %689 = vmatpush1.msra.mxu0 0.0
    %690 = vmatprep.subr.mxu0 0.0
    %691 = vmatpush1.msra.mxu0 0.0
    %692 = vmatprep.subr.mxu0 0.0
    %693 = vmatpush1.msra.mxu0 0.0
    %694 = vmatprep.subr.mxu0 0.0
    %695 = vmatpush1.msra.mxu0 0.0
    %696 = vmatprep.subr.mxu0 0.0
    %697 = vmatpush1.msra.mxu0 0.0
    %698 = vmatprep.subr.mxu0 0.0
    %699 = vmatpush1.msra.mxu0 0.0
    %700 = vmatprep.subr.mxu0 0.0
    %701 = vmatpush1.msra.mxu0 0.0
    %702 = vmatprep.subr.mxu0 0.0
    %703 = vmatpush1.msra.mxu0 0.0
    %704 = vmatprep.subr.mxu0 0.0
    %705 = vmatpush1.msra.mxu0 0.0
    %706 = vmatprep.subr.mxu0 0.0
    %707 = vmatpush1.msra.mxu0 0.0
    %708 = vmatprep.subr.mxu0 0.0
    %709 = vmatpush1.msra.mxu0 %v682
    %710 = vmatprep.subr.mxu0 0.0
    %711 = vmatpush1.msra.mxu0 %v679
    %712 = vmatprep.subr.mxu0 0.0
    %713 = vmatpush1.msra.mxu0 %v678
    %714 = vmatprep.subr.mxu0 0.0
    %715 = vmatpush1.msra.mxu0 %v677
    %716 = vmatprep.subr.mxu0 0.0
    %717 = vmatpush2.msra.mxu0 0.0
    %718 = vmatprep.subr.mxu0 0.0
    %719 = vmatpush2.msra.mxu0 0.0
    %720 = vmatprep.subr.mxu0 0.0
    %721 = vmatpush2.msra.mxu0 0.0
    %722 = vmatprep.subr.mxu0 0.0
    %723 = vmatpush2.msra.mxu0 0.0
    %724 = vmatprep.subr.mxu0 0.0
    %725 = vmatpush2.msra.mxu0 0.0
    %726 = vmatprep.subr.mxu0 0.0
    %727 = vmatpush2.msra.mxu0 0.0
    %728 = vmatprep.subr.mxu0 0.0
    %729 = vmatpush2.msra.mxu0 0.0
    %730 = vmatprep.subr.mxu0 0.0
    %731 = vmatpush2.msra.mxu0 0.0
    %732 = vmatprep.subr.mxu0 0.0
    %733 = vmatpush2.msra.mxu0 0.0
    %734 = vmatprep.subr.mxu0 0.0
    %735 = vmatpush2.msra.mxu0 0.0
    %736 = vmatprep.subr.mxu0 0.0
    %737 = vmatpush2.msra.mxu0 0.0
    %738 = vmatprep.subr.mxu0 0.0
    %739 = vmatpush2.msra.mxu0 0.0
    %740 = vmatprep.subr.mxu0 0.0
    %741 = vmatpush2.msra.mxu0 0.0
    %742 = vmatprep.subr.mxu0 0.0
    %743 = vmatpush2.msra.mxu0 0.0
    %744 = vmatprep.subr.mxu0 0.0
    %745 = vmatpush2.msra.mxu0 0.0
    %746 = vmatprep.subr.mxu0 0.0
    %747 = vmatpush2.msra.mxu0 0.0
    %748 = vmatprep.mubr.f32.mxu0 0.0
    %749 = vmatmul.mubr.f32.gmra.mxu0 %v241
    %v750 = vpop.f32.mrf.mxu0
    %v751 = vadd.f32 0.0, %v750
    %v752 = vpop.f32.mrf.mxu0
    %753 = vmatprep.mubr.f32.mxu0 0.0
    %754 = vmatmul.mubr.f32.gmra.mxu0 %v244
    %v755 = vpop.f32.mrf.mxu0
    %v756 = vadd.f32 0.0, %v755
    %v757 = vpop.f32.mrf.mxu0
    %758 = vdwg.mxu0
    %v759 = vadd.f32 %v668, %v751
    %v760 = vadd.f32 %v673, %v756
    %s761 = scalar_lea.vmem %s4, 224
    %v762 = vld [vmem:[%s761] sm:$0xff]
    %v763 = vld [vmem:[%s761 + $0x8] sm:$0xff]
    %v764 = vld [vmem:[%s761 + $0x10] sm:$0xff]
    %v765 = vld [vmem:[%s761 + $0x18] sm:$0xf]
    %v767 = vsel %vm72, %v765, 0
    %769 = vmatprep.subr.mxu0 0.0
    %770 = vmatpush1.msra.mxu0 0.0
    %771 = vmatprep.subr.mxu0 0.0
    %772 = vmatpush1.msra.mxu0 0.0
    %773 = vmatprep.subr.mxu0 0.0
    %774 = vmatpush1.msra.mxu0 0.0
    %775 = vmatprep.subr.mxu0 0.0
    %776 = vmatpush1.msra.mxu0 0.0
    %777 = vmatprep.subr.mxu0 0.0
    %778 = vmatpush1.msra.mxu0 0.0
    %779 = vmatprep.subr.mxu0 0.0
    %780 = vmatpush1.msra.mxu0 0.0
    %781 = vmatprep.subr.mxu0 0.0
    %782 = vmatpush1.msra.mxu0 0.0
    %783 = vmatprep.subr.mxu0 0.0
    %784 = vmatpush1.msra.mxu0 0.0
    %785 = vmatprep.subr.mxu0 0.0
    %786 = vmatpush1.msra.mxu0 0.0
    %787 = vmatprep.subr.mxu0 0.0
    %788 = vmatpush1.msra.mxu0 0.0
    %789 = vmatprep.subr.mxu0 0.0
    %790 = vmatpush1.msra.mxu0 0.0
    %791 = vmatprep.subr.mxu0 0.0
    %792 = vmatpush1.msra.mxu0 0.0
    %793 = vmatprep.subr.mxu0 0.0
    %794 = vmatpush1.msra.mxu0 %v767
    %795 = vmatprep.subr.mxu0 0.0
    %796 = vmatpush1.msra.mxu0 %v764
    %797 = vmatprep.subr.mxu0 0.0
    %798 = vmatpush1.msra.mxu0 %v763
    %799 = vmatprep.subr.mxu0 0.0
    %800 = vmatpush1.msra.mxu0 %v762
    %801 = vmatprep.subr.mxu0 0.0
    %802 = vmatpush2.msra.mxu0 0.0
    %803 = vmatprep.subr.mxu0 0.0
    %804 = vmatpush2.msra.mxu0 0.0
    %805 = vmatprep.subr.mxu0 0.0
    %806 = vmatpush2.msra.mxu0 0.0
    %807 = vmatprep.subr.mxu0 0.0
    %808 = vmatpush2.msra.mxu0 0.0
    %809 = vmatprep.subr.mxu0 0.0
    %810 = vmatpush2.msra.mxu0 0.0
    %811 = vmatprep.subr.mxu0 0.0
    %812 = vmatpush2.msra.mxu0 0.0
    %813 = vmatprep.subr.mxu0 0.0
    %814 = vmatpush2.msra.mxu0 0.0
    %815 = vmatprep.subr.mxu0 0.0
    %816 = vmatpush2.msra.mxu0 0.0
    %817 = vmatprep.subr.mxu0 0.0
    %818 = vmatpush2.msra.mxu0 0.0
    %819 = vmatprep.subr.mxu0 0.0
    %820 = vmatpush2.msra.mxu0 0.0
    %821 = vmatprep.subr.mxu0 0.0
    %822 = vmatpush2.msra.mxu0 0.0
    %823 = vmatprep.subr.mxu0 0.0
    %824 = vmatpush2.msra.mxu0 0.0
    %825 = vmatprep.subr.mxu0 0.0
    %826 = vmatpush2.msra.mxu0 0.0
    %827 = vmatprep.subr.mxu0 0.0
    %828 = vmatpush2.msra.mxu0 0.0
    %829 = vmatprep.subr.mxu0 0.0
    %830 = vmatpush2.msra.mxu0 0.0
    %831 = vmatprep.subr.mxu0 0.0
    %832 = vmatpush2.msra.mxu0 0.0
    %833 = vmatprep.mubr.f32.mxu0 0.0
    %834 = vmatmul.mubr.f32.gmra.mxu0 %v332
    %v835 = vpop.f32.mrf.mxu0
    %v836 = vadd.f32 0.0, %v835
    %v837 = vpop.f32.mrf.mxu0
    %838 = vmatprep.mubr.f32.mxu0 0.0
    %839 = vmatmul.mubr.f32.gmra.mxu0 %v335
    %v840 = vpop.f32.mrf.mxu0
    %v841 = vadd.f32 0.0, %v840
    %v842 = vpop.f32.mrf.mxu0
    %843 = vdwg.mxu0
    %v844 = vadd.f32 %v759, %v836
    %v845 = vadd.f32 %v760, %v841
    %s846 = scalar_lea.vmem %s4, 288
    %v847 = vld [vmem:[%s846] sm:$0xff]
    %v848 = vld [vmem:[%s846 + $0x8] sm:$0xff]
    %v849 = vld [vmem:[%s846 + $0x10] sm:$0xff]
    %v850 = vld [vmem:[%s846 + $0x18] sm:$0xf]
    %v852 = vsel %vm72, %v850, 0
    %854 = vmatprep.subr.mxu0 0.0
    %855 = vmatpush1.msra.mxu0 0.0
    %856 = vmatprep.subr.mxu0 0.0
    %857 = vmatpush1.msra.mxu0 0.0
    %858 = vmatprep.subr.mxu0 0.0
    %859 = vmatpush1.msra.mxu0 0.0
    %860 = vmatprep.subr.mxu0 0.0
    %861 = vmatpush1.msra.mxu0 0.0
    %862 = vmatprep.subr.mxu0 0.0
    %863 = vmatpush1.msra.mxu0 0.0
    %864 = vmatprep.subr.mxu0 0.0
    %865 = vmatpush1.msra.mxu0 0.0
    %866 = vmatprep.subr.mxu0 0.0
    %867 = vmatpush1.msra.mxu0 0.0
    %868 = vmatprep.subr.mxu0 0.0
    %869 = vmatpush1.msra.mxu0 0.0
    %870 = vmatprep.subr.mxu0 0.0
    %871 = vmatpush1.msra.mxu0 0.0
    %872 = vmatprep.subr.mxu0 0.0
    %873 = vmatpush1.msra.mxu0 0.0
    %874 = vmatprep.subr.mxu0 0.0
    %875 = vmatpush1.msra.mxu0 0.0
    %876 = vmatprep.subr.mxu0 0.0
    %877 = vmatpush1.msra.mxu0 0.0
    %878 = vmatprep.subr.mxu0 0.0
    %879 = vmatpush1.msra.mxu0 %v852
    %880 = vmatprep.subr.mxu0 0.0
    %881 = vmatpush1.msra.mxu0 %v849
    %882 = vmatprep.subr.mxu0 0.0
    %883 = vmatpush1.msra.mxu0 %v848
    %884 = vmatprep.subr.mxu0 0.0
    %885 = vmatpush1.msra.mxu0 %v847
    %886 = vmatprep.subr.mxu0 0.0
    %887 = vmatpush2.msra.mxu0 0.0
    %888 = vmatprep.subr.mxu0 0.0
    %889 = vmatpush2.msra.mxu0 0.0
    %890 = vmatprep.subr.mxu0 0.0
    %891 = vmatpush2.msra.mxu0 0.0
    %892 = vmatprep.subr.mxu0 0.0
    %893 = vmatpush2.msra.mxu0 0.0
    %894 = vmatprep.subr.mxu0 0.0
    %895 = vmatpush2.msra.mxu0 0.0
    %896 = vmatprep.subr.mxu0 0.0
    %897 = vmatpush2.msra.mxu0 0.0
    %898 = vmatprep.subr.mxu0 0.0
    %899 = vmatpush2.msra.mxu0 0.0
    %900 = vmatprep.subr.mxu0 0.0
    %901 = vmatpush2.msra.mxu0 0.0
    %902 = vmatprep.subr.mxu0 0.0
    %903 = vmatpush2.msra.mxu0 0.0
    %904 = vmatprep.subr.mxu0 0.0
    %905 = vmatpush2.msra.mxu0 0.0
    %906 = vmatprep.subr.mxu0 0.0
    %907 = vmatpush2.msra.mxu0 0.0
    %908 = vmatprep.subr.mxu0 0.0
    %909 = vmatpush2.msra.mxu0 0.0
    %910 = vmatprep.subr.mxu0 0.0
    %911 = vmatpush2.msra.mxu0 0.0
    %912 = vmatprep.subr.mxu0 0.0
    %913 = vmatpush2.msra.mxu0 0.0
    %914 = vmatprep.subr.mxu0 0.0
    %915 = vmatpush2.msra.mxu0 0.0
    %916 = vmatprep.subr.mxu0 0.0
    %917 = vmatpush2.msra.mxu0 0.0
    %918 = vmatprep.mubr.f32.mxu0 0.0
    %919 = vmatmul.mubr.f32.gmra.mxu0 %v426
    %v920 = vpop.f32.mrf.mxu0
    %v921 = vadd.f32 0.0, %v920
    %v922 = vpop.f32.mrf.mxu0
    %923 = vmatprep.mubr.f32.mxu0 0.0
    %924 = vmatmul.mubr.f32.gmra.mxu0 %v428
    %v925 = vpop.f32.mrf.mxu0
    %v926 = vadd.f32 0.0, %v925
    %v927 = vpop.f32.mrf.mxu0
    %928 = vdwg.mxu0
    %v929 = vadd.f32 %v844, %v921
    %v930 = vadd.f32 %v845, %v926
    %931 = vmatprep.subr.mxu0 0.0
    %932 = vmatpush1.msra.mxu0 0.0
    %933 = vmatprep.subr.mxu0 0.0
    %934 = vmatpush1.msra.mxu0 0.0
    %935 = vmatprep.subr.mxu0 0.0
    %936 = vmatpush1.msra.mxu0 0.0
    %937 = vmatprep.subr.mxu0 0.0
    %938 = vmatpush1.msra.mxu0 0.0
    %939 = vmatprep.subr.mxu0 0.0
    %940 = vmatpush1.msra.mxu0 0.0
    %941 = vmatprep.subr.mxu0 0.0
    %942 = vmatpush1.msra.mxu0 0.0
    %943 = vmatprep.subr.mxu0 0.0
    %944 = vmatpush1.msra.mxu0 0.0
    %945 = vmatprep.subr.mxu0 0.0
    %946 = vmatpush1.msra.mxu0 0.0
    %947 = vmatprep.subr.mxu0 0.0
    %948 = vmatpush1.msra.mxu0 0.0
    %949 = vmatprep.subr.mxu0 0.0
    %950 = vmatpush1.msra.mxu0 0.0
    %951 = vmatprep.subr.mxu0 0.0
    %952 = vmatpush1.msra.mxu0 0.0
    %953 = vmatprep.subr.mxu0 0.0
    %954 = vmatpush1.msra.mxu0 0.0
    %955 = vmatprep.subr.mxu0 0.0
    %956 = vmatpush1.msra.mxu0 %v74
    %957 = vmatprep.subr.mxu0 0.0
    %958 = vmatpush1.msra.mxu0 %v63
    %959 = vmatprep.subr.mxu0 0.0
    %960 = vmatpush1.msra.mxu0 %v62
    %961 = vmatprep.subr.mxu0 0.0
    %962 = vmatpush1.msra.mxu0 %v61
    %963 = vmatprep.subr.mxu0 0.0
    %964 = vmatpush2.msra.mxu0 0.0
    %965 = vmatprep.subr.mxu0 0.0
    %966 = vmatpush2.msra.mxu0 0.0
    %967 = vmatprep.subr.mxu0 0.0
    %968 = vmatpush2.msra.mxu0 0.0
    %969 = vmatprep.subr.mxu0 0.0
    %970 = vmatpush2.msra.mxu0 0.0
    %971 = vmatprep.subr.mxu0 0.0
    %972 = vmatpush2.msra.mxu0 0.0
    %973 = vmatprep.subr.mxu0 0.0
    %974 = vmatpush2.msra.mxu0 0.0
    %975 = vmatprep.subr.mxu0 0.0
    %976 = vmatpush2.msra.mxu0 0.0
    %977 = vmatprep.subr.mxu0 0.0
    %978 = vmatpush2.msra.mxu0 0.0
    %979 = vmatprep.subr.mxu0 0.0
    %980 = vmatpush2.msra.mxu0 0.0
    %981 = vmatprep.subr.mxu0 0.0
    %982 = vmatpush2.msra.mxu0 0.0
    %983 = vmatprep.subr.mxu0 0.0
    %984 = vmatpush2.msra.mxu0 0.0
    %985 = vmatprep.subr.mxu0 0.0
    %986 = vmatpush2.msra.mxu0 0.0
    %987 = vmatprep.subr.mxu0 0.0
    %988 = vmatpush2.msra.mxu0 0.0
    %989 = vmatprep.subr.mxu0 0.0
    %990 = vmatpush2.msra.mxu0 0.0
    %991 = vmatprep.subr.mxu0 0.0
    %992 = vmatpush2.msra.mxu0 0.0
    %993 = vmatprep.subr.mxu0 0.0
    %994 = vmatpush2.msra.mxu0 0.0
    %995 = vmatprep.mubr.f32.mxu0 0.0
    %996 = vmatmul.mubr.f32.gmra.mxu0 %v241
    %v997 = vpop.f32.mrf.mxu0
    %v998 = vadd.f32 0.0, %v997
    %v999 = vpop.f32.mrf.mxu0
    %1000 = vmatprep.mubr.f32.mxu0 0.0
    %1001 = vmatmul.mubr.f32.gmra.mxu0 %v244
    %v1002 = vpop.f32.mrf.mxu0
    %v1003 = vadd.f32 0.0, %v1002
    %v1004 = vpop.f32.mrf.mxu0
    %1005 = vdwg.mxu0
    %1006 = vmatprep.subr.mxu0 0.0
    %1007 = vmatpush1.msra.mxu0 0.0
    %1008 = vmatprep.subr.mxu0 0.0
    %1009 = vmatpush1.msra.mxu0 0.0
    %1010 = vmatprep.subr.mxu0 0.0
    %1011 = vmatpush1.msra.mxu0 0.0
    %1012 = vmatprep.subr.mxu0 0.0
    %1013 = vmatpush1.msra.mxu0 0.0
    %1014 = vmatprep.subr.mxu0 0.0
    %1015 = vmatpush1.msra.mxu0 0.0
    %1016 = vmatprep.subr.mxu0 0.0
    %1017 = vmatpush1.msra.mxu0 0.0
    %1018 = vmatprep.subr.mxu0 0.0
    %1019 = vmatpush1.msra.mxu0 0.0
    %1020 = vmatprep.subr.mxu0 0.0
    %1021 = vmatpush1.msra.mxu0 0.0
    %1022 = vmatprep.subr.mxu0 0.0
    %1023 = vmatpush1.msra.mxu0 0.0
    %1024 = vmatprep.subr.mxu0 0.0
    %1025 = vmatpush1.msra.mxu0 0.0
    %1026 = vmatprep.subr.mxu0 0.0
    %1027 = vmatpush1.msra.mxu0 0.0
    %1028 = vmatprep.subr.mxu0 0.0
    %1029 = vmatpush1.msra.mxu0 0.0
    %1030 = vmatprep.subr.mxu0 0.0
    %1031 = vmatpush1.msra.mxu0 %v158
    %1032 = vmatprep.subr.mxu0 0.0
    %1033 = vmatpush1.msra.mxu0 %v58
    %1034 = vmatprep.subr.mxu0 0.0
    %1035 = vmatpush1.msra.mxu0 %v57
    %1036 = vmatprep.subr.mxu0 0.0
    %1037 = vmatpush1.msra.mxu0 %v56
    %1038 = vmatprep.subr.mxu0 0.0
    %1039 = vmatpush2.msra.mxu0 0.0
    %1040 = vmatprep.subr.mxu0 0.0
    %1041 = vmatpush2.msra.mxu0 0.0
    %1042 = vmatprep.subr.mxu0 0.0
    %1043 = vmatpush2.msra.mxu0 0.0
    %1044 = vmatprep.subr.mxu0 0.0
    %1045 = vmatpush2.msra.mxu0 0.0
    %1046 = vmatprep.subr.mxu0 0.0
    %1047 = vmatpush2.msra.mxu0 0.0
    %1048 = vmatprep.subr.mxu0 0.0
    %1049 = vmatpush2.msra.mxu0 0.0
    %1050 = vmatprep.subr.mxu0 0.0
    %1051 = vmatpush2.msra.mxu0 0.0
    %1052 = vmatprep.subr.mxu0 0.0
    %1053 = vmatpush2.msra.mxu0 0.0
    %1054 = vmatprep.subr.mxu0 0.0
    %1055 = vmatpush2.msra.mxu0 0.0
    %1056 = vmatprep.subr.mxu0 0.0
    %1057 = vmatpush2.msra.mxu0 0.0
    %1058 = vmatprep.subr.mxu0 0.0
    %1059 = vmatpush2.msra.mxu0 0.0
    %1060 = vmatprep.subr.mxu0 0.0
    %1061 = vmatpush2.msra.mxu0 0.0
    %1062 = vmatprep.subr.mxu0 0.0
    %1063 = vmatpush2.msra.mxu0 0.0
    %1064 = vmatprep.subr.mxu0 0.0
    %1065 = vmatpush2.msra.mxu0 0.0
    %1066 = vmatprep.subr.mxu0 0.0
    %1067 = vmatpush2.msra.mxu0 0.0
    %1068 = vmatprep.subr.mxu0 0.0
    %1069 = vmatpush2.msra.mxu0 0.0
    %1070 = vmatprep.mubr.f32.mxu0 0.0
    %1071 = vmatmul.mubr.f32.gmra.mxu0 %v67
    %v1072 = vpop.f32.mrf.mxu0
    %v1073 = vadd.f32 %v998, %v1072
    %v1074 = vpop.f32.mrf.mxu0
    %1075 = vmatprep.mubr.f32.mxu0 0.0
    %1076 = vmatmul.mubr.f32.gmra.mxu0 %v70
    %v1077 = vpop.f32.mrf.mxu0
    %v1078 = vadd.f32 %v1003, %v1077
    %v1079 = vpop.f32.mrf.mxu0
    %1080 = vdwg.mxu0
    %1081 = vmatprep.subr.mxu0 0.0
    %1082 = vmatpush1.msra.mxu0 0.0
    %1083 = vmatprep.subr.mxu0 0.0
    %1084 = vmatpush1.msra.mxu0 0.0
    %1085 = vmatprep.subr.mxu0 0.0
    %1086 = vmatpush1.msra.mxu0 0.0
    %1087 = vmatprep.subr.mxu0 0.0
    %1088 = vmatpush1.msra.mxu0 0.0
    %1089 = vmatprep.subr.mxu0 0.0
    %1090 = vmatpush1.msra.mxu0 0.0
    %1091 = vmatprep.subr.mxu0 0.0
    %1092 = vmatpush1.msra.mxu0 0.0
    %1093 = vmatprep.subr.mxu0 0.0
    %1094 = vmatpush1.msra.mxu0 0.0
    %1095 = vmatprep.subr.mxu0 0.0
    %1096 = vmatpush1.msra.mxu0 0.0
    %1097 = vmatprep.subr.mxu0 0.0
    %1098 = vmatpush1.msra.mxu0 0.0
    %1099 = vmatprep.subr.mxu0 0.0
    %1100 = vmatpush1.msra.mxu0 0.0
    %1101 = vmatprep.subr.mxu0 0.0
    %1102 = vmatpush1.msra.mxu0 0.0
    %1103 = vmatprep.subr.mxu0 0.0
    %1104 = vmatpush1.msra.mxu0 0.0
    %1105 = vmatprep.subr.mxu0 0.0
    %1106 = vmatpush1.msra.mxu0 %v247
    %1107 = vmatprep.subr.mxu0 0.0
    %1108 = vmatpush1.msra.mxu0 %v238
    %1109 = vmatprep.subr.mxu0 0.0
    %1110 = vmatpush1.msra.mxu0 %v237
    %1111 = vmatprep.subr.mxu0 0.0
    %1112 = vmatpush1.msra.mxu0 %v236
    %1113 = vmatprep.subr.mxu0 0.0
    %1114 = vmatpush2.msra.mxu0 0.0
    %1115 = vmatprep.subr.mxu0 0.0
    %1116 = vmatpush2.msra.mxu0 0.0
    %1117 = vmatprep.subr.mxu0 0.0
    %1118 = vmatpush2.msra.mxu0 0.0
    %1119 = vmatprep.subr.mxu0 0.0
    %1120 = vmatpush2.msra.mxu0 0.0
    %1121 = vmatprep.subr.mxu0 0.0
    %1122 = vmatpush2.msra.mxu0 0.0
    %1123 = vmatprep.subr.mxu0 0.0
    %1124 = vmatpush2.msra.mxu0 0.0
    %1125 = vmatprep.subr.mxu0 0.0
    %1126 = vmatpush2.msra.mxu0 0.0
    %1127 = vmatprep.subr.mxu0 0.0
    %1128 = vmatpush2.msra.mxu0 0.0
    %1129 = vmatprep.subr.mxu0 0.0
    %1130 = vmatpush2.msra.mxu0 0.0
    %1131 = vmatprep.subr.mxu0 0.0
    %1132 = vmatpush2.msra.mxu0 0.0
    %1133 = vmatprep.subr.mxu0 0.0
    %1134 = vmatpush2.msra.mxu0 0.0
    %1135 = vmatprep.subr.mxu0 0.0
    %1136 = vmatpush2.msra.mxu0 0.0
    %1137 = vmatprep.subr.mxu0 0.0
    %1138 = vmatpush2.msra.mxu0 0.0
    %1139 = vmatprep.subr.mxu0 0.0
    %1140 = vmatpush2.msra.mxu0 0.0
    %1141 = vmatprep.subr.mxu0 0.0
    %1142 = vmatpush2.msra.mxu0 0.0
    %1143 = vmatprep.subr.mxu0 0.0
    %1144 = vmatpush2.msra.mxu0 0.0
    %1145 = vmatprep.mubr.f32.mxu0 0.0
    %1146 = vmatmul.mubr.f32.gmra.mxu0 %v332
    %v1147 = vpop.f32.mrf.mxu0
    %v1148 = vadd.f32 0.0, %v1147
    %v1149 = vpop.f32.mrf.mxu0
    %1150 = vmatprep.mubr.f32.mxu0 0.0
    %1151 = vmatmul.mubr.f32.gmra.mxu0 %v335
    %v1152 = vpop.f32.mrf.mxu0
    %v1153 = vadd.f32 0.0, %v1152
    %v1154 = vpop.f32.mrf.mxu0
    %1155 = vdwg.mxu0
    %v1156 = vadd.f32 %v1073, %v1148
    %v1157 = vadd.f32 %v1078, %v1153
    %1158 = vmatprep.subr.mxu0 0.0
    %1159 = vmatpush1.msra.mxu0 0.0
    %1160 = vmatprep.subr.mxu0 0.0
    %1161 = vmatpush1.msra.mxu0 0.0
    %1162 = vmatprep.subr.mxu0 0.0
    %1163 = vmatpush1.msra.mxu0 0.0
    %1164 = vmatprep.subr.mxu0 0.0
    %1165 = vmatpush1.msra.mxu0 0.0
    %1166 = vmatprep.subr.mxu0 0.0
    %1167 = vmatpush1.msra.mxu0 0.0
    %1168 = vmatprep.subr.mxu0 0.0
    %1169 = vmatpush1.msra.mxu0 0.0
    %1170 = vmatprep.subr.mxu0 0.0
    %1171 = vmatpush1.msra.mxu0 0.0
    %1172 = vmatprep.subr.mxu0 0.0
    %1173 = vmatpush1.msra.mxu0 0.0
    %1174 = vmatprep.subr.mxu0 0.0
    %1175 = vmatpush1.msra.mxu0 0.0
    %1176 = vmatprep.subr.mxu0 0.0
    %1177 = vmatpush1.msra.mxu0 0.0
    %1178 = vmatprep.subr.mxu0 0.0
    %1179 = vmatpush1.msra.mxu0 0.0
    %1180 = vmatprep.subr.mxu0 0.0
    %1181 = vmatpush1.msra.mxu0 0.0
    %1182 = vmatprep.subr.mxu0 0.0
    %1183 = vmatpush1.msra.mxu0 %v338
    %1184 = vmatprep.subr.mxu0 0.0
    %1185 = vmatpush1.msra.mxu0 %v329
    %1186 = vmatprep.subr.mxu0 0.0
    %1187 = vmatpush1.msra.mxu0 %v328
    %1188 = vmatprep.subr.mxu0 0.0
    %1189 = vmatpush1.msra.mxu0 %v327
    %1190 = vmatprep.subr.mxu0 0.0
    %1191 = vmatpush2.msra.mxu0 0.0
    %1192 = vmatprep.subr.mxu0 0.0
    %1193 = vmatpush2.msra.mxu0 0.0
    %1194 = vmatprep.subr.mxu0 0.0
    %1195 = vmatpush2.msra.mxu0 0.0
    %1196 = vmatprep.subr.mxu0 0.0
    %1197 = vmatpush2.msra.mxu0 0.0
    %1198 = vmatprep.subr.mxu0 0.0
    %1199 = vmatpush2.msra.mxu0 0.0
    %1200 = vmatprep.subr.mxu0 0.0
    %1201 = vmatpush2.msra.mxu0 0.0
    %1202 = vmatprep.subr.mxu0 0.0
    %1203 = vmatpush2.msra.mxu0 0.0
    %1204 = vmatprep.subr.mxu0 0.0
    %1205 = vmatpush2.msra.mxu0 0.0
    %1206 = vmatprep.subr.mxu0 0.0
    %1207 = vmatpush2.msra.mxu0 0.0
    %1208 = vmatprep.subr.mxu0 0.0
    %1209 = vmatpush2.msra.mxu0 0.0
    %1210 = vmatprep.subr.mxu0 0.0
    %1211 = vmatpush2.msra.mxu0 0.0
    %1212 = vmatprep.subr.mxu0 0.0
    %1213 = vmatpush2.msra.mxu0 0.0
    %1214 = vmatprep.subr.mxu0 0.0
    %1215 = vmatpush2.msra.mxu0 0.0
    %1216 = vmatprep.subr.mxu0 0.0
    %1217 = vmatpush2.msra.mxu0 0.0
    %1218 = vmatprep.subr.mxu0 0.0
    %1219 = vmatpush2.msra.mxu0 0.0
    %1220 = vmatprep.subr.mxu0 0.0
    %1221 = vmatpush2.msra.mxu0 0.0
    %1222 = vmatprep.mubr.f32.mxu0 0.0
    %1223 = vmatmul.mubr.f32.gmra.mxu0 %v426
    %v1224 = vpop.f32.mrf.mxu0
    %v1225 = vadd.f32 0.0, %v1224
    %v1226 = vpop.f32.mrf.mxu0
    %1227 = vmatprep.mubr.f32.mxu0 0.0
    %1228 = vmatmul.mubr.f32.gmra.mxu0 %v428
    %v1229 = vpop.f32.mrf.mxu0
    %v1230 = vadd.f32 0.0, %v1229
    %v1231 = vpop.f32.mrf.mxu0
    %1232 = vdwg.mxu0
    %v1233 = vadd.f32 %v1156, %v1225
    %v1234 = vadd.f32 %v1157, %v1230
    %v1235 = vrot.slane %v50, 2
    %v1236 = vrot.slane %v51, 2
    %v1237 = vsel %vm422, %v1235, %v1236
    %v1238 = vsel %vm65, %v1237, 0
    %v1240 = vsel %vm65, %v1236, 0
    %1242 = vmatprep.subr.mxu0 0.0
    %1243 = vmatpush1.msra.mxu0 0.0
    %1244 = vmatprep.subr.mxu0 0.0
    %1245 = vmatpush1.msra.mxu0 0.0
    %1246 = vmatprep.subr.mxu0 0.0
    %1247 = vmatpush1.msra.mxu0 0.0
    %1248 = vmatprep.subr.mxu0 0.0
    %1249 = vmatpush1.msra.mxu0 0.0
    %1250 = vmatprep.subr.mxu0 0.0
    %1251 = vmatpush1.msra.mxu0 0.0
    %1252 = vmatprep.subr.mxu0 0.0
    %1253 = vmatpush1.msra.mxu0 0.0
    %1254 = vmatprep.subr.mxu0 0.0
    %1255 = vmatpush1.msra.mxu0 0.0
    %1256 = vmatprep.subr.mxu0 0.0
    %1257 = vmatpush1.msra.mxu0 0.0
    %1258 = vmatprep.subr.mxu0 0.0
    %1259 = vmatpush1.msra.mxu0 0.0
    %1260 = vmatprep.subr.mxu0 0.0
    %1261 = vmatpush1.msra.mxu0 0.0
    %1262 = vmatprep.subr.mxu0 0.0
    %1263 = vmatpush1.msra.mxu0 0.0
    %1264 = vmatprep.subr.mxu0 0.0
    %1265 = vmatpush1.msra.mxu0 0.0
    %1266 = vmatprep.subr.mxu0 0.0
    %1267 = vmatpush1.msra.mxu0 %v431
    %1268 = vmatprep.subr.mxu0 0.0
    %1269 = vmatpush1.msra.mxu0 %v420
    %1270 = vmatprep.subr.mxu0 0.0
    %1271 = vmatpush1.msra.mxu0 %v419
    %1272 = vmatprep.subr.mxu0 0.0
    %1273 = vmatpush1.msra.mxu0 %v418
    %1274 = vmatprep.subr.mxu0 0.0
    %1275 = vmatpush2.msra.mxu0 0.0
    %1276 = vmatprep.subr.mxu0 0.0
    %1277 = vmatpush2.msra.mxu0 0.0
    %1278 = vmatprep.subr.mxu0 0.0
    %1279 = vmatpush2.msra.mxu0 0.0
    %1280 = vmatprep.subr.mxu0 0.0
    %1281 = vmatpush2.msra.mxu0 0.0
    %1282 = vmatprep.subr.mxu0 0.0
    %1283 = vmatpush2.msra.mxu0 0.0
    %1284 = vmatprep.subr.mxu0 0.0
    %1285 = vmatpush2.msra.mxu0 0.0
    %1286 = vmatprep.subr.mxu0 0.0
    %1287 = vmatpush2.msra.mxu0 0.0
    %1288 = vmatprep.subr.mxu0 0.0
    %1289 = vmatpush2.msra.mxu0 0.0
    %1290 = vmatprep.subr.mxu0 0.0
    %1291 = vmatpush2.msra.mxu0 0.0
    %1292 = vmatprep.subr.mxu0 0.0
    %1293 = vmatpush2.msra.mxu0 0.0
    %1294 = vmatprep.subr.mxu0 0.0
    %1295 = vmatpush2.msra.mxu0 0.0
    %1296 = vmatprep.subr.mxu0 0.0
    %1297 = vmatpush2.msra.mxu0 0.0
    %1298 = vmatprep.subr.mxu0 0.0
    %1299 = vmatpush2.msra.mxu0 0.0
    %1300 = vmatprep.subr.mxu0 0.0
    %1301 = vmatpush2.msra.mxu0 0.0
    %1302 = vmatprep.subr.mxu0 0.0
    %1303 = vmatpush2.msra.mxu0 0.0
    %1304 = vmatprep.subr.mxu0 0.0
    %1305 = vmatpush2.msra.mxu0 0.0
    %1306 = vmatprep.mubr.f32.mxu0 0.0
    %1307 = vmatmul.mubr.f32.gmra.mxu0 %v1238
    %v1308 = vpop.f32.mrf.mxu0
    %v1309 = vadd.f32 0.0, %v1308
    %v1310 = vpop.f32.mrf.mxu0
    %1311 = vmatprep.mubr.f32.mxu0 0.0
    %1312 = vmatmul.mubr.f32.gmra.mxu0 %v1240
    %v1313 = vpop.f32.mrf.mxu0
    %v1314 = vadd.f32 0.0, %v1313
    %v1315 = vpop.f32.mrf.mxu0
    %1316 = vdwg.mxu0
    %v1317 = vadd.f32 %v1233, %v1309
    %v1318 = vadd.f32 %v1234, %v1314
    %1319 = vmatprep.subr.mxu0 0.0
    %1320 = vmatpush1.msra.mxu0 0.0
    %1321 = vmatprep.subr.mxu0 0.0
    %1322 = vmatpush1.msra.mxu0 0.0
    %1323 = vmatprep.subr.mxu0 0.0
    %1324 = vmatpush1.msra.mxu0 0.0
    %1325 = vmatprep.subr.mxu0 0.0
    %1326 = vmatpush1.msra.mxu0 0.0
    %1327 = vmatprep.subr.mxu0 0.0
    %1328 = vmatpush1.msra.mxu0 0.0
    %1329 = vmatprep.subr.mxu0 0.0
    %1330 = vmatpush1.msra.mxu0 0.0
    %1331 = vmatprep.subr.mxu0 0.0
    %1332 = vmatpush1.msra.mxu0 0.0
    %1333 = vmatprep.subr.mxu0 0.0
    %1334 = vmatpush1.msra.mxu0 0.0
    %1335 = vmatprep.subr.mxu0 0.0
    %1336 = vmatpush1.msra.mxu0 0.0
    %1337 = vmatprep.subr.mxu0 0.0
    %1338 = vmatpush1.msra.mxu0 0.0
    %1339 = vmatprep.subr.mxu0 0.0
    %1340 = vmatpush1.msra.mxu0 0.0
    %1341 = vmatprep.subr.mxu0 0.0
    %1342 = vmatpush1.msra.mxu0 0.0
    %1343 = vmatprep.subr.mxu0 0.0
    %1344 = vmatpush1.msra.mxu0 %v521
    %1345 = vmatprep.subr.mxu0 0.0
    %1346 = vmatpush1.msra.mxu0 %v518
    %1347 = vmatprep.subr.mxu0 0.0
    %1348 = vmatpush1.msra.mxu0 %v517
    %1349 = vmatprep.subr.mxu0 0.0
    %1350 = vmatpush1.msra.mxu0 %v516
    %1351 = vmatprep.subr.mxu0 0.0
    %1352 = vmatpush2.msra.mxu0 0.0
    %1353 = vmatprep.subr.mxu0 0.0
    %1354 = vmatpush2.msra.mxu0 0.0
    %1355 = vmatprep.subr.mxu0 0.0
    %1356 = vmatpush2.msra.mxu0 0.0
    %1357 = vmatprep.subr.mxu0 0.0
    %1358 = vmatpush2.msra.mxu0 0.0
    %1359 = vmatprep.subr.mxu0 0.0
    %1360 = vmatpush2.msra.mxu0 0.0
    %1361 = vmatprep.subr.mxu0 0.0
    %1362 = vmatpush2.msra.mxu0 0.0
    %1363 = vmatprep.subr.mxu0 0.0
    %1364 = vmatpush2.msra.mxu0 0.0
    %1365 = vmatprep.subr.mxu0 0.0
    %1366 = vmatpush2.msra.mxu0 0.0
    %1367 = vmatprep.subr.mxu0 0.0
    %1368 = vmatpush2.msra.mxu0 0.0
    %1369 = vmatprep.subr.mxu0 0.0
    %1370 = vmatpush2.msra.mxu0 0.0
    %1371 = vmatprep.subr.mxu0 0.0
    %1372 = vmatpush2.msra.mxu0 0.0
    %1373 = vmatprep.subr.mxu0 0.0
    %1374 = vmatpush2.msra.mxu0 0.0
    %1375 = vmatprep.subr.mxu0 0.0
    %1376 = vmatpush2.msra.mxu0 0.0
    %1377 = vmatprep.subr.mxu0 0.0
    %1378 = vmatpush2.msra.mxu0 0.0
    %1379 = vmatprep.subr.mxu0 0.0
    %1380 = vmatpush2.msra.mxu0 0.0
    %1381 = vmatprep.subr.mxu0 0.0
    %1382 = vmatpush2.msra.mxu0 0.0
    %1383 = vmatprep.mubr.f32.mxu0 0.0
    %1384 = vmatmul.mubr.f32.gmra.mxu0 %v241
    %v1385 = vpop.f32.mrf.mxu0
    %v1386 = vadd.f32 0.0, %v1385
    %v1387 = vpop.f32.mrf.mxu0
    %1388 = vmatprep.mubr.f32.mxu0 0.0
    %1389 = vmatmul.mubr.f32.gmra.mxu0 %v244
    %v1390 = vpop.f32.mrf.mxu0
    %v1391 = vadd.f32 0.0, %v1390
    %v1392 = vpop.f32.mrf.mxu0
    %1393 = vdwg.mxu0
    %1394 = vmatprep.subr.mxu0 0.0
    %1395 = vmatpush1.msra.mxu0 0.0
    %1396 = vmatprep.subr.mxu0 0.0
    %1397 = vmatpush1.msra.mxu0 0.0
    %1398 = vmatprep.subr.mxu0 0.0
    %1399 = vmatpush1.msra.mxu0 0.0
    %1400 = vmatprep.subr.mxu0 0.0
    %1401 = vmatpush1.msra.mxu0 0.0
    %1402 = vmatprep.subr.mxu0 0.0
    %1403 = vmatpush1.msra.mxu0 0.0
    %1404 = vmatprep.subr.mxu0 0.0
    %1405 = vmatpush1.msra.mxu0 0.0
    %1406 = vmatprep.subr.mxu0 0.0
    %1407 = vmatpush1.msra.mxu0 0.0
    %1408 = vmatprep.subr.mxu0 0.0
    %1409 = vmatpush1.msra.mxu0 0.0
    %1410 = vmatprep.subr.mxu0 0.0
    %1411 = vmatpush1.msra.mxu0 0.0
    %1412 = vmatprep.subr.mxu0 0.0
    %1413 = vmatpush1.msra.mxu0 0.0
    %1414 = vmatprep.subr.mxu0 0.0
    %1415 = vmatpush1.msra.mxu0 0.0
    %1416 = vmatprep.subr.mxu0 0.0
    %1417 = vmatpush1.msra.mxu0 0.0
    %1418 = vmatprep.subr.mxu0 0.0
    %1419 = vmatpush1.msra.mxu0 %v599
    %1420 = vmatprep.subr.mxu0 0.0
    %1421 = vmatpush1.msra.mxu0 %v513
    %1422 = vmatprep.subr.mxu0 0.0
    %1423 = vmatpush1.msra.mxu0 %v512
    %1424 = vmatprep.subr.mxu0 0.0
    %1425 = vmatpush1.msra.mxu0 %v511
    %1426 = vmatprep.subr.mxu0 0.0
    %1427 = vmatpush2.msra.mxu0 0.0
    %1428 = vmatprep.subr.mxu0 0.0
    %1429 = vmatpush2.msra.mxu0 0.0
    %1430 = vmatprep.subr.mxu0 0.0
    %1431 = vmatpush2.msra.mxu0 0.0
    %1432 = vmatprep.subr.mxu0 0.0
    %1433 = vmatpush2.msra.mxu0 0.0
    %1434 = vmatprep.subr.mxu0 0.0
    %1435 = vmatpush2.msra.mxu0 0.0
    %1436 = vmatprep.subr.mxu0 0.0
    %1437 = vmatpush2.msra.mxu0 0.0
    %1438 = vmatprep.subr.mxu0 0.0
    %1439 = vmatpush2.msra.mxu0 0.0
    %1440 = vmatprep.subr.mxu0 0.0
    %1441 = vmatpush2.msra.mxu0 0.0
    %1442 = vmatprep.subr.mxu0 0.0
    %1443 = vmatpush2.msra.mxu0 0.0
    %1444 = vmatprep.subr.mxu0 0.0
    %1445 = vmatpush2.msra.mxu0 0.0
    %1446 = vmatprep.subr.mxu0 0.0
    %1447 = vmatpush2.msra.mxu0 0.0
    %1448 = vmatprep.subr.mxu0 0.0
    %1449 = vmatpush2.msra.mxu0 0.0
    %1450 = vmatprep.subr.mxu0 0.0
    %1451 = vmatpush2.msra.mxu0 0.0
    %1452 = vmatprep.subr.mxu0 0.0
    %1453 = vmatpush2.msra.mxu0 0.0
    %1454 = vmatprep.subr.mxu0 0.0
    %1455 = vmatpush2.msra.mxu0 0.0
    %1456 = vmatprep.subr.mxu0 0.0
    %1457 = vmatpush2.msra.mxu0 0.0
    %1458 = vmatprep.mubr.f32.mxu0 0.0
    %1459 = vmatmul.mubr.f32.gmra.mxu0 %v67
    %v1460 = vpop.f32.mrf.mxu0
    %v1461 = vadd.f32 %v1386, %v1460
    %v1462 = vpop.f32.mrf.mxu0
    %1463 = vmatprep.mubr.f32.mxu0 0.0
    %1464 = vmatmul.mubr.f32.gmra.mxu0 %v70
    %v1465 = vpop.f32.mrf.mxu0
    %v1466 = vadd.f32 %v1391, %v1465
    %v1467 = vpop.f32.mrf.mxu0
    %1468 = vdwg.mxu0
    %1469 = vmatprep.subr.mxu0 0.0
    %1470 = vmatpush1.msra.mxu0 0.0
    %1471 = vmatprep.subr.mxu0 0.0
    %1472 = vmatpush1.msra.mxu0 0.0
    %1473 = vmatprep.subr.mxu0 0.0
    %1474 = vmatpush1.msra.mxu0 0.0
    %1475 = vmatprep.subr.mxu0 0.0
    %1476 = vmatpush1.msra.mxu0 0.0
    %1477 = vmatprep.subr.mxu0 0.0
    %1478 = vmatpush1.msra.mxu0 0.0
    %1479 = vmatprep.subr.mxu0 0.0
    %1480 = vmatpush1.msra.mxu0 0.0
    %1481 = vmatprep.subr.mxu0 0.0
    %1482 = vmatpush1.msra.mxu0 0.0
    %1483 = vmatprep.subr.mxu0 0.0
    %1484 = vmatpush1.msra.mxu0 0.0
    %1485 = vmatprep.subr.mxu0 0.0
    %1486 = vmatpush1.msra.mxu0 0.0
    %1487 = vmatprep.subr.mxu0 0.0
    %1488 = vmatpush1.msra.mxu0 0.0
    %1489 = vmatprep.subr.mxu0 0.0
    %1490 = vmatpush1.msra.mxu0 0.0
    %1491 = vmatprep.subr.mxu0 0.0
    %1492 = vmatpush1.msra.mxu0 0.0
    %1493 = vmatprep.subr.mxu0 0.0
    %1494 = vmatpush1.msra.mxu0 %v682
    %1495 = vmatprep.subr.mxu0 0.0
    %1496 = vmatpush1.msra.mxu0 %v679
    %1497 = vmatprep.subr.mxu0 0.0
    %1498 = vmatpush1.msra.mxu0 %v678
    %1499 = vmatprep.subr.mxu0 0.0
    %1500 = vmatpush1.msra.mxu0 %v677
    %1501 = vmatprep.subr.mxu0 0.0
    %1502 = vmatpush2.msra.mxu0 0.0
    %1503 = vmatprep.subr.mxu0 0.0
    %1504 = vmatpush2.msra.mxu0 0.0
    %1505 = vmatprep.subr.mxu0 0.0
    %1506 = vmatpush2.msra.mxu0 0.0
    %1507 = vmatprep.subr.mxu0 0.0
    %1508 = vmatpush2.msra.mxu0 0.0
    %1509 = vmatprep.subr.mxu0 0.0
    %1510 = vmatpush2.msra.mxu0 0.0
    %1511 = vmatprep.subr.mxu0 0.0
    %1512 = vmatpush2.msra.mxu0 0.0
    %1513 = vmatprep.subr.mxu0 0.0
    %1514 = vmatpush2.msra.mxu0 0.0
    %1515 = vmatprep.subr.mxu0 0.0
    %1516 = vmatpush2.msra.mxu0 0.0
    %1517 = vmatprep.subr.mxu0 0.0
    %1518 = vmatpush2.msra.mxu0 0.0
    %1519 = vmatprep.subr.mxu0 0.0
    %1520 = vmatpush2.msra.mxu0 0.0
    %1521 = vmatprep.subr.mxu0 0.0
    %1522 = vmatpush2.msra.mxu0 0.0
    %1523 = vmatprep.subr.mxu0 0.0
    %1524 = vmatpush2.msra.mxu0 0.0
    %1525 = vmatprep.subr.mxu0 0.0
    %1526 = vmatpush2.msra.mxu0 0.0
    %1527 = vmatprep.subr.mxu0 0.0
    %1528 = vmatpush2.msra.mxu0 0.0
    %1529 = vmatprep.subr.mxu0 0.0
    %1530 = vmatpush2.msra.mxu0 0.0
    %1531 = vmatprep.subr.mxu0 0.0
    %1532 = vmatpush2.msra.mxu0 0.0
    %1533 = vmatprep.mubr.f32.mxu0 0.0
    %1534 = vmatmul.mubr.f32.gmra.mxu0 %v332
    %v1535 = vpop.f32.mrf.mxu0
    %v1536 = vadd.f32 0.0, %v1535
    %v1537 = vpop.f32.mrf.mxu0
    %1538 = vmatprep.mubr.f32.mxu0 0.0
    %1539 = vmatmul.mubr.f32.gmra.mxu0 %v335
    %v1540 = vpop.f32.mrf.mxu0
    %v1541 = vadd.f32 0.0, %v1540
    %v1542 = vpop.f32.mrf.mxu0
    %1543 = vdwg.mxu0
    %v1544 = vadd.f32 %v1461, %v1536
    %v1545 = vadd.f32 %v1466, %v1541
    %1546 = vmatprep.subr.mxu0 0.0
    %1547 = vmatpush1.msra.mxu0 0.0
    %1548 = vmatprep.subr.mxu0 0.0
    %1549 = vmatpush1.msra.mxu0 0.0
    %1550 = vmatprep.subr.mxu0 0.0
    %1551 = vmatpush1.msra.mxu0 0.0
    %1552 = vmatprep.subr.mxu0 0.0
    %1553 = vmatpush1.msra.mxu0 0.0
    %1554 = vmatprep.subr.mxu0 0.0
    %1555 = vmatpush1.msra.mxu0 0.0
    %1556 = vmatprep.subr.mxu0 0.0
    %1557 = vmatpush1.msra.mxu0 0.0
    %1558 = vmatprep.subr.mxu0 0.0
    %1559 = vmatpush1.msra.mxu0 0.0
    %1560 = vmatprep.subr.mxu0 0.0
    %1561 = vmatpush1.msra.mxu0 0.0
    %1562 = vmatprep.subr.mxu0 0.0
    %1563 = vmatpush1.msra.mxu0 0.0
    %1564 = vmatprep.subr.mxu0 0.0
    %1565 = vmatpush1.msra.mxu0 0.0
    %1566 = vmatprep.subr.mxu0 0.0
    %1567 = vmatpush1.msra.mxu0 0.0
    %1568 = vmatprep.subr.mxu0 0.0
    %1569 = vmatpush1.msra.mxu0 0.0
    %1570 = vmatprep.subr.mxu0 0.0
    %1571 = vmatpush1.msra.mxu0 %v767
    %1572 = vmatprep.subr.mxu0 0.0
    %1573 = vmatpush1.msra.mxu0 %v764
    %1574 = vmatprep.subr.mxu0 0.0
    %1575 = vmatpush1.msra.mxu0 %v763
    %1576 = vmatprep.subr.mxu0 0.0
    %1577 = vmatpush1.msra.mxu0 %v762
    %1578 = vmatprep.subr.mxu0 0.0
    %1579 = vmatpush2.msra.mxu0 0.0
    %1580 = vmatprep.subr.mxu0 0.0
    %1581 = vmatpush2.msra.mxu0 0.0
    %1582 = vmatprep.subr.mxu0 0.0
    %1583 = vmatpush2.msra.mxu0 0.0
    %1584 = vmatprep.subr.mxu0 0.0
    %1585 = vmatpush2.msra.mxu0 0.0
    %1586 = vmatprep.subr.mxu0 0.0
    %1587 = vmatpush2.msra.mxu0 0.0
    %1588 = vmatprep.subr.mxu0 0.0
    %1589 = vmatpush2.msra.mxu0 0.0
    %1590 = vmatprep.subr.mxu0 0.0
    %1591 = vmatpush2.msra.mxu0 0.0
    %1592 = vmatprep.subr.mxu0 0.0
    %1593 = vmatpush2.msra.mxu0 0.0
    %1594 = vmatprep.subr.mxu0 0.0
    %1595 = vmatpush2.msra.mxu0 0.0
    %1596 = vmatprep.subr.mxu0 0.0
    %1597 = vmatpush2.msra.mxu0 0.0
    %1598 = vmatprep.subr.mxu0 0.0
    %1599 = vmatpush2.msra.mxu0 0.0
    %1600 = vmatprep.subr.mxu0 0.0
    %1601 = vmatpush2.msra.mxu0 0.0
    %1602 = vmatprep.subr.mxu0 0.0
    %1603 = vmatpush2.msra.mxu0 0.0
    %1604 = vmatprep.subr.mxu0 0.0
    %1605 = vmatpush2.msra.mxu0 0.0
    %1606 = vmatprep.subr.mxu0 0.0
    %1607 = vmatpush2.msra.mxu0 0.0
    %1608 = vmatprep.subr.mxu0 0.0
    %1609 = vmatpush2.msra.mxu0 0.0
    %1610 = vmatprep.mubr.f32.mxu0 0.0
    %1611 = vmatmul.mubr.f32.gmra.mxu0 %v426
    %v1612 = vpop.f32.mrf.mxu0
    %v1613 = vadd.f32 0.0, %v1612
    %v1614 = vpop.f32.mrf.mxu0
    %1615 = vmatprep.mubr.f32.mxu0 0.0
    %1616 = vmatmul.mubr.f32.gmra.mxu0 %v428
    %v1617 = vpop.f32.mrf.mxu0
    %v1618 = vadd.f32 0.0, %v1617
    %v1619 = vpop.f32.mrf.mxu0
    %1620 = vdwg.mxu0
    %v1621 = vadd.f32 %v1544, %v1613
    %v1622 = vadd.f32 %v1545, %v1618
    %1623 = vmatprep.subr.mxu0 0.0
    %1624 = vmatpush1.msra.mxu0 0.0
    %1625 = vmatprep.subr.mxu0 0.0
    %1626 = vmatpush1.msra.mxu0 0.0
    %1627 = vmatprep.subr.mxu0 0.0
    %1628 = vmatpush1.msra.mxu0 0.0
    %1629 = vmatprep.subr.mxu0 0.0
    %1630 = vmatpush1.msra.mxu0 0.0
    %1631 = vmatprep.subr.mxu0 0.0
    %1632 = vmatpush1.msra.mxu0 0.0
    %1633 = vmatprep.subr.mxu0 0.0
    %1634 = vmatpush1.msra.mxu0 0.0
    %1635 = vmatprep.subr.mxu0 0.0
    %1636 = vmatpush1.msra.mxu0 0.0
    %1637 = vmatprep.subr.mxu0 0.0
    %1638 = vmatpush1.msra.mxu0 0.0
    %1639 = vmatprep.subr.mxu0 0.0
    %1640 = vmatpush1.msra.mxu0 0.0
    %1641 = vmatprep.subr.mxu0 0.0
    %1642 = vmatpush1.msra.mxu0 0.0
    %1643 = vmatprep.subr.mxu0 0.0
    %1644 = vmatpush1.msra.mxu0 0.0
    %1645 = vmatprep.subr.mxu0 0.0
    %1646 = vmatpush1.msra.mxu0 0.0
    %1647 = vmatprep.subr.mxu0 0.0
    %1648 = vmatpush1.msra.mxu0 %v852
    %1649 = vmatprep.subr.mxu0 0.0
    %1650 = vmatpush1.msra.mxu0 %v849
    %1651 = vmatprep.subr.mxu0 0.0
    %1652 = vmatpush1.msra.mxu0 %v848
    %1653 = vmatprep.subr.mxu0 0.0
    %1654 = vmatpush1.msra.mxu0 %v847
    %1655 = vmatprep.subr.mxu0 0.0
    %1656 = vmatpush2.msra.mxu0 0.0
    %1657 = vmatprep.subr.mxu0 0.0
    %1658 = vmatpush2.msra.mxu0 0.0
    %1659 = vmatprep.subr.mxu0 0.0
    %1660 = vmatpush2.msra.mxu0 0.0
    %1661 = vmatprep.subr.mxu0 0.0
    %1662 = vmatpush2.msra.mxu0 0.0
    %1663 = vmatprep.subr.mxu0 0.0
    %1664 = vmatpush2.msra.mxu0 0.0
    %1665 = vmatprep.subr.mxu0 0.0
    %1666 = vmatpush2.msra.mxu0 0.0
    %1667 = vmatprep.subr.mxu0 0.0
    %1668 = vmatpush2.msra.mxu0 0.0
    %1669 = vmatprep.subr.mxu0 0.0
    %1670 = vmatpush2.msra.mxu0 0.0
    %1671 = vmatprep.subr.mxu0 0.0
    %1672 = vmatpush2.msra.mxu0 0.0
    %1673 = vmatprep.subr.mxu0 0.0
    %1674 = vmatpush2.msra.mxu0 0.0
    %1675 = vmatprep.subr.mxu0 0.0
    %1676 = vmatpush2.msra.mxu0 0.0
    %1677 = vmatprep.subr.mxu0 0.0
    %1678 = vmatpush2.msra.mxu0 0.0
    %1679 = vmatprep.subr.mxu0 0.0
    %1680 = vmatpush2.msra.mxu0 0.0
    %1681 = vmatprep.subr.mxu0 0.0
    %1682 = vmatpush2.msra.mxu0 0.0
    %1683 = vmatprep.subr.mxu0 0.0
    %1684 = vmatpush2.msra.mxu0 0.0
    %1685 = vmatprep.subr.mxu0 0.0
    %1686 = vmatpush2.msra.mxu0 0.0
    %1687 = vmatprep.mubr.f32.mxu0 0.0
    %1688 = vmatmul.mubr.f32.gmra.mxu0 %v1238
    %v1689 = vpop.f32.mrf.mxu0
    %v1690 = vadd.f32 0.0, %v1689
    %v1691 = vpop.f32.mrf.mxu0
    %1692 = vmatprep.mubr.f32.mxu0 0.0
    %1693 = vmatmul.mubr.f32.gmra.mxu0 %v1240
    %v1694 = vpop.f32.mrf.mxu0
    %v1695 = vadd.f32 0.0, %v1694
    %v1696 = vpop.f32.mrf.mxu0
    %1697 = vdwg.mxu0
    %v1698 = vadd.f32 %v1621, %v1690
    %v1699 = vadd.f32 %v1622, %v1695
    %v1700 = vmax.f32 %v508, %v929
    %v1701 = vmax.f32 %v509, %v930
    %v1702 = vmax.f32 %v1317, %v1698
    %v1703 = vmax.f32 %v1318, %v1699
    %v1704 = vmax.f32 %v1700, %v1702
    %v1705 = vmax.f32 %v1701, %v1703
    %v1706 = vld [vmem:[%s5] sm:$0x1]
    %v1708 = vlaneseq
    %v1709 = vshrl.u32 %v1708, 7
    %v1710 = vsub.s32 0, %v1709
    %v1711 = vrot.slane %v1706, %v1710
    %v1713 = vadd.f32 %v1704, %v1711
    %v1714 = vadd.f32 %v1705, %v1711
    %v1715 = vmax.f32 %v1713, 0.0
    %v1716 = vmax.f32 %v1714, 0.0
    %1717 = vmatprep.subr.mxu0 0.0
    %1718 = vmatpush1.msra.mxu0 0.0
    %1719 = vmatprep.subr.mxu0 0.0
    %1720 = vmatpush1.msra.mxu0 0.0
    %1721 = vmatprep.subr.mxu0 0.0
    %1722 = vmatpush1.msra.mxu0 0.0
    %1723 = vmatprep.subr.mxu0 0.0
    %1724 = vmatpush1.msra.mxu0 0.0
    %1725 = vmatprep.subr.mxu0 0.0
    %1726 = vmatpush1.msra.mxu0 0.0
    %1727 = vmatprep.subr.mxu0 0.0
    %1728 = vmatpush1.msra.mxu0 0.0
    %1729 = vmatprep.subr.mxu0 0.0
    %1730 = vmatpush1.msra.mxu0 0.0
    %1731 = vmatprep.subr.mxu0 0.0
    %1732 = vmatpush1.msra.mxu0 0.0
    %1733 = vmatprep.subr.mxu0 0.0
    %1734 = vmatpush1.msra.mxu0 0.0
    %1735 = vmatprep.subr.mxu0 0.0
    %1736 = vmatpush1.msra.mxu0 0.0
    %1737 = vmatprep.subr.mxu0 0.0
    %1738 = vmatpush1.msra.mxu0 0.0
    %1739 = vmatprep.subr.mxu0 0.0
    %1740 = vmatpush1.msra.mxu0 0.0
    %1741 = vmatprep.subr.mxu0 0.0
    %1742 = vmatpush1.msra.mxu0 %v74
    %1743 = vmatprep.subr.mxu0 0.0
    %1744 = vmatpush1.msra.mxu0 %v63
    %1745 = vmatprep.subr.mxu0 0.0
    %1746 = vmatpush1.msra.mxu0 %v62
    %1747 = vmatprep.subr.mxu0 0.0
    %1748 = vmatpush1.msra.mxu0 %v61
    %1749 = vmatprep.subr.mxu0 0.0
    %1750 = vmatpush2.msra.mxu0 0.0
    %1751 = vmatprep.subr.mxu0 0.0
    %1752 = vmatpush2.msra.mxu0 0.0
    %1753 = vmatprep.subr.mxu0 0.0
    %1754 = vmatpush2.msra.mxu0 0.0
    %1755 = vmatprep.subr.mxu0 0.0
    %1756 = vmatpush2.msra.mxu0 0.0
    %1757 = vmatprep.subr.mxu0 0.0
    %1758 = vmatpush2.msra.mxu0 0.0
    %1759 = vmatprep.subr.mxu0 0.0
    %1760 = vmatpush2.msra.mxu0 0.0
    %1761 = vmatprep.subr.mxu0 0.0
    %1762 = vmatpush2.msra.mxu0 0.0
    %1763 = vmatprep.subr.mxu0 0.0
    %1764 = vmatpush2.msra.mxu0 0.0
    %1765 = vmatprep.subr.mxu0 0.0
    %1766 = vmatpush2.msra.mxu0 0.0
    %1767 = vmatprep.subr.mxu0 0.0
    %1768 = vmatpush2.msra.mxu0 0.0
    %1769 = vmatprep.subr.mxu0 0.0
    %1770 = vmatpush2.msra.mxu0 0.0
    %1771 = vmatprep.subr.mxu0 0.0
    %1772 = vmatpush2.msra.mxu0 0.0
    %1773 = vmatprep.subr.mxu0 0.0
    %1774 = vmatpush2.msra.mxu0 0.0
    %1775 = vmatprep.subr.mxu0 0.0
    %1776 = vmatpush2.msra.mxu0 0.0
    %1777 = vmatprep.subr.mxu0 0.0
    %1778 = vmatpush2.msra.mxu0 0.0
    %1779 = vmatprep.subr.mxu0 0.0
    %1780 = vmatpush2.msra.mxu0 0.0
    %1781 = vmatprep.mubr.f32.mxu0 0.0
    %1782 = vmatmul.mubr.f32.gmra.mxu0 %v332
    %v1783 = vpop.f32.mrf.mxu0
    %v1784 = vadd.f32 0.0, %v1783
    %v1785 = vpop.f32.mrf.mxu0
    %1786 = vmatprep.mubr.f32.mxu0 0.0
    %1787 = vmatmul.mubr.f32.gmra.mxu0 %v335
    %v1788 = vpop.f32.mrf.mxu0
    %v1789 = vadd.f32 0.0, %v1788
    %v1790 = vpop.f32.mrf.mxu0
    %1791 = vdwg.mxu0
    %1792 = vmatprep.subr.mxu0 0.0
    %1793 = vmatpush1.msra.mxu0 0.0
    %1794 = vmatprep.subr.mxu0 0.0
    %1795 = vmatpush1.msra.mxu0 0.0
    %1796 = vmatprep.subr.mxu0 0.0
    %1797 = vmatpush1.msra.mxu0 0.0
    %1798 = vmatprep.subr.mxu0 0.0
    %1799 = vmatpush1.msra.mxu0 0.0
    %1800 = vmatprep.subr.mxu0 0.0
    %1801 = vmatpush1.msra.mxu0 0.0
    %1802 = vmatprep.subr.mxu0 0.0
    %1803 = vmatpush1.msra.mxu0 0.0
    %1804 = vmatprep.subr.mxu0 0.0
    %1805 = vmatpush1.msra.mxu0 0.0
    %1806 = vmatprep.subr.mxu0 0.0
    %1807 = vmatpush1.msra.mxu0 0.0
    %1808 = vmatprep.subr.mxu0 0.0
    %1809 = vmatpush1.msra.mxu0 0.0
    %1810 = vmatprep.subr.mxu0 0.0
    %1811 = vmatpush1.msra.mxu0 0.0
    %1812 = vmatprep.subr.mxu0 0.0
    %1813 = vmatpush1.msra.mxu0 0.0
    %1814 = vmatprep.subr.mxu0 0.0
    %1815 = vmatpush1.msra.mxu0 0.0
    %1816 = vmatprep.subr.mxu0 0.0
    %1817 = vmatpush1.msra.mxu0 %v158
    %1818 = vmatprep.subr.mxu0 0.0
    %1819 = vmatpush1.msra.mxu0 %v58
    %1820 = vmatprep.subr.mxu0 0.0
    %1821 = vmatpush1.msra.mxu0 %v57
    %1822 = vmatprep.subr.mxu0 0.0
    %1823 = vmatpush1.msra.mxu0 %v56
    %1824 = vmatprep.subr.mxu0 0.0
    %1825 = vmatpush2.msra.mxu0 0.0
    %1826 = vmatprep.subr.mxu0 0.0
    %1827 = vmatpush2.msra.mxu0 0.0
    %1828 = vmatprep.subr.mxu0 0.0
    %1829 = vmatpush2.msra.mxu0 0.0
    %1830 = vmatprep.subr.mxu0 0.0
    %1831 = vmatpush2.msra.mxu0 0.0
    %1832 = vmatprep.subr.mxu0 0.0
    %1833 = vmatpush2.msra.mxu0 0.0
    %1834 = vmatprep.subr.mxu0 0.0
    %1835 = vmatpush2.msra.mxu0 0.0
    %1836 = vmatprep.subr.mxu0 0.0
    %1837 = vmatpush2.msra.mxu0 0.0
    %1838 = vmatprep.subr.mxu0 0.0
    %1839 = vmatpush2.msra.mxu0 0.0
    %1840 = vmatprep.subr.mxu0 0.0
    %1841 = vmatpush2.msra.mxu0 0.0
    %1842 = vmatprep.subr.mxu0 0.0
    %1843 = vmatpush2.msra.mxu0 0.0
    %1844 = vmatprep.subr.mxu0 0.0
    %1845 = vmatpush2.msra.mxu0 0.0
    %1846 = vmatprep.subr.mxu0 0.0
    %1847 = vmatpush2.msra.mxu0 0.0
    %1848 = vmatprep.subr.mxu0 0.0
    %1849 = vmatpush2.msra.mxu0 0.0
    %1850 = vmatprep.subr.mxu0 0.0
    %1851 = vmatpush2.msra.mxu0 0.0
    %1852 = vmatprep.subr.mxu0 0.0
    %1853 = vmatpush2.msra.mxu0 0.0
    %1854 = vmatprep.subr.mxu0 0.0
    %1855 = vmatpush2.msra.mxu0 0.0
    %1856 = vmatprep.mubr.f32.mxu0 0.0
    %1857 = vmatmul.mubr.f32.gmra.mxu0 %v241
    %v1858 = vpop.f32.mrf.mxu0
    %v1859 = vadd.f32 %v1784, %v1858
    %v1860 = vpop.f32.mrf.mxu0
    %1861 = vmatprep.mubr.f32.mxu0 0.0
    %1862 = vmatmul.mubr.f32.gmra.mxu0 %v244
    %v1863 = vpop.f32.mrf.mxu0
    %v1864 = vadd.f32 %v1789, %v1863
    %v1865 = vpop.f32.mrf.mxu0
    %1866 = vdwg.mxu0
    %1867 = vmatprep.subr.mxu0 0.0
    %1868 = vmatpush1.msra.mxu0 0.0
    %1869 = vmatprep.subr.mxu0 0.0
    %1870 = vmatpush1.msra.mxu0 0.0
    %1871 = vmatprep.subr.mxu0 0.0
    %1872 = vmatpush1.msra.mxu0 0.0
    %1873 = vmatprep.subr.mxu0 0.0
    %1874 = vmatpush1.msra.mxu0 0.0
    %1875 = vmatprep.subr.mxu0 0.0
    %1876 = vmatpush1.msra.mxu0 0.0
    %1877 = vmatprep.subr.mxu0 0.0
    %1878 = vmatpush1.msra.mxu0 0.0
    %1879 = vmatprep.subr.mxu0 0.0
    %1880 = vmatpush1.msra.mxu0 0.0
    %1881 = vmatprep.subr.mxu0 0.0
    %1882 = vmatpush1.msra.mxu0 0.0
    %1883 = vmatprep.subr.mxu0 0.0
    %1884 = vmatpush1.msra.mxu0 0.0
    %1885 = vmatprep.subr.mxu0 0.0
    %1886 = vmatpush1.msra.mxu0 0.0
    %1887 = vmatprep.subr.mxu0 0.0
    %1888 = vmatpush1.msra.mxu0 0.0
    %1889 = vmatprep.subr.mxu0 0.0
    %1890 = vmatpush1.msra.mxu0 0.0
    %1891 = vmatprep.subr.mxu0 0.0
    %1892 = vmatpush1.msra.mxu0 %v247
    %1893 = vmatprep.subr.mxu0 0.0
    %1894 = vmatpush1.msra.mxu0 %v238
    %1895 = vmatprep.subr.mxu0 0.0
    %1896 = vmatpush1.msra.mxu0 %v237
    %1897 = vmatprep.subr.mxu0 0.0
    %1898 = vmatpush1.msra.mxu0 %v236
    %1899 = vmatprep.subr.mxu0 0.0
    %1900 = vmatpush2.msra.mxu0 0.0
    %1901 = vmatprep.subr.mxu0 0.0
    %1902 = vmatpush2.msra.mxu0 0.0
    %1903 = vmatprep.subr.mxu0 0.0
    %1904 = vmatpush2.msra.mxu0 0.0
    %1905 = vmatprep.subr.mxu0 0.0
    %1906 = vmatpush2.msra.mxu0 0.0
    %1907 = vmatprep.subr.mxu0 0.0
    %1908 = vmatpush2.msra.mxu0 0.0
    %1909 = vmatprep.subr.mxu0 0.0
    %1910 = vmatpush2.msra.mxu0 0.0
    %1911 = vmatprep.subr.mxu0 0.0
    %1912 = vmatpush2.msra.mxu0 0.0
    %1913 = vmatprep.subr.mxu0 0.0
    %1914 = vmatpush2.msra.mxu0 0.0
    %1915 = vmatprep.subr.mxu0 0.0
    %1916 = vmatpush2.msra.mxu0 0.0
    %1917 = vmatprep.subr.mxu0 0.0
    %1918 = vmatpush2.msra.mxu0 0.0
    %1919 = vmatprep.subr.mxu0 0.0
    %1920 = vmatpush2.msra.mxu0 0.0
    %1921 = vmatprep.subr.mxu0 0.0
    %1922 = vmatpush2.msra.mxu0 0.0
    %1923 = vmatprep.subr.mxu0 0.0
    %1924 = vmatpush2.msra.mxu0 0.0
    %1925 = vmatprep.subr.mxu0 0.0
    %1926 = vmatpush2.msra.mxu0 0.0
    %1927 = vmatprep.subr.mxu0 0.0
    %1928 = vmatpush2.msra.mxu0 0.0
    %1929 = vmatprep.subr.mxu0 0.0
    %1930 = vmatpush2.msra.mxu0 0.0
    %1931 = vmatprep.mubr.f32.mxu0 0.0
    %1932 = vmatmul.mubr.f32.gmra.mxu0 %v426
    %v1933 = vpop.f32.mrf.mxu0
    %v1934 = vadd.f32 0.0, %v1933
    %v1935 = vpop.f32.mrf.mxu0
    %1936 = vmatprep.mubr.f32.mxu0 0.0
    %1937 = vmatmul.mubr.f32.gmra.mxu0 %v428
    %v1938 = vpop.f32.mrf.mxu0
    %v1939 = vadd.f32 0.0, %v1938
    %v1940 = vpop.f32.mrf.mxu0
    %1941 = vdwg.mxu0
    %v1942 = vadd.f32 %v1859, %v1934
    %v1943 = vadd.f32 %v1864, %v1939
    %1944 = vmatprep.subr.mxu0 0.0
    %1945 = vmatpush1.msra.mxu0 0.0
    %1946 = vmatprep.subr.mxu0 0.0
    %1947 = vmatpush1.msra.mxu0 0.0
    %1948 = vmatprep.subr.mxu0 0.0
    %1949 = vmatpush1.msra.mxu0 0.0
    %1950 = vmatprep.subr.mxu0 0.0
    %1951 = vmatpush1.msra.mxu0 0.0
    %1952 = vmatprep.subr.mxu0 0.0
    %1953 = vmatpush1.msra.mxu0 0.0
    %1954 = vmatprep.subr.mxu0 0.0
    %1955 = vmatpush1.msra.mxu0 0.0
    %1956 = vmatprep.subr.mxu0 0.0
    %1957 = vmatpush1.msra.mxu0 0.0
    %1958 = vmatprep.subr.mxu0 0.0
    %1959 = vmatpush1.msra.mxu0 0.0
    %1960 = vmatprep.subr.mxu0 0.0
    %1961 = vmatpush1.msra.mxu0 0.0
    %1962 = vmatprep.subr.mxu0 0.0
    %1963 = vmatpush1.msra.mxu0 0.0
    %1964 = vmatprep.subr.mxu0 0.0
    %1965 = vmatpush1.msra.mxu0 0.0
    %1966 = vmatprep.subr.mxu0 0.0
    %1967 = vmatpush1.msra.mxu0 0.0
    %1968 = vmatprep.subr.mxu0 0.0
    %1969 = vmatpush1.msra.mxu0 %v338
    %1970 = vmatprep.subr.mxu0 0.0
    %1971 = vmatpush1.msra.mxu0 %v329
    %1972 = vmatprep.subr.mxu0 0.0
    %1973 = vmatpush1.msra.mxu0 %v328
    %1974 = vmatprep.subr.mxu0 0.0
    %1975 = vmatpush1.msra.mxu0 %v327
    %1976 = vmatprep.subr.mxu0 0.0
    %1977 = vmatpush2.msra.mxu0 0.0
    %1978 = vmatprep.subr.mxu0 0.0
    %1979 = vmatpush2.msra.mxu0 0.0
    %1980 = vmatprep.subr.mxu0 0.0
    %1981 = vmatpush2.msra.mxu0 0.0
    %1982 = vmatprep.subr.mxu0 0.0
    %1983 = vmatpush2.msra.mxu0 0.0
    %1984 = vmatprep.subr.mxu0 0.0
    %1985 = vmatpush2.msra.mxu0 0.0
    %1986 = vmatprep.subr.mxu0 0.0
    %1987 = vmatpush2.msra.mxu0 0.0
    %1988 = vmatprep.subr.mxu0 0.0
    %1989 = vmatpush2.msra.mxu0 0.0
    %1990 = vmatprep.subr.mxu0 0.0
    %1991 = vmatpush2.msra.mxu0 0.0
    %1992 = vmatprep.subr.mxu0 0.0
    %1993 = vmatpush2.msra.mxu0 0.0
    %1994 = vmatprep.subr.mxu0 0.0
    %1995 = vmatpush2.msra.mxu0 0.0
    %1996 = vmatprep.subr.mxu0 0.0
    %1997 = vmatpush2.msra.mxu0 0.0
    %1998 = vmatprep.subr.mxu0 0.0
    %1999 = vmatpush2.msra.mxu0 0.0
    %2000 = vmatprep.subr.mxu0 0.0
    %2001 = vmatpush2.msra.mxu0 0.0
    %2002 = vmatprep.subr.mxu0 0.0
    %2003 = vmatpush2.msra.mxu0 0.0
    %2004 = vmatprep.subr.mxu0 0.0
    %2005 = vmatpush2.msra.mxu0 0.0
    %2006 = vmatprep.subr.mxu0 0.0
    %2007 = vmatpush2.msra.mxu0 0.0
    %2008 = vmatprep.mubr.f32.mxu0 0.0
    %2009 = vmatmul.mubr.f32.gmra.mxu0 %v1238
    %v2010 = vpop.f32.mrf.mxu0
    %v2011 = vadd.f32 0.0, %v2010
    %v2012 = vpop.f32.mrf.mxu0
    %2013 = vmatprep.mubr.f32.mxu0 0.0
    %2014 = vmatmul.mubr.f32.gmra.mxu0 %v1240
    %v2015 = vpop.f32.mrf.mxu0
    %v2016 = vadd.f32 0.0, %v2015
    %v2017 = vpop.f32.mrf.mxu0
    %2018 = vdwg.mxu0
    %v2019 = vadd.f32 %v1942, %v2011
    %v2020 = vadd.f32 %v1943, %v2016
    %v2021 = vrot.slane %v52, 2
    %v2022 = vrot.slane %v53, 2
    %v2023 = vsel %vm422, %v2021, %v2022
    %v2024 = vsel %vm65, %v2023, 0
    %v2026 = vsel %vm65, %v2022, 0
    %2028 = vmatprep.subr.mxu0 0.0
    %2029 = vmatpush1.msra.mxu0 0.0
    %2030 = vmatprep.subr.mxu0 0.0
    %2031 = vmatpush1.msra.mxu0 0.0
    %2032 = vmatprep.subr.mxu0 0.0
    %2033 = vmatpush1.msra.mxu0 0.0
    %2034 = vmatprep.subr.mxu0 0.0
    %2035 = vmatpush1.msra.mxu0 0.0
    %2036 = vmatprep.subr.mxu0 0.0
    %2037 = vmatpush1.msra.mxu0 0.0
    %2038 = vmatprep.subr.mxu0 0.0
    %2039 = vmatpush1.msra.mxu0 0.0
    %2040 = vmatprep.subr.mxu0 0.0
    %2041 = vmatpush1.msra.mxu0 0.0
    %2042 = vmatprep.subr.mxu0 0.0
    %2043 = vmatpush1.msra.mxu0 0.0
    %2044 = vmatprep.subr.mxu0 0.0
    %2045 = vmatpush1.msra.mxu0 0.0
    %2046 = vmatprep.subr.mxu0 0.0
    %2047 = vmatpush1.msra.mxu0 0.0
    %2048 = vmatprep.subr.mxu0 0.0
    %2049 = vmatpush1.msra.mxu0 0.0
    %2050 = vmatprep.subr.mxu0 0.0
    %2051 = vmatpush1.msra.mxu0 0.0
    %2052 = vmatprep.subr.mxu0 0.0
    %2053 = vmatpush1.msra.mxu0 %v431
    %2054 = vmatprep.subr.mxu0 0.0
    %2055 = vmatpush1.msra.mxu0 %v420
    %2056 = vmatprep.subr.mxu0 0.0
    %2057 = vmatpush1.msra.mxu0 %v419
    %2058 = vmatprep.subr.mxu0 0.0
    %2059 = vmatpush1.msra.mxu0 %v418
    %2060 = vmatprep.subr.mxu0 0.0
    %2061 = vmatpush2.msra.mxu0 0.0
    %2062 = vmatprep.subr.mxu0 0.0
    %2063 = vmatpush2.msra.mxu0 0.0
    %2064 = vmatprep.subr.mxu0 0.0
    %2065 = vmatpush2.msra.mxu0 0.0
    %2066 = vmatprep.subr.mxu0 0.0
    %2067 = vmatpush2.msra.mxu0 0.0
    %2068 = vmatprep.subr.mxu0 0.0
    %2069 = vmatpush2.msra.mxu0 0.0
    %2070 = vmatprep.subr.mxu0 0.0
    %2071 = vmatpush2.msra.mxu0 0.0
    %2072 = vmatprep.subr.mxu0 0.0
    %2073 = vmatpush2.msra.mxu0 0.0
    %2074 = vmatprep.subr.mxu0 0.0
    %2075 = vmatpush2.msra.mxu0 0.0
    %2076 = vmatprep.subr.mxu0 0.0
    %2077 = vmatpush2.msra.mxu0 0.0
    %2078 = vmatprep.subr.mxu0 0.0
    %2079 = vmatpush2.msra.mxu0 0.0
    %2080 = vmatprep.subr.mxu0 0.0
    %2081 = vmatpush2.msra.mxu0 0.0
    %2082 = vmatprep.subr.mxu0 0.0
    %2083 = vmatpush2.msra.mxu0 0.0
    %2084 = vmatprep.subr.mxu0 0.0
    %2085 = vmatpush2.msra.mxu0 0.0
    %2086 = vmatprep.subr.mxu0 0.0
    %2087 = vmatpush2.msra.mxu0 0.0
    %2088 = vmatprep.subr.mxu0 0.0
    %2089 = vmatpush2.msra.mxu0 0.0
    %2090 = vmatprep.subr.mxu0 0.0
    %2091 = vmatpush2.msra.mxu0 0.0
    %2092 = vmatprep.mubr.f32.mxu0 0.0
    %2093 = vmatmul.mubr.f32.gmra.mxu0 %v2024
    %v2094 = vpop.f32.mrf.mxu0
    %v2095 = vadd.f32 0.0, %v2094
    %v2096 = vpop.f32.mrf.mxu0
    %2097 = vmatprep.mubr.f32.mxu0 0.0
    %2098 = vmatmul.mubr.f32.gmra.mxu0 %v2026
    %v2099 = vpop.f32.mrf.mxu0
    %v2100 = vadd.f32 0.0, %v2099
    %v2101 = vpop.f32.mrf.mxu0
    %2102 = vdwg.mxu0
    %v2103 = vadd.f32 %v2019, %v2095
    %v2104 = vadd.f32 %v2020, %v2100
    %2105 = vmatprep.subr.mxu0 0.0
    %2106 = vmatpush1.msra.mxu0 0.0
    %2107 = vmatprep.subr.mxu0 0.0
    %2108 = vmatpush1.msra.mxu0 0.0
    %2109 = vmatprep.subr.mxu0 0.0
    %2110 = vmatpush1.msra.mxu0 0.0
    %2111 = vmatprep.subr.mxu0 0.0
    %2112 = vmatpush1.msra.mxu0 0.0
    %2113 = vmatprep.subr.mxu0 0.0
    %2114 = vmatpush1.msra.mxu0 0.0
    %2115 = vmatprep.subr.mxu0 0.0
    %2116 = vmatpush1.msra.mxu0 0.0
    %2117 = vmatprep.subr.mxu0 0.0
    %2118 = vmatpush1.msra.mxu0 0.0
    %2119 = vmatprep.subr.mxu0 0.0
    %2120 = vmatpush1.msra.mxu0 0.0
    %2121 = vmatprep.subr.mxu0 0.0
    %2122 = vmatpush1.msra.mxu0 0.0
    %2123 = vmatprep.subr.mxu0 0.0
    %2124 = vmatpush1.msra.mxu0 0.0
    %2125 = vmatprep.subr.mxu0 0.0
    %2126 = vmatpush1.msra.mxu0 0.0
    %2127 = vmatprep.subr.mxu0 0.0
    %2128 = vmatpush1.msra.mxu0 0.0
    %2129 = vmatprep.subr.mxu0 0.0
    %2130 = vmatpush1.msra.mxu0 %v521
    %2131 = vmatprep.subr.mxu0 0.0
    %2132 = vmatpush1.msra.mxu0 %v518
    %2133 = vmatprep.subr.mxu0 0.0
    %2134 = vmatpush1.msra.mxu0 %v517
    %2135 = vmatprep.subr.mxu0 0.0
    %2136 = vmatpush1.msra.mxu0 %v516
    %2137 = vmatprep.subr.mxu0 0.0
    %2138 = vmatpush2.msra.mxu0 0.0
    %2139 = vmatprep.subr.mxu0 0.0
    %2140 = vmatpush2.msra.mxu0 0.0
    %2141 = vmatprep.subr.mxu0 0.0
    %2142 = vmatpush2.msra.mxu0 0.0
    %2143 = vmatprep.subr.mxu0 0.0
    %2144 = vmatpush2.msra.mxu0 0.0
    %2145 = vmatprep.subr.mxu0 0.0
    %2146 = vmatpush2.msra.mxu0 0.0
    %2147 = vmatprep.subr.mxu0 0.0
    %2148 = vmatpush2.msra.mxu0 0.0
    %2149 = vmatprep.subr.mxu0 0.0
    %2150 = vmatpush2.msra.mxu0 0.0
    %2151 = vmatprep.subr.mxu0 0.0
    %2152 = vmatpush2.msra.mxu0 0.0
    %2153 = vmatprep.subr.mxu0 0.0
    %2154 = vmatpush2.msra.mxu0 0.0
    %2155 = vmatprep.subr.mxu0 0.0
    %2156 = vmatpush2.msra.mxu0 0.0
    %2157 = vmatprep.subr.mxu0 0.0
    %2158 = vmatpush2.msra.mxu0 0.0
    %2159 = vmatprep.subr.mxu0 0.0
    %2160 = vmatpush2.msra.mxu0 0.0
    %2161 = vmatprep.subr.mxu0 0.0
    %2162 = vmatpush2.msra.mxu0 0.0
    %2163 = vmatprep.subr.mxu0 0.0
    %2164 = vmatpush2.msra.mxu0 0.0
    %2165 = vmatprep.subr.mxu0 0.0
    %2166 = vmatpush2.msra.mxu0 0.0
    %2167 = vmatprep.subr.mxu0 0.0
    %2168 = vmatpush2.msra.mxu0 0.0
    %2169 = vmatprep.mubr.f32.mxu0 0.0
    %2170 = vmatmul.mubr.f32.gmra.mxu0 %v332
    %v2171 = vpop.f32.mrf.mxu0
    %v2172 = vadd.f32 0.0, %v2171
    %v2173 = vpop.f32.mrf.mxu0
    %2174 = vmatprep.mubr.f32.mxu0 0.0
    %2175 = vmatmul.mubr.f32.gmra.mxu0 %v335
    %v2176 = vpop.f32.mrf.mxu0
    %v2177 = vadd.f32 0.0, %v2176
    %v2178 = vpop.f32.mrf.mxu0
    %2179 = vdwg.mxu0
    %2180 = vmatprep.subr.mxu0 0.0
    %2181 = vmatpush1.msra.mxu0 0.0
    %2182 = vmatprep.subr.mxu0 0.0
    %2183 = vmatpush1.msra.mxu0 0.0
    %2184 = vmatprep.subr.mxu0 0.0
    %2185 = vmatpush1.msra.mxu0 0.0
    %2186 = vmatprep.subr.mxu0 0.0
    %2187 = vmatpush1.msra.mxu0 0.0
    %2188 = vmatprep.subr.mxu0 0.0
    %2189 = vmatpush1.msra.mxu0 0.0
    %2190 = vmatprep.subr.mxu0 0.0
    %2191 = vmatpush1.msra.mxu0 0.0
    %2192 = vmatprep.subr.mxu0 0.0
    %2193 = vmatpush1.msra.mxu0 0.0
    %2194 = vmatprep.subr.mxu0 0.0
    %2195 = vmatpush1.msra.mxu0 0.0
    %2196 = vmatprep.subr.mxu0 0.0
    %2197 = vmatpush1.msra.mxu0 0.0
    %2198 = vmatprep.subr.mxu0 0.0
    %2199 = vmatpush1.msra.mxu0 0.0
    %2200 = vmatprep.subr.mxu0 0.0
    %2201 = vmatpush1.msra.mxu0 0.0
    %2202 = vmatprep.subr.mxu0 0.0
    %2203 = vmatpush1.msra.mxu0 0.0
    %2204 = vmatprep.subr.mxu0 0.0
    %2205 = vmatpush1.msra.mxu0 %v599
    %2206 = vmatprep.subr.mxu0 0.0
    %2207 = vmatpush1.msra.mxu0 %v513
    %2208 = vmatprep.subr.mxu0 0.0
    %2209 = vmatpush1.msra.mxu0 %v512
    %2210 = vmatprep.subr.mxu0 0.0
    %2211 = vmatpush1.msra.mxu0 %v511
    %2212 = vmatprep.subr.mxu0 0.0
    %2213 = vmatpush2.msra.mxu0 0.0
    %2214 = vmatprep.subr.mxu0 0.0
    %2215 = vmatpush2.msra.mxu0 0.0
    %2216 = vmatprep.subr.mxu0 0.0
    %2217 = vmatpush2.msra.mxu0 0.0
    %2218 = vmatprep.subr.mxu0 0.0
    %2219 = vmatpush2.msra.mxu0 0.0
    %2220 = vmatprep.subr.mxu0 0.0
    %2221 = vmatpush2.msra.mxu0 0.0
    %2222 = vmatprep.subr.mxu0 0.0
    %2223 = vmatpush2.msra.mxu0 0.0
    %2224 = vmatprep.subr.mxu0 0.0
    %2225 = vmatpush2.msra.mxu0 0.0
    %2226 = vmatprep.subr.mxu0 0.0
    %2227 = vmatpush2.msra.mxu0 0.0
    %2228 = vmatprep.subr.mxu0 0.0
    %2229 = vmatpush2.msra.mxu0 0.0
    %2230 = vmatprep.subr.mxu0 0.0
    %2231 = vmatpush2.msra.mxu0 0.0
    %2232 = vmatprep.subr.mxu0 0.0
    %2233 = vmatpush2.msra.mxu0 0.0
    %2234 = vmatprep.subr.mxu0 0.0
    %2235 = vmatpush2.msra.mxu0 0.0
    %2236 = vmatprep.subr.mxu0 0.0
    %2237 = vmatpush2.msra.mxu0 0.0
    %2238 = vmatprep.subr.mxu0 0.0
    %2239 = vmatpush2.msra.mxu0 0.0
    %2240 = vmatprep.subr.mxu0 0.0
    %2241 = vmatpush2.msra.mxu0 0.0
    %2242 = vmatprep.subr.mxu0 0.0
    %2243 = vmatpush2.msra.mxu0 0.0
    %2244 = vmatprep.mubr.f32.mxu0 0.0
    %2245 = vmatmul.mubr.f32.gmra.mxu0 %v241
    %v2246 = vpop.f32.mrf.mxu0
    %v2247 = vadd.f32 %v2172, %v2246
    %v2248 = vpop.f32.mrf.mxu0
    %2249 = vmatprep.mubr.f32.mxu0 0.0
    %2250 = vmatmul.mubr.f32.gmra.mxu0 %v244
    %v2251 = vpop.f32.mrf.mxu0
    %v2252 = vadd.f32 %v2177, %v2251
    %v2253 = vpop.f32.mrf.mxu0
    %2254 = vdwg.mxu0
    %2255 = vmatprep.subr.mxu0 0.0
    %2256 = vmatpush1.msra.mxu0 0.0
    %2257 = vmatprep.subr.mxu0 0.0
    %2258 = vmatpush1.msra.mxu0 0.0
    %2259 = vmatprep.subr.mxu0 0.0
    %2260 = vmatpush1.msra.mxu0 0.0
    %2261 = vmatprep.subr.mxu0 0.0
    %2262 = vmatpush1.msra.mxu0 0.0
    %2263 = vmatprep.subr.mxu0 0.0
    %2264 = vmatpush1.msra.mxu0 0.0
    %2265 = vmatprep.subr.mxu0 0.0
    %2266 = vmatpush1.msra.mxu0 0.0
    %2267 = vmatprep.subr.mxu0 0.0
    %2268 = vmatpush1.msra.mxu0 0.0
    %2269 = vmatprep.subr.mxu0 0.0
    %2270 = vmatpush1.msra.mxu0 0.0
    %2271 = vmatprep.subr.mxu0 0.0
    %2272 = vmatpush1.msra.mxu0 0.0
    %2273 = vmatprep.subr.mxu0 0.0
    %2274 = vmatpush1.msra.mxu0 0.0
    %2275 = vmatprep.subr.mxu0 0.0
    %2276 = vmatpush1.msra.mxu0 0.0
    %2277 = vmatprep.subr.mxu0 0.0
    %2278 = vmatpush1.msra.mxu0 0.0
    %2279 = vmatprep.subr.mxu0 0.0
    %2280 = vmatpush1.msra.mxu0 %v682
    %2281 = vmatprep.subr.mxu0 0.0
    %2282 = vmatpush1.msra.mxu0 %v679
    %2283 = vmatprep.subr.mxu0 0.0
    %2284 = vmatpush1.msra.mxu0 %v678
    %2285 = vmatprep.subr.mxu0 0.0
    %2286 = vmatpush1.msra.mxu0 %v677
    %2287 = vmatprep.subr.mxu0 0.0
    %2288 = vmatpush2.msra.mxu0 0.0
    %2289 = vmatprep.subr.mxu0 0.0
    %2290 = vmatpush2.msra.mxu0 0.0
    %2291 = vmatprep.subr.mxu0 0.0
    %2292 = vmatpush2.msra.mxu0 0.0
    %2293 = vmatprep.subr.mxu0 0.0
    %2294 = vmatpush2.msra.mxu0 0.0
    %2295 = vmatprep.subr.mxu0 0.0
    %2296 = vmatpush2.msra.mxu0 0.0
    %2297 = vmatprep.subr.mxu0 0.0
    %2298 = vmatpush2.msra.mxu0 0.0
    %2299 = vmatprep.subr.mxu0 0.0
    %2300 = vmatpush2.msra.mxu0 0.0
    %2301 = vmatprep.subr.mxu0 0.0
    %2302 = vmatpush2.msra.mxu0 0.0
    %2303 = vmatprep.subr.mxu0 0.0
    %2304 = vmatpush2.msra.mxu0 0.0
    %2305 = vmatprep.subr.mxu0 0.0
    %2306 = vmatpush2.msra.mxu0 0.0
    %2307 = vmatprep.subr.mxu0 0.0
    %2308 = vmatpush2.msra.mxu0 0.0
    %2309 = vmatprep.subr.mxu0 0.0
    %2310 = vmatpush2.msra.mxu0 0.0
    %2311 = vmatprep.subr.mxu0 0.0
    %2312 = vmatpush2.msra.mxu0 0.0
    %2313 = vmatprep.subr.mxu0 0.0
    %2314 = vmatpush2.msra.mxu0 0.0
    %2315 = vmatprep.subr.mxu0 0.0
    %2316 = vmatpush2.msra.mxu0 0.0
    %2317 = vmatprep.subr.mxu0 0.0
    %2318 = vmatpush2.msra.mxu0 0.0
    %2319 = vmatprep.mubr.f32.mxu0 0.0
    %2320 = vmatmul.mubr.f32.gmra.mxu0 %v426
    %v2321 = vpop.f32.mrf.mxu0
    %v2322 = vadd.f32 0.0, %v2321
    %v2323 = vpop.f32.mrf.mxu0
    %2324 = vmatprep.mubr.f32.mxu0 0.0
    %2325 = vmatmul.mubr.f32.gmra.mxu0 %v428
    %v2326 = vpop.f32.mrf.mxu0
    %v2327 = vadd.f32 0.0, %v2326
    %v2328 = vpop.f32.mrf.mxu0
    %2329 = vdwg.mxu0
    %v2330 = vadd.f32 %v2247, %v2322
    %v2331 = vadd.f32 %v2252, %v2327
    %2332 = vmatprep.subr.mxu0 0.0
    %2333 = vmatpush1.msra.mxu0 0.0
    %2334 = vmatprep.subr.mxu0 0.0
    %2335 = vmatpush1.msra.mxu0 0.0
    %2336 = vmatprep.subr.mxu0 0.0
    %2337 = vmatpush1.msra.mxu0 0.0
    %2338 = vmatprep.subr.mxu0 0.0
    %2339 = vmatpush1.msra.mxu0 0.0
    %2340 = vmatprep.subr.mxu0 0.0
    %2341 = vmatpush1.msra.mxu0 0.0
    %2342 = vmatprep.subr.mxu0 0.0
    %2343 = vmatpush1.msra.mxu0 0.0
    %2344 = vmatprep.subr.mxu0 0.0
    %2345 = vmatpush1.msra.mxu0 0.0
    %2346 = vmatprep.subr.mxu0 0.0
    %2347 = vmatpush1.msra.mxu0 0.0
    %2348 = vmatprep.subr.mxu0 0.0
    %2349 = vmatpush1.msra.mxu0 0.0
    %2350 = vmatprep.subr.mxu0 0.0
    %2351 = vmatpush1.msra.mxu0 0.0
    %2352 = vmatprep.subr.mxu0 0.0
    %2353 = vmatpush1.msra.mxu0 0.0
    %2354 = vmatprep.subr.mxu0 0.0
    %2355 = vmatpush1.msra.mxu0 0.0
    %2356 = vmatprep.subr.mxu0 0.0
    %2357 = vmatpush1.msra.mxu0 %v767
    %2358 = vmatprep.subr.mxu0 0.0
    %2359 = vmatpush1.msra.mxu0 %v764
    %2360 = vmatprep.subr.mxu0 0.0
    %2361 = vmatpush1.msra.mxu0 %v763
    %2362 = vmatprep.subr.mxu0 0.0
    %2363 = vmatpush1.msra.mxu0 %v762
    %2364 = vmatprep.subr.mxu0 0.0
    %2365 = vmatpush2.msra.mxu0 0.0
    %2366 = vmatprep.subr.mxu0 0.0
    %2367 = vmatpush2.msra.mxu0 0.0
    %2368 = vmatprep.subr.mxu0 0.0
    %2369 = vmatpush2.msra.mxu0 0.0
    %2370 = vmatprep.subr.mxu0 0.0
    %2371 = vmatpush2.msra.mxu0 0.0
    %2372 = vmatprep.subr.mxu0 0.0
    %2373 = vmatpush2.msra.mxu0 0.0
    %2374 = vmatprep.subr.mxu0 0.0
    %2375 = vmatpush2.msra.mxu0 0.0
    %2376 = vmatprep.subr.mxu0 0.0
    %2377 = vmatpush2.msra.mxu0 0.0
    %2378 = vmatprep.subr.mxu0 0.0
    %2379 = vmatpush2.msra.mxu0 0.0
    %2380 = vmatprep.subr.mxu0 0.0
    %2381 = vmatpush2.msra.mxu0 0.0
    %2382 = vmatprep.subr.mxu0 0.0
    %2383 = vmatpush2.msra.mxu0 0.0
    %2384 = vmatprep.subr.mxu0 0.0
    %2385 = vmatpush2.msra.mxu0 0.0
    %2386 = vmatprep.subr.mxu0 0.0
    %2387 = vmatpush2.msra.mxu0 0.0
    %2388 = vmatprep.subr.mxu0 0.0
    %2389 = vmatpush2.msra.mxu0 0.0
    %2390 = vmatprep.subr.mxu0 0.0
    %2391 = vmatpush2.msra.mxu0 0.0
    %2392 = vmatprep.subr.mxu0 0.0
    %2393 = vmatpush2.msra.mxu0 0.0
    %2394 = vmatprep.subr.mxu0 0.0
    %2395 = vmatpush2.msra.mxu0 0.0
    %2396 = vmatprep.mubr.f32.mxu0 0.0
    %2397 = vmatmul.mubr.f32.gmra.mxu0 %v1238
    %v2398 = vpop.f32.mrf.mxu0
    %v2399 = vadd.f32 0.0, %v2398
    %v2400 = vpop.f32.mrf.mxu0
    %2401 = vmatprep.mubr.f32.mxu0 0.0
    %2402 = vmatmul.mubr.f32.gmra.mxu0 %v1240
    %v2403 = vpop.f32.mrf.mxu0
    %v2404 = vadd.f32 0.0, %v2403
    %v2405 = vpop.f32.mrf.mxu0
    %2406 = vdwg.mxu0
    %v2407 = vadd.f32 %v2330, %v2399
    %v2408 = vadd.f32 %v2331, %v2404
    %2409 = vmatprep.subr.mxu0 0.0
    %2410 = vmatpush1.msra.mxu0 0.0
    %2411 = vmatprep.subr.mxu0 0.0
    %2412 = vmatpush1.msra.mxu0 0.0
    %2413 = vmatprep.subr.mxu0 0.0
    %2414 = vmatpush1.msra.mxu0 0.0
    %2415 = vmatprep.subr.mxu0 0.0
    %2416 = vmatpush1.msra.mxu0 0.0
    %2417 = vmatprep.subr.mxu0 0.0
    %2418 = vmatpush1.msra.mxu0 0.0
    %2419 = vmatprep.subr.mxu0 0.0
    %2420 = vmatpush1.msra.mxu0 0.0
    %2421 = vmatprep.subr.mxu0 0.0
    %2422 = vmatpush1.msra.mxu0 0.0
    %2423 = vmatprep.subr.mxu0 0.0
    %2424 = vmatpush1.msra.mxu0 0.0
    %2425 = vmatprep.subr.mxu0 0.0
    %2426 = vmatpush1.msra.mxu0 0.0
    %2427 = vmatprep.subr.mxu0 0.0
    %2428 = vmatpush1.msra.mxu0 0.0
    %2429 = vmatprep.subr.mxu0 0.0
    %2430 = vmatpush1.msra.mxu0 0.0
    %2431 = vmatprep.subr.mxu0 0.0
    %2432 = vmatpush1.msra.mxu0 0.0
    %2433 = vmatprep.subr.mxu0 0.0
    %2434 = vmatpush1.msra.mxu0 %v852
    %2435 = vmatprep.subr.mxu0 0.0
    %2436 = vmatpush1.msra.mxu0 %v849
    %2437 = vmatprep.subr.mxu0 0.0
    %2438 = vmatpush1.msra.mxu0 %v848
    %2439 = vmatprep.subr.mxu0 0.0
    %2440 = vmatpush1.msra.mxu0 %v847
    %2441 = vmatprep.subr.mxu0 0.0
    %2442 = vmatpush2.msra.mxu0 0.0
    %2443 = vmatprep.subr.mxu0 0.0
    %2444 = vmatpush2.msra.mxu0 0.0
    %2445 = vmatprep.subr.mxu0 0.0
    %2446 = vmatpush2.msra.mxu0 0.0
    %2447 = vmatprep.subr.mxu0 0.0
    %2448 = vmatpush2.msra.mxu0 0.0
    %2449 = vmatprep.subr.mxu0 0.0
    %2450 = vmatpush2.msra.mxu0 0.0
    %2451 = vmatprep.subr.mxu0 0.0
    %2452 = vmatpush2.msra.mxu0 0.0
    %2453 = vmatprep.subr.mxu0 0.0
    %2454 = vmatpush2.msra.mxu0 0.0
    %2455 = vmatprep.subr.mxu0 0.0
    %2456 = vmatpush2.msra.mxu0 0.0
    %2457 = vmatprep.subr.mxu0 0.0
    %2458 = vmatpush2.msra.mxu0 0.0
    %2459 = vmatprep.subr.mxu0 0.0
    %2460 = vmatpush2.msra.mxu0 0.0
    %2461 = vmatprep.subr.mxu0 0.0
    %2462 = vmatpush2.msra.mxu0 0.0
    %2463 = vmatprep.subr.mxu0 0.0
    %2464 = vmatpush2.msra.mxu0 0.0
    %2465 = vmatprep.subr.mxu0 0.0
    %2466 = vmatpush2.msra.mxu0 0.0
    %2467 = vmatprep.subr.mxu0 0.0
    %2468 = vmatpush2.msra.mxu0 0.0
    %2469 = vmatprep.subr.mxu0 0.0
    %2470 = vmatpush2.msra.mxu0 0.0
    %2471 = vmatprep.subr.mxu0 0.0
    %2472 = vmatpush2.msra.mxu0 0.0
    %2473 = vmatprep.mubr.f32.mxu0 0.0
    %2474 = vmatmul.mubr.f32.gmra.mxu0 %v2024
    %v2475 = vpop.f32.mrf.mxu0
    %v2476 = vadd.f32 0.0, %v2475
    %v2477 = vpop.f32.mrf.mxu0
    %2478 = vmatprep.mubr.f32.mxu0 0.0
    %2479 = vmatmul.mubr.f32.gmra.mxu0 %v2026
    %v2480 = vpop.f32.mrf.mxu0
    %v2481 = vadd.f32 0.0, %v2480
    %v2482 = vpop.f32.mrf.mxu0
    %2483 = vdwg.mxu0
    %v2484 = vadd.f32 %v2407, %v2476
    %v2485 = vadd.f32 %v2408, %v2481
    %2486 = vmatprep.subr.mxu0 0.0
    %2487 = vmatpush1.msra.mxu0 0.0
    %2488 = vmatprep.subr.mxu0 0.0
    %2489 = vmatpush1.msra.mxu0 0.0
    %2490 = vmatprep.subr.mxu0 0.0
    %2491 = vmatpush1.msra.mxu0 0.0
    %2492 = vmatprep.subr.mxu0 0.0
    %2493 = vmatpush1.msra.mxu0 0.0
    %2494 = vmatprep.subr.mxu0 0.0
    %2495 = vmatpush1.msra.mxu0 0.0
    %2496 = vmatprep.subr.mxu0 0.0
    %2497 = vmatpush1.msra.mxu0 0.0
    %2498 = vmatprep.subr.mxu0 0.0
    %2499 = vmatpush1.msra.mxu0 0.0
    %2500 = vmatprep.subr.mxu0 0.0
    %2501 = vmatpush1.msra.mxu0 0.0
    %2502 = vmatprep.subr.mxu0 0.0
    %2503 = vmatpush1.msra.mxu0 0.0
    %2504 = vmatprep.subr.mxu0 0.0
    %2505 = vmatpush1.msra.mxu0 0.0
    %2506 = vmatprep.subr.mxu0 0.0
    %2507 = vmatpush1.msra.mxu0 0.0
    %2508 = vmatprep.subr.mxu0 0.0
    %2509 = vmatpush1.msra.mxu0 0.0
    %2510 = vmatprep.subr.mxu0 0.0
    %2511 = vmatpush1.msra.mxu0 %v74
    %2512 = vmatprep.subr.mxu0 0.0
    %2513 = vmatpush1.msra.mxu0 %v63
    %2514 = vmatprep.subr.mxu0 0.0
    %2515 = vmatpush1.msra.mxu0 %v62
    %2516 = vmatprep.subr.mxu0 0.0
    %2517 = vmatpush1.msra.mxu0 %v61
    %2518 = vmatprep.subr.mxu0 0.0
    %2519 = vmatpush2.msra.mxu0 0.0
    %2520 = vmatprep.subr.mxu0 0.0
    %2521 = vmatpush2.msra.mxu0 0.0
    %2522 = vmatprep.subr.mxu0 0.0
    %2523 = vmatpush2.msra.mxu0 0.0
    %2524 = vmatprep.subr.mxu0 0.0
    %2525 = vmatpush2.msra.mxu0 0.0
    %2526 = vmatprep.subr.mxu0 0.0
    %2527 = vmatpush2.msra.mxu0 0.0
    %2528 = vmatprep.subr.mxu0 0.0
    %2529 = vmatpush2.msra.mxu0 0.0
    %2530 = vmatprep.subr.mxu0 0.0
    %2531 = vmatpush2.msra.mxu0 0.0
    %2532 = vmatprep.subr.mxu0 0.0
    %2533 = vmatpush2.msra.mxu0 0.0
    %2534 = vmatprep.subr.mxu0 0.0
    %2535 = vmatpush2.msra.mxu0 0.0
    %2536 = vmatprep.subr.mxu0 0.0
    %2537 = vmatpush2.msra.mxu0 0.0
    %2538 = vmatprep.subr.mxu0 0.0
    %2539 = vmatpush2.msra.mxu0 0.0
    %2540 = vmatprep.subr.mxu0 0.0
    %2541 = vmatpush2.msra.mxu0 0.0
    %2542 = vmatprep.subr.mxu0 0.0
    %2543 = vmatpush2.msra.mxu0 0.0
    %2544 = vmatprep.subr.mxu0 0.0
    %2545 = vmatpush2.msra.mxu0 0.0
    %2546 = vmatprep.subr.mxu0 0.0
    %2547 = vmatpush2.msra.mxu0 0.0
    %2548 = vmatprep.subr.mxu0 0.0
    %2549 = vmatpush2.msra.mxu0 0.0
    %2550 = vmatprep.mubr.f32.mxu0 0.0
    %2551 = vmatmul.mubr.f32.gmra.mxu0 %v426
    %v2552 = vpop.f32.mrf.mxu0
    %v2553 = vadd.f32 0.0, %v2552
    %v2554 = vpop.f32.mrf.mxu0
    %2555 = vmatprep.mubr.f32.mxu0 0.0
    %2556 = vmatmul.mubr.f32.gmra.mxu0 %v428
    %v2557 = vpop.f32.mrf.mxu0
    %v2558 = vadd.f32 0.0, %v2557
    %v2559 = vpop.f32.mrf.mxu0
    %2560 = vdwg.mxu0
    %2561 = vmatprep.subr.mxu0 0.0
    %2562 = vmatpush1.msra.mxu0 0.0
    %2563 = vmatprep.subr.mxu0 0.0
    %2564 = vmatpush1.msra.mxu0 0.0
    %2565 = vmatprep.subr.mxu0 0.0
    %2566 = vmatpush1.msra.mxu0 0.0
    %2567 = vmatprep.subr.mxu0 0.0
    %2568 = vmatpush1.msra.mxu0 0.0
    %2569 = vmatprep.subr.mxu0 0.0
    %2570 = vmatpush1.msra.mxu0 0.0
    %2571 = vmatprep.subr.mxu0 0.0
    %2572 = vmatpush1.msra.mxu0 0.0
    %2573 = vmatprep.subr.mxu0 0.0
    %2574 = vmatpush1.msra.mxu0 0.0
    %2575 = vmatprep.subr.mxu0 0.0
    %2576 = vmatpush1.msra.mxu0 0.0
    %2577 = vmatprep.subr.mxu0 0.0
    %2578 = vmatpush1.msra.mxu0 0.0
    %2579 = vmatprep.subr.mxu0 0.0
    %2580 = vmatpush1.msra.mxu0 0.0
    %2581 = vmatprep.subr.mxu0 0.0
    %2582 = vmatpush1.msra.mxu0 0.0
    %2583 = vmatprep.subr.mxu0 0.0
    %2584 = vmatpush1.msra.mxu0 0.0
    %2585 = vmatprep.subr.mxu0 0.0
    %2586 = vmatpush1.msra.mxu0 %v158
    %2587 = vmatprep.subr.mxu0 0.0
    %2588 = vmatpush1.msra.mxu0 %v58
    %2589 = vmatprep.subr.mxu0 0.0
    %2590 = vmatpush1.msra.mxu0 %v57
    %2591 = vmatprep.subr.mxu0 0.0
    %2592 = vmatpush1.msra.mxu0 %v56
    %2593 = vmatprep.subr.mxu0 0.0
    %2594 = vmatpush2.msra.mxu0 0.0
    %2595 = vmatprep.subr.mxu0 0.0
    %2596 = vmatpush2.msra.mxu0 0.0
    %2597 = vmatprep.subr.mxu0 0.0
    %2598 = vmatpush2.msra.mxu0 0.0
    %2599 = vmatprep.subr.mxu0 0.0
    %2600 = vmatpush2.msra.mxu0 0.0
    %2601 = vmatprep.subr.mxu0 0.0
    %2602 = vmatpush2.msra.mxu0 0.0
    %2603 = vmatprep.subr.mxu0 0.0
    %2604 = vmatpush2.msra.mxu0 0.0
    %2605 = vmatprep.subr.mxu0 0.0
    %2606 = vmatpush2.msra.mxu0 0.0
    %2607 = vmatprep.subr.mxu0 0.0
    %2608 = vmatpush2.msra.mxu0 0.0
    %2609 = vmatprep.subr.mxu0 0.0
    %2610 = vmatpush2.msra.mxu0 0.0
    %2611 = vmatprep.subr.mxu0 0.0
    %2612 = vmatpush2.msra.mxu0 0.0
    %2613 = vmatprep.subr.mxu0 0.0
    %2614 = vmatpush2.msra.mxu0 0.0
    %2615 = vmatprep.subr.mxu0 0.0
    %2616 = vmatpush2.msra.mxu0 0.0
    %2617 = vmatprep.subr.mxu0 0.0
    %2618 = vmatpush2.msra.mxu0 0.0
    %2619 = vmatprep.subr.mxu0 0.0
    %2620 = vmatpush2.msra.mxu0 0.0
    %2621 = vmatprep.subr.mxu0 0.0
    %2622 = vmatpush2.msra.mxu0 0.0
    %2623 = vmatprep.subr.mxu0 0.0
    %2624 = vmatpush2.msra.mxu0 0.0
    %2625 = vmatprep.mubr.f32.mxu0 0.0
    %2626 = vmatmul.mubr.f32.gmra.mxu0 %v332
    %v2627 = vpop.f32.mrf.mxu0
    %v2628 = vadd.f32 %v2553, %v2627
    %v2629 = vpop.f32.mrf.mxu0
    %2630 = vmatprep.mubr.f32.mxu0 0.0
    %2631 = vmatmul.mubr.f32.gmra.mxu0 %v335
    %v2632 = vpop.f32.mrf.mxu0
    %v2633 = vadd.f32 %v2558, %v2632
    %v2634 = vpop.f32.mrf.mxu0
    %2635 = vdwg.mxu0
    %2636 = vmatprep.subr.mxu0 0.0
    %2637 = vmatpush1.msra.mxu0 0.0
    %2638 = vmatprep.subr.mxu0 0.0
    %2639 = vmatpush1.msra.mxu0 0.0
    %2640 = vmatprep.subr.mxu0 0.0
    %2641 = vmatpush1.msra.mxu0 0.0
    %2642 = vmatprep.subr.mxu0 0.0
    %2643 = vmatpush1.msra.mxu0 0.0
    %2644 = vmatprep.subr.mxu0 0.0
    %2645 = vmatpush1.msra.mxu0 0.0
    %2646 = vmatprep.subr.mxu0 0.0
    %2647 = vmatpush1.msra.mxu0 0.0
    %2648 = vmatprep.subr.mxu0 0.0
    %2649 = vmatpush1.msra.mxu0 0.0
    %2650 = vmatprep.subr.mxu0 0.0
    %2651 = vmatpush1.msra.mxu0 0.0
    %2652 = vmatprep.subr.mxu0 0.0
    %2653 = vmatpush1.msra.mxu0 0.0
    %2654 = vmatprep.subr.mxu0 0.0
    %2655 = vmatpush1.msra.mxu0 0.0
    %2656 = vmatprep.subr.mxu0 0.0
    %2657 = vmatpush1.msra.mxu0 0.0
    %2658 = vmatprep.subr.mxu0 0.0
    %2659 = vmatpush1.msra.mxu0 0.0
    %2660 = vmatprep.subr.mxu0 0.0
    %2661 = vmatpush1.msra.mxu0 %v247
    %2662 = vmatprep.subr.mxu0 0.0
    %2663 = vmatpush1.msra.mxu0 %v238
    %2664 = vmatprep.subr.mxu0 0.0
    %2665 = vmatpush1.msra.mxu0 %v237
    %2666 = vmatprep.subr.mxu0 0.0
    %2667 = vmatpush1.msra.mxu0 %v236
    %2668 = vmatprep.subr.mxu0 0.0
    %2669 = vmatpush2.msra.mxu0 0.0
    %2670 = vmatprep.subr.mxu0 0.0
    %2671 = vmatpush2.msra.mxu0 0.0
    %2672 = vmatprep.subr.mxu0 0.0
    %2673 = vmatpush2.msra.mxu0 0.0
    %2674 = vmatprep.subr.mxu0 0.0
    %2675 = vmatpush2.msra.mxu0 0.0
    %2676 = vmatprep.subr.mxu0 0.0
    %2677 = vmatpush2.msra.mxu0 0.0
    %2678 = vmatprep.subr.mxu0 0.0
    %2679 = vmatpush2.msra.mxu0 0.0
    %2680 = vmatprep.subr.mxu0 0.0
    %2681 = vmatpush2.msra.mxu0 0.0
    %2682 = vmatprep.subr.mxu0 0.0
    %2683 = vmatpush2.msra.mxu0 0.0
    %2684 = vmatprep.subr.mxu0 0.0
    %2685 = vmatpush2.msra.mxu0 0.0
    %2686 = vmatprep.subr.mxu0 0.0
    %2687 = vmatpush2.msra.mxu0 0.0
    %2688 = vmatprep.subr.mxu0 0.0
    %2689 = vmatpush2.msra.mxu0 0.0
    %2690 = vmatprep.subr.mxu0 0.0
    %2691 = vmatpush2.msra.mxu0 0.0
    %2692 = vmatprep.subr.mxu0 0.0
    %2693 = vmatpush2.msra.mxu0 0.0
    %2694 = vmatprep.subr.mxu0 0.0
    %2695 = vmatpush2.msra.mxu0 0.0
    %2696 = vmatprep.subr.mxu0 0.0
    %2697 = vmatpush2.msra.mxu0 0.0
    %2698 = vmatprep.subr.mxu0 0.0
    %2699 = vmatpush2.msra.mxu0 0.0
    %2700 = vmatprep.mubr.f32.mxu0 0.0
    %2701 = vmatmul.mubr.f32.gmra.mxu0 %v1238
    %v2702 = vpop.f32.mrf.mxu0
    %v2703 = vadd.f32 0.0, %v2702
    %v2704 = vpop.f32.mrf.mxu0
    %2705 = vmatprep.mubr.f32.mxu0 0.0
    %2706 = vmatmul.mubr.f32.gmra.mxu0 %v1240
    %v2707 = vpop.f32.mrf.mxu0
    %v2708 = vadd.f32 0.0, %v2707
    %v2709 = vpop.f32.mrf.mxu0
    %2710 = vdwg.mxu0
    %v2711 = vadd.f32 %v2628, %v2703
    %v2712 = vadd.f32 %v2633, %v2708
    %2713 = vmatprep.subr.mxu0 0.0
    %2714 = vmatpush1.msra.mxu0 0.0
    %2715 = vmatprep.subr.mxu0 0.0
    %2716 = vmatpush1.msra.mxu0 0.0
    %2717 = vmatprep.subr.mxu0 0.0
    %2718 = vmatpush1.msra.mxu0 0.0
    %2719 = vmatprep.subr.mxu0 0.0
    %2720 = vmatpush1.msra.mxu0 0.0
    %2721 = vmatprep.subr.mxu0 0.0
    %2722 = vmatpush1.msra.mxu0 0.0
    %2723 = vmatprep.subr.mxu0 0.0
    %2724 = vmatpush1.msra.mxu0 0.0
    %2725 = vmatprep.subr.mxu0 0.0
    %2726 = vmatpush1.msra.mxu0 0.0
    %2727 = vmatprep.subr.mxu0 0.0
    %2728 = vmatpush1.msra.mxu0 0.0
    %2729 = vmatprep.subr.mxu0 0.0
    %2730 = vmatpush1.msra.mxu0 0.0
    %2731 = vmatprep.subr.mxu0 0.0
    %2732 = vmatpush1.msra.mxu0 0.0
    %2733 = vmatprep.subr.mxu0 0.0
    %2734 = vmatpush1.msra.mxu0 0.0
    %2735 = vmatprep.subr.mxu0 0.0
    %2736 = vmatpush1.msra.mxu0 0.0
    %2737 = vmatprep.subr.mxu0 0.0
    %2738 = vmatpush1.msra.mxu0 %v338
    %2739 = vmatprep.subr.mxu0 0.0
    %2740 = vmatpush1.msra.mxu0 %v329
    %2741 = vmatprep.subr.mxu0 0.0
    %2742 = vmatpush1.msra.mxu0 %v328
    %2743 = vmatprep.subr.mxu0 0.0
    %2744 = vmatpush1.msra.mxu0 %v327
    %2745 = vmatprep.subr.mxu0 0.0
    %2746 = vmatpush2.msra.mxu0 0.0
    %2747 = vmatprep.subr.mxu0 0.0
    %2748 = vmatpush2.msra.mxu0 0.0
    %2749 = vmatprep.subr.mxu0 0.0
    %2750 = vmatpush2.msra.mxu0 0.0
    %2751 = vmatprep.subr.mxu0 0.0
    %2752 = vmatpush2.msra.mxu0 0.0
    %2753 = vmatprep.subr.mxu0 0.0
    %2754 = vmatpush2.msra.mxu0 0.0
    %2755 = vmatprep.subr.mxu0 0.0
    %2756 = vmatpush2.msra.mxu0 0.0
    %2757 = vmatprep.subr.mxu0 0.0
    %2758 = vmatpush2.msra.mxu0 0.0
    %2759 = vmatprep.subr.mxu0 0.0
    %2760 = vmatpush2.msra.mxu0 0.0
    %2761 = vmatprep.subr.mxu0 0.0
    %2762 = vmatpush2.msra.mxu0 0.0
    %2763 = vmatprep.subr.mxu0 0.0
    %2764 = vmatpush2.msra.mxu0 0.0
    %2765 = vmatprep.subr.mxu0 0.0
    %2766 = vmatpush2.msra.mxu0 0.0
    %2767 = vmatprep.subr.mxu0 0.0
    %2768 = vmatpush2.msra.mxu0 0.0
    %2769 = vmatprep.subr.mxu0 0.0
    %2770 = vmatpush2.msra.mxu0 0.0
    %2771 = vmatprep.subr.mxu0 0.0
    %2772 = vmatpush2.msra.mxu0 0.0
    %2773 = vmatprep.subr.mxu0 0.0
    %2774 = vmatpush2.msra.mxu0 0.0
    %2775 = vmatprep.subr.mxu0 0.0
    %2776 = vmatpush2.msra.mxu0 0.0
    %2777 = vmatprep.mubr.f32.mxu0 0.0
    %2778 = vmatmul.mubr.f32.gmra.mxu0 %v2024
    %v2779 = vpop.f32.mrf.mxu0
    %v2780 = vadd.f32 0.0, %v2779
    %v2781 = vpop.f32.mrf.mxu0
    %2782 = vmatprep.mubr.f32.mxu0 0.0
    %2783 = vmatmul.mubr.f32.gmra.mxu0 %v2026
    %v2784 = vpop.f32.mrf.mxu0
    %v2785 = vadd.f32 0.0, %v2784
    %v2786 = vpop.f32.mrf.mxu0
    %2787 = vdwg.mxu0
    %v2788 = vadd.f32 %v2711, %v2780
    %v2789 = vadd.f32 %v2712, %v2785
    %v2790 = vrot.slane %v54, 2
    %v2791 = vrot.slane %v55, 2
    %v2792 = vsel %vm422, %v2790, %v2791
    %v2793 = vsel %vm65, %v2792, 0
    %v2795 = vsel %vm65, %v2791, 0
    %2797 = vmatprep.subr.mxu0 0.0
    %2798 = vmatpush1.msra.mxu0 0.0
    %2799 = vmatprep.subr.mxu0 0.0
    %2800 = vmatpush1.msra.mxu0 0.0
    %2801 = vmatprep.subr.mxu0 0.0
    %2802 = vmatpush1.msra.mxu0 0.0
    %2803 = vmatprep.subr.mxu0 0.0
    %2804 = vmatpush1.msra.mxu0 0.0
    %2805 = vmatprep.subr.mxu0 0.0
    %2806 = vmatpush1.msra.mxu0 0.0
    %2807 = vmatprep.subr.mxu0 0.0
    %2808 = vmatpush1.msra.mxu0 0.0
    %2809 = vmatprep.subr.mxu0 0.0
    %2810 = vmatpush1.msra.mxu0 0.0
    %2811 = vmatprep.subr.mxu0 0.0
    %2812 = vmatpush1.msra.mxu0 0.0
    %2813 = vmatprep.subr.mxu0 0.0
    %2814 = vmatpush1.msra.mxu0 0.0
    %2815 = vmatprep.subr.mxu0 0.0
    %2816 = vmatpush1.msra.mxu0 0.0
    %2817 = vmatprep.subr.mxu0 0.0
    %2818 = vmatpush1.msra.mxu0 0.0
    %2819 = vmatprep.subr.mxu0 0.0
    %2820 = vmatpush1.msra.mxu0 0.0
    %2821 = vmatprep.subr.mxu0 0.0
    %2822 = vmatpush1.msra.mxu0 %v431
    %2823 = vmatprep.subr.mxu0 0.0
    %2824 = vmatpush1.msra.mxu0 %v420
    %2825 = vmatprep.subr.mxu0 0.0
    %2826 = vmatpush1.msra.mxu0 %v419
    %2827 = vmatprep.subr.mxu0 0.0
    %2828 = vmatpush1.msra.mxu0 %v418
    %2829 = vmatprep.subr.mxu0 0.0
    %2830 = vmatpush2.msra.mxu0 0.0
    %2831 = vmatprep.subr.mxu0 0.0
    %2832 = vmatpush2.msra.mxu0 0.0
    %2833 = vmatprep.subr.mxu0 0.0
    %2834 = vmatpush2.msra.mxu0 0.0
    %2835 = vmatprep.subr.mxu0 0.0
    %2836 = vmatpush2.msra.mxu0 0.0
    %2837 = vmatprep.subr.mxu0 0.0
    %2838 = vmatpush2.msra.mxu0 0.0
    %2839 = vmatprep.subr.mxu0 0.0
    %2840 = vmatpush2.msra.mxu0 0.0
    %2841 = vmatprep.subr.mxu0 0.0
    %2842 = vmatpush2.msra.mxu0 0.0
    %2843 = vmatprep.subr.mxu0 0.0
    %2844 = vmatpush2.msra.mxu0 0.0
    %2845 = vmatprep.subr.mxu0 0.0
    %2846 = vmatpush2.msra.mxu0 0.0
    %2847 = vmatprep.subr.mxu0 0.0
    %2848 = vmatpush2.msra.mxu0 0.0
    %2849 = vmatprep.subr.mxu0 0.0
    %2850 = vmatpush2.msra.mxu0 0.0
    %2851 = vmatprep.subr.mxu0 0.0
    %2852 = vmatpush2.msra.mxu0 0.0
    %2853 = vmatprep.subr.mxu0 0.0
    %2854 = vmatpush2.msra.mxu0 0.0
    %2855 = vmatprep.subr.mxu0 0.0
    %2856 = vmatpush2.msra.mxu0 0.0
    %2857 = vmatprep.subr.mxu0 0.0
    %2858 = vmatpush2.msra.mxu0 0.0
    %2859 = vmatprep.subr.mxu0 0.0
    %2860 = vmatpush2.msra.mxu0 0.0
    %2861 = vmatprep.mubr.f32.mxu0 0.0
    %2862 = vmatmul.mubr.f32.gmra.mxu0 %v2793
    %v2863 = vpop.f32.mrf.mxu0
    %v2864 = vadd.f32 0.0, %v2863
    %v2865 = vpop.f32.mrf.mxu0
    %2866 = vmatprep.mubr.f32.mxu0 0.0
    %2867 = vmatmul.mubr.f32.gmra.mxu0 %v2795
    %v2868 = vpop.f32.mrf.mxu0
    %v2869 = vadd.f32 0.0, %v2868
    %v2870 = vpop.f32.mrf.mxu0
    %2871 = vdwg.mxu0
    %v2872 = vadd.f32 %v2788, %v2864
    %v2873 = vadd.f32 %v2789, %v2869
    %2874 = vmatprep.subr.mxu0 0.0
    %2875 = vmatpush1.msra.mxu0 0.0
    %2876 = vmatprep.subr.mxu0 0.0
    %2877 = vmatpush1.msra.mxu0 0.0
    %2878 = vmatprep.subr.mxu0 0.0
    %2879 = vmatpush1.msra.mxu0 0.0
    %2880 = vmatprep.subr.mxu0 0.0
    %2881 = vmatpush1.msra.mxu0 0.0
    %2882 = vmatprep.subr.mxu0 0.0
    %2883 = vmatpush1.msra.mxu0 0.0
    %2884 = vmatprep.subr.mxu0 0.0
    %2885 = vmatpush1.msra.mxu0 0.0
    %2886 = vmatprep.subr.mxu0 0.0
    %2887 = vmatpush1.msra.mxu0 0.0
    %2888 = vmatprep.subr.mxu0 0.0
    %2889 = vmatpush1.msra.mxu0 0.0
    %2890 = vmatprep.subr.mxu0 0.0
    %2891 = vmatpush1.msra.mxu0 0.0
    %2892 = vmatprep.subr.mxu0 0.0
    %2893 = vmatpush1.msra.mxu0 0.0
    %2894 = vmatprep.subr.mxu0 0.0
    %2895 = vmatpush1.msra.mxu0 0.0
    %2896 = vmatprep.subr.mxu0 0.0
    %2897 = vmatpush1.msra.mxu0 0.0
    %2898 = vmatprep.subr.mxu0 0.0
    %2899 = vmatpush1.msra.mxu0 %v521
    %2900 = vmatprep.subr.mxu0 0.0
    %2901 = vmatpush1.msra.mxu0 %v518
    %2902 = vmatprep.subr.mxu0 0.0
    %2903 = vmatpush1.msra.mxu0 %v517
    %2904 = vmatprep.subr.mxu0 0.0
    %2905 = vmatpush1.msra.mxu0 %v516
    %2906 = vmatprep.subr.mxu0 0.0
    %2907 = vmatpush2.msra.mxu0 0.0
    %2908 = vmatprep.subr.mxu0 0.0
    %2909 = vmatpush2.msra.mxu0 0.0
    %2910 = vmatprep.subr.mxu0 0.0
    %2911 = vmatpush2.msra.mxu0 0.0
    %2912 = vmatprep.subr.mxu0 0.0
    %2913 = vmatpush2.msra.mxu0 0.0
    %2914 = vmatprep.subr.mxu0 0.0
    %2915 = vmatpush2.msra.mxu0 0.0
    %2916 = vmatprep.subr.mxu0 0.0
    %2917 = vmatpush2.msra.mxu0 0.0
    %2918 = vmatprep.subr.mxu0 0.0
    %2919 = vmatpush2.msra.mxu0 0.0
    %2920 = vmatprep.subr.mxu0 0.0
    %2921 = vmatpush2.msra.mxu0 0.0
    %2922 = vmatprep.subr.mxu0 0.0
    %2923 = vmatpush2.msra.mxu0 0.0
    %2924 = vmatprep.subr.mxu0 0.0
    %2925 = vmatpush2.msra.mxu0 0.0
    %2926 = vmatprep.subr.mxu0 0.0
    %2927 = vmatpush2.msra.mxu0 0.0
    %2928 = vmatprep.subr.mxu0 0.0
    %2929 = vmatpush2.msra.mxu0 0.0
    %2930 = vmatprep.subr.mxu0 0.0
    %2931 = vmatpush2.msra.mxu0 0.0
    %2932 = vmatprep.subr.mxu0 0.0
    %2933 = vmatpush2.msra.mxu0 0.0
    %2934 = vmatprep.subr.mxu0 0.0
    %2935 = vmatpush2.msra.mxu0 0.0
    %2936 = vmatprep.subr.mxu0 0.0
    %2937 = vmatpush2.msra.mxu0 0.0
    %2938 = vmatprep.mubr.f32.mxu0 0.0
    %2939 = vmatmul.mubr.f32.gmra.mxu0 %v426
    %v2940 = vpop.f32.mrf.mxu0
    %v2941 = vadd.f32 0.0, %v2940
    %v2942 = vpop.f32.mrf.mxu0
    %2943 = vmatprep.mubr.f32.mxu0 0.0
    %2944 = vmatmul.mubr.f32.gmra.mxu0 %v428
    %v2945 = vpop.f32.mrf.mxu0
    %v2946 = vadd.f32 0.0, %v2945
    %v2947 = vpop.f32.mrf.mxu0
    %2948 = vdwg.mxu0
    %2949 = vmatprep.subr.mxu0 0.0
    %2950 = vmatpush1.msra.mxu0 0.0
    %2951 = vmatprep.subr.mxu0 0.0
    %2952 = vmatpush1.msra.mxu0 0.0
    %2953 = vmatprep.subr.mxu0 0.0
    %2954 = vmatpush1.msra.mxu0 0.0
    %2955 = vmatprep.subr.mxu0 0.0
    %2956 = vmatpush1.msra.mxu0 0.0
    %2957 = vmatprep.subr.mxu0 0.0
    %2958 = vmatpush1.msra.mxu0 0.0
    %2959 = vmatprep.subr.mxu0 0.0
    %2960 = vmatpush1.msra.mxu0 0.0
    %2961 = vmatprep.subr.mxu0 0.0
    %2962 = vmatpush1.msra.mxu0 0.0
    %2963 = vmatprep.subr.mxu0 0.0
    %2964 = vmatpush1.msra.mxu0 0.0
    %2965 = vmatprep.subr.mxu0 0.0
    %2966 = vmatpush1.msra.mxu0 0.0
    %2967 = vmatprep.subr.mxu0 0.0
    %2968 = vmatpush1.msra.mxu0 0.0
    %2969 = vmatprep.subr.mxu0 0.0
    %2970 = vmatpush1.msra.mxu0 0.0
    %2971 = vmatprep.subr.mxu0 0.0
    %2972 = vmatpush1.msra.mxu0 0.0
    %2973 = vmatprep.subr.mxu0 0.0
    %2974 = vmatpush1.msra.mxu0 %v599
    %2975 = vmatprep.subr.mxu0 0.0
    %2976 = vmatpush1.msra.mxu0 %v513
    %2977 = vmatprep.subr.mxu0 0.0
    %2978 = vmatpush1.msra.mxu0 %v512
    %2979 = vmatprep.subr.mxu0 0.0
    %2980 = vmatpush1.msra.mxu0 %v511
    %2981 = vmatprep.subr.mxu0 0.0
    %2982 = vmatpush2.msra.mxu0 0.0
    %2983 = vmatprep.subr.mxu0 0.0
    %2984 = vmatpush2.msra.mxu0 0.0
    %2985 = vmatprep.subr.mxu0 0.0
    %2986 = vmatpush2.msra.mxu0 0.0
    %2987 = vmatprep.subr.mxu0 0.0
    %2988 = vmatpush2.msra.mxu0 0.0
    %2989 = vmatprep.subr.mxu0 0.0
    %2990 = vmatpush2.msra.mxu0 0.0
    %2991 = vmatprep.subr.mxu0 0.0
    %2992 = vmatpush2.msra.mxu0 0.0
    %2993 = vmatprep.subr.mxu0 0.0
    %2994 = vmatpush2.msra.mxu0 0.0
    %2995 = vmatprep.subr.mxu0 0.0
    %2996 = vmatpush2.msra.mxu0 0.0
    %2997 = vmatprep.subr.mxu0 0.0
    %2998 = vmatpush2.msra.mxu0 0.0
    %2999 = vmatprep.subr.mxu0 0.0
    %3000 = vmatpush2.msra.mxu0 0.0
    %3001 = vmatprep.subr.mxu0 0.0
    %3002 = vmatpush2.msra.mxu0 0.0
    %3003 = vmatprep.subr.mxu0 0.0
    %3004 = vmatpush2.msra.mxu0 0.0
    %3005 = vmatprep.subr.mxu0 0.0
    %3006 = vmatpush2.msra.mxu0 0.0
    %3007 = vmatprep.subr.mxu0 0.0
    %3008 = vmatpush2.msra.mxu0 0.0
    %3009 = vmatprep.subr.mxu0 0.0
    %3010 = vmatpush2.msra.mxu0 0.0
    %3011 = vmatprep.subr.mxu0 0.0
    %3012 = vmatpush2.msra.mxu0 0.0
    %3013 = vmatprep.mubr.f32.mxu0 0.0
    %3014 = vmatmul.mubr.f32.gmra.mxu0 %v332
    %v3015 = vpop.f32.mrf.mxu0
    %v3016 = vadd.f32 %v2941, %v3015
    %v3017 = vpop.f32.mrf.mxu0
    %3018 = vmatprep.mubr.f32.mxu0 0.0
    %3019 = vmatmul.mubr.f32.gmra.mxu0 %v335
    %v3020 = vpop.f32.mrf.mxu0
    %v3021 = vadd.f32 %v2946, %v3020
    %v3022 = vpop.f32.mrf.mxu0
    %3023 = vdwg.mxu0
    %3024 = vmatprep.subr.mxu0 0.0
    %3025 = vmatpush1.msra.mxu0 0.0
    %3026 = vmatprep.subr.mxu0 0.0
    %3027 = vmatpush1.msra.mxu0 0.0
    %3028 = vmatprep.subr.mxu0 0.0
    %3029 = vmatpush1.msra.mxu0 0.0
    %3030 = vmatprep.subr.mxu0 0.0
    %3031 = vmatpush1.msra.mxu0 0.0
    %3032 = vmatprep.subr.mxu0 0.0
    %3033 = vmatpush1.msra.mxu0 0.0
    %3034 = vmatprep.subr.mxu0 0.0
    %3035 = vmatpush1.msra.mxu0 0.0
    %3036 = vmatprep.subr.mxu0 0.0
    %3037 = vmatpush1.msra.mxu0 0.0
    %3038 = vmatprep.subr.mxu0 0.0
    %3039 = vmatpush1.msra.mxu0 0.0
    %3040 = vmatprep.subr.mxu0 0.0
    %3041 = vmatpush1.msra.mxu0 0.0
    %3042 = vmatprep.subr.mxu0 0.0
    %3043 = vmatpush1.msra.mxu0 0.0
    %3044 = vmatprep.subr.mxu0 0.0
    %3045 = vmatpush1.msra.mxu0 0.0
    %3046 = vmatprep.subr.mxu0 0.0
    %3047 = vmatpush1.msra.mxu0 0.0
    %3048 = vmatprep.subr.mxu0 0.0
    %3049 = vmatpush1.msra.mxu0 %v682
    %3050 = vmatprep.subr.mxu0 0.0
    %3051 = vmatpush1.msra.mxu0 %v679
    %3052 = vmatprep.subr.mxu0 0.0
    %3053 = vmatpush1.msra.mxu0 %v678
    %3054 = vmatprep.subr.mxu0 0.0
    %3055 = vmatpush1.msra.mxu0 %v677
    %3056 = vmatprep.subr.mxu0 0.0
    %3057 = vmatpush2.msra.mxu0 0.0
    %3058 = vmatprep.subr.mxu0 0.0
    %3059 = vmatpush2.msra.mxu0 0.0
    %3060 = vmatprep.subr.mxu0 0.0
    %3061 = vmatpush2.msra.mxu0 0.0
    %3062 = vmatprep.subr.mxu0 0.0
    %3063 = vmatpush2.msra.mxu0 0.0
    %3064 = vmatprep.subr.mxu0 0.0
    %3065 = vmatpush2.msra.mxu0 0.0
    %3066 = vmatprep.subr.mxu0 0.0
    %3067 = vmatpush2.msra.mxu0 0.0
    %3068 = vmatprep.subr.mxu0 0.0
    %3069 = vmatpush2.msra.mxu0 0.0
    %3070 = vmatprep.subr.mxu0 0.0
    %3071 = vmatpush2.msra.mxu0 0.0
    %3072 = vmatprep.subr.mxu0 0.0
    %3073 = vmatpush2.msra.mxu0 0.0
    %3074 = vmatprep.subr.mxu0 0.0
    %3075 = vmatpush2.msra.mxu0 0.0
    %3076 = vmatprep.subr.mxu0 0.0
    %3077 = vmatpush2.msra.mxu0 0.0
    %3078 = vmatprep.subr.mxu0 0.0
    %3079 = vmatpush2.msra.mxu0 0.0
    %3080 = vmatprep.subr.mxu0 0.0
    %3081 = vmatpush2.msra.mxu0 0.0
    %3082 = vmatprep.subr.mxu0 0.0
    %3083 = vmatpush2.msra.mxu0 0.0
    %3084 = vmatprep.subr.mxu0 0.0
    %3085 = vmatpush2.msra.mxu0 0.0
    %3086 = vmatprep.subr.mxu0 0.0
    %3087 = vmatpush2.msra.mxu0 0.0
    %3088 = vmatprep.mubr.f32.mxu0 0.0
    %3089 = vmatmul.mubr.f32.gmra.mxu0 %v1238
    %v3090 = vpop.f32.mrf.mxu0
    %v3091 = vadd.f32 0.0, %v3090
    %v3092 = vpop.f32.mrf.mxu0
    %3093 = vmatprep.mubr.f32.mxu0 0.0
    %3094 = vmatmul.mubr.f32.gmra.mxu0 %v1240
    %v3095 = vpop.f32.mrf.mxu0
    %v3096 = vadd.f32 0.0, %v3095
    %v3097 = vpop.f32.mrf.mxu0
    %3098 = vdwg.mxu0
    %v3099 = vadd.f32 %v3016, %v3091
    %v3100 = vadd.f32 %v3021, %v3096
    %3101 = vmatprep.subr.mxu0 0.0
    %3102 = vmatpush1.msra.mxu0 0.0
    %3103 = vmatprep.subr.mxu0 0.0
    %3104 = vmatpush1.msra.mxu0 0.0
    %3105 = vmatprep.subr.mxu0 0.0
    %3106 = vmatpush1.msra.mxu0 0.0
    %3107 = vmatprep.subr.mxu0 0.0
    %3108 = vmatpush1.msra.mxu0 0.0
    %3109 = vmatprep.subr.mxu0 0.0
    %3110 = vmatpush1.msra.mxu0 0.0
    %3111 = vmatprep.subr.mxu0 0.0
    %3112 = vmatpush1.msra.mxu0 0.0
    %3113 = vmatprep.subr.mxu0 0.0
    %3114 = vmatpush1.msra.mxu0 0.0
    %3115 = vmatprep.subr.mxu0 0.0
    %3116 = vmatpush1.msra.mxu0 0.0
    %3117 = vmatprep.subr.mxu0 0.0
    %3118 = vmatpush1.msra.mxu0 0.0
    %3119 = vmatprep.subr.mxu0 0.0
    %3120 = vmatpush1.msra.mxu0 0.0
    %3121 = vmatprep.subr.mxu0 0.0
    %3122 = vmatpush1.msra.mxu0 0.0
    %3123 = vmatprep.subr.mxu0 0.0
    %3124 = vmatpush1.msra.mxu0 0.0
    %3125 = vmatprep.subr.mxu0 0.0
    %3126 = vmatpush1.msra.mxu0 %v767
    %3127 = vmatprep.subr.mxu0 0.0
    %3128 = vmatpush1.msra.mxu0 %v764
    %3129 = vmatprep.subr.mxu0 0.0
    %3130 = vmatpush1.msra.mxu0 %v763
    %3131 = vmatprep.subr.mxu0 0.0
    %3132 = vmatpush1.msra.mxu0 %v762
    %3133 = vmatprep.subr.mxu0 0.0
    %3134 = vmatpush2.msra.mxu0 0.0
    %3135 = vmatprep.subr.mxu0 0.0
    %3136 = vmatpush2.msra.mxu0 0.0
    %3137 = vmatprep.subr.mxu0 0.0
    %3138 = vmatpush2.msra.mxu0 0.0
    %3139 = vmatprep.subr.mxu0 0.0
    %3140 = vmatpush2.msra.mxu0 0.0
    %3141 = vmatprep.subr.mxu0 0.0
    %3142 = vmatpush2.msra.mxu0 0.0
    %3143 = vmatprep.subr.mxu0 0.0
    %3144 = vmatpush2.msra.mxu0 0.0
    %3145 = vmatprep.subr.mxu0 0.0
    %3146 = vmatpush2.msra.mxu0 0.0
    %3147 = vmatprep.subr.mxu0 0.0
    %3148 = vmatpush2.msra.mxu0 0.0
    %3149 = vmatprep.subr.mxu0 0.0
    %3150 = vmatpush2.msra.mxu0 0.0
    %3151 = vmatprep.subr.mxu0 0.0
    %3152 = vmatpush2.msra.mxu0 0.0
    %3153 = vmatprep.subr.mxu0 0.0
    %3154 = vmatpush2.msra.mxu0 0.0
    %3155 = vmatprep.subr.mxu0 0.0
    %3156 = vmatpush2.msra.mxu0 0.0
    %3157 = vmatprep.subr.mxu0 0.0
    %3158 = vmatpush2.msra.mxu0 0.0
    %3159 = vmatprep.subr.mxu0 0.0
    %3160 = vmatpush2.msra.mxu0 0.0
    %3161 = vmatprep.subr.mxu0 0.0
    %3162 = vmatpush2.msra.mxu0 0.0
    %3163 = vmatprep.subr.mxu0 0.0
    %3164 = vmatpush2.msra.mxu0 0.0
    %3165 = vmatprep.mubr.f32.mxu0 0.0
    %3166 = vmatmul.mubr.f32.gmra.mxu0 %v2024
    %v3167 = vpop.f32.mrf.mxu0
    %v3168 = vadd.f32 0.0, %v3167
    %v3169 = vpop.f32.mrf.mxu0
    %3170 = vmatprep.mubr.f32.mxu0 0.0
    %3171 = vmatmul.mubr.f32.gmra.mxu0 %v2026
    %v3172 = vpop.f32.mrf.mxu0
    %v3173 = vadd.f32 0.0, %v3172
    %v3174 = vpop.f32.mrf.mxu0
    %3175 = vdwg.mxu0
    %v3176 = vadd.f32 %v3099, %v3168
    %v3177 = vadd.f32 %v3100, %v3173
    %3178 = vmatprep.subr.mxu0 0.0
    %3179 = vmatpush1.msra.mxu0 0.0
    %3180 = vmatprep.subr.mxu0 0.0
    %3181 = vmatpush1.msra.mxu0 0.0
    %3182 = vmatprep.subr.mxu0 0.0
    %3183 = vmatpush1.msra.mxu0 0.0
    %3184 = vmatprep.subr.mxu0 0.0
    %3185 = vmatpush1.msra.mxu0 0.0
    %3186 = vmatprep.subr.mxu0 0.0
    %3187 = vmatpush1.msra.mxu0 0.0
    %3188 = vmatprep.subr.mxu0 0.0
    %3189 = vmatpush1.msra.mxu0 0.0
    %3190 = vmatprep.subr.mxu0 0.0
    %3191 = vmatpush1.msra.mxu0 0.0
    %3192 = vmatprep.subr.mxu0 0.0
    %3193 = vmatpush1.msra.mxu0 0.0
    %3194 = vmatprep.subr.mxu0 0.0
    %3195 = vmatpush1.msra.mxu0 0.0
    %3196 = vmatprep.subr.mxu0 0.0
    %3197 = vmatpush1.msra.mxu0 0.0
    %3198 = vmatprep.subr.mxu0 0.0
    %3199 = vmatpush1.msra.mxu0 0.0
    %3200 = vmatprep.subr.mxu0 0.0
    %3201 = vmatpush1.msra.mxu0 0.0
    %3202 = vmatprep.subr.mxu0 0.0
    %3203 = vmatpush1.msra.mxu0 %v852
    %3204 = vmatprep.subr.mxu0 0.0
    %3205 = vmatpush1.msra.mxu0 %v849
    %3206 = vmatprep.subr.mxu0 0.0
    %3207 = vmatpush1.msra.mxu0 %v848
    %3208 = vmatprep.subr.mxu0 0.0
    %3209 = vmatpush1.msra.mxu0 %v847
    %3210 = vmatprep.subr.mxu0 0.0
    %3211 = vmatpush2.msra.mxu0 0.0
    %3212 = vmatprep.subr.mxu0 0.0
    %3213 = vmatpush2.msra.mxu0 0.0
    %3214 = vmatprep.subr.mxu0 0.0
    %3215 = vmatpush2.msra.mxu0 0.0
    %3216 = vmatprep.subr.mxu0 0.0
    %3217 = vmatpush2.msra.mxu0 0.0
    %3218 = vmatprep.subr.mxu0 0.0
    %3219 = vmatpush2.msra.mxu0 0.0
    %3220 = vmatprep.subr.mxu0 0.0
    %3221 = vmatpush2.msra.mxu0 0.0
    %3222 = vmatprep.subr.mxu0 0.0
    %3223 = vmatpush2.msra.mxu0 0.0
    %3224 = vmatprep.subr.mxu0 0.0
    %3225 = vmatpush2.msra.mxu0 0.0
    %3226 = vmatprep.subr.mxu0 0.0
    %3227 = vmatpush2.msra.mxu0 0.0
    %3228 = vmatprep.subr.mxu0 0.0
    %3229 = vmatpush2.msra.mxu0 0.0
    %3230 = vmatprep.subr.mxu0 0.0
    %3231 = vmatpush2.msra.mxu0 0.0
    %3232 = vmatprep.subr.mxu0 0.0
    %3233 = vmatpush2.msra.mxu0 0.0
    %3234 = vmatprep.subr.mxu0 0.0
    %3235 = vmatpush2.msra.mxu0 0.0
    %3236 = vmatprep.subr.mxu0 0.0
    %3237 = vmatpush2.msra.mxu0 0.0
    %3238 = vmatprep.subr.mxu0 0.0
    %3239 = vmatpush2.msra.mxu0 0.0
    %3240 = vmatprep.subr.mxu0 0.0
    %3241 = vmatpush2.msra.mxu0 0.0
    %3242 = vmatprep.mubr.f32.mxu0 0.0
    %3243 = vmatmul.mubr.f32.gmra.mxu0 %v2793
    %v3244 = vpop.f32.mrf.mxu0
    %v3245 = vadd.f32 0.0, %v3244
    %v3246 = vpop.f32.mrf.mxu0
    %3247 = vmatprep.mubr.f32.mxu0 0.0
    %3248 = vmatmul.mubr.f32.gmra.mxu0 %v2795
    %v3249 = vpop.f32.mrf.mxu0
    %v3250 = vadd.f32 0.0, %v3249
    %v3251 = vpop.f32.mrf.mxu0
    %3252 = vdwg.mxu0
    %v3253 = vadd.f32 %v3176, %v3245
    %v3254 = vadd.f32 %v3177, %v3250
    %v3255 = vmax.f32 %v2103, %v2484
    %v3256 = vmax.f32 %v2104, %v2485
    %v3257 = vmax.f32 %v2872, %v3253
    %v3258 = vmax.f32 %v2873, %v3254
    %v3259 = vmax.f32 %v3255, %v3257
    %v3260 = vmax.f32 %v3256, %v3258
    %v3261 = vadd.f32 %v3259, %v1711
    %v3262 = vadd.f32 %v3260, %v1711
    %v3263 = vmax.f32 %v3261, 0.0
    %v3264 = vmax.f32 %v3262, 0.0
    %v3265 = vld [vmem:[%s6] sm:$0xff]
    %v3266 = vld [vmem:[%s6 + $0x8] sm:$0xff]
    %v3267 = vld [vmem:[%s6 + $0x10] sm:$0xff]
    %v3268 = vld [vmem:[%s6 + $0x18] sm:$0xff]
    %v3269 = vld [vmem:[%s6 + $0x20] sm:$0xff]
    %v3270 = vld [vmem:[%s6 + $0x28] sm:$0xff]
    %v3271 = vld [vmem:[%s6 + $0x30] sm:$0xff]
    %v3272 = vld [vmem:[%s6 + $0x38] sm:$0xff]
    %v3273 = vld [vmem:[%s6 + $0x40] sm:$0xff]
    %s3274 = scalar_lea.vmem %s6, 144
    %v3275 = vld [vmem:[%s3274] sm:$0xff]
    %v3276 = vld [vmem:[%s3274 + $0x8] sm:$0xff]
    %v3277 = vld [vmem:[%s3274 + $0x10] sm:$0xff]
    %v3278 = vld [vmem:[%s3274 + $0x18] sm:$0xff]
    %v3279 = vld [vmem:[%s3274 + $0x20] sm:$0xff]
    %v3280 = vld [vmem:[%s3274 + $0x28] sm:$0xff]
    %v3281 = vld [vmem:[%s3274 + $0x30] sm:$0xff]
    %v3282 = vld [vmem:[%s3274 + $0x38] sm:$0xff]
    %v3283 = vld [vmem:[%s3274 + $0x40] sm:$0xff]
    %vm3284 = vcmask 588800
    %v3286 = vsel %vm3284, %v3263, 0
    %3288 = vmatprep.subr.mxu0 0.0
    %3289 = vmatpush1.msra.mxu0 0.0
    %3290 = vmatprep.subr.mxu0 0.0
    %3291 = vmatpush1.msra.mxu0 0.0
    %3292 = vmatprep.subr.mxu0 0.0
    %3293 = vmatpush1.msra.mxu0 0.0
    %3294 = vmatprep.subr.mxu0 0.0
    %3295 = vmatpush1.msra.mxu0 0.0
    %3296 = vmatprep.subr.mxu0 0.0
    %3297 = vmatpush1.msra.mxu0 0.0
    %3298 = vmatprep.subr.mxu0 0.0
    %3299 = vmatpush1.msra.mxu0 0.0
    %3300 = vmatprep.subr.mxu0 0.0
    %3301 = vmatpush1.msra.mxu0 0.0
    %3302 = vmatprep.subr.mxu0 0.0
    %3303 = vmatpush1.msra.mxu0 %v3283
    %3304 = vmatprep.subr.mxu0 0.0
    %3305 = vmatpush1.msra.mxu0 %v3282
    %3306 = vmatprep.subr.mxu0 0.0
    %3307 = vmatpush1.msra.mxu0 %v3281
    %3308 = vmatprep.subr.mxu0 0.0
    %3309 = vmatpush1.msra.mxu0 %v3280
    %3310 = vmatprep.subr.mxu0 0.0
    %3311 = vmatpush1.msra.mxu0 %v3279
    %3312 = vmatprep.subr.mxu0 0.0
    %3313 = vmatpush1.msra.mxu0 %v3278
    %3314 = vmatprep.subr.mxu0 0.0
    %3315 = vmatpush1.msra.mxu0 %v3277
    %3316 = vmatprep.subr.mxu0 0.0
    %3317 = vmatpush1.msra.mxu0 %v3276
    %3318 = vmatprep.subr.mxu0 0.0
    %3319 = vmatpush1.msra.mxu0 %v3275
    %3320 = vmatprep.subr.mxu0 0.0
    %3321 = vmatpush2.msra.mxu0 0.0
    %3322 = vmatprep.subr.mxu0 0.0
    %3323 = vmatpush2.msra.mxu0 0.0
    %3324 = vmatprep.subr.mxu0 0.0
    %3325 = vmatpush2.msra.mxu0 0.0
    %3326 = vmatprep.subr.mxu0 0.0
    %3327 = vmatpush2.msra.mxu0 0.0
    %3328 = vmatprep.subr.mxu0 0.0
    %3329 = vmatpush2.msra.mxu0 0.0
    %3330 = vmatprep.subr.mxu0 0.0
    %3331 = vmatpush2.msra.mxu0 0.0
    %3332 = vmatprep.subr.mxu0 0.0
    %3333 = vmatpush2.msra.mxu0 0.0
    %3334 = vmatprep.subr.mxu0 0.0
    %3335 = vmatpush2.msra.mxu0 0.0
    %3336 = vmatprep.subr.mxu0 0.0
    %3337 = vmatpush2.msra.mxu0 0.0
    %3338 = vmatprep.subr.mxu0 0.0
    %3339 = vmatpush2.msra.mxu0 0.0
    %3340 = vmatprep.subr.mxu0 0.0
    %3341 = vmatpush2.msra.mxu0 0.0
    %3342 = vmatprep.subr.mxu0 0.0
    %3343 = vmatpush2.msra.mxu0 0.0
    %3344 = vmatprep.subr.mxu0 0.0
    %3345 = vmatpush2.msra.mxu0 0.0
    %3346 = vmatprep.subr.mxu0 0.0
    %3347 = vmatpush2.msra.mxu0 0.0
    %3348 = vmatprep.subr.mxu0 0.0
    %3349 = vmatpush2.msra.mxu0 0.0
    %3350 = vmatprep.subr.mxu0 0.0
    %3351 = vmatpush2.msra.mxu0 0.0
    %3352 = vmatprep.mubr.f32.mxu0 0.0
    %3353 = vmatmul.mubr.f32.gmra.mxu0 %v3286
    %v3354 = vpop.f32.mrf.mxu0
    %v3355 = vadd.f32 0.0, %v3354
    %v3356 = vpop.f32.mrf.mxu0
    %3357 = vdwg.mxu0
    %v3359 = vsel %vm3284, %v1715, 0
    %3361 = vmatprep.subr.mxu0 0.0
    %3362 = vmatpush1.msra.mxu0 0.0
    %3363 = vmatprep.subr.mxu0 0.0
    %3364 = vmatpush1.msra.mxu0 0.0
    %3365 = vmatprep.subr.mxu0 0.0
    %3366 = vmatpush1.msra.mxu0 0.0
    %3367 = vmatprep.subr.mxu0 0.0
    %3368 = vmatpush1.msra.mxu0 0.0
    %3369 = vmatprep.subr.mxu0 0.0
    %3370 = vmatpush1.msra.mxu0 0.0
    %3371 = vmatprep.subr.mxu0 0.0
    %3372 = vmatpush1.msra.mxu0 0.0
    %3373 = vmatprep.subr.mxu0 0.0
    %3374 = vmatpush1.msra.mxu0 0.0
    %3375 = vmatprep.subr.mxu0 0.0
    %3376 = vmatpush1.msra.mxu0 %v3273
    %3377 = vmatprep.subr.mxu0 0.0
    %3378 = vmatpush1.msra.mxu0 %v3272
    %3379 = vmatprep.subr.mxu0 0.0
    %3380 = vmatpush1.msra.mxu0 %v3271
    %3381 = vmatprep.subr.mxu0 0.0
    %3382 = vmatpush1.msra.mxu0 %v3270
    %3383 = vmatprep.subr.mxu0 0.0
    %3384 = vmatpush1.msra.mxu0 %v3269
    %3385 = vmatprep.subr.mxu0 0.0
    %3386 = vmatpush1.msra.mxu0 %v3268
    %3387 = vmatprep.subr.mxu0 0.0
    %3388 = vmatpush1.msra.mxu0 %v3267
    %3389 = vmatprep.subr.mxu0 0.0
    %3390 = vmatpush1.msra.mxu0 %v3266
    %3391 = vmatprep.subr.mxu0 0.0
    %3392 = vmatpush1.msra.mxu0 %v3265
    %3393 = vmatprep.subr.mxu0 0.0
    %3394 = vmatpush2.msra.mxu0 0.0
    %3395 = vmatprep.subr.mxu0 0.0
    %3396 = vmatpush2.msra.mxu0 0.0
    %3397 = vmatprep.subr.mxu0 0.0
    %3398 = vmatpush2.msra.mxu0 0.0
    %3399 = vmatprep.subr.mxu0 0.0
    %3400 = vmatpush2.msra.mxu0 0.0
    %3401 = vmatprep.subr.mxu0 0.0
    %3402 = vmatpush2.msra.mxu0 0.0
    %3403 = vmatprep.subr.mxu0 0.0
    %3404 = vmatpush2.msra.mxu0 0.0
    %3405 = vmatprep.subr.mxu0 0.0
    %3406 = vmatpush2.msra.mxu0 0.0
    %3407 = vmatprep.subr.mxu0 0.0
    %3408 = vmatpush2.msra.mxu0 0.0
    %3409 = vmatprep.subr.mxu0 0.0
    %3410 = vmatpush2.msra.mxu0 0.0
    %3411 = vmatprep.subr.mxu0 0.0
    %3412 = vmatpush2.msra.mxu0 0.0
    %3413 = vmatprep.subr.mxu0 0.0
    %3414 = vmatpush2.msra.mxu0 0.0
    %3415 = vmatprep.subr.mxu0 0.0
    %3416 = vmatpush2.msra.mxu0 0.0
    %3417 = vmatprep.subr.mxu0 0.0
    %3418 = vmatpush2.msra.mxu0 0.0
    %3419 = vmatprep.subr.mxu0 0.0
    %3420 = vmatpush2.msra.mxu0 0.0
    %3421 = vmatprep.subr.mxu0 0.0
    %3422 = vmatpush2.msra.mxu0 0.0
    %3423 = vmatprep.subr.mxu0 0.0
    %3424 = vmatpush2.msra.mxu0 0.0
    %3425 = vmatprep.mubr.f32.mxu0 0.0
    %3426 = vmatmul.mubr.f32.gmra.mxu0 %v3359
    %v3427 = vpop.f32.mrf.mxu0
    %v3428 = vadd.f32 %v3355, %v3427
    %v3429 = vpop.f32.mrf.mxu0
    %3430 = vdwg.mxu0
    %s3431 = scalar_lea.vmem %s6, 288
    %v3432 = vld [vmem:[%s3431] sm:$0xff]
    %v3433 = vld [vmem:[%s3431 + $0x8] sm:$0xff]
    %v3434 = vld [vmem:[%s3431 + $0x10] sm:$0xff]
    %v3435 = vld [vmem:[%s3431 + $0x18] sm:$0xff]
    %v3436 = vld [vmem:[%s3431 + $0x20] sm:$0xff]
    %v3437 = vld [vmem:[%s3431 + $0x28] sm:$0xff]
    %v3438 = vld [vmem:[%s3431 + $0x30] sm:$0xff]
    %v3439 = vld [vmem:[%s3431 + $0x38] sm:$0xff]
    %v3440 = vld [vmem:[%s3431 + $0x40] sm:$0xff]
    %v3442 = vrot.slane %v1715, 2
    %v3443 = vrot.slane %v1716, 2
    %v3444 = vsel %vm422, %v3442, %v3443
    %v3445 = vsel %vm3284, %v3444, 0
    %3447 = vmatprep.subr.mxu0 0.0
    %3448 = vmatpush1.msra.mxu0 0.0
    %3449 = vmatprep.subr.mxu0 0.0
    %3450 = vmatpush1.msra.mxu0 0.0
    %3451 = vmatprep.subr.mxu0 0.0
    %3452 = vmatpush1.msra.mxu0 0.0
    %3453 = vmatprep.subr.mxu0 0.0
    %3454 = vmatpush1.msra.mxu0 0.0
    %3455 = vmatprep.subr.mxu0 0.0
    %3456 = vmatpush1.msra.mxu0 0.0
    %3457 = vmatprep.subr.mxu0 0.0
    %3458 = vmatpush1.msra.mxu0 0.0
    %3459 = vmatprep.subr.mxu0 0.0
    %3460 = vmatpush1.msra.mxu0 0.0
    %3461 = vmatprep.subr.mxu0 0.0
    %3462 = vmatpush1.msra.mxu0 %v3440
    %3463 = vmatprep.subr.mxu0 0.0
    %3464 = vmatpush1.msra.mxu0 %v3439
    %3465 = vmatprep.subr.mxu0 0.0
    %3466 = vmatpush1.msra.mxu0 %v3438
    %3467 = vmatprep.subr.mxu0 0.0
    %3468 = vmatpush1.msra.mxu0 %v3437
    %3469 = vmatprep.subr.mxu0 0.0
    %3470 = vmatpush1.msra.mxu0 %v3436
    %3471 = vmatprep.subr.mxu0 0.0
    %3472 = vmatpush1.msra.mxu0 %v3435
    %3473 = vmatprep.subr.mxu0 0.0
    %3474 = vmatpush1.msra.mxu0 %v3434
    %3475 = vmatprep.subr.mxu0 0.0
    %3476 = vmatpush1.msra.mxu0 %v3433
    %3477 = vmatprep.subr.mxu0 0.0
    %3478 = vmatpush1.msra.mxu0 %v3432
    %3479 = vmatprep.subr.mxu0 0.0
    %3480 = vmatpush2.msra.mxu0 0.0
    %3481 = vmatprep.subr.mxu0 0.0
    %3482 = vmatpush2.msra.mxu0 0.0
    %3483 = vmatprep.subr.mxu0 0.0
    %3484 = vmatpush2.msra.mxu0 0.0
    %3485 = vmatprep.subr.mxu0 0.0
    %3486 = vmatpush2.msra.mxu0 0.0
    %3487 = vmatprep.subr.mxu0 0.0
    %3488 = vmatpush2.msra.mxu0 0.0
    %3489 = vmatprep.subr.mxu0 0.0
    %3490 = vmatpush2.msra.mxu0 0.0
    %3491 = vmatprep.subr.mxu0 0.0
    %3492 = vmatpush2.msra.mxu0 0.0
    %3493 = vmatprep.subr.mxu0 0.0
    %3494 = vmatpush2.msra.mxu0 0.0
    %3495 = vmatprep.subr.mxu0 0.0
    %3496 = vmatpush2.msra.mxu0 0.0
    %3497 = vmatprep.subr.mxu0 0.0
    %3498 = vmatpush2.msra.mxu0 0.0
    %3499 = vmatprep.subr.mxu0 0.0
    %3500 = vmatpush2.msra.mxu0 0.0
    %3501 = vmatprep.subr.mxu0 0.0
    %3502 = vmatpush2.msra.mxu0 0.0
    %3503 = vmatprep.subr.mxu0 0.0
    %3504 = vmatpush2.msra.mxu0 0.0
    %3505 = vmatprep.subr.mxu0 0.0
    %3506 = vmatpush2.msra.mxu0 0.0
    %3507 = vmatprep.subr.mxu0 0.0
    %3508 = vmatpush2.msra.mxu0 0.0
    %3509 = vmatprep.subr.mxu0 0.0
    %3510 = vmatpush2.msra.mxu0 0.0
    %3511 = vmatprep.mubr.f32.mxu0 0.0
    %3512 = vmatmul.mubr.f32.gmra.mxu0 %v3445
    %v3513 = vpop.f32.mrf.mxu0
    %v3514 = vadd.f32 0.0, %v3513
    %v3515 = vpop.f32.mrf.mxu0
    %3516 = vdwg.mxu0
    %v3517 = vadd.f32 %v3428, %v3514
    %s3518 = scalar_lea.vmem %s6, 432
    %v3519 = vld [vmem:[%s3518] sm:$0xff]
    %v3520 = vld [vmem:[%s3518 + $0x8] sm:$0xff]
    %v3521 = vld [vmem:[%s3518 + $0x10] sm:$0xff]
    %v3522 = vld [vmem:[%s3518 + $0x18] sm:$0xff]
    %v3523 = vld [vmem:[%s3518 + $0x20] sm:$0xff]
    %v3524 = vld [vmem:[%s3518 + $0x28] sm:$0xff]
    %v3525 = vld [vmem:[%s3518 + $0x30] sm:$0xff]
    %v3526 = vld [vmem:[%s3518 + $0x38] sm:$0xff]
    %v3527 = vld [vmem:[%s3518 + $0x40] sm:$0xff]
    %v3529 = vrot.slane %v3263, 2
    %v3530 = vrot.slane %v3264, 2
    %v3531 = vsel %vm422, %v3529, %v3530
    %v3532 = vsel %vm3284, %v3531, 0
    %3534 = vmatprep.subr.mxu0 0.0
    %3535 = vmatpush1.msra.mxu0 0.0
    %3536 = vmatprep.subr.mxu0 0.0
    %3537 = vmatpush1.msra.mxu0 0.0
    %3538 = vmatprep.subr.mxu0 0.0
    %3539 = vmatpush1.msra.mxu0 0.0
    %3540 = vmatprep.subr.mxu0 0.0
    %3541 = vmatpush1.msra.mxu0 0.0
    %3542 = vmatprep.subr.mxu0 0.0
    %3543 = vmatpush1.msra.mxu0 0.0
    %3544 = vmatprep.subr.mxu0 0.0
    %3545 = vmatpush1.msra.mxu0 0.0
    %3546 = vmatprep.subr.mxu0 0.0
    %3547 = vmatpush1.msra.mxu0 0.0
    %3548 = vmatprep.subr.mxu0 0.0
    %3549 = vmatpush1.msra.mxu0 %v3527
    %3550 = vmatprep.subr.mxu0 0.0
    %3551 = vmatpush1.msra.mxu0 %v3526
    %3552 = vmatprep.subr.mxu0 0.0
    %3553 = vmatpush1.msra.mxu0 %v3525
    %3554 = vmatprep.subr.mxu0 0.0
    %3555 = vmatpush1.msra.mxu0 %v3524
    %3556 = vmatprep.subr.mxu0 0.0
    %3557 = vmatpush1.msra.mxu0 %v3523
    %3558 = vmatprep.subr.mxu0 0.0
    %3559 = vmatpush1.msra.mxu0 %v3522
    %3560 = vmatprep.subr.mxu0 0.0
    %3561 = vmatpush1.msra.mxu0 %v3521
    %3562 = vmatprep.subr.mxu0 0.0
    %3563 = vmatpush1.msra.mxu0 %v3520
    %3564 = vmatprep.subr.mxu0 0.0
    %3565 = vmatpush1.msra.mxu0 %v3519
    %3566 = vmatprep.subr.mxu0 0.0
    %3567 = vmatpush2.msra.mxu0 0.0
    %3568 = vmatprep.subr.mxu0 0.0
    %3569 = vmatpush2.msra.mxu0 0.0
    %3570 = vmatprep.subr.mxu0 0.0
    %3571 = vmatpush2.msra.mxu0 0.0
    %3572 = vmatprep.subr.mxu0 0.0
    %3573 = vmatpush2.msra.mxu0 0.0
    %3574 = vmatprep.subr.mxu0 0.0
    %3575 = vmatpush2.msra.mxu0 0.0
    %3576 = vmatprep.subr.mxu0 0.0
    %3577 = vmatpush2.msra.mxu0 0.0
    %3578 = vmatprep.subr.mxu0 0.0
    %3579 = vmatpush2.msra.mxu0 0.0
    %3580 = vmatprep.subr.mxu0 0.0
    %3581 = vmatpush2.msra.mxu0 0.0
    %3582 = vmatprep.subr.mxu0 0.0
    %3583 = vmatpush2.msra.mxu0 0.0
    %3584 = vmatprep.subr.mxu0 0.0
    %3585 = vmatpush2.msra.mxu0 0.0
    %3586 = vmatprep.subr.mxu0 0.0
    %3587 = vmatpush2.msra.mxu0 0.0
    %3588 = vmatprep.subr.mxu0 0.0
    %3589 = vmatpush2.msra.mxu0 0.0
    %3590 = vmatprep.subr.mxu0 0.0
    %3591 = vmatpush2.msra.mxu0 0.0
    %3592 = vmatprep.subr.mxu0 0.0
    %3593 = vmatpush2.msra.mxu0 0.0
    %3594 = vmatprep.subr.mxu0 0.0
    %3595 = vmatpush2.msra.mxu0 0.0
    %3596 = vmatprep.subr.mxu0 0.0
    %3597 = vmatpush2.msra.mxu0 0.0
    %3598 = vmatprep.mubr.f32.mxu0 0.0
    %3599 = vmatmul.mubr.f32.gmra.mxu0 %v3532
    %v3600 = vpop.f32.mrf.mxu0
    %v3601 = vadd.f32 0.0, %v3600
    %v3602 = vpop.f32.mrf.mxu0
    %3603 = vdwg.mxu0
    %v3604 = vadd.f32 %v3517, %v3601
    %s3605 = scalar_lea.vmem %s6, 576
    %v3606 = vld [vmem:[%s3605] sm:$0xff]
    %v3607 = vld [vmem:[%s3605 + $0x8] sm:$0xff]
    %v3608 = vld [vmem:[%s3605 + $0x10] sm:$0xff]
    %v3609 = vld [vmem:[%s3605 + $0x18] sm:$0xff]
    %v3610 = vld [vmem:[%s3605 + $0x20] sm:$0xff]
    %v3611 = vld [vmem:[%s3605 + $0x28] sm:$0xff]
    %v3612 = vld [vmem:[%s3605 + $0x30] sm:$0xff]
    %v3613 = vld [vmem:[%s3605 + $0x38] sm:$0xff]
    %v3614 = vld [vmem:[%s3605 + $0x40] sm:$0xff]
    %v3615 = vrot.slane %v1715, 4
    %v3616 = vrot.slane %v1716, 4
    %v3617 = vsel %vm72, %v3615, %v3616
    %v3618 = vsel %vm3284, %v3617, 0
    %3620 = vmatprep.subr.mxu0 0.0
    %3621 = vmatpush1.msra.mxu0 0.0
    %3622 = vmatprep.subr.mxu0 0.0
    %3623 = vmatpush1.msra.mxu0 0.0
    %3624 = vmatprep.subr.mxu0 0.0
    %3625 = vmatpush1.msra.mxu0 0.0
    %3626 = vmatprep.subr.mxu0 0.0
    %3627 = vmatpush1.msra.mxu0 0.0
    %3628 = vmatprep.subr.mxu0 0.0
    %3629 = vmatpush1.msra.mxu0 0.0
    %3630 = vmatprep.subr.mxu0 0.0
    %3631 = vmatpush1.msra.mxu0 0.0
    %3632 = vmatprep.subr.mxu0 0.0
    %3633 = vmatpush1.msra.mxu0 0.0
    %3634 = vmatprep.subr.mxu0 0.0
    %3635 = vmatpush1.msra.mxu0 %v3614
    %3636 = vmatprep.subr.mxu0 0.0
    %3637 = vmatpush1.msra.mxu0 %v3613
    %3638 = vmatprep.subr.mxu0 0.0
    %3639 = vmatpush1.msra.mxu0 %v3612
    %3640 = vmatprep.subr.mxu0 0.0
    %3641 = vmatpush1.msra.mxu0 %v3611
    %3642 = vmatprep.subr.mxu0 0.0
    %3643 = vmatpush1.msra.mxu0 %v3610
    %3644 = vmatprep.subr.mxu0 0.0
    %3645 = vmatpush1.msra.mxu0 %v3609
    %3646 = vmatprep.subr.mxu0 0.0
    %3647 = vmatpush1.msra.mxu0 %v3608
    %3648 = vmatprep.subr.mxu0 0.0
    %3649 = vmatpush1.msra.mxu0 %v3607
    %3650 = vmatprep.subr.mxu0 0.0
    %3651 = vmatpush1.msra.mxu0 %v3606
    %3652 = vmatprep.subr.mxu0 0.0
    %3653 = vmatpush2.msra.mxu0 0.0
    %3654 = vmatprep.subr.mxu0 0.0
    %3655 = vmatpush2.msra.mxu0 0.0
    %3656 = vmatprep.subr.mxu0 0.0
    %3657 = vmatpush2.msra.mxu0 0.0
    %3658 = vmatprep.subr.mxu0 0.0
    %3659 = vmatpush2.msra.mxu0 0.0
    %3660 = vmatprep.subr.mxu0 0.0
    %3661 = vmatpush2.msra.mxu0 0.0
    %3662 = vmatprep.subr.mxu0 0.0
    %3663 = vmatpush2.msra.mxu0 0.0
    %3664 = vmatprep.subr.mxu0 0.0
    %3665 = vmatpush2.msra.mxu0 0.0
    %3666 = vmatprep.subr.mxu0 0.0
    %3667 = vmatpush2.msra.mxu0 0.0
    %3668 = vmatprep.subr.mxu0 0.0
    %3669 = vmatpush2.msra.mxu0 0.0
    %3670 = vmatprep.subr.mxu0 0.0
    %3671 = vmatpush2.msra.mxu0 0.0
    %3672 = vmatprep.subr.mxu0 0.0
    %3673 = vmatpush2.msra.mxu0 0.0
    %3674 = vmatprep.subr.mxu0 0.0
    %3675 = vmatpush2.msra.mxu0 0.0
    %3676 = vmatprep.subr.mxu0 0.0
    %3677 = vmatpush2.msra.mxu0 0.0
    %3678 = vmatprep.subr.mxu0 0.0
    %3679 = vmatpush2.msra.mxu0 0.0
    %3680 = vmatprep.subr.mxu0 0.0
    %3681 = vmatpush2.msra.mxu0 0.0
    %3682 = vmatprep.subr.mxu0 0.0
    %3683 = vmatpush2.msra.mxu0 0.0
    %3684 = vmatprep.mubr.f32.mxu0 0.0
    %3685 = vmatmul.mubr.f32.gmra.mxu0 %v3618
    %v3686 = vpop.f32.mrf.mxu0
    %v3687 = vadd.f32 0.0, %v3686
    %v3688 = vpop.f32.mrf.mxu0
    %3689 = vdwg.mxu0
    %v3690 = vadd.f32 %v3604, %v3687
    %s3691 = scalar_lea.vmem %s6, 72
    %v3692 = vld [vmem:[%s3691] sm:$0xff]
    %v3693 = vld [vmem:[%s3691 + $0x8] sm:$0xff]
    %v3694 = vld [vmem:[%s3691 + $0x10] sm:$0xff]
    %v3695 = vld [vmem:[%s3691 + $0x18] sm:$0xff]
    %v3696 = vld [vmem:[%s3691 + $0x20] sm:$0xff]
    %v3697 = vld [vmem:[%s3691 + $0x28] sm:$0xff]
    %v3698 = vld [vmem:[%s3691 + $0x30] sm:$0xff]
    %v3699 = vld [vmem:[%s3691 + $0x38] sm:$0xff]
    %v3700 = vld [vmem:[%s3691 + $0x40] sm:$0xff]
    %s3701 = scalar_lea.vmem %s6, 216
    %v3702 = vld [vmem:[%s3701] sm:$0xff]
    %v3703 = vld [vmem:[%s3701 + $0x8] sm:$0xff]
    %v3704 = vld [vmem:[%s3701 + $0x10] sm:$0xff]
    %v3705 = vld [vmem:[%s3701 + $0x18] sm:$0xff]
    %v3706 = vld [vmem:[%s3701 + $0x20] sm:$0xff]
    %v3707 = vld [vmem:[%s3701 + $0x28] sm:$0xff]
    %v3708 = vld [vmem:[%s3701 + $0x30] sm:$0xff]
    %v3709 = vld [vmem:[%s3701 + $0x38] sm:$0xff]
    %v3710 = vld [vmem:[%s3701 + $0x40] sm:$0xff]
    %3711 = vmatprep.subr.mxu0 0.0
    %3712 = vmatpush1.msra.mxu0 0.0
    %3713 = vmatprep.subr.mxu0 0.0
    %3714 = vmatpush1.msra.mxu0 0.0
    %3715 = vmatprep.subr.mxu0 0.0
    %3716 = vmatpush1.msra.mxu0 0.0
    %3717 = vmatprep.subr.mxu0 0.0
    %3718 = vmatpush1.msra.mxu0 0.0
    %3719 = vmatprep.subr.mxu0 0.0
    %3720 = vmatpush1.msra.mxu0 0.0
    %3721 = vmatprep.subr.mxu0 0.0
    %3722 = vmatpush1.msra.mxu0 0.0
    %3723 = vmatprep.subr.mxu0 0.0
    %3724 = vmatpush1.msra.mxu0 0.0
    %3725 = vmatprep.subr.mxu0 0.0
    %3726 = vmatpush1.msra.mxu0 %v3710
    %3727 = vmatprep.subr.mxu0 0.0
    %3728 = vmatpush1.msra.mxu0 %v3709
    %3729 = vmatprep.subr.mxu0 0.0
    %3730 = vmatpush1.msra.mxu0 %v3708
    %3731 = vmatprep.subr.mxu0 0.0
    %3732 = vmatpush1.msra.mxu0 %v3707
    %3733 = vmatprep.subr.mxu0 0.0
    %3734 = vmatpush1.msra.mxu0 %v3706
    %3735 = vmatprep.subr.mxu0 0.0
    %3736 = vmatpush1.msra.mxu0 %v3705
    %3737 = vmatprep.subr.mxu0 0.0
    %3738 = vmatpush1.msra.mxu0 %v3704
    %3739 = vmatprep.subr.mxu0 0.0
    %3740 = vmatpush1.msra.mxu0 %v3703
    %3741 = vmatprep.subr.mxu0 0.0
    %3742 = vmatpush1.msra.mxu0 %v3702
    %3743 = vmatprep.subr.mxu0 0.0
    %3744 = vmatpush2.msra.mxu0 0.0
    %3745 = vmatprep.subr.mxu0 0.0
    %3746 = vmatpush2.msra.mxu0 0.0
    %3747 = vmatprep.subr.mxu0 0.0
    %3748 = vmatpush2.msra.mxu0 0.0
    %3749 = vmatprep.subr.mxu0 0.0
    %3750 = vmatpush2.msra.mxu0 0.0
    %3751 = vmatprep.subr.mxu0 0.0
    %3752 = vmatpush2.msra.mxu0 0.0
    %3753 = vmatprep.subr.mxu0 0.0
    %3754 = vmatpush2.msra.mxu0 0.0
    %3755 = vmatprep.subr.mxu0 0.0
    %3756 = vmatpush2.msra.mxu0 0.0
    %3757 = vmatprep.subr.mxu0 0.0
    %3758 = vmatpush2.msra.mxu0 0.0
    %3759 = vmatprep.subr.mxu0 0.0
    %3760 = vmatpush2.msra.mxu0 0.0
    %3761 = vmatprep.subr.mxu0 0.0
    %3762 = vmatpush2.msra.mxu0 0.0
    %3763 = vmatprep.subr.mxu0 0.0
    %3764 = vmatpush2.msra.mxu0 0.0
    %3765 = vmatprep.subr.mxu0 0.0
    %3766 = vmatpush2.msra.mxu0 0.0
    %3767 = vmatprep.subr.mxu0 0.0
    %3768 = vmatpush2.msra.mxu0 0.0
    %3769 = vmatprep.subr.mxu0 0.0
    %3770 = vmatpush2.msra.mxu0 0.0
    %3771 = vmatprep.subr.mxu0 0.0
    %3772 = vmatpush2.msra.mxu0 0.0
    %3773 = vmatprep.subr.mxu0 0.0
    %3774 = vmatpush2.msra.mxu0 0.0
    %3775 = vmatprep.mubr.f32.mxu0 0.0
    %3776 = vmatmul.mubr.f32.gmra.mxu0 %v3286
    %v3777 = vpop.f32.mrf.mxu0
    %v3778 = vadd.f32 0.0, %v3777
    %v3779 = vpop.f32.mrf.mxu0
    %3780 = vdwg.mxu0
    %3781 = vmatprep.subr.mxu0 0.0
    %3782 = vmatpush1.msra.mxu0 0.0
    %3783 = vmatprep.subr.mxu0 0.0
    %3784 = vmatpush1.msra.mxu0 0.0
    %3785 = vmatprep.subr.mxu0 0.0
    %3786 = vmatpush1.msra.mxu0 0.0
    %3787 = vmatprep.subr.mxu0 0.0
    %3788 = vmatpush1.msra.mxu0 0.0
    %3789 = vmatprep.subr.mxu0 0.0
    %3790 = vmatpush1.msra.mxu0 0.0
    %3791 = vmatprep.subr.mxu0 0.0
    %3792 = vmatpush1.msra.mxu0 0.0
    %3793 = vmatprep.subr.mxu0 0.0
    %3794 = vmatpush1.msra.mxu0 0.0
    %3795 = vmatprep.subr.mxu0 0.0
    %3796 = vmatpush1.msra.mxu0 %v3700
    %3797 = vmatprep.subr.mxu0 0.0
    %3798 = vmatpush1.msra.mxu0 %v3699
    %3799 = vmatprep.subr.mxu0 0.0
    %3800 = vmatpush1.msra.mxu0 %v3698
    %3801 = vmatprep.subr.mxu0 0.0
    %3802 = vmatpush1.msra.mxu0 %v3697
    %3803 = vmatprep.subr.mxu0 0.0
    %3804 = vmatpush1.msra.mxu0 %v3696
    %3805 = vmatprep.subr.mxu0 0.0
    %3806 = vmatpush1.msra.mxu0 %v3695
    %3807 = vmatprep.subr.mxu0 0.0
    %3808 = vmatpush1.msra.mxu0 %v3694
    %3809 = vmatprep.subr.mxu0 0.0
    %3810 = vmatpush1.msra.mxu0 %v3693
    %3811 = vmatprep.subr.mxu0 0.0
    %3812 = vmatpush1.msra.mxu0 %v3692
    %3813 = vmatprep.subr.mxu0 0.0
    %3814 = vmatpush2.msra.mxu0 0.0
    %3815 = vmatprep.subr.mxu0 0.0
    %3816 = vmatpush2.msra.mxu0 0.0
    %3817 = vmatprep.subr.mxu0 0.0
    %3818 = vmatpush2.msra.mxu0 0.0
    %3819 = vmatprep.subr.mxu0 0.0
    %3820 = vmatpush2.msra.mxu0 0.0
    %3821 = vmatprep.subr.mxu0 0.0
    %3822 = vmatpush2.msra.mxu0 0.0
    %3823 = vmatprep.subr.mxu0 0.0
    %3824 = vmatpush2.msra.mxu0 0.0
    %3825 = vmatprep.subr.mxu0 0.0
    %3826 = vmatpush2.msra.mxu0 0.0
    %3827 = vmatprep.subr.mxu0 0.0
    %3828 = vmatpush2.msra.mxu0 0.0
    %3829 = vmatprep.subr.mxu0 0.0
    %3830 = vmatpush2.msra.mxu0 0.0
    %3831 = vmatprep.subr.mxu0 0.0
    %3832 = vmatpush2.msra.mxu0 0.0
    %3833 = vmatprep.subr.mxu0 0.0
    %3834 = vmatpush2.msra.mxu0 0.0
    %3835 = vmatprep.subr.mxu0 0.0
    %3836 = vmatpush2.msra.mxu0 0.0
    %3837 = vmatprep.subr.mxu0 0.0
    %3838 = vmatpush2.msra.mxu0 0.0
    %3839 = vmatprep.subr.mxu0 0.0
    %3840 = vmatpush2.msra.mxu0 0.0
    %3841 = vmatprep.subr.mxu0 0.0
    %3842 = vmatpush2.msra.mxu0 0.0
    %3843 = vmatprep.subr.mxu0 0.0
    %3844 = vmatpush2.msra.mxu0 0.0
    %3845 = vmatprep.mubr.f32.mxu0 0.0
    %3846 = vmatmul.mubr.f32.gmra.mxu0 %v3359
    %v3847 = vpop.f32.mrf.mxu0
    %v3848 = vadd.f32 %v3778, %v3847
    %v3849 = vpop.f32.mrf.mxu0
    %3850 = vdwg.mxu0
    %s3851 = scalar_lea.vmem %s6, 360
    %v3852 = vld [vmem:[%s3851] sm:$0xff]
    %v3853 = vld [vmem:[%s3851 + $0x8] sm:$0xff]
    %v3854 = vld [vmem:[%s3851 + $0x10] sm:$0xff]
    %v3855 = vld [vmem:[%s3851 + $0x18] sm:$0xff]
    %v3856 = vld [vmem:[%s3851 + $0x20] sm:$0xff]
    %v3857 = vld [vmem:[%s3851 + $0x28] sm:$0xff]
    %v3858 = vld [vmem:[%s3851 + $0x30] sm:$0xff]
    %v3859 = vld [vmem:[%s3851 + $0x38] sm:$0xff]
    %v3860 = vld [vmem:[%s3851 + $0x40] sm:$0xff]
    %3861 = vmatprep.subr.mxu0 0.0
    %3862 = vmatpush1.msra.mxu0 0.0
    %3863 = vmatprep.subr.mxu0 0.0
    %3864 = vmatpush1.msra.mxu0 0.0
    %3865 = vmatprep.subr.mxu0 0.0
    %3866 = vmatpush1.msra.mxu0 0.0
    %3867 = vmatprep.subr.mxu0 0.0
    %3868 = vmatpush1.msra.mxu0 0.0
    %3869 = vmatprep.subr.mxu0 0.0
    %3870 = vmatpush1.msra.mxu0 0.0
    %3871 = vmatprep.subr.mxu0 0.0
    %3872 = vmatpush1.msra.mxu0 0.0
    %3873 = vmatprep.subr.mxu0 0.0
    %3874 = vmatpush1.msra.mxu0 0.0
    %3875 = vmatprep.subr.mxu0 0.0
    %3876 = vmatpush1.msra.mxu0 %v3860
    %3877 = vmatprep.subr.mxu0 0.0
    %3878 = vmatpush1.msra.mxu0 %v3859
    %3879 = vmatprep.subr.mxu0 0.0
    %3880 = vmatpush1.msra.mxu0 %v3858
    %3881 = vmatprep.subr.mxu0 0.0
    %3882 = vmatpush1.msra.mxu0 %v3857
    %3883 = vmatprep.subr.mxu0 0.0
    %3884 = vmatpush1.msra.mxu0 %v3856
    %3885 = vmatprep.subr.mxu0 0.0
    %3886 = vmatpush1.msra.mxu0 %v3855
    %3887 = vmatprep.subr.mxu0 0.0
    %3888 = vmatpush1.msra.mxu0 %v3854
    %3889 = vmatprep.subr.mxu0 0.0
    %3890 = vmatpush1.msra.mxu0 %v3853
    %3891 = vmatprep.subr.mxu0 0.0
    %3892 = vmatpush1.msra.mxu0 %v3852
    %3893 = vmatprep.subr.mxu0 0.0
    %3894 = vmatpush2.msra.mxu0 0.0
    %3895 = vmatprep.subr.mxu0 0.0
    %3896 = vmatpush2.msra.mxu0 0.0
    %3897 = vmatprep.subr.mxu0 0.0
    %3898 = vmatpush2.msra.mxu0 0.0
    %3899 = vmatprep.subr.mxu0 0.0
    %3900 = vmatpush2.msra.mxu0 0.0
    %3901 = vmatprep.subr.mxu0 0.0
    %3902 = vmatpush2.msra.mxu0 0.0
    %3903 = vmatprep.subr.mxu0 0.0
    %3904 = vmatpush2.msra.mxu0 0.0
    %3905 = vmatprep.subr.mxu0 0.0
    %3906 = vmatpush2.msra.mxu0 0.0
    %3907 = vmatprep.subr.mxu0 0.0
    %3908 = vmatpush2.msra.mxu0 0.0
    %3909 = vmatprep.subr.mxu0 0.0
    %3910 = vmatpush2.msra.mxu0 0.0
    %3911 = vmatprep.subr.mxu0 0.0
    %3912 = vmatpush2.msra.mxu0 0.0
    %3913 = vmatprep.subr.mxu0 0.0
    %3914 = vmatpush2.msra.mxu0 0.0
    %3915 = vmatprep.subr.mxu0 0.0
    %3916 = vmatpush2.msra.mxu0 0.0
    %3917 = vmatprep.subr.mxu0 0.0
    %3918 = vmatpush2.msra.mxu0 0.0
    %3919 = vmatprep.subr.mxu0 0.0
    %3920 = vmatpush2.msra.mxu0 0.0
    %3921 = vmatprep.subr.mxu0 0.0
    %3922 = vmatpush2.msra.mxu0 0.0
    %3923 = vmatprep.subr.mxu0 0.0
    %3924 = vmatpush2.msra.mxu0 0.0
    %3925 = vmatprep.mubr.f32.mxu0 0.0
    %3926 = vmatmul.mubr.f32.gmra.mxu0 %v3445
    %v3927 = vpop.f32.mrf.mxu0
    %v3928 = vadd.f32 0.0, %v3927
    %v3929 = vpop.f32.mrf.mxu0
    %3930 = vdwg.mxu0
    %v3931 = vadd.f32 %v3848, %v3928
    %s3932 = scalar_lea.vmem %s6, 504
    %v3933 = vld [vmem:[%s3932] sm:$0xff]
    %v3934 = vld [vmem:[%s3932 + $0x8] sm:$0xff]
    %v3935 = vld [vmem:[%s3932 + $0x10] sm:$0xff]
    %v3936 = vld [vmem:[%s3932 + $0x18] sm:$0xff]
    %v3937 = vld [vmem:[%s3932 + $0x20] sm:$0xff]
    %v3938 = vld [vmem:[%s3932 + $0x28] sm:$0xff]
    %v3939 = vld [vmem:[%s3932 + $0x30] sm:$0xff]
    %v3940 = vld [vmem:[%s3932 + $0x38] sm:$0xff]
    %v3941 = vld [vmem:[%s3932 + $0x40] sm:$0xff]
    %3942 = vmatprep.subr.mxu0 0.0
    %3943 = vmatpush1.msra.mxu0 0.0
    %3944 = vmatprep.subr.mxu0 0.0
    %3945 = vmatpush1.msra.mxu0 0.0
    %3946 = vmatprep.subr.mxu0 0.0
    %3947 = vmatpush1.msra.mxu0 0.0
    %3948 = vmatprep.subr.mxu0 0.0
    %3949 = vmatpush1.msra.mxu0 0.0
    %3950 = vmatprep.subr.mxu0 0.0
    %3951 = vmatpush1.msra.mxu0 0.0
    %3952 = vmatprep.subr.mxu0 0.0
    %3953 = vmatpush1.msra.mxu0 0.0
    %3954 = vmatprep.subr.mxu0 0.0
    %3955 = vmatpush1.msra.mxu0 0.0
    %3956 = vmatprep.subr.mxu0 0.0
    %3957 = vmatpush1.msra.mxu0 %v3941
    %3958 = vmatprep.subr.mxu0 0.0
    %3959 = vmatpush1.msra.mxu0 %v3940
    %3960 = vmatprep.subr.mxu0 0.0
    %3961 = vmatpush1.msra.mxu0 %v3939
    %3962 = vmatprep.subr.mxu0 0.0
    %3963 = vmatpush1.msra.mxu0 %v3938
    %3964 = vmatprep.subr.mxu0 0.0
    %3965 = vmatpush1.msra.mxu0 %v3937
    %3966 = vmatprep.subr.mxu0 0.0
    %3967 = vmatpush1.msra.mxu0 %v3936
    %3968 = vmatprep.subr.mxu0 0.0
    %3969 = vmatpush1.msra.mxu0 %v3935
    %3970 = vmatprep.subr.mxu0 0.0
    %3971 = vmatpush1.msra.mxu0 %v3934
    %3972 = vmatprep.subr.mxu0 0.0
    %3973 = vmatpush1.msra.mxu0 %v3933
    %3974 = vmatprep.subr.mxu0 0.0
    %3975 = vmatpush2.msra.mxu0 0.0
    %3976 = vmatprep.subr.mxu0 0.0
    %3977 = vmatpush2.msra.mxu0 0.0
    %3978 = vmatprep.subr.mxu0 0.0
    %3979 = vmatpush2.msra.mxu0 0.0
    %3980 = vmatprep.subr.mxu0 0.0
    %3981 = vmatpush2.msra.mxu0 0.0
    %3982 = vmatprep.subr.mxu0 0.0
    %3983 = vmatpush2.msra.mxu0 0.0
    %3984 = vmatprep.subr.mxu0 0.0
    %3985 = vmatpush2.msra.mxu0 0.0
    %3986 = vmatprep.subr.mxu0 0.0
    %3987 = vmatpush2.msra.mxu0 0.0
    %3988 = vmatprep.subr.mxu0 0.0
    %3989 = vmatpush2.msra.mxu0 0.0
    %3990 = vmatprep.subr.mxu0 0.0
    %3991 = vmatpush2.msra.mxu0 0.0
    %3992 = vmatprep.subr.mxu0 0.0
    %3993 = vmatpush2.msra.mxu0 0.0
    %3994 = vmatprep.subr.mxu0 0.0
    %3995 = vmatpush2.msra.mxu0 0.0
    %3996 = vmatprep.subr.mxu0 0.0
    %3997 = vmatpush2.msra.mxu0 0.0
    %3998 = vmatprep.subr.mxu0 0.0
    %3999 = vmatpush2.msra.mxu0 0.0
    %4000 = vmatprep.subr.mxu0 0.0
    %4001 = vmatpush2.msra.mxu0 0.0
    %4002 = vmatprep.subr.mxu0 0.0
    %4003 = vmatpush2.msra.mxu0 0.0
    %4004 = vmatprep.subr.mxu0 0.0
    %4005 = vmatpush2.msra.mxu0 0.0
    %4006 = vmatprep.mubr.f32.mxu0 0.0
    %4007 = vmatmul.mubr.f32.gmra.mxu0 %v3532
    %v4008 = vpop.f32.mrf.mxu0
    %v4009 = vadd.f32 0.0, %v4008
    %v4010 = vpop.f32.mrf.mxu0
    %4011 = vdwg.mxu0
    %v4012 = vadd.f32 %v3931, %v4009
    %s4013 = scalar_lea.vmem %s6, 648
    %v4014 = vld [vmem:[%s4013] sm:$0xff]
    %v4015 = vld [vmem:[%s4013 + $0x8] sm:$0xff]
    %v4016 = vld [vmem:[%s4013 + $0x10] sm:$0xff]
    %v4017 = vld [vmem:[%s4013 + $0x18] sm:$0xff]
    %v4018 = vld [vmem:[%s4013 + $0x20] sm:$0xff]
    %v4019 = vld [vmem:[%s4013 + $0x28] sm:$0xff]
    %v4020 = vld [vmem:[%s4013 + $0x30] sm:$0xff]
    %v4021 = vld [vmem:[%s4013 + $0x38] sm:$0xff]
    %v4022 = vld [vmem:[%s4013 + $0x40] sm:$0xff]
    %4023 = vmatprep.subr.mxu0 0.0
    %4024 = vmatpush1.msra.mxu0 0.0
    %4025 = vmatprep.subr.mxu0 0.0
    %4026 = vmatpush1.msra.mxu0 0.0
    %4027 = vmatprep.subr.mxu0 0.0
    %4028 = vmatpush1.msra.mxu0 0.0
    %4029 = vmatprep.subr.mxu0 0.0
    %4030 = vmatpush1.msra.mxu0 0.0
    %4031 = vmatprep.subr.mxu0 0.0
    %4032 = vmatpush1.msra.mxu0 0.0
    %4033 = vmatprep.subr.mxu0 0.0
    %4034 = vmatpush1.msra.mxu0 0.0
    %4035 = vmatprep.subr.mxu0 0.0
    %4036 = vmatpush1.msra.mxu0 0.0
    %4037 = vmatprep.subr.mxu0 0.0
    %4038 = vmatpush1.msra.mxu0 %v4022
    %4039 = vmatprep.subr.mxu0 0.0
    %4040 = vmatpush1.msra.mxu0 %v4021
    %4041 = vmatprep.subr.mxu0 0.0
    %4042 = vmatpush1.msra.mxu0 %v4020
    %4043 = vmatprep.subr.mxu0 0.0
    %4044 = vmatpush1.msra.mxu0 %v4019
    %4045 = vmatprep.subr.mxu0 0.0
    %4046 = vmatpush1.msra.mxu0 %v4018
    %4047 = vmatprep.subr.mxu0 0.0
    %4048 = vmatpush1.msra.mxu0 %v4017
    %4049 = vmatprep.subr.mxu0 0.0
    %4050 = vmatpush1.msra.mxu0 %v4016
    %4051 = vmatprep.subr.mxu0 0.0
    %4052 = vmatpush1.msra.mxu0 %v4015
    %4053 = vmatprep.subr.mxu0 0.0
    %4054 = vmatpush1.msra.mxu0 %v4014
    %4055 = vmatprep.subr.mxu0 0.0
    %4056 = vmatpush2.msra.mxu0 0.0
    %4057 = vmatprep.subr.mxu0 0.0
    %4058 = vmatpush2.msra.mxu0 0.0
    %4059 = vmatprep.subr.mxu0 0.0
    %4060 = vmatpush2.msra.mxu0 0.0
    %4061 = vmatprep.subr.mxu0 0.0
    %4062 = vmatpush2.msra.mxu0 0.0
    %4063 = vmatprep.subr.mxu0 0.0
    %4064 = vmatpush2.msra.mxu0 0.0
    %4065 = vmatprep.subr.mxu0 0.0
    %4066 = vmatpush2.msra.mxu0 0.0
    %4067 = vmatprep.subr.mxu0 0.0
    %4068 = vmatpush2.msra.mxu0 0.0
    %4069 = vmatprep.subr.mxu0 0.0
    %4070 = vmatpush2.msra.mxu0 0.0
    %4071 = vmatprep.subr.mxu0 0.0
    %4072 = vmatpush2.msra.mxu0 0.0
    %4073 = vmatprep.subr.mxu0 0.0
    %4074 = vmatpush2.msra.mxu0 0.0
    %4075 = vmatprep.subr.mxu0 0.0
    %4076 = vmatpush2.msra.mxu0 0.0
    %4077 = vmatprep.subr.mxu0 0.0
    %4078 = vmatpush2.msra.mxu0 0.0
    %4079 = vmatprep.subr.mxu0 0.0
    %4080 = vmatpush2.msra.mxu0 0.0
    %4081 = vmatprep.subr.mxu0 0.0
    %4082 = vmatpush2.msra.mxu0 0.0
    %4083 = vmatprep.subr.mxu0 0.0
    %4084 = vmatpush2.msra.mxu0 0.0
    %4085 = vmatprep.subr.mxu0 0.0
    %4086 = vmatpush2.msra.mxu0 0.0
    %4087 = vmatprep.mubr.f32.mxu0 0.0
    %4088 = vmatmul.mubr.f32.gmra.mxu0 %v3618
    %v4089 = vpop.f32.mrf.mxu0
    %v4090 = vadd.f32 0.0, %v4089
    %v4091 = vpop.f32.mrf.mxu0
    %4092 = vdwg.mxu0
    %v4093 = vadd.f32 %v4012, %v4090
    %4094 = vmatprep.subr.mxu0 0.0
    %4095 = vmatpush1.msra.mxu0 0.0
    %4096 = vmatprep.subr.mxu0 0.0
    %4097 = vmatpush1.msra.mxu0 0.0
    %4098 = vmatprep.subr.mxu0 0.0
    %4099 = vmatpush1.msra.mxu0 0.0
    %4100 = vmatprep.subr.mxu0 0.0
    %4101 = vmatpush1.msra.mxu0 0.0
    %4102 = vmatprep.subr.mxu0 0.0
    %4103 = vmatpush1.msra.mxu0 0.0
    %4104 = vmatprep.subr.mxu0 0.0
    %4105 = vmatpush1.msra.mxu0 0.0
    %4106 = vmatprep.subr.mxu0 0.0
    %4107 = vmatpush1.msra.mxu0 0.0
    %4108 = vmatprep.subr.mxu0 0.0
    %4109 = vmatpush1.msra.mxu0 %v3283
    %4110 = vmatprep.subr.mxu0 0.0
    %4111 = vmatpush1.msra.mxu0 %v3282
    %4112 = vmatprep.subr.mxu0 0.0
    %4113 = vmatpush1.msra.mxu0 %v3281
    %4114 = vmatprep.subr.mxu0 0.0
    %4115 = vmatpush1.msra.mxu0 %v3280
    %4116 = vmatprep.subr.mxu0 0.0
    %4117 = vmatpush1.msra.mxu0 %v3279
    %4118 = vmatprep.subr.mxu0 0.0
    %4119 = vmatpush1.msra.mxu0 %v3278
    %4120 = vmatprep.subr.mxu0 0.0
    %4121 = vmatpush1.msra.mxu0 %v3277
    %4122 = vmatprep.subr.mxu0 0.0
    %4123 = vmatpush1.msra.mxu0 %v3276
    %4124 = vmatprep.subr.mxu0 0.0
    %4125 = vmatpush1.msra.mxu0 %v3275
    %4126 = vmatprep.subr.mxu0 0.0
    %4127 = vmatpush2.msra.mxu0 0.0
    %4128 = vmatprep.subr.mxu0 0.0
    %4129 = vmatpush2.msra.mxu0 0.0
    %4130 = vmatprep.subr.mxu0 0.0
    %4131 = vmatpush2.msra.mxu0 0.0
    %4132 = vmatprep.subr.mxu0 0.0
    %4133 = vmatpush2.msra.mxu0 0.0
    %4134 = vmatprep.subr.mxu0 0.0
    %4135 = vmatpush2.msra.mxu0 0.0
    %4136 = vmatprep.subr.mxu0 0.0
    %4137 = vmatpush2.msra.mxu0 0.0
    %4138 = vmatprep.subr.mxu0 0.0
    %4139 = vmatpush2.msra.mxu0 0.0
    %4140 = vmatprep.subr.mxu0 0.0
    %4141 = vmatpush2.msra.mxu0 0.0
    %4142 = vmatprep.subr.mxu0 0.0
    %4143 = vmatpush2.msra.mxu0 0.0
    %4144 = vmatprep.subr.mxu0 0.0
    %4145 = vmatpush2.msra.mxu0 0.0
    %4146 = vmatprep.subr.mxu0 0.0
    %4147 = vmatpush2.msra.mxu0 0.0
    %4148 = vmatprep.subr.mxu0 0.0
    %4149 = vmatpush2.msra.mxu0 0.0
    %4150 = vmatprep.subr.mxu0 0.0
    %4151 = vmatpush2.msra.mxu0 0.0
    %4152 = vmatprep.subr.mxu0 0.0
    %4153 = vmatpush2.msra.mxu0 0.0
    %4154 = vmatprep.subr.mxu0 0.0
    %4155 = vmatpush2.msra.mxu0 0.0
    %4156 = vmatprep.subr.mxu0 0.0
    %4157 = vmatpush2.msra.mxu0 0.0
    %4158 = vmatprep.mubr.f32.mxu0 0.0
    %4159 = vmatmul.mubr.f32.gmra.mxu0 %v3445
    %v4160 = vpop.f32.mrf.mxu0
    %v4161 = vadd.f32 0.0, %v4160
    %v4162 = vpop.f32.mrf.mxu0
    %4163 = vdwg.mxu0
    %4164 = vmatprep.subr.mxu0 0.0
    %4165 = vmatpush1.msra.mxu0 0.0
    %4166 = vmatprep.subr.mxu0 0.0
    %4167 = vmatpush1.msra.mxu0 0.0
    %4168 = vmatprep.subr.mxu0 0.0
    %4169 = vmatpush1.msra.mxu0 0.0
    %4170 = vmatprep.subr.mxu0 0.0
    %4171 = vmatpush1.msra.mxu0 0.0
    %4172 = vmatprep.subr.mxu0 0.0
    %4173 = vmatpush1.msra.mxu0 0.0
    %4174 = vmatprep.subr.mxu0 0.0
    %4175 = vmatpush1.msra.mxu0 0.0
    %4176 = vmatprep.subr.mxu0 0.0
    %4177 = vmatpush1.msra.mxu0 0.0
    %4178 = vmatprep.subr.mxu0 0.0
    %4179 = vmatpush1.msra.mxu0 %v3273
    %4180 = vmatprep.subr.mxu0 0.0
    %4181 = vmatpush1.msra.mxu0 %v3272
    %4182 = vmatprep.subr.mxu0 0.0
    %4183 = vmatpush1.msra.mxu0 %v3271
    %4184 = vmatprep.subr.mxu0 0.0
    %4185 = vmatpush1.msra.mxu0 %v3270
    %4186 = vmatprep.subr.mxu0 0.0
    %4187 = vmatpush1.msra.mxu0 %v3269
    %4188 = vmatprep.subr.mxu0 0.0
    %4189 = vmatpush1.msra.mxu0 %v3268
    %4190 = vmatprep.subr.mxu0 0.0
    %4191 = vmatpush1.msra.mxu0 %v3267
    %4192 = vmatprep.subr.mxu0 0.0
    %4193 = vmatpush1.msra.mxu0 %v3266
    %4194 = vmatprep.subr.mxu0 0.0
    %4195 = vmatpush1.msra.mxu0 %v3265
    %4196 = vmatprep.subr.mxu0 0.0
    %4197 = vmatpush2.msra.mxu0 0.0
    %4198 = vmatprep.subr.mxu0 0.0
    %4199 = vmatpush2.msra.mxu0 0.0
    %4200 = vmatprep.subr.mxu0 0.0
    %4201 = vmatpush2.msra.mxu0 0.0
    %4202 = vmatprep.subr.mxu0 0.0
    %4203 = vmatpush2.msra.mxu0 0.0
    %4204 = vmatprep.subr.mxu0 0.0
    %4205 = vmatpush2.msra.mxu0 0.0
    %4206 = vmatprep.subr.mxu0 0.0
    %4207 = vmatpush2.msra.mxu0 0.0
    %4208 = vmatprep.subr.mxu0 0.0
    %4209 = vmatpush2.msra.mxu0 0.0
    %4210 = vmatprep.subr.mxu0 0.0
    %4211 = vmatpush2.msra.mxu0 0.0
    %4212 = vmatprep.subr.mxu0 0.0
    %4213 = vmatpush2.msra.mxu0 0.0
    %4214 = vmatprep.subr.mxu0 0.0
    %4215 = vmatpush2.msra.mxu0 0.0
    %4216 = vmatprep.subr.mxu0 0.0
    %4217 = vmatpush2.msra.mxu0 0.0
    %4218 = vmatprep.subr.mxu0 0.0
    %4219 = vmatpush2.msra.mxu0 0.0
    %4220 = vmatprep.subr.mxu0 0.0
    %4221 = vmatpush2.msra.mxu0 0.0
    %4222 = vmatprep.subr.mxu0 0.0
    %4223 = vmatpush2.msra.mxu0 0.0
    %4224 = vmatprep.subr.mxu0 0.0
    %4225 = vmatpush2.msra.mxu0 0.0
    %4226 = vmatprep.subr.mxu0 0.0
    %4227 = vmatpush2.msra.mxu0 0.0
    %4228 = vmatprep.mubr.f32.mxu0 0.0
    %4229 = vmatmul.mubr.f32.gmra.mxu0 %v3286
    %v4230 = vpop.f32.mrf.mxu0
    %v4231 = vadd.f32 %v4161, %v4230
    %v4232 = vpop.f32.mrf.mxu0
    %4233 = vdwg.mxu0
    %4234 = vmatprep.subr.mxu0 0.0
    %4235 = vmatpush1.msra.mxu0 0.0
    %4236 = vmatprep.subr.mxu0 0.0
    %4237 = vmatpush1.msra.mxu0 0.0
    %4238 = vmatprep.subr.mxu0 0.0
    %4239 = vmatpush1.msra.mxu0 0.0
    %4240 = vmatprep.subr.mxu0 0.0
    %4241 = vmatpush1.msra.mxu0 0.0
    %4242 = vmatprep.subr.mxu0 0.0
    %4243 = vmatpush1.msra.mxu0 0.0
    %4244 = vmatprep.subr.mxu0 0.0
    %4245 = vmatpush1.msra.mxu0 0.0
    %4246 = vmatprep.subr.mxu0 0.0
    %4247 = vmatpush1.msra.mxu0 0.0
    %4248 = vmatprep.subr.mxu0 0.0
    %4249 = vmatpush1.msra.mxu0 %v3440
    %4250 = vmatprep.subr.mxu0 0.0
    %4251 = vmatpush1.msra.mxu0 %v3439
    %4252 = vmatprep.subr.mxu0 0.0
    %4253 = vmatpush1.msra.mxu0 %v3438
    %4254 = vmatprep.subr.mxu0 0.0
    %4255 = vmatpush1.msra.mxu0 %v3437
    %4256 = vmatprep.subr.mxu0 0.0
    %4257 = vmatpush1.msra.mxu0 %v3436
    %4258 = vmatprep.subr.mxu0 0.0
    %4259 = vmatpush1.msra.mxu0 %v3435
    %4260 = vmatprep.subr.mxu0 0.0
    %4261 = vmatpush1.msra.mxu0 %v3434
    %4262 = vmatprep.subr.mxu0 0.0
    %4263 = vmatpush1.msra.mxu0 %v3433
    %4264 = vmatprep.subr.mxu0 0.0
    %4265 = vmatpush1.msra.mxu0 %v3432
    %4266 = vmatprep.subr.mxu0 0.0
    %4267 = vmatpush2.msra.mxu0 0.0
    %4268 = vmatprep.subr.mxu0 0.0
    %4269 = vmatpush2.msra.mxu0 0.0
    %4270 = vmatprep.subr.mxu0 0.0
    %4271 = vmatpush2.msra.mxu0 0.0
    %4272 = vmatprep.subr.mxu0 0.0
    %4273 = vmatpush2.msra.mxu0 0.0
    %4274 = vmatprep.subr.mxu0 0.0
    %4275 = vmatpush2.msra.mxu0 0.0
    %4276 = vmatprep.subr.mxu0 0.0
    %4277 = vmatpush2.msra.mxu0 0.0
    %4278 = vmatprep.subr.mxu0 0.0
    %4279 = vmatpush2.msra.mxu0 0.0
    %4280 = vmatprep.subr.mxu0 0.0
    %4281 = vmatpush2.msra.mxu0 0.0
    %4282 = vmatprep.subr.mxu0 0.0
    %4283 = vmatpush2.msra.mxu0 0.0
    %4284 = vmatprep.subr.mxu0 0.0
    %4285 = vmatpush2.msra.mxu0 0.0
    %4286 = vmatprep.subr.mxu0 0.0
    %4287 = vmatpush2.msra.mxu0 0.0
    %4288 = vmatprep.subr.mxu0 0.0
    %4289 = vmatpush2.msra.mxu0 0.0
    %4290 = vmatprep.subr.mxu0 0.0
    %4291 = vmatpush2.msra.mxu0 0.0
    %4292 = vmatprep.subr.mxu0 0.0
    %4293 = vmatpush2.msra.mxu0 0.0
    %4294 = vmatprep.subr.mxu0 0.0
    %4295 = vmatpush2.msra.mxu0 0.0
    %4296 = vmatprep.subr.mxu0 0.0
    %4297 = vmatpush2.msra.mxu0 0.0
    %4298 = vmatprep.mubr.f32.mxu0 0.0
    %4299 = vmatmul.mubr.f32.gmra.mxu0 %v3532
    %v4300 = vpop.f32.mrf.mxu0
    %v4301 = vadd.f32 0.0, %v4300
    %v4302 = vpop.f32.mrf.mxu0
    %4303 = vdwg.mxu0
    %v4304 = vadd.f32 %v4231, %v4301
    %4305 = vmatprep.subr.mxu0 0.0
    %4306 = vmatpush1.msra.mxu0 0.0
    %4307 = vmatprep.subr.mxu0 0.0
    %4308 = vmatpush1.msra.mxu0 0.0
    %4309 = vmatprep.subr.mxu0 0.0
    %4310 = vmatpush1.msra.mxu0 0.0
    %4311 = vmatprep.subr.mxu0 0.0
    %4312 = vmatpush1.msra.mxu0 0.0
    %4313 = vmatprep.subr.mxu0 0.0
    %4314 = vmatpush1.msra.mxu0 0.0
    %4315 = vmatprep.subr.mxu0 0.0
    %4316 = vmatpush1.msra.mxu0 0.0
    %4317 = vmatprep.subr.mxu0 0.0
    %4318 = vmatpush1.msra.mxu0 0.0
    %4319 = vmatprep.subr.mxu0 0.0
    %4320 = vmatpush1.msra.mxu0 %v3527
    %4321 = vmatprep.subr.mxu0 0.0
    %4322 = vmatpush1.msra.mxu0 %v3526
    %4323 = vmatprep.subr.mxu0 0.0
    %4324 = vmatpush1.msra.mxu0 %v3525
    %4325 = vmatprep.subr.mxu0 0.0
    %4326 = vmatpush1.msra.mxu0 %v3524
    %4327 = vmatprep.subr.mxu0 0.0
    %4328 = vmatpush1.msra.mxu0 %v3523
    %4329 = vmatprep.subr.mxu0 0.0
    %4330 = vmatpush1.msra.mxu0 %v3522
    %4331 = vmatprep.subr.mxu0 0.0
    %4332 = vmatpush1.msra.mxu0 %v3521
    %4333 = vmatprep.subr.mxu0 0.0
    %4334 = vmatpush1.msra.mxu0 %v3520
    %4335 = vmatprep.subr.mxu0 0.0
    %4336 = vmatpush1.msra.mxu0 %v3519
    %4337 = vmatprep.subr.mxu0 0.0
    %4338 = vmatpush2.msra.mxu0 0.0
    %4339 = vmatprep.subr.mxu0 0.0
    %4340 = vmatpush2.msra.mxu0 0.0
    %4341 = vmatprep.subr.mxu0 0.0
    %4342 = vmatpush2.msra.mxu0 0.0
    %4343 = vmatprep.subr.mxu0 0.0
    %4344 = vmatpush2.msra.mxu0 0.0
    %4345 = vmatprep.subr.mxu0 0.0
    %4346 = vmatpush2.msra.mxu0 0.0
    %4347 = vmatprep.subr.mxu0 0.0
    %4348 = vmatpush2.msra.mxu0 0.0
    %4349 = vmatprep.subr.mxu0 0.0
    %4350 = vmatpush2.msra.mxu0 0.0
    %4351 = vmatprep.subr.mxu0 0.0
    %4352 = vmatpush2.msra.mxu0 0.0
    %4353 = vmatprep.subr.mxu0 0.0
    %4354 = vmatpush2.msra.mxu0 0.0
    %4355 = vmatprep.subr.mxu0 0.0
    %4356 = vmatpush2.msra.mxu0 0.0
    %4357 = vmatprep.subr.mxu0 0.0
    %4358 = vmatpush2.msra.mxu0 0.0
    %4359 = vmatprep.subr.mxu0 0.0
    %4360 = vmatpush2.msra.mxu0 0.0
    %4361 = vmatprep.subr.mxu0 0.0
    %4362 = vmatpush2.msra.mxu0 0.0
    %4363 = vmatprep.subr.mxu0 0.0
    %4364 = vmatpush2.msra.mxu0 0.0
    %4365 = vmatprep.subr.mxu0 0.0
    %4366 = vmatpush2.msra.mxu0 0.0
    %4367 = vmatprep.subr.mxu0 0.0
    %4368 = vmatpush2.msra.mxu0 0.0
    %4369 = vmatprep.mubr.f32.mxu0 0.0
    %4370 = vmatmul.mubr.f32.gmra.mxu0 %v3618
    %v4371 = vpop.f32.mrf.mxu0
    %v4372 = vadd.f32 0.0, %v4371
    %v4373 = vpop.f32.mrf.mxu0
    %4374 = vdwg.mxu0
    %v4375 = vadd.f32 %v4304, %v4372
    %v4376 = vrot.slane %v3263, 4
    %v4377 = vrot.slane %v3264, 4
    %v4378 = vsel %vm72, %v4376, %v4377
    %v4379 = vsel %vm3284, %v4378, 0
    %4381 = vmatprep.subr.mxu0 0.0
    %4382 = vmatpush1.msra.mxu0 0.0
    %4383 = vmatprep.subr.mxu0 0.0
    %4384 = vmatpush1.msra.mxu0 0.0
    %4385 = vmatprep.subr.mxu0 0.0
    %4386 = vmatpush1.msra.mxu0 0.0
    %4387 = vmatprep.subr.mxu0 0.0
    %4388 = vmatpush1.msra.mxu0 0.0
    %4389 = vmatprep.subr.mxu0 0.0
    %4390 = vmatpush1.msra.mxu0 0.0
    %4391 = vmatprep.subr.mxu0 0.0
    %4392 = vmatpush1.msra.mxu0 0.0
    %4393 = vmatprep.subr.mxu0 0.0
    %4394 = vmatpush1.msra.mxu0 0.0
    %4395 = vmatprep.subr.mxu0 0.0
    %4396 = vmatpush1.msra.mxu0 %v3614
    %4397 = vmatprep.subr.mxu0 0.0
    %4398 = vmatpush1.msra.mxu0 %v3613
    %4399 = vmatprep.subr.mxu0 0.0
    %4400 = vmatpush1.msra.mxu0 %v3612
    %4401 = vmatprep.subr.mxu0 0.0
    %4402 = vmatpush1.msra.mxu0 %v3611
    %4403 = vmatprep.subr.mxu0 0.0
    %4404 = vmatpush1.msra.mxu0 %v3610
    %4405 = vmatprep.subr.mxu0 0.0
    %4406 = vmatpush1.msra.mxu0 %v3609
    %4407 = vmatprep.subr.mxu0 0.0
    %4408 = vmatpush1.msra.mxu0 %v3608
    %4409 = vmatprep.subr.mxu0 0.0
    %4410 = vmatpush1.msra.mxu0 %v3607
    %4411 = vmatprep.subr.mxu0 0.0
    %4412 = vmatpush1.msra.mxu0 %v3606
    %4413 = vmatprep.subr.mxu0 0.0
    %4414 = vmatpush2.msra.mxu0 0.0
    %4415 = vmatprep.subr.mxu0 0.0
    %4416 = vmatpush2.msra.mxu0 0.0
    %4417 = vmatprep.subr.mxu0 0.0
    %4418 = vmatpush2.msra.mxu0 0.0
    %4419 = vmatprep.subr.mxu0 0.0
    %4420 = vmatpush2.msra.mxu0 0.0
    %4421 = vmatprep.subr.mxu0 0.0
    %4422 = vmatpush2.msra.mxu0 0.0
    %4423 = vmatprep.subr.mxu0 0.0
    %4424 = vmatpush2.msra.mxu0 0.0
    %4425 = vmatprep.subr.mxu0 0.0
    %4426 = vmatpush2.msra.mxu0 0.0
    %4427 = vmatprep.subr.mxu0 0.0
    %4428 = vmatpush2.msra.mxu0 0.0
    %4429 = vmatprep.subr.mxu0 0.0
    %4430 = vmatpush2.msra.mxu0 0.0
    %4431 = vmatprep.subr.mxu0 0.0
    %4432 = vmatpush2.msra.mxu0 0.0
    %4433 = vmatprep.subr.mxu0 0.0
    %4434 = vmatpush2.msra.mxu0 0.0
    %4435 = vmatprep.subr.mxu0 0.0
    %4436 = vmatpush2.msra.mxu0 0.0
    %4437 = vmatprep.subr.mxu0 0.0
    %4438 = vmatpush2.msra.mxu0 0.0
    %4439 = vmatprep.subr.mxu0 0.0
    %4440 = vmatpush2.msra.mxu0 0.0
    %4441 = vmatprep.subr.mxu0 0.0
    %4442 = vmatpush2.msra.mxu0 0.0
    %4443 = vmatprep.subr.mxu0 0.0
    %4444 = vmatpush2.msra.mxu0 0.0
    %4445 = vmatprep.mubr.f32.mxu0 0.0
    %4446 = vmatmul.mubr.f32.gmra.mxu0 %v4379
    %v4447 = vpop.f32.mrf.mxu0
    %v4448 = vadd.f32 0.0, %v4447
    %v4449 = vpop.f32.mrf.mxu0
    %4450 = vdwg.mxu0
    %v4451 = vadd.f32 %v4375, %v4448
    %4452 = vmatprep.subr.mxu0 0.0
    %4453 = vmatpush1.msra.mxu0 0.0
    %4454 = vmatprep.subr.mxu0 0.0
    %4455 = vmatpush1.msra.mxu0 0.0
    %4456 = vmatprep.subr.mxu0 0.0
    %4457 = vmatpush1.msra.mxu0 0.0
    %4458 = vmatprep.subr.mxu0 0.0
    %4459 = vmatpush1.msra.mxu0 0.0
    %4460 = vmatprep.subr.mxu0 0.0
    %4461 = vmatpush1.msra.mxu0 0.0
    %4462 = vmatprep.subr.mxu0 0.0
    %4463 = vmatpush1.msra.mxu0 0.0
    %4464 = vmatprep.subr.mxu0 0.0
    %4465 = vmatpush1.msra.mxu0 0.0
    %4466 = vmatprep.subr.mxu0 0.0
    %4467 = vmatpush1.msra.mxu0 %v3710
    %4468 = vmatprep.subr.mxu0 0.0
    %4469 = vmatpush1.msra.mxu0 %v3709
    %4470 = vmatprep.subr.mxu0 0.0
    %4471 = vmatpush1.msra.mxu0 %v3708
    %4472 = vmatprep.subr.mxu0 0.0
    %4473 = vmatpush1.msra.mxu0 %v3707
    %4474 = vmatprep.subr.mxu0 0.0
    %4475 = vmatpush1.msra.mxu0 %v3706
    %4476 = vmatprep.subr.mxu0 0.0
    %4477 = vmatpush1.msra.mxu0 %v3705
    %4478 = vmatprep.subr.mxu0 0.0
    %4479 = vmatpush1.msra.mxu0 %v3704
    %4480 = vmatprep.subr.mxu0 0.0
    %4481 = vmatpush1.msra.mxu0 %v3703
    %4482 = vmatprep.subr.mxu0 0.0
    %4483 = vmatpush1.msra.mxu0 %v3702
    %4484 = vmatprep.subr.mxu0 0.0
    %4485 = vmatpush2.msra.mxu0 0.0
    %4486 = vmatprep.subr.mxu0 0.0
    %4487 = vmatpush2.msra.mxu0 0.0
    %4488 = vmatprep.subr.mxu0 0.0
    %4489 = vmatpush2.msra.mxu0 0.0
    %4490 = vmatprep.subr.mxu0 0.0
    %4491 = vmatpush2.msra.mxu0 0.0
    %4492 = vmatprep.subr.mxu0 0.0
    %4493 = vmatpush2.msra.mxu0 0.0
    %4494 = vmatprep.subr.mxu0 0.0
    %4495 = vmatpush2.msra.mxu0 0.0
    %4496 = vmatprep.subr.mxu0 0.0
    %4497 = vmatpush2.msra.mxu0 0.0
    %4498 = vmatprep.subr.mxu0 0.0
    %4499 = vmatpush2.msra.mxu0 0.0
    %4500 = vmatprep.subr.mxu0 0.0
    %4501 = vmatpush2.msra.mxu0 0.0
    %4502 = vmatprep.subr.mxu0 0.0
    %4503 = vmatpush2.msra.mxu0 0.0
    %4504 = vmatprep.subr.mxu0 0.0
    %4505 = vmatpush2.msra.mxu0 0.0
    %4506 = vmatprep.subr.mxu0 0.0
    %4507 = vmatpush2.msra.mxu0 0.0
    %4508 = vmatprep.subr.mxu0 0.0
    %4509 = vmatpush2.msra.mxu0 0.0
    %4510 = vmatprep.subr.mxu0 0.0
    %4511 = vmatpush2.msra.mxu0 0.0
    %4512 = vmatprep.subr.mxu0 0.0
    %4513 = vmatpush2.msra.mxu0 0.0
    %4514 = vmatprep.subr.mxu0 0.0
    %4515 = vmatpush2.msra.mxu0 0.0
    %4516 = vmatprep.mubr.f32.mxu0 0.0
    %4517 = vmatmul.mubr.f32.gmra.mxu0 %v3445
    %v4518 = vpop.f32.mrf.mxu0
    %v4519 = vadd.f32 0.0, %v4518
    %v4520 = vpop.f32.mrf.mxu0
    %4521 = vdwg.mxu0
    %4522 = vmatprep.subr.mxu0 0.0
    %4523 = vmatpush1.msra.mxu0 0.0
    %4524 = vmatprep.subr.mxu0 0.0
    %4525 = vmatpush1.msra.mxu0 0.0
    %4526 = vmatprep.subr.mxu0 0.0
    %4527 = vmatpush1.msra.mxu0 0.0
    %4528 = vmatprep.subr.mxu0 0.0
    %4529 = vmatpush1.msra.mxu0 0.0
    %4530 = vmatprep.subr.mxu0 0.0
    %4531 = vmatpush1.msra.mxu0 0.0
    %4532 = vmatprep.subr.mxu0 0.0
    %4533 = vmatpush1.msra.mxu0 0.0
    %4534 = vmatprep.subr.mxu0 0.0
    %4535 = vmatpush1.msra.mxu0 0.0
    %4536 = vmatprep.subr.mxu0 0.0
    %4537 = vmatpush1.msra.mxu0 %v3700
    %4538 = vmatprep.subr.mxu0 0.0
    %4539 = vmatpush1.msra.mxu0 %v3699
    %4540 = vmatprep.subr.mxu0 0.0
    %4541 = vmatpush1.msra.mxu0 %v3698
    %4542 = vmatprep.subr.mxu0 0.0
    %4543 = vmatpush1.msra.mxu0 %v3697
    %4544 = vmatprep.subr.mxu0 0.0
    %4545 = vmatpush1.msra.mxu0 %v3696
    %4546 = vmatprep.subr.mxu0 0.0
    %4547 = vmatpush1.msra.mxu0 %v3695
    %4548 = vmatprep.subr.mxu0 0.0
    %4549 = vmatpush1.msra.mxu0 %v3694
    %4550 = vmatprep.subr.mxu0 0.0
    %4551 = vmatpush1.msra.mxu0 %v3693
    %4552 = vmatprep.subr.mxu0 0.0
    %4553 = vmatpush1.msra.mxu0 %v3692
    %4554 = vmatprep.subr.mxu0 0.0
    %4555 = vmatpush2.msra.mxu0 0.0
    %4556 = vmatprep.subr.mxu0 0.0
    %4557 = vmatpush2.msra.mxu0 0.0
    %4558 = vmatprep.subr.mxu0 0.0
    %4559 = vmatpush2.msra.mxu0 0.0
    %4560 = vmatprep.subr.mxu0 0.0
    %4561 = vmatpush2.msra.mxu0 0.0
    %4562 = vmatprep.subr.mxu0 0.0
    %4563 = vmatpush2.msra.mxu0 0.0
    %4564 = vmatprep.subr.mxu0 0.0
    %4565 = vmatpush2.msra.mxu0 0.0
    %4566 = vmatprep.subr.mxu0 0.0
    %4567 = vmatpush2.msra.mxu0 0.0
    %4568 = vmatprep.subr.mxu0 0.0
    %4569 = vmatpush2.msra.mxu0 0.0
    %4570 = vmatprep.subr.mxu0 0.0
    %4571 = vmatpush2.msra.mxu0 0.0
    %4572 = vmatprep.subr.mxu0 0.0
    %4573 = vmatpush2.msra.mxu0 0.0
    %4574 = vmatprep.subr.mxu0 0.0
    %4575 = vmatpush2.msra.mxu0 0.0
    %4576 = vmatprep.subr.mxu0 0.0
    %4577 = vmatpush2.msra.mxu0 0.0
    %4578 = vmatprep.subr.mxu0 0.0
    %4579 = vmatpush2.msra.mxu0 0.0
    %4580 = vmatprep.subr.mxu0 0.0
    %4581 = vmatpush2.msra.mxu0 0.0
    %4582 = vmatprep.subr.mxu0 0.0
    %4583 = vmatpush2.msra.mxu0 0.0
    %4584 = vmatprep.subr.mxu0 0.0
    %4585 = vmatpush2.msra.mxu0 0.0
    %4586 = vmatprep.mubr.f32.mxu0 0.0
    %4587 = vmatmul.mubr.f32.gmra.mxu0 %v3286
    %v4588 = vpop.f32.mrf.mxu0
    %v4589 = vadd.f32 %v4519, %v4588
    %v4590 = vpop.f32.mrf.mxu0
    %4591 = vdwg.mxu0
    %4592 = vmatprep.subr.mxu0 0.0
    %4593 = vmatpush1.msra.mxu0 0.0
    %4594 = vmatprep.subr.mxu0 0.0
    %4595 = vmatpush1.msra.mxu0 0.0
    %4596 = vmatprep.subr.mxu0 0.0
    %4597 = vmatpush1.msra.mxu0 0.0
    %4598 = vmatprep.subr.mxu0 0.0
    %4599 = vmatpush1.msra.mxu0 0.0
    %4600 = vmatprep.subr.mxu0 0.0
    %4601 = vmatpush1.msra.mxu0 0.0
    %4602 = vmatprep.subr.mxu0 0.0
    %4603 = vmatpush1.msra.mxu0 0.0
    %4604 = vmatprep.subr.mxu0 0.0
    %4605 = vmatpush1.msra.mxu0 0.0
    %4606 = vmatprep.subr.mxu0 0.0
    %4607 = vmatpush1.msra.mxu0 %v3860
    %4608 = vmatprep.subr.mxu0 0.0
    %4609 = vmatpush1.msra.mxu0 %v3859
    %4610 = vmatprep.subr.mxu0 0.0
    %4611 = vmatpush1.msra.mxu0 %v3858
    %4612 = vmatprep.subr.mxu0 0.0
    %4613 = vmatpush1.msra.mxu0 %v3857
    %4614 = vmatprep.subr.mxu0 0.0
    %4615 = vmatpush1.msra.mxu0 %v3856
    %4616 = vmatprep.subr.mxu0 0.0
    %4617 = vmatpush1.msra.mxu0 %v3855
    %4618 = vmatprep.subr.mxu0 0.0
    %4619 = vmatpush1.msra.mxu0 %v3854
    %4620 = vmatprep.subr.mxu0 0.0
    %4621 = vmatpush1.msra.mxu0 %v3853
    %4622 = vmatprep.subr.mxu0 0.0
    %4623 = vmatpush1.msra.mxu0 %v3852
    %4624 = vmatprep.subr.mxu0 0.0
    %4625 = vmatpush2.msra.mxu0 0.0
    %4626 = vmatprep.subr.mxu0 0.0
    %4627 = vmatpush2.msra.mxu0 0.0
    %4628 = vmatprep.subr.mxu0 0.0
    %4629 = vmatpush2.msra.mxu0 0.0
    %4630 = vmatprep.subr.mxu0 0.0
    %4631 = vmatpush2.msra.mxu0 0.0
    %4632 = vmatprep.subr.mxu0 0.0
    %4633 = vmatpush2.msra.mxu0 0.0
    %4634 = vmatprep.subr.mxu0 0.0
    %4635 = vmatpush2.msra.mxu0 0.0
    %4636 = vmatprep.subr.mxu0 0.0
    %4637 = vmatpush2.msra.mxu0 0.0
    %4638 = vmatprep.subr.mxu0 0.0
    %4639 = vmatpush2.msra.mxu0 0.0
    %4640 = vmatprep.subr.mxu0 0.0
    %4641 = vmatpush2.msra.mxu0 0.0
    %4642 = vmatprep.subr.mxu0 0.0
    %4643 = vmatpush2.msra.mxu0 0.0
    %4644 = vmatprep.subr.mxu0 0.0
    %4645 = vmatpush2.msra.mxu0 0.0
    %4646 = vmatprep.subr.mxu0 0.0
    %4647 = vmatpush2.msra.mxu0 0.0
    %4648 = vmatprep.subr.mxu0 0.0
    %4649 = vmatpush2.msra.mxu0 0.0
    %4650 = vmatprep.subr.mxu0 0.0
    %4651 = vmatpush2.msra.mxu0 0.0
    %4652 = vmatprep.subr.mxu0 0.0
    %4653 = vmatpush2.msra.mxu0 0.0
    %4654 = vmatprep.subr.mxu0 0.0
    %4655 = vmatpush2.msra.mxu0 0.0
    %4656 = vmatprep.mubr.f32.mxu0 0.0
    %4657 = vmatmul.mubr.f32.gmra.mxu0 %v3532
    %v4658 = vpop.f32.mrf.mxu0
    %v4659 = vadd.f32 0.0, %v4658
    %v4660 = vpop.f32.mrf.mxu0
    %4661 = vdwg.mxu0
    %v4662 = vadd.f32 %v4589, %v4659
    %4663 = vmatprep.subr.mxu0 0.0
    %4664 = vmatpush1.msra.mxu0 0.0
    %4665 = vmatprep.subr.mxu0 0.0
    %4666 = vmatpush1.msra.mxu0 0.0
    %4667 = vmatprep.subr.mxu0 0.0
    %4668 = vmatpush1.msra.mxu0 0.0
    %4669 = vmatprep.subr.mxu0 0.0
    %4670 = vmatpush1.msra.mxu0 0.0
    %4671 = vmatprep.subr.mxu0 0.0
    %4672 = vmatpush1.msra.mxu0 0.0
    %4673 = vmatprep.subr.mxu0 0.0
    %4674 = vmatpush1.msra.mxu0 0.0
    %4675 = vmatprep.subr.mxu0 0.0
    %4676 = vmatpush1.msra.mxu0 0.0
    %4677 = vmatprep.subr.mxu0 0.0
    %4678 = vmatpush1.msra.mxu0 %v3941
    %4679 = vmatprep.subr.mxu0 0.0
    %4680 = vmatpush1.msra.mxu0 %v3940
    %4681 = vmatprep.subr.mxu0 0.0
    %4682 = vmatpush1.msra.mxu0 %v3939
    %4683 = vmatprep.subr.mxu0 0.0
    %4684 = vmatpush1.msra.mxu0 %v3938
    %4685 = vmatprep.subr.mxu0 0.0
    %4686 = vmatpush1.msra.mxu0 %v3937
    %4687 = vmatprep.subr.mxu0 0.0
    %4688 = vmatpush1.msra.mxu0 %v3936
    %4689 = vmatprep.subr.mxu0 0.0
    %4690 = vmatpush1.msra.mxu0 %v3935
    %4691 = vmatprep.subr.mxu0 0.0
    %4692 = vmatpush1.msra.mxu0 %v3934
    %4693 = vmatprep.subr.mxu0 0.0
    %4694 = vmatpush1.msra.mxu0 %v3933
    %4695 = vmatprep.subr.mxu0 0.0
    %4696 = vmatpush2.msra.mxu0 0.0
    %4697 = vmatprep.subr.mxu0 0.0
    %4698 = vmatpush2.msra.mxu0 0.0
    %4699 = vmatprep.subr.mxu0 0.0
    %4700 = vmatpush2.msra.mxu0 0.0
    %4701 = vmatprep.subr.mxu0 0.0
    %4702 = vmatpush2.msra.mxu0 0.0
    %4703 = vmatprep.subr.mxu0 0.0
    %4704 = vmatpush2.msra.mxu0 0.0
    %4705 = vmatprep.subr.mxu0 0.0
    %4706 = vmatpush2.msra.mxu0 0.0
    %4707 = vmatprep.subr.mxu0 0.0
    %4708 = vmatpush2.msra.mxu0 0.0
    %4709 = vmatprep.subr.mxu0 0.0
    %4710 = vmatpush2.msra.mxu0 0.0
    %4711 = vmatprep.subr.mxu0 0.0
    %4712 = vmatpush2.msra.mxu0 0.0
    %4713 = vmatprep.subr.mxu0 0.0
    %4714 = vmatpush2.msra.mxu0 0.0
    %4715 = vmatprep.subr.mxu0 0.0
    %4716 = vmatpush2.msra.mxu0 0.0
    %4717 = vmatprep.subr.mxu0 0.0
    %4718 = vmatpush2.msra.mxu0 0.0
    %4719 = vmatprep.subr.mxu0 0.0
    %4720 = vmatpush2.msra.mxu0 0.0
    %4721 = vmatprep.subr.mxu0 0.0
    %4722 = vmatpush2.msra.mxu0 0.0
    %4723 = vmatprep.subr.mxu0 0.0
    %4724 = vmatpush2.msra.mxu0 0.0
    %4725 = vmatprep.subr.mxu0 0.0
    %4726 = vmatpush2.msra.mxu0 0.0
    %4727 = vmatprep.mubr.f32.mxu0 0.0
    %4728 = vmatmul.mubr.f32.gmra.mxu0 %v3618
    %v4729 = vpop.f32.mrf.mxu0
    %v4730 = vadd.f32 0.0, %v4729
    %v4731 = vpop.f32.mrf.mxu0
    %4732 = vdwg.mxu0
    %v4733 = vadd.f32 %v4662, %v4730
    %4734 = vmatprep.subr.mxu0 0.0
    %4735 = vmatpush1.msra.mxu0 0.0
    %4736 = vmatprep.subr.mxu0 0.0
    %4737 = vmatpush1.msra.mxu0 0.0
    %4738 = vmatprep.subr.mxu0 0.0
    %4739 = vmatpush1.msra.mxu0 0.0
    %4740 = vmatprep.subr.mxu0 0.0
    %4741 = vmatpush1.msra.mxu0 0.0
    %4742 = vmatprep.subr.mxu0 0.0
    %4743 = vmatpush1.msra.mxu0 0.0
    %4744 = vmatprep.subr.mxu0 0.0
    %4745 = vmatpush1.msra.mxu0 0.0
    %4746 = vmatprep.subr.mxu0 0.0
    %4747 = vmatpush1.msra.mxu0 0.0
    %4748 = vmatprep.subr.mxu0 0.0
    %4749 = vmatpush1.msra.mxu0 %v4022
    %4750 = vmatprep.subr.mxu0 0.0
    %4751 = vmatpush1.msra.mxu0 %v4021
    %4752 = vmatprep.subr.mxu0 0.0
    %4753 = vmatpush1.msra.mxu0 %v4020
    %4754 = vmatprep.subr.mxu0 0.0
    %4755 = vmatpush1.msra.mxu0 %v4019
    %4756 = vmatprep.subr.mxu0 0.0
    %4757 = vmatpush1.msra.mxu0 %v4018
    %4758 = vmatprep.subr.mxu0 0.0
    %4759 = vmatpush1.msra.mxu0 %v4017
    %4760 = vmatprep.subr.mxu0 0.0
    %4761 = vmatpush1.msra.mxu0 %v4016
    %4762 = vmatprep.subr.mxu0 0.0
    %4763 = vmatpush1.msra.mxu0 %v4015
    %4764 = vmatprep.subr.mxu0 0.0
    %4765 = vmatpush1.msra.mxu0 %v4014
    %4766 = vmatprep.subr.mxu0 0.0
    %4767 = vmatpush2.msra.mxu0 0.0
    %4768 = vmatprep.subr.mxu0 0.0
    %4769 = vmatpush2.msra.mxu0 0.0
    %4770 = vmatprep.subr.mxu0 0.0
    %4771 = vmatpush2.msra.mxu0 0.0
    %4772 = vmatprep.subr.mxu0 0.0
    %4773 = vmatpush2.msra.mxu0 0.0
    %4774 = vmatprep.subr.mxu0 0.0
    %4775 = vmatpush2.msra.mxu0 0.0
    %4776 = vmatprep.subr.mxu0 0.0
    %4777 = vmatpush2.msra.mxu0 0.0
    %4778 = vmatprep.subr.mxu0 0.0
    %4779 = vmatpush2.msra.mxu0 0.0
    %4780 = vmatprep.subr.mxu0 0.0
    %4781 = vmatpush2.msra.mxu0 0.0
    %4782 = vmatprep.subr.mxu0 0.0
    %4783 = vmatpush2.msra.mxu0 0.0
    %4784 = vmatprep.subr.mxu0 0.0
    %4785 = vmatpush2.msra.mxu0 0.0
    %4786 = vmatprep.subr.mxu0 0.0
    %4787 = vmatpush2.msra.mxu0 0.0
    %4788 = vmatprep.subr.mxu0 0.0
    %4789 = vmatpush2.msra.mxu0 0.0
    %4790 = vmatprep.subr.mxu0 0.0
    %4791 = vmatpush2.msra.mxu0 0.0
    %4792 = vmatprep.subr.mxu0 0.0
    %4793 = vmatpush2.msra.mxu0 0.0
    %4794 = vmatprep.subr.mxu0 0.0
    %4795 = vmatpush2.msra.mxu0 0.0
    %4796 = vmatprep.subr.mxu0 0.0
    %4797 = vmatpush2.msra.mxu0 0.0
    %4798 = vmatprep.mubr.f32.mxu0 0.0
    %4799 = vmatmul.mubr.f32.gmra.mxu0 %v4379
    %v4800 = vpop.f32.mrf.mxu0
    %v4801 = vadd.f32 0.0, %v4800
    %v4802 = vpop.f32.mrf.mxu0
    %4803 = vdwg.mxu0
    %v4804 = vadd.f32 %v4733, %v4801
    %v4805 = vmax.f32 %v3690, %v4093
    %v4806 = vmax.f32 %v4451, %v4804
    %v4807 = vmax.f32 %v4805, %v4806
    %v4808 = vld [vmem:[%s7] sm:$0x1]
    %v4810 = vlaneseq
    %v4811 = vshrl.u32 %v4810, 7
    %v4812 = vsub.s32 0, %v4811
    %v4813 = vrot.slane %v4808, %v4812
    %v4815 = vadd.f32 %v4807, %v4813
    %v4816 = vmax.f32 %v4815, 0.0
    %v4817 = vld [vmem:[%s8] sm:$0xff]
    %v4818 = vld [vmem:[%s8 + $0x8] sm:$0xff]
    %v4819 = vld [vmem:[%s8 + $0x10] sm:$0xff]
    %v4820 = vld [vmem:[%s8 + $0x18] sm:$0xff]
    %v4821 = vld [vmem:[%s8 + $0x20] sm:$0xff]
    %v4822 = vld [vmem:[%s8 + $0x28] sm:$0xff]
    %v4823 = vld [vmem:[%s8 + $0x30] sm:$0xff]
    %v4824 = vld [vmem:[%s8 + $0x38] sm:$0xff]
    %s4825 = scalar_lea.vmem %s8, 64
    %v4826 = vld [vmem:[%s4825] sm:$0xff]
    %v4827 = vld [vmem:[%s4825 + $0x8] sm:$0xff]
    %v4828 = vld [vmem:[%s4825 + $0x10] sm:$0xff]
    %v4829 = vld [vmem:[%s4825 + $0x18] sm:$0xff]
    %v4830 = vld [vmem:[%s4825 + $0x20] sm:$0xff]
    %v4831 = vld [vmem:[%s4825 + $0x28] sm:$0xff]
    %v4832 = vld [vmem:[%s4825 + $0x30] sm:$0xff]
    %v4833 = vld [vmem:[%s4825 + $0x38] sm:$0xff]
    %v4835 = vrot.slane %v4816, 2
    %vm4836 = vcmask 523264
    %v4837 = vsel %vm4836, %v4835, 0
    %4839 = vmatprep.subr.mxu0 0.0
    %4840 = vmatpush1.msra.mxu0 0.0
    %4841 = vmatprep.subr.mxu0 0.0
    %4842 = vmatpush1.msra.mxu0 0.0
    %4843 = vmatprep.subr.mxu0 0.0
    %4844 = vmatpush1.msra.mxu0 0.0
    %4845 = vmatprep.subr.mxu0 0.0
    %4846 = vmatpush1.msra.mxu0 0.0
    %4847 = vmatprep.subr.mxu0 0.0
    %4848 = vmatpush1.msra.mxu0 0.0
    %4849 = vmatprep.subr.mxu0 0.0
    %4850 = vmatpush1.msra.mxu0 0.0
    %4851 = vmatprep.subr.mxu0 0.0
    %4852 = vmatpush1.msra.mxu0 0.0
    %4853 = vmatprep.subr.mxu0 0.0
    %4854 = vmatpush1.msra.mxu0 0.0
    %4855 = vmatprep.subr.mxu0 0.0
    %4856 = vmatpush1.msra.mxu0 %v4833
    %4857 = vmatprep.subr.mxu0 0.0
    %4858 = vmatpush1.msra.mxu0 %v4832
    %4859 = vmatprep.subr.mxu0 0.0
    %4860 = vmatpush1.msra.mxu0 %v4831
    %4861 = vmatprep.subr.mxu0 0.0
    %4862 = vmatpush1.msra.mxu0 %v4830
    %4863 = vmatprep.subr.mxu0 0.0
    %4864 = vmatpush1.msra.mxu0 %v4829
    %4865 = vmatprep.subr.mxu0 0.0
    %4866 = vmatpush1.msra.mxu0 %v4828
    %4867 = vmatprep.subr.mxu0 0.0
    %4868 = vmatpush1.msra.mxu0 %v4827
    %4869 = vmatprep.subr.mxu0 0.0
    %4870 = vmatpush1.msra.mxu0 %v4826
    %4871 = vmatprep.subr.mxu0 0.0
    %4872 = vmatpush2.msra.mxu0 0.0
    %4873 = vmatprep.subr.mxu0 0.0
    %4874 = vmatpush2.msra.mxu0 0.0
    %4875 = vmatprep.subr.mxu0 0.0
    %4876 = vmatpush2.msra.mxu0 0.0
    %4877 = vmatprep.subr.mxu0 0.0
    %4878 = vmatpush2.msra.mxu0 0.0
    %4879 = vmatprep.subr.mxu0 0.0
    %4880 = vmatpush2.msra.mxu0 0.0
    %4881 = vmatprep.subr.mxu0 0.0
    %4882 = vmatpush2.msra.mxu0 0.0
    %4883 = vmatprep.subr.mxu0 0.0
    %4884 = vmatpush2.msra.mxu0 0.0
    %4885 = vmatprep.subr.mxu0 0.0
    %4886 = vmatpush2.msra.mxu0 0.0
    %4887 = vmatprep.subr.mxu0 0.0
    %4888 = vmatpush2.msra.mxu0 0.0
    %4889 = vmatprep.subr.mxu0 0.0
    %4890 = vmatpush2.msra.mxu0 0.0
    %4891 = vmatprep.subr.mxu0 0.0
    %4892 = vmatpush2.msra.mxu0 0.0
    %4893 = vmatprep.subr.mxu0 0.0
    %4894 = vmatpush2.msra.mxu0 0.0
    %4895 = vmatprep.subr.mxu0 0.0
    %4896 = vmatpush2.msra.mxu0 0.0
    %4897 = vmatprep.subr.mxu0 0.0
    %4898 = vmatpush2.msra.mxu0 0.0
    %4899 = vmatprep.subr.mxu0 0.0
    %4900 = vmatpush2.msra.mxu0 0.0
    %4901 = vmatprep.subr.mxu0 0.0
    %4902 = vmatpush2.msra.mxu0 0.0
    %4903 = vmatprep.mubr.f32.mxu0 0.0
    %4904 = vmatmul.mubr.f32.gmra.mxu0 %v4837
    %v4905 = vpop.f32.mrf.mxu0
    %v4906 = vadd.f32 0.0, %v4905
    %v4907 = vpop.f32.mrf.mxu0
    %4908 = vdwg.mxu0
    %v4909 = vsel %vm4836, %v4816, 0
    %4911 = vmatprep.subr.mxu0 0.0
    %4912 = vmatpush1.msra.mxu0 0.0
    %4913 = vmatprep.subr.mxu0 0.0
    %4914 = vmatpush1.msra.mxu0 0.0
    %4915 = vmatprep.subr.mxu0 0.0
    %4916 = vmatpush1.msra.mxu0 0.0
    %4917 = vmatprep.subr.mxu0 0.0
    %4918 = vmatpush1.msra.mxu0 0.0
    %4919 = vmatprep.subr.mxu0 0.0
    %4920 = vmatpush1.msra.mxu0 0.0
    %4921 = vmatprep.subr.mxu0 0.0
    %4922 = vmatpush1.msra.mxu0 0.0
    %4923 = vmatprep.subr.mxu0 0.0
    %4924 = vmatpush1.msra.mxu0 0.0
    %4925 = vmatprep.subr.mxu0 0.0
    %4926 = vmatpush1.msra.mxu0 0.0
    %4927 = vmatprep.subr.mxu0 0.0
    %4928 = vmatpush1.msra.mxu0 %v4824
    %4929 = vmatprep.subr.mxu0 0.0
    %4930 = vmatpush1.msra.mxu0 %v4823
    %4931 = vmatprep.subr.mxu0 0.0
    %4932 = vmatpush1.msra.mxu0 %v4822
    %4933 = vmatprep.subr.mxu0 0.0
    %4934 = vmatpush1.msra.mxu0 %v4821
    %4935 = vmatprep.subr.mxu0 0.0
    %4936 = vmatpush1.msra.mxu0 %v4820
    %4937 = vmatprep.subr.mxu0 0.0
    %4938 = vmatpush1.msra.mxu0 %v4819
    %4939 = vmatprep.subr.mxu0 0.0
    %4940 = vmatpush1.msra.mxu0 %v4818
    %4941 = vmatprep.subr.mxu0 0.0
    %4942 = vmatpush1.msra.mxu0 %v4817
    %4943 = vmatprep.subr.mxu0 0.0
    %4944 = vmatpush2.msra.mxu0 0.0
    %4945 = vmatprep.subr.mxu0 0.0
    %4946 = vmatpush2.msra.mxu0 0.0
    %4947 = vmatprep.subr.mxu0 0.0
    %4948 = vmatpush2.msra.mxu0 0.0
    %4949 = vmatprep.subr.mxu0 0.0
    %4950 = vmatpush2.msra.mxu0 0.0
    %4951 = vmatprep.subr.mxu0 0.0
    %4952 = vmatpush2.msra.mxu0 0.0
    %4953 = vmatprep.subr.mxu0 0.0
    %4954 = vmatpush2.msra.mxu0 0.0
    %4955 = vmatprep.subr.mxu0 0.0
    %4956 = vmatpush2.msra.mxu0 0.0
    %4957 = vmatprep.subr.mxu0 0.0
    %4958 = vmatpush2.msra.mxu0 0.0
    %4959 = vmatprep.subr.mxu0 0.0
    %4960 = vmatpush2.msra.mxu0 0.0
    %4961 = vmatprep.subr.mxu0 0.0
    %4962 = vmatpush2.msra.mxu0 0.0
    %4963 = vmatprep.subr.mxu0 0.0
    %4964 = vmatpush2.msra.mxu0 0.0
    %4965 = vmatprep.subr.mxu0 0.0
    %4966 = vmatpush2.msra.mxu0 0.0
    %4967 = vmatprep.subr.mxu0 0.0
    %4968 = vmatpush2.msra.mxu0 0.0
    %4969 = vmatprep.subr.mxu0 0.0
    %4970 = vmatpush2.msra.mxu0 0.0
    %4971 = vmatprep.subr.mxu0 0.0
    %4972 = vmatpush2.msra.mxu0 0.0
    %4973 = vmatprep.subr.mxu0 0.0
    %4974 = vmatpush2.msra.mxu0 0.0
    %4975 = vmatprep.mubr.f32.mxu0 0.0
    %4976 = vmatmul.mubr.f32.gmra.mxu0 %v4909
    %v4977 = vpop.f32.mrf.mxu0
    %v4978 = vadd.f32 %v4906, %v4977
    %v4979 = vpop.f32.mrf.mxu0
    %4980 = vdwg.mxu0
    %s4981 = scalar_lea.vmem %s8, 128
    %v4982 = vld [vmem:[%s4981] sm:$0xff]
    %v4983 = vld [vmem:[%s4981 + $0x8] sm:$0xff]
    %v4984 = vld [vmem:[%s4981 + $0x10] sm:$0xff]
    %v4985 = vld [vmem:[%s4981 + $0x18] sm:$0xff]
    %v4986 = vld [vmem:[%s4981 + $0x20] sm:$0xff]
    %v4987 = vld [vmem:[%s4981 + $0x28] sm:$0xff]
    %v4988 = vld [vmem:[%s4981 + $0x30] sm:$0xff]
    %v4989 = vld [vmem:[%s4981 + $0x38] sm:$0xff]
    %v4990 = vrot.slane %v4816, 4
    %v4991 = vsel %vm4836, %v4990, 0
    %4993 = vmatprep.subr.mxu0 0.0
    %4994 = vmatpush1.msra.mxu0 0.0
    %4995 = vmatprep.subr.mxu0 0.0
    %4996 = vmatpush1.msra.mxu0 0.0
    %4997 = vmatprep.subr.mxu0 0.0
    %4998 = vmatpush1.msra.mxu0 0.0
    %4999 = vmatprep.subr.mxu0 0.0
    %5000 = vmatpush1.msra.mxu0 0.0
    %5001 = vmatprep.subr.mxu0 0.0
    %5002 = vmatpush1.msra.mxu0 0.0
    %5003 = vmatprep.subr.mxu0 0.0
    %5004 = vmatpush1.msra.mxu0 0.0
    %5005 = vmatprep.subr.mxu0 0.0
    %5006 = vmatpush1.msra.mxu0 0.0
    %5007 = vmatprep.subr.mxu0 0.0
    %5008 = vmatpush1.msra.mxu0 0.0
    %5009 = vmatprep.subr.mxu0 0.0
    %5010 = vmatpush1.msra.mxu0 %v4989
    %5011 = vmatprep.subr.mxu0 0.0
    %5012 = vmatpush1.msra.mxu0 %v4988
    %5013 = vmatprep.subr.mxu0 0.0
    %5014 = vmatpush1.msra.mxu0 %v4987
    %5015 = vmatprep.subr.mxu0 0.0
    %5016 = vmatpush1.msra.mxu0 %v4986
    %5017 = vmatprep.subr.mxu0 0.0
    %5018 = vmatpush1.msra.mxu0 %v4985
    %5019 = vmatprep.subr.mxu0 0.0
    %5020 = vmatpush1.msra.mxu0 %v4984
    %5021 = vmatprep.subr.mxu0 0.0
    %5022 = vmatpush1.msra.mxu0 %v4983
    %5023 = vmatprep.subr.mxu0 0.0
    %5024 = vmatpush1.msra.mxu0 %v4982
    %5025 = vmatprep.subr.mxu0 0.0
    %5026 = vmatpush2.msra.mxu0 0.0
    %5027 = vmatprep.subr.mxu0 0.0
    %5028 = vmatpush2.msra.mxu0 0.0
    %5029 = vmatprep.subr.mxu0 0.0
    %5030 = vmatpush2.msra.mxu0 0.0
    %5031 = vmatprep.subr.mxu0 0.0
    %5032 = vmatpush2.msra.mxu0 0.0
    %5033 = vmatprep.subr.mxu0 0.0
    %5034 = vmatpush2.msra.mxu0 0.0
    %5035 = vmatprep.subr.mxu0 0.0
    %5036 = vmatpush2.msra.mxu0 0.0
    %5037 = vmatprep.subr.mxu0 0.0
    %5038 = vmatpush2.msra.mxu0 0.0
    %5039 = vmatprep.subr.mxu0 0.0
    %5040 = vmatpush2.msra.mxu0 0.0
    %5041 = vmatprep.subr.mxu0 0.0
    %5042 = vmatpush2.msra.mxu0 0.0
    %5043 = vmatprep.subr.mxu0 0.0
    %5044 = vmatpush2.msra.mxu0 0.0
    %5045 = vmatprep.subr.mxu0 0.0
    %5046 = vmatpush2.msra.mxu0 0.0
    %5047 = vmatprep.subr.mxu0 0.0
    %5048 = vmatpush2.msra.mxu0 0.0
    %5049 = vmatprep.subr.mxu0 0.0
    %5050 = vmatpush2.msra.mxu0 0.0
    %5051 = vmatprep.subr.mxu0 0.0
    %5052 = vmatpush2.msra.mxu0 0.0
    %5053 = vmatprep.subr.mxu0 0.0
    %5054 = vmatpush2.msra.mxu0 0.0
    %5055 = vmatprep.subr.mxu0 0.0
    %5056 = vmatpush2.msra.mxu0 0.0
    %5057 = vmatprep.mubr.f32.mxu0 0.0
    %5058 = vmatmul.mubr.f32.gmra.mxu0 %v4991
    %v5059 = vpop.f32.mrf.mxu0
    %v5060 = vadd.f32 0.0, %v5059
    %v5061 = vpop.f32.mrf.mxu0
    %5062 = vdwg.mxu0
    %v5063 = vadd.f32 %v4978, %v5060
    %s5064 = scalar_lea.vmem %s8, 192
    %v5065 = vld [vmem:[%s5064] sm:$0xff]
    %v5066 = vld [vmem:[%s5064 + $0x8] sm:$0xff]
    %v5067 = vld [vmem:[%s5064 + $0x10] sm:$0xff]
    %v5068 = vld [vmem:[%s5064 + $0x18] sm:$0xff]
    %v5069 = vld [vmem:[%s5064 + $0x20] sm:$0xff]
    %v5070 = vld [vmem:[%s5064 + $0x28] sm:$0xff]
    %v5071 = vld [vmem:[%s5064 + $0x30] sm:$0xff]
    %v5072 = vld [vmem:[%s5064 + $0x38] sm:$0xff]
    %v5073 = vrot.slane %v4816, 6
    %v5074 = vsel %vm4836, %v5073, 0
    %5076 = vmatprep.subr.mxu0 0.0
    %5077 = vmatpush1.msra.mxu0 0.0
    %5078 = vmatprep.subr.mxu0 0.0
    %5079 = vmatpush1.msra.mxu0 0.0
    %5080 = vmatprep.subr.mxu0 0.0
    %5081 = vmatpush1.msra.mxu0 0.0
    %5082 = vmatprep.subr.mxu0 0.0
    %5083 = vmatpush1.msra.mxu0 0.0
    %5084 = vmatprep.subr.mxu0 0.0
    %5085 = vmatpush1.msra.mxu0 0.0
    %5086 = vmatprep.subr.mxu0 0.0
    %5087 = vmatpush1.msra.mxu0 0.0
    %5088 = vmatprep.subr.mxu0 0.0
    %5089 = vmatpush1.msra.mxu0 0.0
    %5090 = vmatprep.subr.mxu0 0.0
    %5091 = vmatpush1.msra.mxu0 0.0
    %5092 = vmatprep.subr.mxu0 0.0
    %5093 = vmatpush1.msra.mxu0 %v5072
    %5094 = vmatprep.subr.mxu0 0.0
    %5095 = vmatpush1.msra.mxu0 %v5071
    %5096 = vmatprep.subr.mxu0 0.0
    %5097 = vmatpush1.msra.mxu0 %v5070
    %5098 = vmatprep.subr.mxu0 0.0
    %5099 = vmatpush1.msra.mxu0 %v5069
    %5100 = vmatprep.subr.mxu0 0.0
    %5101 = vmatpush1.msra.mxu0 %v5068
    %5102 = vmatprep.subr.mxu0 0.0
    %5103 = vmatpush1.msra.mxu0 %v5067
    %5104 = vmatprep.subr.mxu0 0.0
    %5105 = vmatpush1.msra.mxu0 %v5066
    %5106 = vmatprep.subr.mxu0 0.0
    %5107 = vmatpush1.msra.mxu0 %v5065
    %5108 = vmatprep.subr.mxu0 0.0
    %5109 = vmatpush2.msra.mxu0 0.0
    %5110 = vmatprep.subr.mxu0 0.0
    %5111 = vmatpush2.msra.mxu0 0.0
    %5112 = vmatprep.subr.mxu0 0.0
    %5113 = vmatpush2.msra.mxu0 0.0
    %5114 = vmatprep.subr.mxu0 0.0
    %5115 = vmatpush2.msra.mxu0 0.0
    %5116 = vmatprep.subr.mxu0 0.0
    %5117 = vmatpush2.msra.mxu0 0.0
    %5118 = vmatprep.subr.mxu0 0.0
    %5119 = vmatpush2.msra.mxu0 0.0
    %5120 = vmatprep.subr.mxu0 0.0
    %5121 = vmatpush2.msra.mxu0 0.0
    %5122 = vmatprep.subr.mxu0 0.0
    %5123 = vmatpush2.msra.mxu0 0.0
    %5124 = vmatprep.subr.mxu0 0.0
    %5125 = vmatpush2.msra.mxu0 0.0
    %5126 = vmatprep.subr.mxu0 0.0
    %5127 = vmatpush2.msra.mxu0 0.0
    %5128 = vmatprep.subr.mxu0 0.0
    %5129 = vmatpush2.msra.mxu0 0.0
    %5130 = vmatprep.subr.mxu0 0.0
    %5131 = vmatpush2.msra.mxu0 0.0
    %5132 = vmatprep.subr.mxu0 0.0
    %5133 = vmatpush2.msra.mxu0 0.0
    %5134 = vmatprep.subr.mxu0 0.0
    %5135 = vmatpush2.msra.mxu0 0.0
    %5136 = vmatprep.subr.mxu0 0.0
    %5137 = vmatpush2.msra.mxu0 0.0
    %5138 = vmatprep.subr.mxu0 0.0
    %5139 = vmatpush2.msra.mxu0 0.0
    %5140 = vmatprep.mubr.f32.mxu0 0.0
    %5141 = vmatmul.mubr.f32.gmra.mxu0 %v5074
    %v5142 = vpop.f32.mrf.mxu0
    %v5143 = vadd.f32 0.0, %v5142
    %v5144 = vpop.f32.mrf.mxu0
    %5145 = vdwg.mxu0
    %v5146 = vadd.f32 %v5063, %v5143
    %v5147 = vld [vmem:[%s9] sm:$0x1]
    %v5149 = vlaneseq
    %v5150 = vshrl.u32 %v5149, 7
    %v5151 = vsub.s32 0, %v5150
    %v5152 = vrot.slane %v5147, %v5151
    %v5154 = vadd.f32 %v5146, %v5152
    %v5155 = vmax.f32 %v5154, 0.0
    %v5156 = vld [vmem:[%s10] sm:$0xff]
    %v5157 = vld [vmem:[%s10 + $0x8] sm:$0xff]
    %v5158 = vld [vmem:[%s10 + $0x10] sm:$0xff]
    %v5159 = vld [vmem:[%s10 + $0x18] sm:$0xff]
    %v5160 = vld [vmem:[%s10 + $0x20] sm:$0xff]
    %v5161 = vld [vmem:[%s10 + $0x28] sm:$0xff]
    %v5162 = vld [vmem:[%s10 + $0x30] sm:$0xff]
    %v5163 = vld [vmem:[%s10 + $0x38] sm:$0xff]
    %v5164 = vld [vmem:[%s10 + $0x40] sm:$0xff]
    %v5165 = vld [vmem:[%s10 + $0x48] sm:$0xff]
    %v5166 = vld [vmem:[%s10 + $0x50] sm:$0xff]
    %v5167 = vld [vmem:[%s10 + $0x58] sm:$0xff]
    %v5168 = vld [vmem:[%s10 + $0x60] sm:$0xff]
    %v5169 = vld [vmem:[%s10 + $0x68] sm:$0xff]
    %v5170 = vld [vmem:[%s10 + $0x70] sm:$0xff]
    %v5171 = vld [vmem:[%s11] sm:$0x1]
    %v5173 = vlaneseq
    %v5174 = vshrl.u32 %v5173, 7
    %v5175 = vsub.s32 0, %v5174
    %v5176 = vrot.slane %v5171, %v5175
    %vm5178 = vcmask 982016
    %v5180 = vsel %vm5178, %v5155, 0
    %5182 = vmatprep.subr.mxu0 0.0
    %5183 = vmatpush1.msra.mxu0 0.0
    %5184 = vmatprep.subr.mxu0 0.0
    %5185 = vmatpush1.msra.mxu0 %v5170
    %5186 = vmatprep.subr.mxu0 0.0
    %5187 = vmatpush1.msra.mxu0 %v5169
    %5188 = vmatprep.subr.mxu0 0.0
    %5189 = vmatpush1.msra.mxu0 %v5168
    %5190 = vmatprep.subr.mxu0 0.0
    %5191 = vmatpush1.msra.mxu0 %v5167
    %5192 = vmatprep.subr.mxu0 0.0
    %5193 = vmatpush1.msra.mxu0 %v5166
    %5194 = vmatprep.subr.mxu0 0.0
    %5195 = vmatpush1.msra.mxu0 %v5165
    %5196 = vmatprep.subr.mxu0 0.0
    %5197 = vmatpush1.msra.mxu0 %v5164
    %5198 = vmatprep.subr.mxu0 0.0
    %5199 = vmatpush1.msra.mxu0 %v5163
    %5200 = vmatprep.subr.mxu0 0.0
    %5201 = vmatpush1.msra.mxu0 %v5162
    %5202 = vmatprep.subr.mxu0 0.0
    %5203 = vmatpush1.msra.mxu0 %v5161
    %5204 = vmatprep.subr.mxu0 0.0
    %5205 = vmatpush1.msra.mxu0 %v5160
    %5206 = vmatprep.subr.mxu0 0.0
    %5207 = vmatpush1.msra.mxu0 %v5159
    %5208 = vmatprep.subr.mxu0 0.0
    %5209 = vmatpush1.msra.mxu0 %v5158
    %5210 = vmatprep.subr.mxu0 0.0
    %5211 = vmatpush1.msra.mxu0 %v5157
    %5212 = vmatprep.subr.mxu0 0.0
    %5213 = vmatpush1.msra.mxu0 %v5156
    %5214 = vmatprep.subr.mxu0 0.0
    %5215 = vmatpush2.msra.mxu0 0.0
    %5216 = vmatprep.subr.mxu0 0.0
    %5217 = vmatpush2.msra.mxu0 0.0
    %5218 = vmatprep.subr.mxu0 0.0
    %5219 = vmatpush2.msra.mxu0 0.0
    %5220 = vmatprep.subr.mxu0 0.0
    %5221 = vmatpush2.msra.mxu0 0.0
    %5222 = vmatprep.subr.mxu0 0.0
    %5223 = vmatpush2.msra.mxu0 0.0
    %5224 = vmatprep.subr.mxu0 0.0
    %5225 = vmatpush2.msra.mxu0 0.0
    %5226 = vmatprep.subr.mxu0 0.0
    %5227 = vmatpush2.msra.mxu0 0.0
    %5228 = vmatprep.subr.mxu0 0.0
    %5229 = vmatpush2.msra.mxu0 0.0
    %5230 = vmatprep.subr.mxu0 0.0
    %5231 = vmatpush2.msra.mxu0 0.0
    %5232 = vmatprep.subr.mxu0 0.0
    %5233 = vmatpush2.msra.mxu0 0.0
    %5234 = vmatprep.subr.mxu0 0.0
    %5235 = vmatpush2.msra.mxu0 0.0
    %5236 = vmatprep.subr.mxu0 0.0
    %5237 = vmatpush2.msra.mxu0 0.0
    %5238 = vmatprep.subr.mxu0 0.0
    %5239 = vmatpush2.msra.mxu0 0.0
    %5240 = vmatprep.subr.mxu0 0.0
    %5241 = vmatpush2.msra.mxu0 0.0
    %5242 = vmatprep.subr.mxu0 0.0
    %5243 = vmatpush2.msra.mxu0 0.0
    %5244 = vmatprep.subr.mxu0 0.0
    %5245 = vmatpush2.msra.mxu0 0.0
    %5246 = vmatprep.mubr.f32.mxu0 0.0
    %5247 = vmatmul.mubr.f32.gmra.mxu0 %v5180
    %v5248 = vpop.f32.mrf.mxu0
    %v5249 = vadd.f32 %v5176, %v5248
    %v5250 = vpop.f32.mrf.mxu0
    %5251 = vdwg.mxu0
    %v5252 = vmax.f32 %v5249, 0.0
    %v5253 = vld [vmem:[%s12] sm:$0xff]
    %v5254 = vld [vmem:[%s12 + $0x8] sm:$0xff]
    %v5255 = vld [vmem:[%s12 + $0x10] sm:$0xff]
    %v5256 = vld [vmem:[%s12 + $0x18] sm:$0xff]
    %v5257 = vld [vmem:[%s12 + $0x20] sm:$0xff]
    %v5258 = vld [vmem:[%s12 + $0x28] sm:$0xff]
    %v5259 = vld [vmem:[%s12 + $0x30] sm:$0xff]
    %v5260 = vld [vmem:[%s12 + $0x38] sm:$0xff]
    %v5261 = vld [vmem:[%s12 + $0x40] sm:$0xff]
    %v5262 = vld [vmem:[%s12 + $0x48] sm:$0xff]
    %v5263 = vld [vmem:[%s12 + $0x50] sm:$0xf]
    %v5264 = vld [vmem:[%s13] sm:$0x1]
    %v5266 = vlaneseq
    %v5267 = vshrl.u32 %v5266, 7
    %v5268 = vsub.s32 0, %v5267
    %v5269 = vrot.slane %v5264, %v5268
    %vm5271 = vcmask 687104
    %v5273 = vsel %vm5271, %v5252, 0
    %v5276 = vsel %vm72, %v5263, 0
    %5278 = vmatprep.subr.mxu0 0.0
    %5279 = vmatpush1.msra.mxu0 0.0
    %5280 = vmatprep.subr.mxu0 0.0
    %5281 = vmatpush1.msra.mxu0 0.0
    %5282 = vmatprep.subr.mxu0 0.0
    %5283 = vmatpush1.msra.mxu0 0.0
    %5284 = vmatprep.subr.mxu0 0.0
    %5285 = vmatpush1.msra.mxu0 0.0
    %5286 = vmatprep.subr.mxu0 0.0
    %5287 = vmatpush1.msra.mxu0 0.0
    %5288 = vmatprep.subr.mxu0 0.0
    %5289 = vmatpush1.msra.mxu0 %v5276
    %5290 = vmatprep.subr.mxu0 0.0
    %5291 = vmatpush1.msra.mxu0 %v5262
    %5292 = vmatprep.subr.mxu0 0.0
    %5293 = vmatpush1.msra.mxu0 %v5261
    %5294 = vmatprep.subr.mxu0 0.0
    %5295 = vmatpush1.msra.mxu0 %v5260
    %5296 = vmatprep.subr.mxu0 0.0
    %5297 = vmatpush1.msra.mxu0 %v5259
    %5298 = vmatprep.subr.mxu0 0.0
    %5299 = vmatpush1.msra.mxu0 %v5258
    %5300 = vmatprep.subr.mxu0 0.0
    %5301 = vmatpush1.msra.mxu0 %v5257
    %5302 = vmatprep.subr.mxu0 0.0
    %5303 = vmatpush1.msra.mxu0 %v5256
    %5304 = vmatprep.subr.mxu0 0.0
    %5305 = vmatpush1.msra.mxu0 %v5255
    %5306 = vmatprep.subr.mxu0 0.0
    %5307 = vmatpush1.msra.mxu0 %v5254
    %5308 = vmatprep.subr.mxu0 0.0
    %5309 = vmatpush1.msra.mxu0 %v5253
    %5310 = vmatprep.subr.mxu0 0.0
    %5311 = vmatpush2.msra.mxu0 0.0
    %5312 = vmatprep.subr.mxu0 0.0
    %5313 = vmatpush2.msra.mxu0 0.0
    %5314 = vmatprep.subr.mxu0 0.0
    %5315 = vmatpush2.msra.mxu0 0.0
    %5316 = vmatprep.subr.mxu0 0.0
    %5317 = vmatpush2.msra.mxu0 0.0
    %5318 = vmatprep.subr.mxu0 0.0
    %5319 = vmatpush2.msra.mxu0 0.0
    %5320 = vmatprep.subr.mxu0 0.0
    %5321 = vmatpush2.msra.mxu0 0.0
    %5322 = vmatprep.subr.mxu0 0.0
    %5323 = vmatpush2.msra.mxu0 0.0
    %5324 = vmatprep.subr.mxu0 0.0
    %5325 = vmatpush2.msra.mxu0 0.0
    %5326 = vmatprep.subr.mxu0 0.0
    %5327 = vmatpush2.msra.mxu0 0.0
    %5328 = vmatprep.subr.mxu0 0.0
    %5329 = vmatpush2.msra.mxu0 0.0
    %5330 = vmatprep.subr.mxu0 0.0
    %5331 = vmatpush2.msra.mxu0 0.0
    %5332 = vmatprep.subr.mxu0 0.0
    %5333 = vmatpush2.msra.mxu0 0.0
    %5334 = vmatprep.subr.mxu0 0.0
    %5335 = vmatpush2.msra.mxu0 0.0
    %5336 = vmatprep.subr.mxu0 0.0
    %5337 = vmatpush2.msra.mxu0 0.0
    %5338 = vmatprep.subr.mxu0 0.0
    %5339 = vmatpush2.msra.mxu0 0.0
    %5340 = vmatprep.subr.mxu0 0.0
    %5341 = vmatpush2.msra.mxu0 0.0
    %5342 = vmatprep.mubr.f32.mxu0 0.0
    %5343 = vmatmul.mubr.f32.gmra.mxu0 %v5273
    %v5344 = vpop.f32.mrf.mxu0
    %v5345 = vadd.f32 %v5269, %v5344
    %v5346 = vpop.f32.mrf.mxu0
    %5347 = vdwg.mxu0
    %vm5348 = vcmask 9216
    %v5349 = vsel %vm5348, %v5345, -inf
    %5350 = vmax.xlane.f32.xlu0 %v5349
    %v5351 = vpop.xlane.xlu0 %5350
    %v5352 = vsub.f32 %v5345, %v5351
    %v5353 = vmul.f32 %v5352, 1.442695
    %v5354 = vpow.pop %v5353
    %v5355 = vsel %vm5348, %v5354, 0.0
    %5356 = vadd.xlane.f32.xlu0 %v5355
    %v5357 = vpop.xlane.xlu0 %5356
    %v5358 = vrcp.pop %v5357
    %v5359 = vmul.f32 %v5354, %v5358
    %5360 = vst.msk [vmem:[#allocation2] sm:$0x3] %vm5348, %v5359
    // Predicated region
    $region58: #{mnist_net_forward.1} parent=1 // pred_check
      _
    $region59: #{mnist_net_forward.1} parent=1 // pred_check_branch
      %5362 = sbr.rel (0) target = $region61
    $region60: #{mnist_net_forward.1} parent=1 // pred_region
      %s5364 = ssub.s32 32, 32
      %5365 = vsyncadd [#allocation3], %s5364
      %s5367 = sshll.u32 [#allocation2], 4
      %s5368 = int_to_ptr.vmem [resolvable:$true] %s5367
      %5370 = dma.vmem_to_hbm [thread:$0]  %s5368, 32, %s14, [#allocation3]
    $region61: #{mnist_net_forward.1} parent=1 // pred_fallthru
      _
    // Predicated region
    $region62: #{mnist_net_forward.1} parent=1 // pred_check
      _
    $region63: #{mnist_net_forward.1} parent=1 // pred_check_branch
      %5372 = sbr.rel (0) target = $region65
    $region64: #{mnist_net_forward.1} parent=1 // pred_region
      %5373 = dma.done [#allocation3], 32
    $region65: #{mnist_net_forward.1} parent=1 // pred_fallthru
      _
    %5374 = vsyncpa [#allocation3], 1

</llo_original>
